<compile_context>
chip_gen: v7x
topology: tpu7x:2x2x1
jax: 0.10.0
libtpu: 0.0.40
codegen_flags: <defaults>
</compile_context>

<pallas_src>
import functools

import jax
import jax.numpy as jnp
from jax import lax
from jax.experimental import pallas as pl
from jax.experimental.pallas import tpu as pltpu

NDF = 64          # as in the PyTorch module
EPS = 1e-5        # BatchNorm2d default eps
NEG_SLOPE = 0.2   # LeakyReLU slope

_VMEM_SPEC = pl.BlockSpec(memory_space=pltpu.MemorySpace.VMEM)


def _apply_act(x, act):
    if act == "relu":
        return jnp.maximum(x, 0.0)
    if act == "leaky":
        return jnp.where(x >= 0.0, x, NEG_SLOPE * x)
    if act == "tanh":
        return jnp.tanh(x)
    return x


# ------------- fused Pallas kernel: matmul + BatchNorm(batch stats) + activation ----

def _fused_layer_kernel(p_ref, w_ref, g_ref, b_ref, o_ref, *, act, inv_total, cfirst):
    """One conv / conv-transpose layer, fully fused.

    cfirst=False:  p_ref (P, M, K), w_ref (P, K, C), o_ref (P, M, C), g/b (1, C)
    cfirst=True :  p_ref (P, K, M), w_ref (P, C, K), o_ref (P, C, M), g/b (C, 1)
    P = number of sub-pixel phases (1 for a plain conv, 4 for a conv-transpose).
    BatchNorm statistics (biased variance, training mode) are accumulated over all
    P*M output pixels per channel in a single pass (sum + sum-of-squares) on the
    f32 MXU accumulator -- no intermediate ever leaves VMEM.
    """
    nphase = p_ref.shape[0]
    red_axis = 1 if cfirst else 0
    ys = []
    s1 = None
    s2 = None
    for i in range(nphase):
        if cfirst:
            y = jnp.dot(w_ref[i], p_ref[i], preferred_element_type=jnp.float32)
        else:
            y = jnp.dot(p_ref[i], w_ref[i], preferred_element_type=jnp.float32)
        ys.append(y)
        t1 = jnp.sum(y, axis=red_axis, keepdims=True)
        t2 = jnp.sum(y * y, axis=red_axis, keepdims=True)
        s1 = t1 if s1 is None else s1 + t1
        s2 = t2 if s2 is None else s2 + t2
    mean = s1 * inv_total
    var = jnp.maximum(s2 * inv_total - mean * mean, 0.0)   # clamp guards cancellation
    scale = lax.rsqrt(var + EPS) * g_ref[...]
    shift = b_ref[...] - mean * scale
    for i in range(nphase):
        o_ref[i, :, :] = _apply_act(ys[i] * scale + shift, act)


def _fused_layer(patches, wmats, gamma, beta, act, inv_total, cfirst):
    # Single-block call: all operands of every layer fit comfortably in VMEM
    # (< 3 MiB per layer).  No grid => no v7x dual-TC split: BatchNorm needs
    # full-batch statistics, and a cross-core reduction is not worth it at M<=512.
    nphase = patches.shape[0]
    if cfirst:
        c, m = wmats.shape[1], patches.shape[2]
        out_shape = (nphase, c, m)
        g2, b2 = gamma.reshape(c, 1), beta.reshape(c, 1)
    else:
        c, m = wmats.shape[2], patches.shape[1]
        out_shape = (nphase, m, c)
        g2, b2 = gamma.reshape(1, c), beta.reshape(1, c)
    return pl.pallas_call(
        functools.partial(_fused_layer_kernel, act=act, inv_total=inv_total,
                          cfirst=cfirst),
        out_shape=jax.ShapeDtypeStruct(out_shape, jnp.float32),
        in_specs=[_VMEM_SPEC] * 4,
        out_specs=_VMEM_SPEC,
        # Explicit VMEM budget: safe on v5e (128 MiB phys), v6e (128 MiB) and
        # v7x (64 MiB phys); actual per-layer footprint is far smaller.
        compiler_params=pltpu.CompilerParams(vmem_limit_bytes=32 * 1024 * 1024),
    )(patches, wmats, g2, b2)


# ---------------- XLA glue: patch-matrix construction ----------------

def _im2col(xp, k, stride):
    # xp: already-padded NHWC.  Returns (N*Ho*Wo, k*k*C); K ordering = (ky, kx, C).
    # Built with concatenate (no interleaved 5-D intermediate) and with exact slice
    # ends (no reliance on jnp slice clamping).
    n, h, w, c = xp.shape
    ho = (h - k) // stride + 1
    wo = (w - k) // stride + 1
    cols = []
    for i in range(k):
        for j in range(k):
            cols.append(xp[:, i:i + stride * (ho - 1) + 1:stride,
                           j:j + stride * (wo - 1) + 1:stride, :])
    p = jnp.concatenate(cols, axis=-1)                       # (N, Ho, Wo, k*k*C)
    return p.reshape(n * ho * wo, k * k * c), (n, ho, wo)


def conv_bn_act(x, w, gamma, beta, act):
    # nn.Conv2d(k=4, stride=2, padding=1) + BatchNorm2d(batch stats) + activation.
    # (Conv bias omitted: cancelled exactly by the BN mean subtraction.)
    c_out, c_in, k, _ = w.shape
    xp = jnp.pad(x, ((0, 0), (1, 1), (1, 1), (0, 0)))
    patches, (n, ho, wo) = _im2col(xp, k, stride=2)
    wm = jnp.transpose(w, (2, 3, 1, 0)).reshape(k * k * c_in, c_out)
    m = patches.shape[0]
    y = _fused_layer(patches[None], wm[None], gamma, beta, act, 1.0 / m, cfirst=False)
    return y[0].reshape(n, ho, wo, c_out)


def convT_bn_act(x, w, gamma, beta, act, cfirst=False):
    # nn.ConvTranspose2d(k=4, stride=2, padding=1) + BN + act via the 4-phase
    # (sub-pixel) decomposition.  For output parity (py, px):
    #   out[n, 2t+py, 2s+px, :] = sum_{dy,dx} xp[n, py+dy+t, px+dx+s, :] @
    #                             w[:, :, 3-py-2*dy, 3-px-2*dx]
    # where xp is the input padded by 1 on each side (no zero insertion).
    c_in, c_out = w.shape[0], w.shape[1]
    n, hi, wi, _ = x.shape
    m = n * hi * wi
    xp = jnp.pad(x, ((0, 0), (1, 1), (1, 1), (0, 0)))
    patches, wmats = [], []
    for py in (0, 1):
        for px in (0, 1):
            cols = []
            for dy in (0, 1):
                for dx in (0, 1):
                    cols.append(xp[:, py + dy:py + dy + hi, px + dx:px + dx + wi, :])
            p = jnp.concatenate(cols, axis=-1).reshape(m, 4 * c_in)
            wsub = w[:, :, 3 - py::-2, 3 - px::-2]            # (Cin, Cout, 2dy, 2dx)
            wm = jnp.transpose(wsub, (2, 3, 0, 1)).reshape(4 * c_in, c_out)
            if cfirst:                                        # lane-dense (C, M) out
                patches.append(p.T)
                wmats.append(wm.T)
            else:
                patches.append(p)
                wmats.append(wm)
    patches = jnp.stack(patches, axis=0)
    wmats = jnp.stack(wmats, axis=0)
    inv_total = 1.0 / (4 * m)                  # BN stats over ALL output pixels
    y = _fused_layer(patches, wmats, gamma, beta, act, inv_total, cfirst=cfirst)
    if cfirst:
        # (4, C, M) -> NCHW directly (also removes the final NHWC->NCHW transpose).
        y = y.reshape(2, 2, c_out, n, hi, wi)
        return jnp.transpose(y, (3, 2, 4, 0, 5, 1)).reshape(n, c_out, 2 * hi, 2 * wi)
    y = y.reshape(2, 2, n, hi, wi, c_out)
    return jnp.transpose(y, (2, 3, 0, 4, 1, 5)).reshape(n, 2 * hi, 2 * wi, c_out)


# ---------------- Model ----------------

def init_params(key):
    # PyTorch parameter shapes:
    #   Conv2d weight (Cout, Cin, 4, 4); ConvTranspose2d weight (Cin, Cout, 4, 4);
    #   BatchNorm2d gamma=1, beta=0 (defaults).  Conv/ConvT biases are kept for
    #   structural fidelity but unused: every conv feeds a training-mode BatchNorm,
    #   whose mean subtraction cancels any per-channel constant exactly.
    enc_shapes = [(NDF, 3, 4, 4), (2 * NDF, NDF, 4, 4), (4 * NDF, 2 * NDF, 4, 4)]
    dec_shapes = [(4 * NDF, 2 * NDF, 4, 4), (2 * NDF, NDF, 4, 4), (NDF, 3, 4, 4)]
    keys = jax.random.split(key, 2 * (len(enc_shapes) + len(dec_shapes)))
    enc, dec = [], []
    ki = 0
    for s in enc_shapes:
        c = s[0]
        w = 0.05 * jax.random.normal(keys[ki], s, jnp.float32)
        b = 0.01 * jax.random.normal(keys[ki + 1], (c,), jnp.float32)
        enc.append((w, b, jnp.ones((c,), jnp.float32), jnp.zeros((c,), jnp.float32)))
        ki += 2
    for s in dec_shapes:
        c = s[1]
        w = 0.05 * jax.random.normal(keys[ki], s, jnp.float32)
        b = 0.01 * jax.random.normal(keys[ki + 1], (c,), jnp.float32)
        dec.append((w, b, jnp.ones((c,), jnp.float32), jnp.zeros((c,), jnp.float32)))
        ki += 2
    return {"enc": enc, "dec": dec}


@jax.jit
def autoencoder_forward(x_nchw, params):
    # TODO(synk): BatchNorm running-stats update (training-mode buffer mutation) is
    # not modeled; it does not affect forward outputs.
    x = jnp.transpose(x_nchw, (0, 2, 3, 1)).astype(jnp.float32)   # NCHW -> NHWC
    h = x
    for (w, _b, g, bt), act in zip(params["enc"], ("relu", "leaky", "leaky")):
        h = conv_bn_act(h, w, g, bt, act)
    enc_nhwc = h
    dec_layers = list(zip(params["dec"], ("leaky", "leaky", "tanh")))
    for li, ((w, _b, g, bt), act) in enumerate(dec_layers):
        h = convT_bn_act(h, w, g, bt, act, cfirst=(li == len(dec_layers) - 1))
    dec_nchw = h                                   # last layer already emits NCHW
    return jnp.transpose(enc_nhwc, (0, 3, 1, 2)), dec_nchw


if __name__ == "__main__":
    key = jax.random.PRNGKey(0)
    kx, kp = jax.random.split(key)
    x = jax.random.normal(kx, (2, 3, 16, 16), jnp.float32)   # small NCHW input
    params = init_params(kp)
    enc, dec = autoencoder_forward(x, params)
    jax.block_until_ready((enc, dec))
    assert enc.shape == (2, 4 * NDF, 2, 2), enc.shape
    assert dec.shape == (2, 3, 16, 16), dec.shape
    assert enc.dtype == jnp.float32 and dec.dtype == jnp.float32
    print("KERNEL_OK")
</pallas_src>

<mosaic_0001>
module attributes {stable_mosaic.version = 11 : i64} {
  func.func @_fused_layer_kernel(%arg0: memref<1x128x48xf32, #tpu.memory_space<vmem>>, %arg1: memref<1x48x64xf32, #tpu.memory_space<vmem>>, %arg2: memref<1x64xf32, #tpu.memory_space<vmem>>, %arg3: memref<1x64xf32, #tpu.memory_space<vmem>>, %arg4: memref<1x128x64xf32, #tpu.memory_space<vmem>>) attributes {dimension_semantics = [], scalar_prefetch = 0 : i64, scratch_operands = 0 : i64, tpu.core_type = #tpu.core_type<tc>} {
    %c0 = arith.constant 0 : index
    %c0_0 = arith.constant 0 : index
    %c0_1 = arith.constant 0 : index
    %0 = vector.load %arg0[%c0, %c0_0, %c0_1] : memref<1x128x48xf32, #tpu.memory_space<vmem>>, vector<1x128x48xf32>
    %1 = vector.shape_cast %0 : vector<1x128x48xf32> to vector<128x48xf32>
    %c0_2 = arith.constant 0 : index
    %c0_3 = arith.constant 0 : index
    %c0_4 = arith.constant 0 : index
    %2 = vector.load %arg1[%c0_2, %c0_3, %c0_4] : memref<1x48x64xf32, #tpu.memory_space<vmem>>, vector<1x48x64xf32>
    %3 = vector.shape_cast %2 : vector<1x48x64xf32> to vector<48x64xf32>
    %cst = arith.constant dense<0.000000e+00> : vector<128x64xf32>
    %4 = tpu.matmul %1, %3, %cst {dimension_numbers = #tpu.dot_dimension_numbers<[1], [0], [0], [1], [0, 0, 1, 1], [], []>} : vector<128x48xf32>, vector<48x64xf32>, vector<128x64xf32> -> vector<128x64xf32>
    %cst_5 = arith.constant dense<0.000000e+00> : vector<64xf32>
    %5 = vector.multi_reduction <add>, %4, %cst_5 [0] : vector<128x64xf32> to vector<64xf32>
    %6 = vector.shape_cast %5 : vector<64xf32> to vector<1x64xf32>
    %7 = arith.mulf %4, %4 : vector<128x64xf32>
    %cst_6 = arith.constant dense<0.000000e+00> : vector<64xf32>
    %8 = vector.multi_reduction <add>, %7, %cst_6 [0] : vector<128x64xf32> to vector<64xf32>
    %9 = vector.shape_cast %8 : vector<64xf32> to vector<1x64xf32>
    %cst_7 = arith.constant 7.812500e-03 : f32
    %10 = vector.broadcast %cst_7 : f32 to vector<1x64xf32>
    %11 = arith.mulf %6, %10 : vector<1x64xf32>
    %cst_8 = arith.constant 7.812500e-03 : f32
    %12 = vector.broadcast %cst_8 : f32 to vector<1x64xf32>
    %13 = arith.mulf %9, %12 : vector<1x64xf32>
    %14 = arith.mulf %11, %11 : vector<1x64xf32>
    %15 = arith.subf %13, %14 : vector<1x64xf32>
    %cst_9 = arith.constant 0.000000e+00 : f32
    %16 = vector.broadcast %cst_9 : f32 to vector<1x64xf32>
    %17 = arith.maximumf %15, %16 : vector<1x64xf32>
    %cst_10 = arith.constant 9.99999974E-6 : f32
    %18 = vector.broadcast %cst_10 : f32 to vector<1x64xf32>
    %19 = arith.addf %17, %18 : vector<1x64xf32>
    %20 = math.rsqrt %19 : vector<1x64xf32>
    %c0_11 = arith.constant 0 : index
    %c0_12 = arith.constant 0 : index
    %21 = vector.load %arg2[%c0_11, %c0_12] : memref<1x64xf32, #tpu.memory_space<vmem>>, vector<1x64xf32>
    %22 = arith.mulf %20, %21 : vector<1x64xf32>
    %c0_13 = arith.constant 0 : index
    %c0_14 = arith.constant 0 : index
    %23 = vector.load %arg3[%c0_13, %c0_14] : memref<1x64xf32, #tpu.memory_space<vmem>>, vector<1x64xf32>
    %24 = arith.mulf %11, %22 : vector<1x64xf32>
    %25 = arith.subf %23, %24 : vector<1x64xf32>
    %26 = vector.broadcast %22 : vector<1x64xf32> to vector<128x64xf32>
    %27 = arith.mulf %4, %26 : vector<128x64xf32>
    %28 = vector.broadcast %25 : vector<1x64xf32> to vector<128x64xf32>
    %29 = arith.addf %27, %28 : vector<128x64xf32>
    %cst_15 = arith.constant 0.000000e+00 : f32
    %30 = vector.broadcast %cst_15 : f32 to vector<128x64xf32>
    %31 = arith.maximumf %29, %30 : vector<128x64xf32>
    %c0_16 = arith.constant 0 : index
    %c0_17 = arith.constant 0 : index
    %c0_18 = arith.constant 0 : index
    %32 = vector.load %arg4[%c0_16, %c0_17, %c0_18] : memref<1x128x64xf32, #tpu.memory_space<vmem>>, vector<1x128x64xf32>
    %33 = vector.shape_cast %32 : vector<1x128x64xf32> to vector<128x64xf32>
    %34 = vector.shape_cast %31 : vector<128x64xf32> to vector<1x128x64xf32>
    tpu.vector_store %arg4[%c0_16, %c0_17, %c0_18], %34 {strides = array<i32>} : memref<1x128x64xf32, #tpu.memory_space<vmem>>, vector<1x128x64xf32>,
    return
  }
}

module attributes {stable_mosaic.version = 11 : i64} {
  func.func @_fused_layer_kernel(%arg0: memref<1x32x1024xf32, #tpu.memory_space<vmem>>, %arg1: memref<1x1024x128xf32, #tpu.memory_space<vmem>>, %arg2: memref<1x128xf32, #tpu.memory_space<vmem>>, %arg3: memref<1x128xf32, #tpu.memory_space<vmem>>, %arg4: memref<1x32x128xf32, #tpu.memory_space<vmem>>) attributes {dimension_semantics = [], scalar_prefetch = 0 : i64, scratch_operands = 0 : i64, tpu.core_type = #tpu.core_type<tc>} {
    %c0 = arith.constant 0 : index
    %c0_0 = arith.constant 0 : index
    %c0_1 = arith.constant 0 : index
    %0 = vector.load %arg0[%c0, %c0_0, %c0_1] : memref<1x32x1024xf32, #tpu.memory_space<vmem>>, vector<1x32x1024xf32>
    %1 = vector.shape_cast %0 : vector<1x32x1024xf32> to vector<32x1024xf32>
    %c0_2 = arith.constant 0 : index
    %c0_3 = arith.constant 0 : index
    %c0_4 = arith.constant 0 : index
    %2 = vector.load %arg1[%c0_2, %c0_3, %c0_4] : memref<1x1024x128xf32, #tpu.memory_space<vmem>>, vector<1x1024x128xf32>
    %3 = vector.shape_cast %2 : vector<1x1024x128xf32> to vector<1024x128xf32>
    %cst = arith.constant dense<0.000000e+00> : vector<32x128xf32>
    %4 = tpu.matmul %1, %3, %cst {dimension_numbers = #tpu.dot_dimension_numbers<[1], [0], [0], [1], [0, 0, 1, 1], [], []>} : vector<32x1024xf32>, vector<1024x128xf32>, vector<32x128xf32> -> vector<32x128xf32>
    %cst_5 = arith.constant dense<0.000000e+00> : vector<128xf32>
    %5 = vector.multi_reduction <add>, %4, %cst_5 [0] : vector<32x128xf32> to vector<128xf32>
    %6 = vector.shape_cast %5 : vector<128xf32> to vector<1x128xf32>
    %7 = arith.mulf %4, %4 : vector<32x128xf32>
    %cst_6 = arith.constant dense<0.000000e+00> : vector<128xf32>
    %8 = vector.multi_reduction <add>, %7, %cst_6 [0] : vector<32x128xf32> to vector<128xf32>
    %9 = vector.shape_cast %8 : vector<128xf32> to vector<1x128xf32>
    %cst_7 = arith.constant 3.125000e-02 : f32
    %10 = vector.broadcast %cst_7 : f32 to vector<1x128xf32>
    %11 = arith.mulf %6, %10 : vector<1x128xf32>
    %cst_8 = arith.constant 3.125000e-02 : f32
    %12 = vector.broadcast %cst_8 : f32 to vector<1x128xf32>
    %13 = arith.mulf %9, %12 : vector<1x128xf32>
    %14 = arith.mulf %11, %11 : vector<1x128xf32>
    %15 = arith.subf %13, %14 : vector<1x128xf32>
    %cst_9 = arith.constant 0.000000e+00 : f32
    %16 = vector.broadcast %cst_9 : f32 to vector<1x128xf32>
    %17 = arith.maximumf %15, %16 : vector<1x128xf32>
    %cst_10 = arith.constant 9.99999974E-6 : f32
    %18 = vector.broadcast %cst_10 : f32 to vector<1x128xf32>
    %19 = arith.addf %17, %18 : vector<1x128xf32>
    %20 = math.rsqrt %19 : vector<1x128xf32>
    %c0_11 = arith.constant 0 : index
    %c0_12 = arith.constant 0 : index
    %21 = vector.load %arg2[%c0_11, %c0_12] : memref<1x128xf32, #tpu.memory_space<vmem>>, vector<1x128xf32>
    %22 = arith.mulf %20, %21 : vector<1x128xf32>
    %c0_13 = arith.constant 0 : index
    %c0_14 = arith.constant 0 : index
    %23 = vector.load %arg3[%c0_13, %c0_14] : memref<1x128xf32, #tpu.memory_space<vmem>>, vector<1x128xf32>
    %24 = arith.mulf %11, %22 : vector<1x128xf32>
    %25 = arith.subf %23, %24 : vector<1x128xf32>
    %26 = vector.broadcast %22 : vector<1x128xf32> to vector<32x128xf32>
    %27 = arith.mulf %4, %26 : vector<32x128xf32>
    %28 = vector.broadcast %25 : vector<1x128xf32> to vector<32x128xf32>
    %29 = arith.addf %27, %28 : vector<32x128xf32>
    %cst_15 = arith.constant 0.000000e+00 : f32
    %30 = vector.broadcast %cst_15 : f32 to vector<32x128xf32>
    %31 = arith.cmpf oge, %29, %30 : vector<32x128xf32>
    %cst_16 = arith.constant 2.000000e-01 : f32
    %32 = vector.broadcast %cst_16 : f32 to vector<32x128xf32>
    %33 = arith.mulf %32, %29 : vector<32x128xf32>
    %34 = arith.select %31, %29, %33 : vector<32x128xi1>, vector<32x128xf32>
    %c0_17 = arith.constant 0 : index
    %c0_18 = arith.constant 0 : index
    %c0_19 = arith.constant 0 : index
    %35 = vector.load %arg4[%c0_17, %c0_18, %c0_19] : memref<1x32x128xf32, #tpu.memory_space<vmem>>, vector<1x32x128xf32>
    %36 = vector.shape_cast %35 : vector<1x32x128xf32> to vector<32x128xf32>
    %37 = vector.shape_cast %34 : vector<32x128xf32> to vector<1x32x128xf32>
    tpu.vector_store %arg4[%c0_17, %c0_18, %c0_19], %37 {strides = array<i32>} : memref<1x32x128xf32, #tpu.memory_space<vmem>>, vector<1x32x128xf32>,
    return
  }
}

module attributes {stable_mosaic.version = 11 : i64} {
  func.func @_fused_layer_kernel(%arg0: memref<1x8x2048xf32, #tpu.memory_space<vmem>>, %arg1: memref<1x2048x256xf32, #tpu.memory_space<vmem>>, %arg2: memref<1x256xf32, #tpu.memory_space<vmem>>, %arg3: memref<1x256xf32, #tpu.memory_space<vmem>>, %arg4: memref<1x8x256xf32, #tpu.memory_space<vmem>>) attributes {dimension_semantics = [], scalar_prefetch = 0 : i64, scratch_operands = 0 : i64, tpu.core_type = #tpu.core_type<tc>} {
    %c0 = arith.constant 0 : index
    %c0_0 = arith.constant 0 : index
    %c0_1 = arith.constant 0 : index
    %0 = vector.load %arg0[%c0, %c0_0, %c0_1] : memref<1x8x2048xf32, #tpu.memory_space<vmem>>, vector<1x8x2048xf32>
    %1 = vector.shape_cast %0 : vector<1x8x2048xf32> to vector<8x2048xf32>
    %c0_2 = arith.constant 0 : index
    %c0_3 = arith.constant 0 : index
    %c0_4 = arith.constant 0 : index
    %2 = vector.load %arg1[%c0_2, %c0_3, %c0_4] : memref<1x2048x256xf32, #tpu.memory_space<vmem>>, vector<1x2048x256xf32>
    %3 = vector.shape_cast %2 : vector<1x2048x256xf32> to vector<2048x256xf32>
    %cst = arith.constant dense<0.000000e+00> : vector<8x256xf32>
    %4 = tpu.matmul %1, %3, %cst {dimension_numbers = #tpu.dot_dimension_numbers<[1], [0], [0], [1], [0, 0, 1, 1], [], []>} : vector<8x2048xf32>, vector<2048x256xf32>, vector<8x256xf32> -> vector<8x256xf32>
    %cst_5 = arith.constant dense<0.000000e+00> : vector<256xf32>
    %5 = vector.multi_reduction <add>, %4, %cst_5 [0] : vector<8x256xf32> to vector<256xf32>
    %6 = vector.shape_cast %5 : vector<256xf32> to vector<1x256xf32>
    %7 = arith.mulf %4, %4 : vector<8x256xf32>
    %cst_6 = arith.constant dense<0.000000e+00> : vector<256xf32>
    %8 = vector.multi_reduction <add>, %7, %cst_6 [0] : vector<8x256xf32> to vector<256xf32>
    %9 = vector.shape_cast %8 : vector<256xf32> to vector<1x256xf32>
    %cst_7 = arith.constant 1.250000e-01 : f32
    %10 = vector.broadcast %cst_7 : f32 to vector<1x256xf32>
    %11 = arith.mulf %6, %10 : vector<1x256xf32>
    %cst_8 = arith.constant 1.250000e-01 : f32
    %12 = vector.broadcast %cst_8 : f32 to vector<1x256xf32>
    %13 = arith.mulf %9, %12 : vector<1x256xf32>
    %14 = arith.mulf %11, %11 : vector<1x256xf32>
    %15 = arith.subf %13, %14 : vector<1x256xf32>
    %cst_9 = arith.constant 0.000000e+00 : f32
    %16 = vector.broadcast %cst_9 : f32 to vector<1x256xf32>
    %17 = arith.maximumf %15, %16 : vector<1x256xf32>
    %cst_10 = arith.constant 9.99999974E-6 : f32
    %18 = vector.broadcast %cst_10 : f32 to vector<1x256xf32>
    %19 = arith.addf %17, %18 : vector<1x256xf32>
    %20 = math.rsqrt %19 : vector<1x256xf32>
    %c0_11 = arith.constant 0 : index
    %c0_12 = arith.constant 0 : index
    %21 = vector.load %arg2[%c0_11, %c0_12] : memref<1x256xf32, #tpu.memory_space<vmem>>, vector<1x256xf32>
    %22 = arith.mulf %20, %21 : vector<1x256xf32>
    %c0_13 = arith.constant 0 : index
    %c0_14 = arith.constant 0 : index
    %23 = vector.load %arg3[%c0_13, %c0_14] : memref<1x256xf32, #tpu.memory_space<vmem>>, vector<1x256xf32>
    %24 = arith.mulf %11, %22 : vector<1x256xf32>
    %25 = arith.subf %23, %24 : vector<1x256xf32>
    %26 = vector.broadcast %22 : vector<1x256xf32> to vector<8x256xf32>
    %27 = arith.mulf %4, %26 : vector<8x256xf32>
    %28 = vector.broadcast %25 : vector<1x256xf32> to vector<8x256xf32>
    %29 = arith.addf %27, %28 : vector<8x256xf32>
    %cst_15 = arith.constant 0.000000e+00 : f32
    %30 = vector.broadcast %cst_15 : f32 to vector<8x256xf32>
    %31 = arith.cmpf oge, %29, %30 : vector<8x256xf32>
    %cst_16 = arith.constant 2.000000e-01 : f32
    %32 = vector.broadcast %cst_16 : f32 to vector<8x256xf32>
    %33 = arith.mulf %32, %29 : vector<8x256xf32>
    %34 = arith.select %31, %29, %33 : vector<8x256xi1>, vector<8x256xf32>
    %c0_17 = arith.constant 0 : index
    %c0_18 = arith.constant 0 : index
    %c0_19 = arith.constant 0 : index
    %35 = vector.load %arg4[%c0_17, %c0_18, %c0_19] : memref<1x8x256xf32, #tpu.memory_space<vmem>>, vector<1x8x256xf32>
    %36 = vector.shape_cast %35 : vector<1x8x256xf32> to vector<8x256xf32>
    %37 = vector.shape_cast %34 : vector<8x256xf32> to vector<1x8x256xf32>
    tpu.vector_store %arg4[%c0_17, %c0_18, %c0_19], %37 {strides = array<i32>} : memref<1x8x256xf32, #tpu.memory_space<vmem>>, vector<1x8x256xf32>,
    return
  }
}

module attributes {stable_mosaic.version = 11 : i64} {
  func.func @_fused_layer_kernel(%arg0: memref<4x8x1024xf32, #tpu.memory_space<vmem>>, %arg1: memref<4x1024x128xf32, #tpu.memory_space<vmem>>, %arg2: memref<1x128xf32, #tpu.memory_space<vmem>>, %arg3: memref<1x128xf32, #tpu.memory_space<vmem>>, %arg4: memref<4x8x128xf32, #tpu.memory_space<vmem>>) attributes {dimension_semantics = [], scalar_prefetch = 0 : i64, scratch_operands = 0 : i64, tpu.core_type = #tpu.core_type<tc>} {
    %c0 = arith.constant 0 : index
    %c0_0 = arith.constant 0 : index
    %c0_1 = arith.constant 0 : index
    %0 = vector.load %arg0[%c0, %c0_0, %c0_1] : memref<4x8x1024xf32, #tpu.memory_space<vmem>>, vector<1x8x1024xf32>
    %1 = vector.shape_cast %0 : vector<1x8x1024xf32> to vector<8x1024xf32>
    %c0_2 = arith.constant 0 : index
    %c0_3 = arith.constant 0 : index
    %c0_4 = arith.constant 0 : index
    %2 = vector.load %arg1[%c0_2, %c0_3, %c0_4] : memref<4x1024x128xf32, #tpu.memory_space<vmem>>, vector<1x1024x128xf32>
    %3 = vector.shape_cast %2 : vector<1x1024x128xf32> to vector<1024x128xf32>
    %cst = arith.constant dense<0.000000e+00> : vector<8x128xf32>
    %4 = tpu.matmul %1, %3, %cst {dimension_numbers = #tpu.dot_dimension_numbers<[1], [0], [0], [1], [0, 0, 1, 1], [], []>} : vector<8x1024xf32>, vector<1024x128xf32>, vector<8x128xf32> -> vector<8x128xf32>
    %cst_5 = arith.constant dense<0.000000e+00> : vector<128xf32>
    %5 = vector.multi_reduction <add>, %4, %cst_5 [0] : vector<8x128xf32> to vector<128xf32>
    %6 = vector.shape_cast %5 : vector<128xf32> to vector<1x128xf32>
    %7 = arith.mulf %4, %4 : vector<8x128xf32>
    %cst_6 = arith.constant dense<0.000000e+00> : vector<128xf32>
    %8 = vector.multi_reduction <add>, %7, %cst_6 [0] : vector<8x128xf32> to vector<128xf32>
    %9 = vector.shape_cast %8 : vector<128xf32> to vector<1x128xf32>
    %c1 = arith.constant 1 : index
    %c0_7 = arith.constant 0 : index
    %c0_8 = arith.constant 0 : index
    %10 = vector.load %arg0[%c1, %c0_7, %c0_8] : memref<4x8x1024xf32, #tpu.memory_space<vmem>>, vector<1x8x1024xf32>
    %11 = vector.shape_cast %10 : vector<1x8x1024xf32> to vector<8x1024xf32>
    %c1_9 = arith.constant 1 : index
    %c0_10 = arith.constant 0 : index
    %c0_11 = arith.constant 0 : index
    %12 = vector.load %arg1[%c1_9, %c0_10, %c0_11] : memref<4x1024x128xf32, #tpu.memory_space<vmem>>, vector<1x1024x128xf32>
    %13 = vector.shape_cast %12 : vector<1x1024x128xf32> to vector<1024x128xf32>
    %cst_12 = arith.constant dense<0.000000e+00> : vector<8x128xf32>
    %14 = tpu.matmul %11, %13, %cst_12 {dimension_numbers = #tpu.dot_dimension_numbers<[1], [0], [0], [1], [0, 0, 1, 1], [], []>} : vector<8x1024xf32>, vector<1024x128xf32>, vector<8x128xf32> -> vector<8x128xf32>
    %cst_13 = arith.constant dense<0.000000e+00> : vector<128xf32>
    %15 = vector.multi_reduction <add>, %14, %cst_13 [0] : vector<8x128xf32> to vector<128xf32>
    %16 = vector.shape_cast %15 : vector<128xf32> to vector<1x128xf32>
    %17 = arith.mulf %14, %14 : vector<8x128xf32>
    %cst_14 = arith.constant dense<0.000000e+00> : vector<128xf32>
    %18 = vector.multi_reduction <add>, %17, %cst_14 [0] : vector<8x128xf32> to vector<128xf32>
    %19 = vector.shape_cast %18 : vector<128xf32> to vector<1x128xf32>
    %20 = arith.addf %6, %16 : vector<1x128xf32>
    %21 = arith.addf %9, %19 : vector<1x128xf32>
    %c2 = arith.constant 2 : index
    %c0_15 = arith.constant 0 : index
    %c0_16 = arith.constant 0 : index
    %22 = vector.load %arg0[%c2, %c0_15, %c0_16] : memref<4x8x1024xf32, #tpu.memory_space<vmem>>, vector<1x8x1024xf32>
    %23 = vector.shape_cast %22 : vector<1x8x1024xf32> to vector<8x1024xf32>
    %c2_17 = arith.constant 2 : index
    %c0_18 = arith.constant 0 : index
    %c0_19 = arith.constant 0 : index
    %24 = vector.load %arg1[%c2_17, %c0_18, %c0_19] : memref<4x1024x128xf32, #tpu.memory_space<vmem>>, vector<1x1024x128xf32>
    %25 = vector.shape_cast %24 : vector<1x1024x128xf32> to vector<1024x128xf32>
    %cst_20 = arith.constant dense<0.000000e+00> : vector<8x128xf32>
    %26 = tpu.matmul %23, %25, %cst_20 {dimension_numbers = #tpu.dot_dimension_numbers<[1], [0], [0], [1], [0, 0, 1, 1], [], []>} : vector<8x1024xf32>, vector<1024x128xf32>, vector<8x128xf32> -> vector<8x128xf32>
    %cst_21 = arith.constant dense<0.000000e+00> : vector<128xf32>
    %27 = vector.multi_reduction <add>, %26, %cst_21 [0] : vector<8x128xf32> to vector<128xf32>
    %28 = vector.shape_cast %27 : vector<128xf32> to vector<1x128xf32>
    %29 = arith.mulf %26, %26 : vector<8x128xf32>
    %cst_22 = arith.constant dense<0.000000e+00> : vector<128xf32>
    %30 = vector.multi_reduction <add>, %29, %cst_22 [0] : vector<8x128xf32> to vector<128xf32>
    %31 = vector.shape_cast %30 : vector<128xf32> to vector<1x128xf32>
    %32 = arith.addf %20, %28 : vector<1x128xf32>
    %33 = arith.addf %21, %31 : vector<1x128xf32>
    %c3 = arith.constant 3 : index
    %c0_23 = arith.constant 0 : index
    %c0_24 = arith.constant 0 : index
    %34 = vector.load %arg0[%c3, %c0_23, %c0_24] : memref<4x8x1024xf32, #tpu.memory_space<vmem>>, vector<1x8x1024xf32>
    %35 = vector.shape_cast %34 : vector<1x8x1024xf32> to vector<8x1024xf32>
    %c3_25 = arith.constant 3 : index
    %c0_26 = arith.constant 0 : index
    %c0_27 = arith.constant 0 : index
    %36 = vector.load %arg1[%c3_25, %c0_26, %c0_27] : memref<4x1024x128xf32, #tpu.memory_space<vmem>>, vector<1x1024x128xf32>
    %37 = vector.shape_cast %36 : vector<1x1024x128xf32> to vector<1024x128xf32>
    %cst_28 = arith.constant dense<0.000000e+00> : vector<8x128xf32>
    %38 = tpu.matmul %35, %37, %cst_28 {dimension_numbers = #tpu.dot_dimension_numbers<[1], [0], [0], [1], [0, 0, 1, 1], [], []>} : vector<8x1024xf32>, vector<1024x128xf32>, vector<8x128xf32> -> vector<8x128xf32>
    %cst_29 = arith.constant dense<0.000000e+00> : vector<128xf32>
    %39 = vector.multi_reduction <add>, %38, %cst_29 [0] : vector<8x128xf32> to vector<128xf32>
    %40 = vector.shape_cast %39 : vector<128xf32> to vector<1x128xf32>
    %41 = arith.mulf %38, %38 : vector<8x128xf32>
    %cst_30 = arith.constant dense<0.000000e+00> : vector<128xf32>
    %42 = vector.multi_reduction <add>, %41, %cst_30 [0] : vector<8x128xf32> to vector<128xf32>
    %43 = vector.shape_cast %42 : vector<128xf32> to vector<1x128xf32>
    %44 = arith.addf %32, %40 : vector<1x128xf32>
    %45 = arith.addf %33, %43 : vector<1x128xf32>
    %cst_31 = arith.constant 3.125000e-02 : f32
    %46 = vector.broadcast %cst_31 : f32 to vector<1x128xf32>
    %47 = arith.mulf %44, %46 : vector<1x128xf32>
    %cst_32 = arith.constant 3.125000e-02 : f32
    %48 = vector.broadcast %cst_32 : f32 to vector<1x128xf32>
    %49 = arith.mulf %45, %48 : vector<1x128xf32>
    %50 = arith.mulf %47, %47 : vector<1x128xf32>
    %51 = arith.subf %49, %50 : vector<1x128xf32>
    %cst_33 = arith.constant 0.000000e+00 : f32
    %52 = vector.broadcast %cst_33 : f32 to vector<1x128xf32>
    %53 = arith.maximumf %51, %52 : vector<1x128xf32>
    %cst_34 = arith.constant 9.99999974E-6 : f32
    %54 = vector.broadcast %cst_34 : f32 to vector<1x128xf32>
    %55 = arith.addf %53, %54 : vector<1x128xf32>
    %56 = math.rsqrt %55 : vector<1x128xf32>
    %c0_35 = arith.constant 0 : index
    %c0_36 = arith.constant 0 : index
    %57 = vector.load %arg2[%c0_35, %c0_36] : memref<1x128xf32, #tpu.memory_space<vmem>>, vector<1x128xf32>
    %58 = arith.mulf %56, %57 : vector<1x128xf32>
    %c0_37 = arith.constant 0 : index
    %c0_38 = arith.constant 0 : index
    %59 = vector.load %arg3[%c0_37, %c0_38] : memref<1x128xf32, #tpu.memory_space<vmem>>, vector<1x128xf32>
    %60 = arith.mulf %47, %58 : vector<1x128xf32>
    %61 = arith.subf %59, %60 : vector<1x128xf32>
    %62 = vector.broadcast %58 : vector<1x128xf32> to vector<8x128xf32>
    %63 = arith.mulf %4, %62 : vector<8x128xf32>
    %64 = vector.broadcast %61 : vector<1x128xf32> to vector<8x128xf32>
    %65 = arith.addf %63, %64 : vector<8x128xf32>
    %cst_39 = arith.constant 0.000000e+00 : f32
    %66 = vector.broadcast %cst_39 : f32 to vector<8x128xf32>
    %67 = arith.cmpf oge, %65, %66 : vector<8x128xf32>
    %cst_40 = arith.constant 2.000000e-01 : f32
    %68 = vector.broadcast %cst_40 : f32 to vector<8x128xf32>
    %69 = arith.mulf %68, %65 : vector<8x128xf32>
    %70 = arith.select %67, %65, %69 : vector<8x128xi1>, vector<8x128xf32>
    %c0_41 = arith.constant 0 : index
    %c0_42 = arith.constant 0 : index
    %c0_43 = arith.constant 0 : index
    %71 = vector.load %arg4[%c0_41, %c0_42, %c0_43] : memref<4x8x128xf32, #tpu.memory_space<vmem>>, vector<1x8x128xf32>
    %72 = vector.shape_cast %71 : vector<1x8x128xf32> to vector<8x128xf32>
    %73 = vector.shape_cast %70 : vector<8x128xf32> to vector<1x8x128xf32>
    tpu.vector_store %arg4[%c0_41, %c0_42, %c0_43], %73 {strides = array<i32>} : memref<4x8x128xf32, #tpu.memory_space<vmem>>, vector<1x8x128xf32>,
    %74 = vector.broadcast %58 : vector<1x128xf32> to vector<8x128xf32>
    %75 = arith.mulf %14, %74 : vector<8x128xf32>
    %76 = vector.broadcast %61 : vector<1x128xf32> to vector<8x128xf32>
    %77 = arith.addf %75, %76 : vector<8x128xf32>
    %cst_44 = arith.constant 0.000000e+00 : f32
    %78 = vector.broadcast %cst_44 : f32 to vector<8x128xf32>
    %79 = arith.cmpf oge, %77, %78 : vector<8x128xf32>
    %cst_45 = arith.constant 2.000000e-01 : f32
    %80 = vector.broadcast %cst_45 : f32 to vector<8x128xf32>
    %81 = arith.mulf %80, %77 : vector<8x128xf32>
    %82 = arith.select %79, %77, %81 : vector<8x128xi1>, vector<8x128xf32>
    %c1_46 = arith.constant 1 : index
    %c0_47 = arith.constant 0 : index
    %c0_48 = arith.constant 0 : index
    %83 = vector.load %arg4[%c1_46, %c0_47, %c0_48] : memref<4x8x128xf32, #tpu.memory_space<vmem>>, vector<1x8x128xf32>
    %84 = vector.shape_cast %83 : vector<1x8x128xf32> to vector<8x128xf32>
    %85 = vector.shape_cast %82 : vector<8x128xf32> to vector<1x8x128xf32>
    tpu.vector_store %arg4[%c1_46, %c0_47, %c0_48], %85 {strides = array<i32>} : memref<4x8x128xf32, #tpu.memory_space<vmem>>, vector<1x8x128xf32>,
    %86 = vector.broadcast %58 : vector<1x128xf32> to vector<8x128xf32>
    %87 = arith.mulf %26, %86 : vector<8x128xf32>
    %88 = vector.broadcast %61 : vector<1x128xf32> to vector<8x128xf32>
    %89 = arith.addf %87, %88 : vector<8x128xf32>
    %cst_49 = arith.constant 0.000000e+00 : f32
    %90 = vector.broadcast %cst_49 : f32 to vector<8x128xf32>
    %91 = arith.cmpf oge, %89, %90 : vector<8x128xf32>
    %cst_50 = arith.constant 2.000000e-01 : f32
    %92 = vector.broadcast %cst_50 : f32 to vector<8x128xf32>
    %93 = arith.mulf %92, %89 : vector<8x128xf32>
    %94 = arith.select %91, %89, %93 : vector<8x128xi1>, vector<8x128xf32>
    %c2_51 = arith.constant 2 : index
    %c0_52 = arith.constant 0 : index
    %c0_53 = arith.constant 0 : index
    %95 = vector.load %arg4[%c2_51, %c0_52, %c0_53] : memref<4x8x128xf32, #tpu.memory_space<vmem>>, vector<1x8x128xf32>
    %96 = vector.shape_cast %95 : vector<1x8x128xf32> to vector<8x128xf32>
    %97 = vector.shape_cast %94 : vector<8x128xf32> to vector<1x8x128xf32>
    tpu.vector_store %arg4[%c2_51, %c0_52, %c0_53], %97 {strides = array<i32>} : memref<4x8x128xf32, #tpu.memory_space<vmem>>, vector<1x8x128xf32>,
    %98 = vector.broadcast %58 : vector<1x128xf32> to vector<8x128xf32>
    %99 = arith.mulf %38, %98 : vector<8x128xf32>
    %100 = vector.broadcast %61 : vector<1x128xf32> to vector<8x128xf32>
    %101 = arith.addf %99, %100 : vector<8x128xf32>
    %cst_54 = arith.constant 0.000000e+00 : f32
    %102 = vector.broadcast %cst_54 : f32 to vector<8x128xf32>
    %103 = arith.cmpf oge, %101, %102 : vector<8x128xf32>
    %cst_55 = arith.constant 2.000000e-01 : f32
    %104 = vector.broadcast %cst_55 : f32 to vector<8x128xf32>
    %105 = arith.mulf %104, %101 : vector<8x128xf32>
    %106 = arith.select %103, %101, %105 : vector<8x128xi1>, vector<8x128xf32>
    %c3_56 = arith.constant 3 : index
    %c0_57 = arith.constant 0 : index
    %c0_58 = arith.constant 0 : index
    %107 = vector.load %arg4[%c3_56, %c0_57, %c0_58] : memref<4x8x128xf32, #tpu.memory_space<vmem>>, vector<1x8x128xf32>
    %108 = vector.shape_cast %107 : vector<1x8x128xf32> to vector<8x128xf32>
    %109 = vector.shape_cast %106 : vector<8x128xf32> to vector<1x8x128xf32>
    tpu.vector_store %arg4[%c3_56, %c0_57, %c0_58], %109 {strides = array<i32>} : memref<4x8x128xf32, #tpu.memory_space<vmem>>, vector<1x8x128xf32>,
    return
  }
}

module attributes {stable_mosaic.version = 11 : i64} {
  func.func @_fused_layer_kernel(%arg0: memref<4x32x512xf32, #tpu.memory_space<vmem>>, %arg1: memref<4x512x64xf32, #tpu.memory_space<vmem>>, %arg2: memref<1x64xf32, #tpu.memory_space<vmem>>, %arg3: memref<1x64xf32, #tpu.memory_space<vmem>>, %arg4: memref<4x32x64xf32, #tpu.memory_space<vmem>>) attributes {dimension_semantics = [], scalar_prefetch = 0 : i64, scratch_operands = 0 : i64, tpu.core_type = #tpu.core_type<tc>} {
    %c0 = arith.constant 0 : index
    %c0_0 = arith.constant 0 : index
    %c0_1 = arith.constant 0 : index
    %0 = vector.load %arg0[%c0, %c0_0, %c0_1] : memref<4x32x512xf32, #tpu.memory_space<vmem>>, vector<1x32x512xf32>
    %1 = vector.shape_cast %0 : vector<1x32x512xf32> to vector<32x512xf32>
    %c0_2 = arith.constant 0 : index
    %c0_3 = arith.constant 0 : index
    %c0_4 = arith.constant 0 : index
    %2 = vector.load %arg1[%c0_2, %c0_3, %c0_4] : memref<4x512x64xf32, #tpu.memory_space<vmem>>, vector<1x512x64xf32>
    %3 = vector.shape_cast %2 : vector<1x512x64xf32> to vector<512x64xf32>
    %cst = arith.constant dense<0.000000e+00> : vector<32x64xf32>
    %4 = tpu.matmul %1, %3, %cst {dimension_numbers = #tpu.dot_dimension_numbers<[1], [0], [0], [1], [0, 0, 1, 1], [], []>} : vector<32x512xf32>, vector<512x64xf32>, vector<32x64xf32> -> vector<32x64xf32>
    %cst_5 = arith.constant dense<0.000000e+00> : vector<64xf32>
    %5 = vector.multi_reduction <add>, %4, %cst_5 [0] : vector<32x64xf32> to vector<64xf32>
    %6 = vector.shape_cast %5 : vector<64xf32> to vector<1x64xf32>
    %7 = arith.mulf %4, %4 : vector<32x64xf32>
    %cst_6 = arith.constant dense<0.000000e+00> : vector<64xf32>
    %8 = vector.multi_reduction <add>, %7, %cst_6 [0] : vector<32x64xf32> to vector<64xf32>
    %9 = vector.shape_cast %8 : vector<64xf32> to vector<1x64xf32>
    %c1 = arith.constant 1 : index
    %c0_7 = arith.constant 0 : index
    %c0_8 = arith.constant 0 : index
    %10 = vector.load %arg0[%c1, %c0_7, %c0_8] : memref<4x32x512xf32, #tpu.memory_space<vmem>>, vector<1x32x512xf32>
    %11 = vector.shape_cast %10 : vector<1x32x512xf32> to vector<32x512xf32>
    %c1_9 = arith.constant 1 : index
    %c0_10 = arith.constant 0 : index
    %c0_11 = arith.constant 0 : index
    %12 = vector.load %arg1[%c1_9, %c0_10, %c0_11] : memref<4x512x64xf32, #tpu.memory_space<vmem>>, vector<1x512x64xf32>
    %13 = vector.shape_cast %12 : vector<1x512x64xf32> to vector<512x64xf32>
    %cst_12 = arith.constant dense<0.000000e+00> : vector<32x64xf32>
    %14 = tpu.matmul %11, %13, %cst_12 {dimension_numbers = #tpu.dot_dimension_numbers<[1], [0], [0], [1], [0, 0, 1, 1], [], []>} : vector<32x512xf32>, vector<512x64xf32>, vector<32x64xf32> -> vector<32x64xf32>
    %cst_13 = arith.constant dense<0.000000e+00> : vector<64xf32>
    %15 = vector.multi_reduction <add>, %14, %cst_13 [0] : vector<32x64xf32> to vector<64xf32>
    %16 = vector.shape_cast %15 : vector<64xf32> to vector<1x64xf32>
    %17 = arith.mulf %14, %14 : vector<32x64xf32>
    %cst_14 = arith.constant dense<0.000000e+00> : vector<64xf32>
    %18 = vector.multi_reduction <add>, %17, %cst_14 [0] : vector<32x64xf32> to vector<64xf32>
    %19 = vector.shape_cast %18 : vector<64xf32> to vector<1x64xf32>
    %20 = arith.addf %6, %16 : vector<1x64xf32>
    %21 = arith.addf %9, %19 : vector<1x64xf32>
    %c2 = arith.constant 2 : index
    %c0_15 = arith.constant 0 : index
    %c0_16 = arith.constant 0 : index
    %22 = vector.load %arg0[%c2, %c0_15, %c0_16] : memref<4x32x512xf32, #tpu.memory_space<vmem>>, vector<1x32x512xf32>
    %23 = vector.shape_cast %22 : vector<1x32x512xf32> to vector<32x512xf32>
    %c2_17 = arith.constant 2 : index
    %c0_18 = arith.constant 0 : index
    %c0_19 = arith.constant 0 : index
    %24 = vector.load %arg1[%c2_17, %c0_18, %c0_19] : memref<4x512x64xf32, #tpu.memory_space<vmem>>, vector<1x512x64xf32>
    %25 = vector.shape_cast %24 : vector<1x512x64xf32> to vector<512x64xf32>
    %cst_20 = arith.constant dense<0.000000e+00> : vector<32x64xf32>
    %26 = tpu.matmul %23, %25, %cst_20 {dimension_numbers = #tpu.dot_dimension_numbers<[1], [0], [0], [1], [0, 0, 1, 1], [], []>} : vector<32x512xf32>, vector<512x64xf32>, vector<32x64xf32> -> vector<32x64xf32>
    %cst_21 = arith.constant dense<0.000000e+00> : vector<64xf32>
    %27 = vector.multi_reduction <add>, %26, %cst_21 [0] : vector<32x64xf32> to vector<64xf32>
    %28 = vector.shape_cast %27 : vector<64xf32> to vector<1x64xf32>
    %29 = arith.mulf %26, %26 : vector<32x64xf32>
    %cst_22 = arith.constant dense<0.000000e+00> : vector<64xf32>
    %30 = vector.multi_reduction <add>, %29, %cst_22 [0] : vector<32x64xf32> to vector<64xf32>
    %31 = vector.shape_cast %30 : vector<64xf32> to vector<1x64xf32>
    %32 = arith.addf %20, %28 : vector<1x64xf32>
    %33 = arith.addf %21, %31 : vector<1x64xf32>
    %c3 = arith.constant 3 : index
    %c0_23 = arith.constant 0 : index
    %c0_24 = arith.constant 0 : index
    %34 = vector.load %arg0[%c3, %c0_23, %c0_24] : memref<4x32x512xf32, #tpu.memory_space<vmem>>, vector<1x32x512xf32>
    %35 = vector.shape_cast %34 : vector<1x32x512xf32> to vector<32x512xf32>
    %c3_25 = arith.constant 3 : index
    %c0_26 = arith.constant 0 : index
    %c0_27 = arith.constant 0 : index
    %36 = vector.load %arg1[%c3_25, %c0_26, %c0_27] : memref<4x512x64xf32, #tpu.memory_space<vmem>>, vector<1x512x64xf32>
    %37 = vector.shape_cast %36 : vector<1x512x64xf32> to vector<512x64xf32>
    %cst_28 = arith.constant dense<0.000000e+00> : vector<32x64xf32>
    %38 = tpu.matmul %35, %37, %cst_28 {dimension_numbers = #tpu.dot_dimension_numbers<[1], [0], [0], [1], [0, 0, 1, 1], [], []>} : vector<32x512xf32>, vector<512x64xf32>, vector<32x64xf32> -> vector<32x64xf32>
    %cst_29 = arith.constant dense<0.000000e+00> : vector<64xf32>
    %39 = vector.multi_reduction <add>, %38, %cst_29 [0] : vector<32x64xf32> to vector<64xf32>
    %40 = vector.shape_cast %39 : vector<64xf32> to vector<1x64xf32>
    %41 = arith.mulf %38, %38 : vector<32x64xf32>
    %cst_30 = arith.constant dense<0.000000e+00> : vector<64xf32>
    %42 = vector.multi_reduction <add>, %41, %cst_30 [0] : vector<32x64xf32> to vector<64xf32>
    %43 = vector.shape_cast %42 : vector<64xf32> to vector<1x64xf32>
    %44 = arith.addf %32, %40 : vector<1x64xf32>
    %45 = arith.addf %33, %43 : vector<1x64xf32>
    %cst_31 = arith.constant 7.812500e-03 : f32
    %46 = vector.broadcast %cst_31 : f32 to vector<1x64xf32>
    %47 = arith.mulf %44, %46 : vector<1x64xf32>
    %cst_32 = arith.constant 7.812500e-03 : f32
    %48 = vector.broadcast %cst_32 : f32 to vector<1x64xf32>
    %49 = arith.mulf %45, %48 : vector<1x64xf32>
    %50 = arith.mulf %47, %47 : vector<1x64xf32>
    %51 = arith.subf %49, %50 : vector<1x64xf32>
    %cst_33 = arith.constant 0.000000e+00 : f32
    %52 = vector.broadcast %cst_33 : f32 to vector<1x64xf32>
    %53 = arith.maximumf %51, %52 : vector<1x64xf32>
    %cst_34 = arith.constant 9.99999974E-6 : f32
    %54 = vector.broadcast %cst_34 : f32 to vector<1x64xf32>
    %55 = arith.addf %53, %54 : vector<1x64xf32>
    %56 = math.rsqrt %55 : vector<1x64xf32>
    %c0_35 = arith.constant 0 : index
    %c0_36 = arith.constant 0 : index
    %57 = vector.load %arg2[%c0_35, %c0_36] : memref<1x64xf32, #tpu.memory_space<vmem>>, vector<1x64xf32>
    %58 = arith.mulf %56, %57 : vector<1x64xf32>
    %c0_37 = arith.constant 0 : index
    %c0_38 = arith.constant 0 : index
    %59 = vector.load %arg3[%c0_37, %c0_38] : memref<1x64xf32, #tpu.memory_space<vmem>>, vector<1x64xf32>
    %60 = arith.mulf %47, %58 : vector<1x64xf32>
    %61 = arith.subf %59, %60 : vector<1x64xf32>
    %62 = vector.broadcast %58 : vector<1x64xf32> to vector<32x64xf32>
    %63 = arith.mulf %4, %62 : vector<32x64xf32>
    %64 = vector.broadcast %61 : vector<1x64xf32> to vector<32x64xf32>
    %65 = arith.addf %63, %64 : vector<32x64xf32>
    %cst_39 = arith.constant 0.000000e+00 : f32
    %66 = vector.broadcast %cst_39 : f32 to vector<32x64xf32>
    %67 = arith.cmpf oge, %65, %66 : vector<32x64xf32>
    %cst_40 = arith.constant 2.000000e-01 : f32
    %68 = vector.broadcast %cst_40 : f32 to vector<32x64xf32>
    %69 = arith.mulf %68, %65 : vector<32x64xf32>
    %70 = arith.select %67, %65, %69 : vector<32x64xi1>, vector<32x64xf32>
    %c0_41 = arith.constant 0 : index
    %c0_42 = arith.constant 0 : index
    %c0_43 = arith.constant 0 : index
    %71 = vector.load %arg4[%c0_41, %c0_42, %c0_43] : memref<4x32x64xf32, #tpu.memory_space<vmem>>, vector<1x32x64xf32>
    %72 = vector.shape_cast %71 : vector<1x32x64xf32> to vector<32x64xf32>
    %73 = vector.shape_cast %70 : vector<32x64xf32> to vector<1x32x64xf32>
    tpu.vector_store %arg4[%c0_41, %c0_42, %c0_43], %73 {strides = array<i32>} : memref<4x32x64xf32, #tpu.memory_space<vmem>>, vector<1x32x64xf32>,
    %74 = vector.broadcast %58 : vector<1x64xf32> to vector<32x64xf32>
    %75 = arith.mulf %14, %74 : vector<32x64xf32>
    %76 = vector.broadcast %61 : vector<1x64xf32> to vector<32x64xf32>
    %77 = arith.addf %75, %76 : vector<32x64xf32>
    %cst_44 = arith.constant 0.000000e+00 : f32
    %78 = vector.broadcast %cst_44 : f32 to vector<32x64xf32>
    %79 = arith.cmpf oge, %77, %78 : vector<32x64xf32>
    %cst_45 = arith.constant 2.000000e-01 : f32
    %80 = vector.broadcast %cst_45 : f32 to vector<32x64xf32>
    %81 = arith.mulf %80, %77 : vector<32x64xf32>
    %82 = arith.select %79, %77, %81 : vector<32x64xi1>, vector<32x64xf32>
    %c1_46 = arith.constant 1 : index
    %c0_47 = arith.constant 0 : index
    %c0_48 = arith.constant 0 : index
    %83 = vector.load %arg4[%c1_46, %c0_47, %c0_48] : memref<4x32x64xf32, #tpu.memory_space<vmem>>, vector<1x32x64xf32>
    %84 = vector.shape_cast %83 : vector<1x32x64xf32> to vector<32x64xf32>
    %85 = vector.shape_cast %82 : vector<32x64xf32> to vector<1x32x64xf32>
    tpu.vector_store %arg4[%c1_46, %c0_47, %c0_48], %85 {strides = array<i32>} : memref<4x32x64xf32, #tpu.memory_space<vmem>>, vector<1x32x64xf32>,
    %86 = vector.broadcast %58 : vector<1x64xf32> to vector<32x64xf32>
    %87 = arith.mulf %26, %86 : vector<32x64xf32>
    %88 = vector.broadcast %61 : vector<1x64xf32> to vector<32x64xf32>
    %89 = arith.addf %87, %88 : vector<32x64xf32>
    %cst_49 = arith.constant 0.000000e+00 : f32
    %90 = vector.broadcast %cst_49 : f32 to vector<32x64xf32>
    %91 = arith.cmpf oge, %89, %90 : vector<32x64xf32>
    %cst_50 = arith.constant 2.000000e-01 : f32
    %92 = vector.broadcast %cst_50 : f32 to vector<32x64xf32>
    %93 = arith.mulf %92, %89 : vector<32x64xf32>
    %94 = arith.select %91, %89, %93 : vector<32x64xi1>, vector<32x64xf32>
    %c2_51 = arith.constant 2 : index
    %c0_52 = arith.constant 0 : index
    %c0_53 = arith.constant 0 : index
    %95 = vector.load %arg4[%c2_51, %c0_52, %c0_53] : memref<4x32x64xf32, #tpu.memory_space<vmem>>, vector<1x32x64xf32>
    %96 = vector.shape_cast %95 : vector<1x32x64xf32> to vector<32x64xf32>
    %97 = vector.shape_cast %94 : vector<32x64xf32> to vector<1x32x64xf32>
    tpu.vector_store %arg4[%c2_51, %c0_52, %c0_53], %97 {strides = array<i32>} : memref<4x32x64xf32, #tpu.memory_space<vmem>>, vector<1x32x64xf32>,
    %98 = vector.broadcast %58 : vector<1x64xf32> to vector<32x64xf32>
    %99 = arith.mulf %38, %98 : vector<32x64xf32>
    %100 = vector.broadcast %61 : vector<1x64xf32> to vector<32x64xf32>
    %101 = arith.addf %99, %100 : vector<32x64xf32>
    %cst_54 = arith.constant 0.000000e+00 : f32
    %102 = vector.broadcast %cst_54 : f32 to vector<32x64xf32>
    %103 = arith.cmpf oge, %101, %102 : vector<32x64xf32>
    %cst_55 = arith.constant 2.000000e-01 : f32
    %104 = vector.broadcast %cst_55 : f32 to vector<32x64xf32>
    %105 = arith.mulf %104, %101 : vector<32x64xf32>
    %106 = arith.select %103, %101, %105 : vector<32x64xi1>, vector<32x64xf32>
    %c3_56 = arith.constant 3 : index
    %c0_57 = arith.constant 0 : index
    %c0_58 = arith.constant 0 : index
    %107 = vector.load %arg4[%c3_56, %c0_57, %c0_58] : memref<4x32x64xf32, #tpu.memory_space<vmem>>, vector<1x32x64xf32>
    %108 = vector.shape_cast %107 : vector<1x32x64xf32> to vector<32x64xf32>
    %109 = vector.shape_cast %106 : vector<32x64xf32> to vector<1x32x64xf32>
    tpu.vector_store %arg4[%c3_56, %c0_57, %c0_58], %109 {strides = array<i32>} : memref<4x32x64xf32, #tpu.memory_space<vmem>>, vector<1x32x64xf32>,
    return
  }
}

module attributes {stable_mosaic.version = 11 : i64} {
  func.func @_fused_layer_kernel(%arg0: memref<4x256x128xf32, #tpu.memory_space<vmem>>, %arg1: memref<4x3x256xf32, #tpu.memory_space<vmem>>, %arg2: memref<3x1xf32, #tpu.memory_space<vmem>>, %arg3: memref<3x1xf32, #tpu.memory_space<vmem>>, %arg4: memref<4x3x128xf32, #tpu.memory_space<vmem>>) attributes {dimension_semantics = [], scalar_prefetch = 0 : i64, scratch_operands = 0 : i64, tpu.core_type = #tpu.core_type<tc>} {
    %c0 = arith.constant 0 : index
    %c0_0 = arith.constant 0 : index
    %c0_1 = arith.constant 0 : index
    %0 = vector.load %arg1[%c0, %c0_0, %c0_1] : memref<4x3x256xf32, #tpu.memory_space<vmem>>, vector<1x3x256xf32>
    %1 = vector.shape_cast %0 : vector<1x3x256xf32> to vector<3x256xf32>
    %c0_2 = arith.constant 0 : index
    %c0_3 = arith.constant 0 : index
    %c0_4 = arith.constant 0 : index
    %2 = vector.load %arg0[%c0_2, %c0_3, %c0_4] : memref<4x256x128xf32, #tpu.memory_space<vmem>>, vector<1x256x128xf32>
    %3 = vector.shape_cast %2 : vector<1x256x128xf32> to vector<256x128xf32>
    %cst = arith.constant dense<0.000000e+00> : vector<3x128xf32>
    %4 = tpu.matmul %1, %3, %cst {dimension_numbers = #tpu.dot_dimension_numbers<[1], [0], [0], [1], [0, 0, 1, 1], [], []>} : vector<3x256xf32>, vector<256x128xf32>, vector<3x128xf32> -> vector<3x128xf32>
    %cst_5 = arith.constant dense<0.000000e+00> : vector<3xf32>
    %5 = vector.multi_reduction <add>, %4, %cst_5 [1] : vector<3x128xf32> to vector<3xf32>
    %6 = vector.shape_cast %5 : vector<3xf32> to vector<3x1xf32>
    %7 = arith.mulf %4, %4 : vector<3x128xf32>
    %cst_6 = arith.constant dense<0.000000e+00> : vector<3xf32>
    %8 = vector.multi_reduction <add>, %7, %cst_6 [1] : vector<3x128xf32> to vector<3xf32>
    %9 = vector.shape_cast %8 : vector<3xf32> to vector<3x1xf32>
    %c1 = arith.constant 1 : index
    %c0_7 = arith.constant 0 : index
    %c0_8 = arith.constant 0 : index
    %10 = vector.load %arg1[%c1, %c0_7, %c0_8] : memref<4x3x256xf32, #tpu.memory_space<vmem>>, vector<1x3x256xf32>
    %11 = vector.shape_cast %10 : vector<1x3x256xf32> to vector<3x256xf32>
    %c1_9 = arith.constant 1 : index
    %c0_10 = arith.constant 0 : index
    %c0_11 = arith.constant 0 : index
    %12 = vector.load %arg0[%c1_9, %c0_10, %c0_11] : memref<4x256x128xf32, #tpu.memory_space<vmem>>, vector<1x256x128xf32>
    %13 = vector.shape_cast %12 : vector<1x256x128xf32> to vector<256x128xf32>
    %cst_12 = arith.constant dense<0.000000e+00> : vector<3x128xf32>
    %14 = tpu.matmul %11, %13, %cst_12 {dimension_numbers = #tpu.dot_dimension_numbers<[1], [0], [0], [1], [0, 0, 1, 1], [], []>} : vector<3x256xf32>, vector<256x128xf32>, vector<3x128xf32> -> vector<3x128xf32>
    %cst_13 = arith.constant dense<0.000000e+00> : vector<3xf32>
    %15 = vector.multi_reduction <add>, %14, %cst_13 [1] : vector<3x128xf32> to vector<3xf32>
    %16 = vector.shape_cast %15 : vector<3xf32> to vector<3x1xf32>
    %17 = arith.mulf %14, %14 : vector<3x128xf32>
    %cst_14 = arith.constant dense<0.000000e+00> : vector<3xf32>
    %18 = vector.multi_reduction <add>, %17, %cst_14 [1] : vector<3x128xf32> to vector<3xf32>
    %19 = vector.shape_cast %18 : vector<3xf32> to vector<3x1xf32>
    %20 = arith.addf %6, %16 : vector<3x1xf32>
    %21 = arith.addf %9, %19 : vector<3x1xf32>
    %c2 = arith.constant 2 : index
    %c0_15 = arith.constant 0 : index
    %c0_16 = arith.constant 0 : index
    %22 = vector.load %arg1[%c2, %c0_15, %c0_16] : memref<4x3x256xf32, #tpu.memory_space<vmem>>, vector<1x3x256xf32>
    %23 = vector.shape_cast %22 : vector<1x3x256xf32> to vector<3x256xf32>
    %c2_17 = arith.constant 2 : index
    %c0_18 = arith.constant 0 : index
    %c0_19 = arith.constant 0 : index
    %24 = vector.load %arg0[%c2_17, %c0_18, %c0_19] : memref<4x256x128xf32, #tpu.memory_space<vmem>>, vector<1x256x128xf32>
    %25 = vector.shape_cast %24 : vector<1x256x128xf32> to vector<256x128xf32>
    %cst_20 = arith.constant dense<0.000000e+00> : vector<3x128xf32>
    %26 = tpu.matmul %23, %25, %cst_20 {dimension_numbers = #tpu.dot_dimension_numbers<[1], [0], [0], [1], [0, 0, 1, 1], [], []>} : vector<3x256xf32>, vector<256x128xf32>, vector<3x128xf32> -> vector<3x128xf32>
    %cst_21 = arith.constant dense<0.000000e+00> : vector<3xf32>
    %27 = vector.multi_reduction <add>, %26, %cst_21 [1] : vector<3x128xf32> to vector<3xf32>
    %28 = vector.shape_cast %27 : vector<3xf32> to vector<3x1xf32>
    %29 = arith.mulf %26, %26 : vector<3x128xf32>
    %cst_22 = arith.constant dense<0.000000e+00> : vector<3xf32>
    %30 = vector.multi_reduction <add>, %29, %cst_22 [1] : vector<3x128xf32> to vector<3xf32>
    %31 = vector.shape_cast %30 : vector<3xf32> to vector<3x1xf32>
    %32 = arith.addf %20, %28 : vector<3x1xf32>
    %33 = arith.addf %21, %31 : vector<3x1xf32>
    %c3 = arith.constant 3 : index
    %c0_23 = arith.constant 0 : index
    %c0_24 = arith.constant 0 : index
    %34 = vector.load %arg1[%c3, %c0_23, %c0_24] : memref<4x3x256xf32, #tpu.memory_space<vmem>>, vector<1x3x256xf32>
    %35 = vector.shape_cast %34 : vector<1x3x256xf32> to vector<3x256xf32>
    %c3_25 = arith.constant 3 : index
    %c0_26 = arith.constant 0 : index
    %c0_27 = arith.constant 0 : index
    %36 = vector.load %arg0[%c3_25, %c0_26, %c0_27] : memref<4x256x128xf32, #tpu.memory_space<vmem>>, vector<1x256x128xf32>
    %37 = vector.shape_cast %36 : vector<1x256x128xf32> to vector<256x128xf32>
    %cst_28 = arith.constant dense<0.000000e+00> : vector<3x128xf32>
    %38 = tpu.matmul %35, %37, %cst_28 {dimension_numbers = #tpu.dot_dimension_numbers<[1], [0], [0], [1], [0, 0, 1, 1], [], []>} : vector<3x256xf32>, vector<256x128xf32>, vector<3x128xf32> -> vector<3x128xf32>
    %cst_29 = arith.constant dense<0.000000e+00> : vector<3xf32>
    %39 = vector.multi_reduction <add>, %38, %cst_29 [1] : vector<3x128xf32> to vector<3xf32>
    %40 = vector.shape_cast %39 : vector<3xf32> to vector<3x1xf32>
    %41 = arith.mulf %38, %38 : vector<3x128xf32>
    %cst_30 = arith.constant dense<0.000000e+00> : vector<3xf32>
    %42 = vector.multi_reduction <add>, %41, %cst_30 [1] : vector<3x128xf32> to vector<3xf32>
    %43 = vector.shape_cast %42 : vector<3xf32> to vector<3x1xf32>
    %44 = arith.addf %32, %40 : vector<3x1xf32>
    %45 = arith.addf %33, %43 : vector<3x1xf32>
    %cst_31 = arith.constant 0.001953125 : f32
    %46 = vector.broadcast %cst_31 : f32 to vector<3x1xf32>
    %47 = arith.mulf %44, %46 : vector<3x1xf32>
    %cst_32 = arith.constant 0.001953125 : f32
    %48 = vector.broadcast %cst_32 : f32 to vector<3x1xf32>
    %49 = arith.mulf %45, %48 : vector<3x1xf32>
    %50 = arith.mulf %47, %47 : vector<3x1xf32>
    %51 = arith.subf %49, %50 : vector<3x1xf32>
    %cst_33 = arith.constant 0.000000e+00 : f32
    %52 = vector.broadcast %cst_33 : f32 to vector<3x1xf32>
    %53 = arith.maximumf %51, %52 : vector<3x1xf32>
    %cst_34 = arith.constant 9.99999974E-6 : f32
    %54 = vector.broadcast %cst_34 : f32 to vector<3x1xf32>
    %55 = arith.addf %53, %54 : vector<3x1xf32>
    %56 = math.rsqrt %55 : vector<3x1xf32>
    %c0_35 = arith.constant 0 : index
    %c0_36 = arith.constant 0 : index
    %57 = vector.load %arg2[%c0_35, %c0_36] : memref<3x1xf32, #tpu.memory_space<vmem>>, vector<3x1xf32>
    %58 = arith.mulf %56, %57 : vector<3x1xf32>
    %c0_37 = arith.constant 0 : index
    %c0_38 = arith.constant 0 : index
    %59 = vector.load %arg3[%c0_37, %c0_38] : memref<3x1xf32, #tpu.memory_space<vmem>>, vector<3x1xf32>
    %60 = arith.mulf %47, %58 : vector<3x1xf32>
    %61 = arith.subf %59, %60 : vector<3x1xf32>
    %62 = vector.broadcast %58 : vector<3x1xf32> to vector<3x128xf32>
    %63 = arith.mulf %4, %62 : vector<3x128xf32>
    %64 = vector.broadcast %61 : vector<3x1xf32> to vector<3x128xf32>
    %65 = arith.addf %63, %64 : vector<3x128xf32>
    %66 = math.tanh %65 : vector<3x128xf32>
    %c0_39 = arith.constant 0 : index
    %c0_40 = arith.constant 0 : index
    %c0_41 = arith.constant 0 : index
    %67 = vector.load %arg4[%c0_39, %c0_40, %c0_41] : memref<4x3x128xf32, #tpu.memory_space<vmem>>, vector<1x3x128xf32>
    %68 = vector.shape_cast %67 : vector<1x3x128xf32> to vector<3x128xf32>
    %69 = vector.shape_cast %66 : vector<3x128xf32> to vector<1x3x128xf32>
    tpu.vector_store %arg4[%c0_39, %c0_40, %c0_41], %69 {strides = array<i32>} : memref<4x3x128xf32, #tpu.memory_space<vmem>>, vector<1x3x128xf32>,
    %70 = vector.broadcast %58 : vector<3x1xf32> to vector<3x128xf32>
    %71 = arith.mulf %14, %70 : vector<3x128xf32>
    %72 = vector.broadcast %61 : vector<3x1xf32> to vector<3x128xf32>
    %73 = arith.addf %71, %72 : vector<3x128xf32>
    %74 = math.tanh %73 : vector<3x128xf32>
    %c1_42 = arith.constant 1 : index
    %c0_43 = arith.constant 0 : index
    %c0_44 = arith.constant 0 : index
    %75 = vector.load %arg4[%c1_42, %c0_43, %c0_44] : memref<4x3x128xf32, #tpu.memory_space<vmem>>, vector<1x3x128xf32>
    %76 = vector.shape_cast %75 : vector<1x3x128xf32> to vector<3x128xf32>
    %77 = vector.shape_cast %74 : vector<3x128xf32> to vector<1x3x128xf32>
    tpu.vector_store %arg4[%c1_42, %c0_43, %c0_44], %77 {strides = array<i32>} : memref<4x3x128xf32, #tpu.memory_space<vmem>>, vector<1x3x128xf32>,
    %78 = vector.broadcast %58 : vector<3x1xf32> to vector<3x128xf32>
    %79 = arith.mulf %26, %78 : vector<3x128xf32>
    %80 = vector.broadcast %61 : vector<3x1xf32> to vector<3x128xf32>
    %81 = arith.addf %79, %80 : vector<3x128xf32>
    %82 = math.tanh %81 : vector<3x128xf32>
    %c2_45 = arith.constant 2 : index
    %c0_46 = arith.constant 0 : index
    %c0_47 = arith.constant 0 : index
    %83 = vector.load %arg4[%c2_45, %c0_46, %c0_47] : memref<4x3x128xf32, #tpu.memory_space<vmem>>, vector<1x3x128xf32>
    %84 = vector.shape_cast %83 : vector<1x3x128xf32> to vector<3x128xf32>
    %85 = vector.shape_cast %82 : vector<3x128xf32> to vector<1x3x128xf32>
    tpu.vector_store %arg4[%c2_45, %c0_46, %c0_47], %85 {strides = array<i32>} : memref<4x3x128xf32, #tpu.memory_space<vmem>>, vector<1x3x128xf32>,
    %86 = vector.broadcast %58 : vector<3x1xf32> to vector<3x128xf32>
    %87 = arith.mulf %38, %86 : vector<3x128xf32>
    %88 = vector.broadcast %61 : vector<3x1xf32> to vector<3x128xf32>
    %89 = arith.addf %87, %88 : vector<3x128xf32>
    %90 = math.tanh %89 : vector<3x128xf32>
    %c3_48 = arith.constant 3 : index
    %c0_49 = arith.constant 0 : index
    %c0_50 = arith.constant 0 : index
    %91 = vector.load %arg4[%c3_48, %c0_49, %c0_50] : memref<4x3x128xf32, #tpu.memory_space<vmem>>, vector<1x3x128xf32>
    %92 = vector.shape_cast %91 : vector<1x3x128xf32> to vector<3x128xf32>
    %93 = vector.shape_cast %90 : vector<3x128xf32> to vector<1x3x128xf32>
    tpu.vector_store %arg4[%c3_48, %c0_49, %c0_50], %93 {strides = array<i32>} : memref<4x3x128xf32, #tpu.memory_space<vmem>>, vector<1x3x128xf32>,
    return
  }
}

</mosaic_0001>

<llo_original>
// kernel: autoencoder_forward.6
$region0: #{autoencoder_forward.6}
  #allocation0 [shape = 'u32[]', space=smem, size = 0x4, offset = 0x4, fixed_abs, tag = 'smem constant byte address 0x4 - core index']
  #allocation1 [shape = 'u32[144,128]{1,0:T(1,128)}', space=vmem, size = 0x12000, scoped, tag = 'internal scratch']
  %s0 = inlined_call_operand.vmem [shape: f32[1,128,48], index: 0, kind: input, shape index: {}]
  %s1 = inlined_call_operand.vmem [shape: f32[1,48,64], index: 1, kind: input, shape index: {}]
  %s2 = inlined_call_operand.vmem [shape: f32[1,64], index: 2, kind: input, shape index: {}]
  %s3 = inlined_call_operand.vmem [shape: f32[1,64], index: 3, kind: input, shape index: {}]
  %s4 = inlined_call_operand.vmem [shape: f32[1,128,64], index: 4, kind: output, shape index: {}]
  %s5 = sld [smem:[#allocation0]]
  $region26: #{autoencoder_forward.6} parent=0
    _
  %s7 = ssub.s32 1, %s5
  %s8 = scalar_select 0, %s7, %s5
  // Predicated region
  $region2: #{autoencoder_forward.6} parent=0 // pred_check
    _
  $region3: #{autoencoder_forward.6} parent=0 // pred_check_branch
    %10 = sbr.rel (0) target = $region5
  $region4: #{autoencoder_forward.6} parent=0 // pred_region
    _
  $region5: #{autoencoder_forward.6} parent=0 // pred_fallthru
    _
  // Predicated region
  $region6: #{autoencoder_forward.6} parent=0 // pred_check
    _
  $region7: #{autoencoder_forward.6} parent=0 // pred_check_branch
    %12 = sbr.rel (0) target = $region9
  $region8: #{autoencoder_forward.6} parent=0 // pred_region
    _
  $region9: #{autoencoder_forward.6} parent=0 // pred_fallthru
    _
  // Predicated region
  $region10: #{autoencoder_forward.6} parent=0 // pred_check
    _
  $region11: #{autoencoder_forward.6} parent=0 // pred_check_branch
    %14 = sbr.rel (0) target = $region13
  $region12: #{autoencoder_forward.6} parent=0 // pred_region
    _
  $region13: #{autoencoder_forward.6} parent=0 // pred_fallthru
    _
  // Predicated region
  $region14: #{autoencoder_forward.6} parent=0 // pred_check
    _
  $region15: #{autoencoder_forward.6} parent=0 // pred_check_branch
    %16 = sbr.rel (0) target = $region17
  $region16: #{autoencoder_forward.6} parent=0 // pred_region
    _
  $region17: #{autoencoder_forward.6} parent=0 // pred_fallthru
    _
  %v17 = vld [vmem:[%s0] sm:$0xff]
  %v18 = vld [vmem:[%s0 + $0x8] sm:$0xff]
  %v19 = vld [vmem:[%s0 + $0x10] sm:$0xff]
  %v20 = vld [vmem:[%s0 + $0x18] sm:$0xff]
  %v21 = vld [vmem:[%s0 + $0x20] sm:$0xff]
  %v22 = vld [vmem:[%s0 + $0x28] sm:$0xff]
  %v23 = vld [vmem:[%s0 + $0x30] sm:$0xff]
  %v24 = vld [vmem:[%s0 + $0x38] sm:$0xff]
  %v25 = vld [vmem:[%s0 + $0x40] sm:$0xff]
  %v26 = vld [vmem:[%s0 + $0x48] sm:$0xff]
  %v27 = vld [vmem:[%s0 + $0x50] sm:$0xff]
  %v28 = vld [vmem:[%s0 + $0x58] sm:$0xff]
  %v29 = vld [vmem:[%s0 + $0x60] sm:$0xff]
  %v30 = vld [vmem:[%s0 + $0x68] sm:$0xff]
  %v31 = vld [vmem:[%s0 + $0x70] sm:$0xff]
  %v32 = vld [vmem:[%s0 + $0x78] sm:$0xff]
  %v33 = vld [vmem:[%s1] sm:$0xff]
  %v34 = vld [vmem:[%s1 + $0x8] sm:$0xff]
  %v35 = vld [vmem:[%s1 + $0x10] sm:$0xff]
  %v36 = vld [vmem:[%s1 + $0x18] sm:$0xff]
  %v37 = vld [vmem:[%s1 + $0x20] sm:$0xff]
  %v38 = vld [vmem:[%s1 + $0x28] sm:$0xff]
  %vm39 = vcmask 392192
  %v41 = vsel %vm39, %v17, 0
  %v44 = vsel %vm39, %v18, 0
  %v47 = vsel %vm39, %v19, 0
  %v50 = vsel %vm39, %v20, 0
  %v53 = vsel %vm39, %v21, 0
  %v56 = vsel %vm39, %v22, 0
  %v59 = vsel %vm39, %v23, 0
  %v62 = vsel %vm39, %v24, 0
  %v65 = vsel %vm39, %v25, 0
  %v68 = vsel %vm39, %v26, 0
  %v71 = vsel %vm39, %v27, 0
  %v74 = vsel %vm39, %v28, 0
  %v77 = vsel %vm39, %v29, 0
  %v80 = vsel %vm39, %v30, 0
  %v83 = vsel %vm39, %v31, 0
  %v86 = vsel %vm39, %v32, 0
  %88 = vmatprep.subr.mxu0 0.0
  %89 = vmatpush1.msra.mxu0 %v33
  %90 = vmatprep.subr.mxu0 0.0
  %91 = vmatpush1.msra.mxu0 %v34
  %92 = vmatprep.subr.mxu0 0.0
  %93 = vmatpush1.msra.mxu0 %v35
  %94 = vmatprep.subr.mxu0 0.0
  %95 = vmatpush1.msra.mxu0 %v36
  %96 = vmatprep.subr.mxu0 0.0
  %97 = vmatpush1.msra.mxu0 %v37
  %98 = vmatprep.subr.mxu0 0.0
  %99 = vmatpush1.msra.mxu0 %v38
  %100 = vmatprep.subr.mxu0 0.0
  %101 = vmatpush1.msra.mxu0 0.0
  %102 = vmatprep.subr.mxu0 0.0
  %103 = vmatpush1.msra.mxu0 0.0
  %104 = vmatprep.subr.mxu0 0.0
  %105 = vmatpush1.msra.mxu0 0.0
  %106 = vmatprep.subr.mxu0 0.0
  %107 = vmatpush1.msra.mxu0 0.0
  %108 = vmatprep.subr.mxu0 0.0
  %109 = vmatpush1.msra.mxu0 0.0
  %110 = vmatprep.subr.mxu0 0.0
  %111 = vmatpush1.msra.mxu0 0.0
  %112 = vmatprep.subr.mxu0 0.0
  %113 = vmatpush1.msra.mxu0 0.0
  %114 = vmatprep.subr.mxu0 0.0
  %115 = vmatpush1.msra.mxu0 0.0
  %116 = vmatprep.subr.mxu0 0.0
  %117 = vmatpush1.msra.mxu0 0.0
  %118 = vmatprep.subr.mxu0 0.0
  %119 = vmatpush1.msra.mxu0 0.0
  %120 = vmatprep.subr.mxu0 0.0
  %121 = vmatpush1.msra.mxu0 0.0
  %122 = vmatprep.subr.mxu0 0.0
  %123 = vmatpush1.msra.mxu0 0.0
  %124 = vmatprep.subr.mxu0 0.0
  %125 = vmatpush1.msra.mxu0 0.0
  %126 = vmatprep.subr.mxu0 0.0
  %127 = vmatpush1.msra.mxu0 0.0
  %128 = vmatprep.subr.mxu0 0.0
  %129 = vmatpush1.msra.mxu0 0.0
  %130 = vmatprep.subr.mxu0 0.0
  %131 = vmatpush1.msra.mxu0 0.0
  %132 = vmatprep.subr.mxu0 0.0
  %133 = vmatpush1.msra.mxu0 0.0
  %134 = vmatprep.subr.mxu0 0.0
  %135 = vmatpush1.msra.mxu0 0.0
  %136 = vmatprep.subr.mxu0 0.0
  %137 = vmatpush1.msra.mxu0 0.0
  %138 = vmatprep.subr.mxu0 0.0
  %139 = vmatpush1.msra.mxu0 0.0
  %140 = vmatprep.subr.mxu0 0.0
  %141 = vmatpush1.msra.mxu0 0.0
  %142 = vmatprep.subr.mxu0 0.0
  %143 = vmatpush1.msra.mxu0 0.0
  %144 = vmatprep.subr.mxu0 0.0
  %145 = vmatpush1.msra.mxu0 0.0
  %146 = vmatprep.subr.mxu0 0.0
  %147 = vmatpush1.msra.mxu0 0.0
  %148 = vmatprep.subr.mxu0 0.0
  %149 = vmatpush1.msra.mxu0 0.0
  %150 = vmatprep.subr.mxu0 0.0
  %151 = vmatpush1.msra.mxu0 0.0
  %152 = vmatprep.mubr.f32.mxu0 0.0
  %153 = vmatmul.mubr.f32.gmra.mrb[0].mxu0 %v41
  %v154 = vpop.f32.mrb[0].mxu0
  %v155 = vadd.f32 0.0, %v154
  %v156 = vpop.f32.mrb[0].mxu0
  %157 = vmatprep.mubr.f32.mxu0 0.0
  %158 = vmatmul.mubr.f32.gmra.mrb[0].mxu0 %v44
  %v159 = vpop.f32.mrb[0].mxu0
  %v160 = vadd.f32 0.0, %v159
  %v161 = vpop.f32.mrb[0].mxu0
  %162 = vmatprep.mubr.f32.mxu0 0.0
  %163 = vmatmul.mubr.f32.gmra.mrb[0].mxu0 %v47
  %v164 = vpop.f32.mrb[0].mxu0
  %v165 = vadd.f32 0.0, %v164
  %v166 = vpop.f32.mrb[0].mxu0
  %167 = vmatprep.mubr.f32.mxu0 0.0
  %168 = vmatmul.mubr.f32.gmra.mrb[0].mxu0 %v50
  %v169 = vpop.f32.mrb[0].mxu0
  %v170 = vadd.f32 0.0, %v169
  %v171 = vpop.f32.mrb[0].mxu0
  %172 = vmatprep.mubr.f32.mxu0 0.0
  %173 = vmatmul.mubr.f32.gmra.mrb[0].mxu0 %v53
  %v174 = vpop.f32.mrb[0].mxu0
  %v175 = vadd.f32 0.0, %v174
  %v176 = vpop.f32.mrb[0].mxu0
  %177 = vmatprep.mubr.f32.mxu0 0.0
  %178 = vmatmul.mubr.f32.gmra.mrb[0].mxu0 %v56
  %v179 = vpop.f32.mrb[0].mxu0
  %v180 = vadd.f32 0.0, %v179
  %v181 = vpop.f32.mrb[0].mxu0
  %182 = vmatprep.mubr.f32.mxu0 0.0
  %183 = vmatmul.mubr.f32.gmra.mrb[0].mxu0 %v59
  %v184 = vpop.f32.mrb[0].mxu0
  %v185 = vadd.f32 0.0, %v184
  %v186 = vpop.f32.mrb[0].mxu0
  %187 = vmatprep.mubr.f32.mxu0 0.0
  %188 = vmatmul.mubr.f32.gmra.mrb[0].mxu0 %v62
  %v189 = vpop.f32.mrb[0].mxu0
  %v190 = vadd.f32 0.0, %v189
  %v191 = vpop.f32.mrb[0].mxu0
  %192 = vmatprep.mubr.f32.mxu0 0.0
  %193 = vmatmul.mubr.f32.gmra.mrb[0].mxu0 %v65
  %v194 = vpop.f32.mrb[0].mxu0
  %v195 = vadd.f32 0.0, %v194
  %v196 = vpop.f32.mrb[0].mxu0
  %197 = vmatprep.mubr.f32.mxu0 0.0
  %198 = vmatmul.mubr.f32.gmra.mrb[0].mxu0 %v68
  %v199 = vpop.f32.mrb[0].mxu0
  %v200 = vadd.f32 0.0, %v199
  %v201 = vpop.f32.mrb[0].mxu0
  %202 = vmatprep.mubr.f32.mxu0 0.0
  %203 = vmatmul.mubr.f32.gmra.mrb[0].mxu0 %v71
  %v204 = vpop.f32.mrb[0].mxu0
  %v205 = vadd.f32 0.0, %v204
  %v206 = vpop.f32.mrb[0].mxu0
  %207 = vmatprep.mubr.f32.mxu0 0.0
  %208 = vmatmul.mubr.f32.gmra.mrb[0].mxu0 %v74
  %v209 = vpop.f32.mrb[0].mxu0
  %v210 = vadd.f32 0.0, %v209
  %v211 = vpop.f32.mrb[0].mxu0
  %212 = vmatprep.mubr.f32.mxu0 0.0
  %213 = vmatmul.mubr.f32.gmra.mrb[0].mxu0 %v77
  %v214 = vpop.f32.mrb[0].mxu0
  %v215 = vadd.f32 0.0, %v214
  %v216 = vpop.f32.mrb[0].mxu0
  %217 = vmatprep.mubr.f32.mxu0 0.0
  %218 = vmatmul.mubr.f32.gmra.mrb[0].mxu0 %v80
  %v219 = vpop.f32.mrb[0].mxu0
  %v220 = vadd.f32 0.0, %v219
  %v221 = vpop.f32.mrb[0].mxu0
  %222 = vmatprep.mubr.f32.mxu0 0.0
  %223 = vmatmul.mubr.f32.gmra.mrb[0].mxu0 %v83
  %v224 = vpop.f32.mrb[0].mxu0
  %v225 = vadd.f32 0.0, %v224
  %v226 = vpop.f32.mrb[0].mxu0
  %227 = vmatprep.mubr.f32.mxu0 0.0
  %228 = vmatmul.mubr.f32.gmra.mrb[0].mxu0 %v86
  %v229 = vpop.f32.mrb[0].mxu0
  %v230 = vadd.f32 0.0, %v229
  %v231 = vpop.f32.mrb[0].mxu0
  %232 = vdwg.mxu0
  %vm233 = vcmask 523264
  %v234 = vsel %vm233, %v155, 0.0
  %v235 = vsel %vm233, %v160, 0.0
  %v236 = vadd.f32 %v234, %v235
  %v237 = vsel %vm233, %v165, 0.0
  %v238 = vadd.f32 %v236, %v237
  %v239 = vsel %vm233, %v170, 0.0
  %v240 = vadd.f32 %v238, %v239
  %v241 = vsel %vm233, %v175, 0.0
  %v242 = vadd.f32 %v240, %v241
  %v243 = vsel %vm233, %v180, 0.0
  %v244 = vadd.f32 %v242, %v243
  %v245 = vsel %vm233, %v185, 0.0
  %v246 = vadd.f32 %v244, %v245
  %v247 = vsel %vm233, %v190, 0.0
  %v248 = vadd.f32 %v246, %v247
  %v249 = vsel %vm233, %v195, 0.0
  %v250 = vadd.f32 %v248, %v249
  %v251 = vsel %vm233, %v200, 0.0
  %v252 = vadd.f32 %v250, %v251
  %v253 = vsel %vm233, %v205, 0.0
  %v254 = vadd.f32 %v252, %v253
  %v255 = vsel %vm233, %v210, 0.0
  %v256 = vadd.f32 %v254, %v255
  %v257 = vsel %vm233, %v215, 0.0
  %v258 = vadd.f32 %v256, %v257
  %v259 = vsel %vm233, %v220, 0.0
  %v260 = vadd.f32 %v258, %v259
  %v261 = vsel %vm233, %v225, 0.0
  %v262 = vadd.f32 %v260, %v261
  %v263 = vsel %vm233, %v230, 0.0
  %v264 = vadd.f32 %v262, %v263
  %v265 = vrot.slane %v264, 4
  %v266 = vadd.f32 %v264, %v265
  %v267 = vrot.slane %v266, 2
  %v268 = vadd.f32 %v266, %v267
  %v269 = vrot.slane %v268, 1
  %v270 = vadd.f32 %v268, %v269
  %v271 = vmul.f32 %v155, %v155
  %v272 = vmul.f32 %v160, %v160
  %v273 = vmul.f32 %v165, %v165
  %v274 = vmul.f32 %v170, %v170
  %v275 = vmul.f32 %v175, %v175
  %v276 = vmul.f32 %v180, %v180
  %v277 = vmul.f32 %v185, %v185
  %v278 = vmul.f32 %v190, %v190
  %v279 = vmul.f32 %v195, %v195
  %v280 = vmul.f32 %v200, %v200
  %v281 = vmul.f32 %v205, %v205
  %v282 = vmul.f32 %v210, %v210
  %v283 = vmul.f32 %v215, %v215
  %v284 = vmul.f32 %v220, %v220
  %v285 = vmul.f32 %v225, %v225
  %v286 = vmul.f32 %v230, %v230
  %v287 = vsel %vm233, %v271, 0.0
  %v288 = vsel %vm233, %v272, 0.0
  %v289 = vadd.f32 %v287, %v288
  %v290 = vsel %vm233, %v273, 0.0
  %v291 = vadd.f32 %v289, %v290
  %v292 = vsel %vm233, %v274, 0.0
  %v293 = vadd.f32 %v291, %v292
  %v294 = vsel %vm233, %v275, 0.0
  %v295 = vadd.f32 %v293, %v294
  %v296 = vsel %vm233, %v276, 0.0
  %v297 = vadd.f32 %v295, %v296
  %v298 = vsel %vm233, %v277, 0.0
  %v299 = vadd.f32 %v297, %v298
  %v300 = vsel %vm233, %v278, 0.0
  %v301 = vadd.f32 %v299, %v300
  %v302 = vsel %vm233, %v279, 0.0
  %v303 = vadd.f32 %v301, %v302
  %v304 = vsel %vm233, %v280, 0.0
  %v305 = vadd.f32 %v303, %v304
  %v306 = vsel %vm233, %v281, 0.0
  %v307 = vadd.f32 %v305, %v306
  %v308 = vsel %vm233, %v282, 0.0
  %v309 = vadd.f32 %v307, %v308
  %v310 = vsel %vm233, %v283, 0.0
  %v311 = vadd.f32 %v309, %v310
  %v312 = vsel %vm233, %v284, 0.0
  %v313 = vadd.f32 %v311, %v312
  %v314 = vsel %vm233, %v285, 0.0
  %v315 = vadd.f32 %v313, %v314
  %v316 = vsel %vm233, %v286, 0.0
  %v317 = vadd.f32 %v315, %v316
  %v318 = vrot.slane %v317, 4
  %v319 = vadd.f32 %v317, %v318
  %v320 = vrot.slane %v319, 2
  %v321 = vadd.f32 %v319, %v320
  %v322 = vrot.slane %v321, 1
  %v323 = vadd.f32 %v321, %v322
  %v324 = vmul.f32 %v270, 0.0078125
  %v325 = vmul.f32 %v323, 0.0078125
  %v326 = vmul.f32 %v324, %v324
  %v327 = vsub.f32 %v325, %v326
  %v328 = vmax.f32 %v327, 0.0
  %v329 = vadd.f32 %v328, 1e-05
  %v330 = vrsqrt.pop %v329
  %v331 = vld [vmem:[%s2] sm:$0x1]
  %v332 = vmul.f32 %v330, %v331
  %v333 = vld [vmem:[%s3] sm:$0x1]
  %v334 = vmul.f32 %v324, %v332
  %v335 = vsub.f32 %v333, %v334
  %v336 = vlaneseq
  %v337 = vshrl.u32 %v336, 7
  %v338 = vsub.s32 0, %v337
  %v339 = vrot.slane %v332, %v338
  %v340 = vmul.f32 %v155, %v339
  %v341 = vmul.f32 %v160, %v339
  %v342 = vmul.f32 %v165, %v339
  %v343 = vmul.f32 %v170, %v339
  %v344 = vmul.f32 %v175, %v339
  %v345 = vmul.f32 %v180, %v339
  %v346 = vmul.f32 %v185, %v339
  %v347 = vmul.f32 %v190, %v339
  %v348 = vmul.f32 %v195, %v339
  %v349 = vmul.f32 %v200, %v339
  %v350 = vmul.f32 %v205, %v339
  %v351 = vmul.f32 %v210, %v339
  %v352 = vmul.f32 %v215, %v339
  %v353 = vmul.f32 %v220, %v339
  %v354 = vmul.f32 %v225, %v339
  %v355 = vmul.f32 %v230, %v339
  %v357 = vlaneseq
  %v358 = vshrl.u32 %v357, 7
  %v359 = vsub.s32 0, %v358
  %v360 = vrot.slane %v335, %v359
  %v362 = vadd.f32 %v340, %v360
  %v363 = vadd.f32 %v341, %v360
  %v364 = vadd.f32 %v342, %v360
  %v365 = vadd.f32 %v343, %v360
  %v366 = vadd.f32 %v344, %v360
  %v367 = vadd.f32 %v345, %v360
  %v368 = vadd.f32 %v346, %v360
  %v369 = vadd.f32 %v347, %v360
  %v370 = vadd.f32 %v348, %v360
  %v371 = vadd.f32 %v349, %v360
  %v372 = vadd.f32 %v350, %v360
  %v373 = vadd.f32 %v351, %v360
  %v374 = vadd.f32 %v352, %v360
  %v375 = vadd.f32 %v353, %v360
  %v376 = vadd.f32 %v354, %v360
  %v377 = vadd.f32 %v355, %v360
  %v378 = vmax.f32 %v362, 0.0
  %v379 = vmax.f32 %v363, 0.0
  %v380 = vmax.f32 %v364, 0.0
  %v381 = vmax.f32 %v365, 0.0
  %v382 = vmax.f32 %v366, 0.0
  %v383 = vmax.f32 %v367, 0.0
  %v384 = vmax.f32 %v368, 0.0
  %v385 = vmax.f32 %v369, 0.0
  %v386 = vmax.f32 %v370, 0.0
  %v387 = vmax.f32 %v371, 0.0
  %v388 = vmax.f32 %v372, 0.0
  %v389 = vmax.f32 %v373, 0.0
  %v390 = vmax.f32 %v374, 0.0
  %v391 = vmax.f32 %v375, 0.0
  %v392 = vmax.f32 %v376, 0.0
  %v393 = vmax.f32 %v377, 0.0
  %394 = vst.msk [vmem:[%s4] sm:$0xff] %vm233, %v378
  %395 = vst.msk [vmem:[%s4 + $0x8] sm:$0xff] %vm233, %v379
  %396 = vst.msk [vmem:[%s4 + $0x10] sm:$0xff] %vm233, %v380
  %397 = vst.msk [vmem:[%s4 + $0x18] sm:$0xff] %vm233, %v381
  %398 = vst.msk [vmem:[%s4 + $0x20] sm:$0xff] %vm233, %v382
  %399 = vst.msk [vmem:[%s4 + $0x28] sm:$0xff] %vm233, %v383
  %400 = vst.msk [vmem:[%s4 + $0x30] sm:$0xff] %vm233, %v384
  %401 = vst.msk [vmem:[%s4 + $0x38] sm:$0xff] %vm233, %v385
  %402 = vst.msk [vmem:[%s4 + $0x40] sm:$0xff] %vm233, %v386
  %403 = vst.msk [vmem:[%s4 + $0x48] sm:$0xff] %vm233, %v387
  %404 = vst.msk [vmem:[%s4 + $0x50] sm:$0xff] %vm233, %v388
  %405 = vst.msk [vmem:[%s4 + $0x58] sm:$0xff] %vm233, %v389
  %406 = vst.msk [vmem:[%s4 + $0x60] sm:$0xff] %vm233, %v390
  %407 = vst.msk [vmem:[%s4 + $0x68] sm:$0xff] %vm233, %v391
  %408 = vst.msk [vmem:[%s4 + $0x70] sm:$0xff] %vm233, %v392
  %409 = vst.msk [vmem:[%s4 + $0x78] sm:$0xff] %vm233, %v393
  // Predicated region
  $region18: #{autoencoder_forward.6} parent=0 // pred_check
    _
  $region19: #{autoencoder_forward.6} parent=0 // pred_check_branch
    %411 = sbr.rel (0) target = $region21
  $region20: #{autoencoder_forward.6} parent=0 // pred_region
    _
  $region21: #{autoencoder_forward.6} parent=0 // pred_fallthru
    _
  // Predicated region
  $region22: #{autoencoder_forward.6} parent=0 // pred_check
    _
  $region23: #{autoencoder_forward.6} parent=0 // pred_check_branch
    %413 = sbr.rel (0) target = $region25
  $region24: #{autoencoder_forward.6} parent=0 // pred_region
    _
  $region25: #{autoencoder_forward.6} parent=0 // pred_fallthru
    _

// kernel: autoencoder_forward.7
$region0: #{autoencoder_forward.7}
  #allocation0 [shape = 'u32[]', space=smem, size = 0x4, offset = 0x4, fixed_abs, tag = 'smem constant byte address 0x4 - core index']
  #allocation1 [shape = 'u32[144,128]{1,0:T(1,128)}', space=vmem, size = 0x12000, scoped, tag = 'internal scratch']
  %s0 = inlined_call_operand.vmem [shape: f32[1,32,1024], index: 0, kind: input, shape index: {}]
  %s1 = inlined_call_operand.vmem [shape: f32[1,1024,128], index: 1, kind: input, shape index: {}]
  %s2 = inlined_call_operand.vmem [shape: f32[1,128], index: 2, kind: input, shape index: {}]
  %s3 = inlined_call_operand.vmem [shape: f32[1,128], index: 3, kind: input, shape index: {}]
  %s4 = inlined_call_operand.vmem [shape: f32[1,32,128], index: 4, kind: output, shape index: {}]
  %s5 = sld [smem:[#allocation0]]
  $region26: #{autoencoder_forward.7} parent=0
    _
  %s7 = ssub.s32 1, %s5
  %s8 = scalar_select 0, %s7, %s5
  // Predicated region
  $region2: #{autoencoder_forward.7} parent=0 // pred_check
    _
  $region3: #{autoencoder_forward.7} parent=0 // pred_check_branch
    %10 = sbr.rel (0) target = $region5
  $region4: #{autoencoder_forward.7} parent=0 // pred_region
    _
  $region5: #{autoencoder_forward.7} parent=0 // pred_fallthru
    _
  // Predicated region
  $region6: #{autoencoder_forward.7} parent=0 // pred_check
    _
  $region7: #{autoencoder_forward.7} parent=0 // pred_check_branch
    %12 = sbr.rel (0) target = $region9
  $region8: #{autoencoder_forward.7} parent=0 // pred_region
    _
  $region9: #{autoencoder_forward.7} parent=0 // pred_fallthru
    _
  // Predicated region
  $region10: #{autoencoder_forward.7} parent=0 // pred_check
    _
  $region11: #{autoencoder_forward.7} parent=0 // pred_check_branch
    %14 = sbr.rel (0) target = $region13
  $region12: #{autoencoder_forward.7} parent=0 // pred_region
    _
  $region13: #{autoencoder_forward.7} parent=0 // pred_fallthru
    _
  // Predicated region
  $region14: #{autoencoder_forward.7} parent=0 // pred_check
    _
  $region15: #{autoencoder_forward.7} parent=0 // pred_check_branch
    %16 = sbr.rel (0) target = $region17
  $region16: #{autoencoder_forward.7} parent=0 // pred_region
    _
  $region17: #{autoencoder_forward.7} parent=0 // pred_fallthru
    _
  %v17 = vld [vmem:[%s0] sm:$0xff]
  %v18 = vld [vmem:[%s0 + $0x8] sm:$0xff]
  %v19 = vld [vmem:[%s0 + $0x10] sm:$0xff]
  %v20 = vld [vmem:[%s0 + $0x18] sm:$0xff]
  %v21 = vld [vmem:[%s0 + $0x20] sm:$0xff]
  %v22 = vld [vmem:[%s0 + $0x28] sm:$0xff]
  %v23 = vld [vmem:[%s0 + $0x30] sm:$0xff]
  %v24 = vld [vmem:[%s0 + $0x38] sm:$0xff]
  %v25 = vld [vmem:[%s0 + $0x40] sm:$0xff]
  %v26 = vld [vmem:[%s0 + $0x48] sm:$0xff]
  %v27 = vld [vmem:[%s0 + $0x50] sm:$0xff]
  %v28 = vld [vmem:[%s0 + $0x58] sm:$0xff]
  %v29 = vld [vmem:[%s0 + $0x60] sm:$0xff]
  %v30 = vld [vmem:[%s0 + $0x68] sm:$0xff]
  %v31 = vld [vmem:[%s0 + $0x70] sm:$0xff]
  %v32 = vld [vmem:[%s0 + $0x78] sm:$0xff]
  %v33 = vld [vmem:[%s0 + $0x80] sm:$0xff]
  %v34 = vld [vmem:[%s0 + $0x88] sm:$0xff]
  %v35 = vld [vmem:[%s0 + $0x90] sm:$0xff]
  %v36 = vld [vmem:[%s0 + $0x98] sm:$0xff]
  %v37 = vld [vmem:[%s0 + $0xa0] sm:$0xff]
  %v38 = vld [vmem:[%s0 + $0xa8] sm:$0xff]
  %v39 = vld [vmem:[%s0 + $0xb0] sm:$0xff]
  %v40 = vld [vmem:[%s0 + $0xb8] sm:$0xff]
  %v41 = vld [vmem:[%s0 + $0xc0] sm:$0xff]
  %v42 = vld [vmem:[%s0 + $0xc8] sm:$0xff]
  %v43 = vld [vmem:[%s0 + $0xd0] sm:$0xff]
  %v44 = vld [vmem:[%s0 + $0xd8] sm:$0xff]
  %v45 = vld [vmem:[%s0 + $0xe0] sm:$0xff]
  %v46 = vld [vmem:[%s0 + $0xe8] sm:$0xff]
  %v47 = vld [vmem:[%s0 + $0xf0] sm:$0xff]
  %v48 = vld [vmem:[%s0 + $0xf8] sm:$0xff]
  %v49 = vld [vmem:[%s1] sm:$0xff]
  %v50 = vld [vmem:[%s1 + $0x8] sm:$0xff]
  %v51 = vld [vmem:[%s1 + $0x10] sm:$0xff]
  %v52 = vld [vmem:[%s1 + $0x18] sm:$0xff]
  %v53 = vld [vmem:[%s1 + $0x20] sm:$0xff]
  %v54 = vld [vmem:[%s1 + $0x28] sm:$0xff]
  %v55 = vld [vmem:[%s1 + $0x30] sm:$0xff]
  %v56 = vld [vmem:[%s1 + $0x38] sm:$0xff]
  %v57 = vld [vmem:[%s1 + $0x40] sm:$0xff]
  %v58 = vld [vmem:[%s1 + $0x48] sm:$0xff]
  %v59 = vld [vmem:[%s1 + $0x50] sm:$0xff]
  %v60 = vld [vmem:[%s1 + $0x58] sm:$0xff]
  %v61 = vld [vmem:[%s1 + $0x60] sm:$0xff]
  %v62 = vld [vmem:[%s1 + $0x68] sm:$0xff]
  %v63 = vld [vmem:[%s1 + $0x70] sm:$0xff]
  %v64 = vld [vmem:[%s1 + $0x78] sm:$0xff]
  %v65 = vld [vmem:[%s1 + $0x80] sm:$0xff]
  %v66 = vld [vmem:[%s1 + $0x88] sm:$0xff]
  %v67 = vld [vmem:[%s1 + $0x90] sm:$0xff]
  %v68 = vld [vmem:[%s1 + $0x98] sm:$0xff]
  %v69 = vld [vmem:[%s1 + $0xa0] sm:$0xff]
  %v70 = vld [vmem:[%s1 + $0xa8] sm:$0xff]
  %v71 = vld [vmem:[%s1 + $0xb0] sm:$0xff]
  %v72 = vld [vmem:[%s1 + $0xb8] sm:$0xff]
  %v73 = vld [vmem:[%s1 + $0xc0] sm:$0xff]
  %v74 = vld [vmem:[%s1 + $0xc8] sm:$0xff]
  %v75 = vld [vmem:[%s1 + $0xd0] sm:$0xff]
  %v76 = vld [vmem:[%s1 + $0xd8] sm:$0xff]
  %v77 = vld [vmem:[%s1 + $0xe0] sm:$0xff]
  %v78 = vld [vmem:[%s1 + $0xe8] sm:$0xff]
  %v79 = vld [vmem:[%s1 + $0xf0] sm:$0xff]
  %v80 = vld [vmem:[%s1 + $0xf8] sm:$0xff]
  %v81 = vld [vmem:[%s1 + $0x100] sm:$0xff]
  %v82 = vld [vmem:[%s1 + $0x108] sm:$0xff]
  %v83 = vld [vmem:[%s1 + $0x110] sm:$0xff]
  %v84 = vld [vmem:[%s1 + $0x118] sm:$0xff]
  %v85 = vld [vmem:[%s1 + $0x120] sm:$0xff]
  %v86 = vld [vmem:[%s1 + $0x128] sm:$0xff]
  %v87 = vld [vmem:[%s1 + $0x130] sm:$0xff]
  %v88 = vld [vmem:[%s1 + $0x138] sm:$0xff]
  %v89 = vld [vmem:[%s1 + $0x140] sm:$0xff]
  %v90 = vld [vmem:[%s1 + $0x148] sm:$0xff]
  %v91 = vld [vmem:[%s1 + $0x150] sm:$0xff]
  %v92 = vld [vmem:[%s1 + $0x158] sm:$0xff]
  %v93 = vld [vmem:[%s1 + $0x160] sm:$0xff]
  %v94 = vld [vmem:[%s1 + $0x168] sm:$0xff]
  %v95 = vld [vmem:[%s1 + $0x170] sm:$0xff]
  %v96 = vld [vmem:[%s1 + $0x178] sm:$0xff]
  %v97 = vld [vmem:[%s1 + $0x180] sm:$0xff]
  %v98 = vld [vmem:[%s1 + $0x188] sm:$0xff]
  %v99 = vld [vmem:[%s1 + $0x190] sm:$0xff]
  %v100 = vld [vmem:[%s1 + $0x198] sm:$0xff]
  %v101 = vld [vmem:[%s1 + $0x1a0] sm:$0xff]
  %v102 = vld [vmem:[%s1 + $0x1a8] sm:$0xff]
  %v103 = vld [vmem:[%s1 + $0x1b0] sm:$0xff]
  %v104 = vld [vmem:[%s1 + $0x1b8] sm:$0xff]
  %v105 = vld [vmem:[%s1 + $0x1c0] sm:$0xff]
  %v106 = vld [vmem:[%s1 + $0x1c8] sm:$0xff]
  %v107 = vld [vmem:[%s1 + $0x1d0] sm:$0xff]
  %v108 = vld [vmem:[%s1 + $0x1d8] sm:$0xff]
  %v109 = vld [vmem:[%s1 + $0x1e0] sm:$0xff]
  %v110 = vld [vmem:[%s1 + $0x1e8] sm:$0xff]
  %v111 = vld [vmem:[%s1 + $0x1f0] sm:$0xff]
  %v112 = vld [vmem:[%s1 + $0x1f8] sm:$0xff]
  %v113 = vld [vmem:[%s1 + $0x200] sm:$0xff]
  %v114 = vld [vmem:[%s1 + $0x208] sm:$0xff]
  %v115 = vld [vmem:[%s1 + $0x210] sm:$0xff]
  %v116 = vld [vmem:[%s1 + $0x218] sm:$0xff]
  %v117 = vld [vmem:[%s1 + $0x220] sm:$0xff]
  %v118 = vld [vmem:[%s1 + $0x228] sm:$0xff]
  %v119 = vld [vmem:[%s1 + $0x230] sm:$0xff]
  %v120 = vld [vmem:[%s1 + $0x238] sm:$0xff]
  %v121 = vld [vmem:[%s1 + $0x240] sm:$0xff]
  %v122 = vld [vmem:[%s1 + $0x248] sm:$0xff]
  %v123 = vld [vmem:[%s1 + $0x250] sm:$0xff]
  %v124 = vld [vmem:[%s1 + $0x258] sm:$0xff]
  %v125 = vld [vmem:[%s1 + $0x260] sm:$0xff]
  %v126 = vld [vmem:[%s1 + $0x268] sm:$0xff]
  %v127 = vld [vmem:[%s1 + $0x270] sm:$0xff]
  %v128 = vld [vmem:[%s1 + $0x278] sm:$0xff]
  %v129 = vld [vmem:[%s1 + $0x280] sm:$0xff]
  %v130 = vld [vmem:[%s1 + $0x288] sm:$0xff]
  %v131 = vld [vmem:[%s1 + $0x290] sm:$0xff]
  %v132 = vld [vmem:[%s1 + $0x298] sm:$0xff]
  %v133 = vld [vmem:[%s1 + $0x2a0] sm:$0xff]
  %v134 = vld [vmem:[%s1 + $0x2a8] sm:$0xff]
  %v135 = vld [vmem:[%s1 + $0x2b0] sm:$0xff]
  %v136 = vld [vmem:[%s1 + $0x2b8] sm:$0xff]
  %v137 = vld [vmem:[%s1 + $0x2c0] sm:$0xff]
  %v138 = vld [vmem:[%s1 + $0x2c8] sm:$0xff]
  %v139 = vld [vmem:[%s1 + $0x2d0] sm:$0xff]
  %v140 = vld [vmem:[%s1 + $0x2d8] sm:$0xff]
  %v141 = vld [vmem:[%s1 + $0x2e0] sm:$0xff]
  %v142 = vld [vmem:[%s1 + $0x2e8] sm:$0xff]
  %v143 = vld [vmem:[%s1 + $0x2f0] sm:$0xff]
  %v144 = vld [vmem:[%s1 + $0x2f8] sm:$0xff]
  %v145 = vld [vmem:[%s1 + $0x300] sm:$0xff]
  %v146 = vld [vmem:[%s1 + $0x308] sm:$0xff]
  %v147 = vld [vmem:[%s1 + $0x310] sm:$0xff]
  %v148 = vld [vmem:[%s1 + $0x318] sm:$0xff]
  %v149 = vld [vmem:[%s1 + $0x320] sm:$0xff]
  %v150 = vld [vmem:[%s1 + $0x328] sm:$0xff]
  %v151 = vld [vmem:[%s1 + $0x330] sm:$0xff]
  %v152 = vld [vmem:[%s1 + $0x338] sm:$0xff]
  %v153 = vld [vmem:[%s1 + $0x340] sm:$0xff]
  %v154 = vld [vmem:[%s1 + $0x348] sm:$0xff]
  %v155 = vld [vmem:[%s1 + $0x350] sm:$0xff]
  %v156 = vld [vmem:[%s1 + $0x358] sm:$0xff]
  %v157 = vld [vmem:[%s1 + $0x360] sm:$0xff]
  %v158 = vld [vmem:[%s1 + $0x368] sm:$0xff]
  %v159 = vld [vmem:[%s1 + $0x370] sm:$0xff]
  %v160 = vld [vmem:[%s1 + $0x378] sm:$0xff]
  %v161 = vld [vmem:[%s1 + $0x380] sm:$0xff]
  %v162 = vld [vmem:[%s1 + $0x388] sm:$0xff]
  %v163 = vld [vmem:[%s1 + $0x390] sm:$0xff]
  %v164 = vld [vmem:[%s1 + $0x398] sm:$0xff]
  %v165 = vld [vmem:[%s1 + $0x3a0] sm:$0xff]
  %v166 = vld [vmem:[%s1 + $0x3a8] sm:$0xff]
  %v167 = vld [vmem:[%s1 + $0x3b0] sm:$0xff]
  %v168 = vld [vmem:[%s1 + $0x3b8] sm:$0xff]
  %v169 = vld [vmem:[%s1 + $0x3c0] sm:$0xff]
  %v170 = vld [vmem:[%s1 + $0x3c8] sm:$0xff]
  %v171 = vld [vmem:[%s1 + $0x3d0] sm:$0xff]
  %v172 = vld [vmem:[%s1 + $0x3d8] sm:$0xff]
  %v173 = vld [vmem:[%s1 + $0x3e0] sm:$0xff]
  %v174 = vld [vmem:[%s1 + $0x3e8] sm:$0xff]
  %v175 = vld [vmem:[%s1 + $0x3f0] sm:$0xff]
  %v176 = vld [vmem:[%s1 + $0x3f8] sm:$0xff]
  %177 = vmatprep.subr.mxu0 0.0
  %178 = vmatpush1.msra.mxu0 %v49
  %179 = vmatprep.subr.mxu0 0.0
  %180 = vmatpush1.msra.mxu0 %v50
  %181 = vmatprep.subr.mxu0 0.0
  %182 = vmatpush1.msra.mxu0 %v51
  %183 = vmatprep.subr.mxu0 0.0
  %184 = vmatpush1.msra.mxu0 %v52
  %185 = vmatprep.subr.mxu0 0.0
  %186 = vmatpush1.msra.mxu0 %v53
  %187 = vmatprep.subr.mxu0 0.0
  %188 = vmatpush1.msra.mxu0 %v54
  %189 = vmatprep.subr.mxu0 0.0
  %190 = vmatpush1.msra.mxu0 %v55
  %191 = vmatprep.subr.mxu0 0.0
  %192 = vmatpush1.msra.mxu0 %v56
  %193 = vmatprep.subr.mxu0 0.0
  %194 = vmatpush1.msra.mxu0 %v57
  %195 = vmatprep.subr.mxu0 0.0
  %196 = vmatpush1.msra.mxu0 %v58
  %197 = vmatprep.subr.mxu0 0.0
  %198 = vmatpush1.msra.mxu0 %v59
  %199 = vmatprep.subr.mxu0 0.0
  %200 = vmatpush1.msra.mxu0 %v60
  %201 = vmatprep.subr.mxu0 0.0
  %202 = vmatpush1.msra.mxu0 %v61
  %203 = vmatprep.subr.mxu0 0.0
  %204 = vmatpush1.msra.mxu0 %v62
  %205 = vmatprep.subr.mxu0 0.0
  %206 = vmatpush1.msra.mxu0 %v63
  %207 = vmatprep.subr.mxu0 0.0
  %208 = vmatpush1.msra.mxu0 %v64
  %209 = vmatprep.subr.mxu0 0.0
  %210 = vmatpush1.msra.mxu0 %v65
  %211 = vmatprep.subr.mxu0 0.0
  %212 = vmatpush1.msra.mxu0 %v66
  %213 = vmatprep.subr.mxu0 0.0
  %214 = vmatpush1.msra.mxu0 %v67
  %215 = vmatprep.subr.mxu0 0.0
  %216 = vmatpush1.msra.mxu0 %v68
  %217 = vmatprep.subr.mxu0 0.0
  %218 = vmatpush1.msra.mxu0 %v69
  %219 = vmatprep.subr.mxu0 0.0
  %220 = vmatpush1.msra.mxu0 %v70
  %221 = vmatprep.subr.mxu0 0.0
  %222 = vmatpush1.msra.mxu0 %v71
  %223 = vmatprep.subr.mxu0 0.0
  %224 = vmatpush1.msra.mxu0 %v72
  %225 = vmatprep.subr.mxu0 0.0
  %226 = vmatpush1.msra.mxu0 %v73
  %227 = vmatprep.subr.mxu0 0.0
  %228 = vmatpush1.msra.mxu0 %v74
  %229 = vmatprep.subr.mxu0 0.0
  %230 = vmatpush1.msra.mxu0 %v75
  %231 = vmatprep.subr.mxu0 0.0
  %232 = vmatpush1.msra.mxu0 %v76
  %233 = vmatprep.subr.mxu0 0.0
  %234 = vmatpush1.msra.mxu0 %v77
  %235 = vmatprep.subr.mxu0 0.0
  %236 = vmatpush1.msra.mxu0 %v78
  %237 = vmatprep.subr.mxu0 0.0
  %238 = vmatpush1.msra.mxu0 %v79
  %239 = vmatprep.subr.mxu0 0.0
  %240 = vmatpush1.msra.mxu0 %v80
  %241 = vmatprep.mubr.f32.mxu0 %v18
  %242 = vmatmul.mubr.f32.gmra.mrb[0].mxu0 %v17
  %v243 = vpop.f32.mrb[0].mxu0
  %v244 = vadd.f32 0.0, %v243
  %v245 = vpop.f32.mrb[0].mxu0
  %246 = vmatprep.mubr.f32.mxu0 %v26
  %247 = vmatmul.mubr.f32.gmra.mrb[0].mxu0 %v25
  %v248 = vpop.f32.mrb[0].mxu0
  %v249 = vadd.f32 0.0, %v248
  %v250 = vpop.f32.mrb[0].mxu0
  %251 = vmatprep.mubr.f32.mxu0 %v34
  %252 = vmatmul.mubr.f32.gmra.mrb[0].mxu0 %v33
  %v253 = vpop.f32.mrb[0].mxu0
  %v254 = vadd.f32 0.0, %v253
  %v255 = vpop.f32.mrb[0].mxu0
  %256 = vmatprep.mubr.f32.mxu0 %v42
  %257 = vmatmul.mubr.f32.gmra.mrb[0].mxu0 %v41
  %v258 = vpop.f32.mrb[0].mxu0
  %v259 = vadd.f32 0.0, %v258
  %v260 = vpop.f32.mrb[0].mxu0
  %261 = vdwg.mxu0
  %262 = vmatprep.subr.mxu0 0.0
  %263 = vmatpush1.msra.mxu0 %v81
  %264 = vmatprep.subr.mxu0 0.0
  %265 = vmatpush1.msra.mxu0 %v82
  %266 = vmatprep.subr.mxu0 0.0
  %267 = vmatpush1.msra.mxu0 %v83
  %268 = vmatprep.subr.mxu0 0.0
  %269 = vmatpush1.msra.mxu0 %v84
  %270 = vmatprep.subr.mxu0 0.0
  %271 = vmatpush1.msra.mxu0 %v85
  %272 = vmatprep.subr.mxu0 0.0
  %273 = vmatpush1.msra.mxu0 %v86
  %274 = vmatprep.subr.mxu0 0.0
  %275 = vmatpush1.msra.mxu0 %v87
  %276 = vmatprep.subr.mxu0 0.0
  %277 = vmatpush1.msra.mxu0 %v88
  %278 = vmatprep.subr.mxu0 0.0
  %279 = vmatpush1.msra.mxu0 %v89
  %280 = vmatprep.subr.mxu0 0.0
  %281 = vmatpush1.msra.mxu0 %v90
  %282 = vmatprep.subr.mxu0 0.0
  %283 = vmatpush1.msra.mxu0 %v91
  %284 = vmatprep.subr.mxu0 0.0
  %285 = vmatpush1.msra.mxu0 %v92
  %286 = vmatprep.subr.mxu0 0.0
  %287 = vmatpush1.msra.mxu0 %v93
  %288 = vmatprep.subr.mxu0 0.0
  %289 = vmatpush1.msra.mxu0 %v94
  %290 = vmatprep.subr.mxu0 0.0
  %291 = vmatpush1.msra.mxu0 %v95
  %292 = vmatprep.subr.mxu0 0.0
  %293 = vmatpush1.msra.mxu0 %v96
  %294 = vmatprep.subr.mxu0 0.0
  %295 = vmatpush1.msra.mxu0 %v97
  %296 = vmatprep.subr.mxu0 0.0
  %297 = vmatpush1.msra.mxu0 %v98
  %298 = vmatprep.subr.mxu0 0.0
  %299 = vmatpush1.msra.mxu0 %v99
  %300 = vmatprep.subr.mxu0 0.0
  %301 = vmatpush1.msra.mxu0 %v100
  %302 = vmatprep.subr.mxu0 0.0
  %303 = vmatpush1.msra.mxu0 %v101
  %304 = vmatprep.subr.mxu0 0.0
  %305 = vmatpush1.msra.mxu0 %v102
  %306 = vmatprep.subr.mxu0 0.0
  %307 = vmatpush1.msra.mxu0 %v103
  %308 = vmatprep.subr.mxu0 0.0
  %309 = vmatpush1.msra.mxu0 %v104
  %310 = vmatprep.subr.mxu0 0.0
  %311 = vmatpush1.msra.mxu0 %v105
  %312 = vmatprep.subr.mxu0 0.0
  %313 = vmatpush1.msra.mxu0 %v106
  %314 = vmatprep.subr.mxu0 0.0
  %315 = vmatpush1.msra.mxu0 %v107
  %316 = vmatprep.subr.mxu0 0.0
  %317 = vmatpush1.msra.mxu0 %v108
  %318 = vmatprep.subr.mxu0 0.0
  %319 = vmatpush1.msra.mxu0 %v109
  %320 = vmatprep.subr.mxu0 0.0
  %321 = vmatpush1.msra.mxu0 %v110
  %322 = vmatprep.subr.mxu0 0.0
  %323 = vmatpush1.msra.mxu0 %v111
  %324 = vmatprep.subr.mxu0 0.0
  %325 = vmatpush1.msra.mxu0 %v112
  %326 = vmatprep.mubr.f32.mxu0 %v20
  %327 = vmatmul.mubr.f32.gmra.mrb[0].mxu0 %v19
  %v328 = vpop.f32.mrb[0].mxu0
  %v329 = vadd.f32 %v244, %v328
  %v330 = vpop.f32.mrb[0].mxu0
  %331 = vmatprep.mubr.f32.mxu0 %v28
  %332 = vmatmul.mubr.f32.gmra.mrb[0].mxu0 %v27
  %v333 = vpop.f32.mrb[0].mxu0
  %v334 = vadd.f32 %v249, %v333
  %v335 = vpop.f32.mrb[0].mxu0
  %336 = vmatprep.mubr.f32.mxu0 %v36
  %337 = vmatmul.mubr.f32.gmra.mrb[0].mxu0 %v35
  %v338 = vpop.f32.mrb[0].mxu0
  %v339 = vadd.f32 %v254, %v338
  %v340 = vpop.f32.mrb[0].mxu0
  %341 = vmatprep.mubr.f32.mxu0 %v44
  %342 = vmatmul.mubr.f32.gmra.mrb[0].mxu0 %v43
  %v343 = vpop.f32.mrb[0].mxu0
  %v344 = vadd.f32 %v259, %v343
  %v345 = vpop.f32.mrb[0].mxu0
  %346 = vdwg.mxu0
  %347 = vmatprep.subr.mxu0 0.0
  %348 = vmatpush1.msra.mxu0 %v113
  %349 = vmatprep.subr.mxu0 0.0
  %350 = vmatpush1.msra.mxu0 %v114
  %351 = vmatprep.subr.mxu0 0.0
  %352 = vmatpush1.msra.mxu0 %v115
  %353 = vmatprep.subr.mxu0 0.0
  %354 = vmatpush1.msra.mxu0 %v116
  %355 = vmatprep.subr.mxu0 0.0
  %356 = vmatpush1.msra.mxu0 %v117
  %357 = vmatprep.subr.mxu0 0.0
  %358 = vmatpush1.msra.mxu0 %v118
  %359 = vmatprep.subr.mxu0 0.0
  %360 = vmatpush1.msra.mxu0 %v119
  %361 = vmatprep.subr.mxu0 0.0
  %362 = vmatpush1.msra.mxu0 %v120
  %363 = vmatprep.subr.mxu0 0.0
  %364 = vmatpush1.msra.mxu0 %v121
  %365 = vmatprep.subr.mxu0 0.0
  %366 = vmatpush1.msra.mxu0 %v122
  %367 = vmatprep.subr.mxu0 0.0
  %368 = vmatpush1.msra.mxu0 %v123
  %369 = vmatprep.subr.mxu0 0.0
  %370 = vmatpush1.msra.mxu0 %v124
  %371 = vmatprep.subr.mxu0 0.0
  %372 = vmatpush1.msra.mxu0 %v125
  %373 = vmatprep.subr.mxu0 0.0
  %374 = vmatpush1.msra.mxu0 %v126
  %375 = vmatprep.subr.mxu0 0.0
  %376 = vmatpush1.msra.mxu0 %v127
  %377 = vmatprep.subr.mxu0 0.0
  %378 = vmatpush1.msra.mxu0 %v128
  %379 = vmatprep.subr.mxu0 0.0
  %380 = vmatpush1.msra.mxu0 %v129
  %381 = vmatprep.subr.mxu0 0.0
  %382 = vmatpush1.msra.mxu0 %v130
  %383 = vmatprep.subr.mxu0 0.0
  %384 = vmatpush1.msra.mxu0 %v131
  %385 = vmatprep.subr.mxu0 0.0
  %386 = vmatpush1.msra.mxu0 %v132
  %387 = vmatprep.subr.mxu0 0.0
  %388 = vmatpush1.msra.mxu0 %v133
  %389 = vmatprep.subr.mxu0 0.0
  %390 = vmatpush1.msra.mxu0 %v134
  %391 = vmatprep.subr.mxu0 0.0
  %392 = vmatpush1.msra.mxu0 %v135
  %393 = vmatprep.subr.mxu0 0.0
  %394 = vmatpush1.msra.mxu0 %v136
  %395 = vmatprep.subr.mxu0 0.0
  %396 = vmatpush1.msra.mxu0 %v137
  %397 = vmatprep.subr.mxu0 0.0
  %398 = vmatpush1.msra.mxu0 %v138
  %399 = vmatprep.subr.mxu0 0.0
  %400 = vmatpush1.msra.mxu0 %v139
  %401 = vmatprep.subr.mxu0 0.0
  %402 = vmatpush1.msra.mxu0 %v140
  %403 = vmatprep.subr.mxu0 0.0
  %404 = vmatpush1.msra.mxu0 %v141
  %405 = vmatprep.subr.mxu0 0.0
  %406 = vmatpush1.msra.mxu0 %v142
  %407 = vmatprep.subr.mxu0 0.0
  %408 = vmatpush1.msra.mxu0 %v143
  %409 = vmatprep.subr.mxu0 0.0
  %410 = vmatpush1.msra.mxu0 %v144
  %411 = vmatprep.mubr.f32.mxu0 %v22
  %412 = vmatmul.mubr.f32.gmra.mrb[0].mxu0 %v21
  %v413 = vpop.f32.mrb[0].mxu0
  %v414 = vadd.f32 %v329, %v413
  %v415 = vpop.f32.mrb[0].mxu0
  %416 = vmatprep.mubr.f32.mxu0 %v30
  %417 = vmatmul.mubr.f32.gmra.mrb[0].mxu0 %v29
  %v418 = vpop.f32.mrb[0].mxu0
  %v419 = vadd.f32 %v334, %v418
  %v420 = vpop.f32.mrb[0].mxu0
  %421 = vmatprep.mubr.f32.mxu0 %v38
  %422 = vmatmul.mubr.f32.gmra.mrb[0].mxu0 %v37
  %v423 = vpop.f32.mrb[0].mxu0
  %v424 = vadd.f32 %v339, %v423
  %v425 = vpop.f32.mrb[0].mxu0
  %426 = vmatprep.mubr.f32.mxu0 %v46
  %427 = vmatmul.mubr.f32.gmra.mrb[0].mxu0 %v45
  %v428 = vpop.f32.mrb[0].mxu0
  %v429 = vadd.f32 %v344, %v428
  %v430 = vpop.f32.mrb[0].mxu0
  %431 = vdwg.mxu0
  %432 = vmatprep.subr.mxu0 0.0
  %433 = vmatpush1.msra.mxu0 %v145
  %434 = vmatprep.subr.mxu0 0.0
  %435 = vmatpush1.msra.mxu0 %v146
  %436 = vmatprep.subr.mxu0 0.0
  %437 = vmatpush1.msra.mxu0 %v147
  %438 = vmatprep.subr.mxu0 0.0
  %439 = vmatpush1.msra.mxu0 %v148
  %440 = vmatprep.subr.mxu0 0.0
  %441 = vmatpush1.msra.mxu0 %v149
  %442 = vmatprep.subr.mxu0 0.0
  %443 = vmatpush1.msra.mxu0 %v150
  %444 = vmatprep.subr.mxu0 0.0
  %445 = vmatpush1.msra.mxu0 %v151
  %446 = vmatprep.subr.mxu0 0.0
  %447 = vmatpush1.msra.mxu0 %v152
  %448 = vmatprep.subr.mxu0 0.0
  %449 = vmatpush1.msra.mxu0 %v153
  %450 = vmatprep.subr.mxu0 0.0
  %451 = vmatpush1.msra.mxu0 %v154
  %452 = vmatprep.subr.mxu0 0.0
  %453 = vmatpush1.msra.mxu0 %v155
  %454 = vmatprep.subr.mxu0 0.0
  %455 = vmatpush1.msra.mxu0 %v156
  %456 = vmatprep.subr.mxu0 0.0
  %457 = vmatpush1.msra.mxu0 %v157
  %458 = vmatprep.subr.mxu0 0.0
  %459 = vmatpush1.msra.mxu0 %v158
  %460 = vmatprep.subr.mxu0 0.0
  %461 = vmatpush1.msra.mxu0 %v159
  %462 = vmatprep.subr.mxu0 0.0
  %463 = vmatpush1.msra.mxu0 %v160
  %464 = vmatprep.subr.mxu0 0.0
  %465 = vmatpush1.msra.mxu0 %v161
  %466 = vmatprep.subr.mxu0 0.0
  %467 = vmatpush1.msra.mxu0 %v162
  %468 = vmatprep.subr.mxu0 0.0
  %469 = vmatpush1.msra.mxu0 %v163
  %470 = vmatprep.subr.mxu0 0.0
  %471 = vmatpush1.msra.mxu0 %v164
  %472 = vmatprep.subr.mxu0 0.0
  %473 = vmatpush1.msra.mxu0 %v165
  %474 = vmatprep.subr.mxu0 0.0
  %475 = vmatpush1.msra.mxu0 %v166
  %476 = vmatprep.subr.mxu0 0.0
  %477 = vmatpush1.msra.mxu0 %v167
  %478 = vmatprep.subr.mxu0 0.0
  %479 = vmatpush1.msra.mxu0 %v168
  %480 = vmatprep.subr.mxu0 0.0
  %481 = vmatpush1.msra.mxu0 %v169
  %482 = vmatprep.subr.mxu0 0.0
  %483 = vmatpush1.msra.mxu0 %v170
  %484 = vmatprep.subr.mxu0 0.0
  %485 = vmatpush1.msra.mxu0 %v171
  %486 = vmatprep.subr.mxu0 0.0
  %487 = vmatpush1.msra.mxu0 %v172
  %488 = vmatprep.subr.mxu0 0.0
  %489 = vmatpush1.msra.mxu0 %v173
  %490 = vmatprep.subr.mxu0 0.0
  %491 = vmatpush1.msra.mxu0 %v174
  %492 = vmatprep.subr.mxu0 0.0
  %493 = vmatpush1.msra.mxu0 %v175
  %494 = vmatprep.subr.mxu0 0.0
  %495 = vmatpush1.msra.mxu0 %v176
  %496 = vmatprep.mubr.f32.mxu0 %v24
  %497 = vmatmul.mubr.f32.gmra.mrb[0].mxu0 %v23
  %v498 = vpop.f32.mrb[0].mxu0
  %v499 = vadd.f32 %v414, %v498
  %v500 = vpop.f32.mrb[0].mxu0
  %501 = vmatprep.mubr.f32.mxu0 %v32
  %502 = vmatmul.mubr.f32.gmra.mrb[0].mxu0 %v31
  %v503 = vpop.f32.mrb[0].mxu0
  %v504 = vadd.f32 %v419, %v503
  %v505 = vpop.f32.mrb[0].mxu0
  %506 = vmatprep.mubr.f32.mxu0 %v40
  %507 = vmatmul.mubr.f32.gmra.mrb[0].mxu0 %v39
  %v508 = vpop.f32.mrb[0].mxu0
  %v509 = vadd.f32 %v424, %v508
  %v510 = vpop.f32.mrb[0].mxu0
  %511 = vmatprep.mubr.f32.mxu0 %v48
  %512 = vmatmul.mubr.f32.gmra.mrb[0].mxu0 %v47
  %v513 = vpop.f32.mrb[0].mxu0
  %v514 = vadd.f32 %v429, %v513
  %v515 = vpop.f32.mrb[0].mxu0
  %516 = vdwg.mxu0
  %v517 = vadd.f32 %v499, %v504
  %v518 = vadd.f32 %v517, %v509
  %v519 = vadd.f32 %v518, %v514
  %v520 = vrot.slane %v519, 4
  %v521 = vadd.f32 %v519, %v520
  %v522 = vrot.slane %v521, 2
  %v523 = vadd.f32 %v521, %v522
  %v524 = vrot.slane %v523, 1
  %v525 = vadd.f32 %v523, %v524
  %v526 = vmul.f32 %v499, %v499
  %v527 = vmul.f32 %v504, %v504
  %v528 = vmul.f32 %v509, %v509
  %v529 = vmul.f32 %v514, %v514
  %v530 = vadd.f32 %v526, %v527
  %v531 = vadd.f32 %v530, %v528
  %v532 = vadd.f32 %v531, %v529
  %v533 = vrot.slane %v532, 4
  %v534 = vadd.f32 %v532, %v533
  %v535 = vrot.slane %v534, 2
  %v536 = vadd.f32 %v534, %v535
  %v537 = vrot.slane %v536, 1
  %v538 = vadd.f32 %v536, %v537
  %v539 = vmul.f32 %v525, 0.03125
  %v540 = vmul.f32 %v538, 0.03125
  %v541 = vmul.f32 %v539, %v539
  %v542 = vsub.f32 %v540, %v541
  %v543 = vmax.f32 %v542, 0.0
  %v544 = vadd.f32 %v543, 1e-05
  %v545 = vrsqrt.pop %v544
  %v546 = vld [vmem:[%s2] sm:$0x1]
  %v547 = vmul.f32 %v545, %v546
  %v548 = vld [vmem:[%s3] sm:$0x1]
  %v549 = vmul.f32 %v539, %v547
  %v550 = vsub.f32 %v548, %v549
  %v551 = vlaneseq
  %v552 = vshrl.u32 %v551, 7
  %v553 = vsub.s32 0, %v552
  %v554 = vrot.slane %v547, %v553
  %v555 = vmul.f32 %v499, %v554
  %v556 = vmul.f32 %v504, %v554
  %v557 = vmul.f32 %v509, %v554
  %v558 = vmul.f32 %v514, %v554
  %v560 = vlaneseq
  %v561 = vshrl.u32 %v560, 7
  %v562 = vsub.s32 0, %v561
  %v563 = vrot.slane %v550, %v562
  %v565 = vadd.f32 %v555, %v563
  %v566 = vadd.f32 %v556, %v563
  %v567 = vadd.f32 %v557, %v563
  %v568 = vadd.f32 %v558, %v563
  %vm569 = vcmp.ge.f32.partialorder %v565, 0.0
  %vm570 = vcmp.ge.f32.partialorder %v566, 0.0
  %vm571 = vcmp.ge.f32.partialorder %v567, 0.0
  %vm572 = vcmp.ge.f32.partialorder %v568, 0.0
  %v573 = vmul.f32 %v565, 0.2
  %v574 = vmul.f32 %v566, 0.2
  %v575 = vmul.f32 %v567, 0.2
  %v576 = vmul.f32 %v568, 0.2
  %v577 = vsel %vm569, %v565, %v573
  %v578 = vsel %vm570, %v566, %v574
  %v579 = vsel %vm571, %v567, %v575
  %v580 = vsel %vm572, %v568, %v576
  %581 = vst [vmem:[%s4] sm:$0xff] %v577
  %582 = vst [vmem:[%s4 + $0x8] sm:$0xff] %v578
  %583 = vst [vmem:[%s4 + $0x10] sm:$0xff] %v579
  %584 = vst [vmem:[%s4 + $0x18] sm:$0xff] %v580
  // Predicated region
  $region18: #{autoencoder_forward.7} parent=0 // pred_check
    _
  $region19: #{autoencoder_forward.7} parent=0 // pred_check_branch
    %586 = sbr.rel (0) target = $region21
  $region20: #{autoencoder_forward.7} parent=0 // pred_region
    _
  $region21: #{autoencoder_forward.7} parent=0 // pred_fallthru
    _
  // Predicated region
  $region22: #{autoencoder_forward.7} parent=0 // pred_check
    _
  $region23: #{autoencoder_forward.7} parent=0 // pred_check_branch
    %588 = sbr.rel (0) target = $region25
  $region24: #{autoencoder_forward.7} parent=0 // pred_region
    _
  $region25: #{autoencoder_forward.7} parent=0 // pred_fallthru
    _

// kernel: squeeze.5
$region0: #{squeeze.5}
  %s0 = inlined_call_operand.vmem [shape: f32[1,8,256], index: 0, kind: input, shape index: {}]
  %s1 = inlined_call_operand.vmem [shape: f32[2,2,2,256], index: 1, kind: output, shape index: {}]
  $region1: #{squeeze.5} parent=0
    #allocation0 [shape = 'u8[32768]{0}', space=vmem, size = 0x8000, scoped, tag = 'scoped mem for output reshape']
    %v2 = vld [vmem:[%s0] sm:$0xff]
    %3 = vst [vmem:[#allocation0] sm:$0x3] %v2
    %s4 = scalar_lea.vmem [#allocation0], 14
    %5 = vst [vmem:[%s4] sm:$0xc] %v2
    %s6 = scalar_lea.vmem [#allocation0], 28
    %7 = vst [vmem:[%s6] sm:$0x30] %v2
    %s8 = scalar_lea.vmem [#allocation0], 42
    %9 = vst [vmem:[%s8] sm:$0xc0] %v2
    %s10 = scalar_lea.vmem %s0, 8
    %v11 = vld [vmem:[%s10] sm:$0xff]
    %s12 = scalar_lea.vmem [#allocation0], 8
    %13 = vst [vmem:[%s12] sm:$0x3] %v11
    %s14 = scalar_lea.vmem [#allocation0], 22
    %15 = vst [vmem:[%s14] sm:$0xc] %v11
    %s16 = scalar_lea.vmem [#allocation0], 36
    %17 = vst [vmem:[%s16] sm:$0x30] %v11
    %s18 = scalar_lea.vmem [#allocation0], 50
    %19 = vst [vmem:[%s18] sm:$0xc0] %v11
    %s21 = sshllo.u32 0, 2
    %v23 = vld [vmem:[#allocation0] sm:%s21]
    %s24 = sshllo.u32 0, 2
    %25 = vst [vmem:[%s1] sm:%s24] %v23
    %s26 = scalar_lea.vmem [#allocation0], 8
    %v27 = vld [vmem:[%s26] sm:%s21]
    %s28 = sshllo.u32 0, 2
    %s29 = scalar_lea.vmem %s1, 2
    %30 = vst [vmem:[%s29] sm:%s28] %v27
    %s31 = scalar_lea.vmem [#allocation0], 16
    %v32 = vld [vmem:[%s31] sm:%s21]
    %s33 = sshllo.u32 0, 2
    %s34 = smul.addr 2, 2
    %s35 = scalar_lea.vmem %s1, %s34
    %36 = vst [vmem:[%s35] sm:%s33] %v32
    %s37 = scalar_lea.vmem [#allocation0], 24
    %v38 = vld [vmem:[%s37] sm:%s21]
    %s39 = sshllo.u32 0, 2
    %s40 = smul.addr 2, 3
    %s41 = scalar_lea.vmem %s1, %s40
    %42 = vst [vmem:[%s41] sm:%s39] %v38
    %s43 = scalar_lea.vmem [#allocation0], 32
    %v44 = vld [vmem:[%s43] sm:%s21]
    %s45 = sshllo.u32 0, 2
    %s46 = smul.addr 2, 4
    %s47 = scalar_lea.vmem %s1, %s46
    %48 = vst [vmem:[%s47] sm:%s45] %v44
    %s49 = scalar_lea.vmem [#allocation0], 40
    %v50 = vld [vmem:[%s49] sm:%s21]
    %s51 = sshllo.u32 0, 2
    %s52 = smul.addr 2, 5
    %s53 = scalar_lea.vmem %s1, %s52
    %54 = vst [vmem:[%s53] sm:%s51] %v50
    %s55 = scalar_lea.vmem [#allocation0], 48
    %v56 = vld [vmem:[%s55] sm:%s21]
    %s57 = sshllo.u32 0, 2
    %s58 = smul.addr 2, 6
    %s59 = scalar_lea.vmem %s1, %s58
    %60 = vst [vmem:[%s59] sm:%s57] %v56
    %s61 = scalar_lea.vmem [#allocation0], 56
    %v62 = vld [vmem:[%s61] sm:%s21]
    %s63 = sshllo.u32 0, 2
    %s64 = smul.addr 2, 7
    %s65 = scalar_lea.vmem %s1, %s64
    %66 = vst [vmem:[%s65] sm:%s63] %v62

// kernel: autoencoder_forward.8
$region0: #{autoencoder_forward.8}
  #allocation0 [shape = 'u32[]', space=smem, size = 0x4, offset = 0x4, fixed_abs, tag = 'smem constant byte address 0x4 - core index']
  #allocation1 [shape = 'u32[144,128]{1,0:T(1,128)}', space=vmem, size = 0x12000, scoped, tag = 'internal scratch']
  %s0 = inlined_call_operand.vmem [shape: f32[1,8,2048], index: 0, kind: input, shape index: {}]
  %s1 = inlined_call_operand.vmem [shape: f32[1,2048,256], index: 1, kind: input, shape index: {}]
  %s2 = inlined_call_operand.vmem [shape: f32[1,256], index: 2, kind: input, shape index: {}]
  %s3 = inlined_call_operand.vmem [shape: f32[1,256], index: 3, kind: input, shape index: {}]
  %s4 = inlined_call_operand.vmem [shape: f32[1,8,256], index: 4, kind: output, shape index: {}]
  %s5 = sld [smem:[#allocation0]]
  $region26: #{autoencoder_forward.8} parent=0
    _
  %s7 = ssub.s32 1, %s5
  %s8 = scalar_select 0, %s7, %s5
  // Predicated region
  $region2: #{autoencoder_forward.8} parent=0 // pred_check
    _
  $region3: #{autoencoder_forward.8} parent=0 // pred_check_branch
    %10 = sbr.rel (0) target = $region5
  $region4: #{autoencoder_forward.8} parent=0 // pred_region
    _
  $region5: #{autoencoder_forward.8} parent=0 // pred_fallthru
    _
  // Predicated region
  $region6: #{autoencoder_forward.8} parent=0 // pred_check
    _
  $region7: #{autoencoder_forward.8} parent=0 // pred_check_branch
    %12 = sbr.rel (0) target = $region9
  $region8: #{autoencoder_forward.8} parent=0 // pred_region
    _
  $region9: #{autoencoder_forward.8} parent=0 // pred_fallthru
    _
  // Predicated region
  $region10: #{autoencoder_forward.8} parent=0 // pred_check
    _
  $region11: #{autoencoder_forward.8} parent=0 // pred_check_branch
    %14 = sbr.rel (0) target = $region13
  $region12: #{autoencoder_forward.8} parent=0 // pred_region
    _
  $region13: #{autoencoder_forward.8} parent=0 // pred_fallthru
    _
  // Predicated region
  $region14: #{autoencoder_forward.8} parent=0 // pred_check
    _
  $region15: #{autoencoder_forward.8} parent=0 // pred_check_branch
    %16 = sbr.rel (0) target = $region17
  $region16: #{autoencoder_forward.8} parent=0 // pred_region
    _
  $region17: #{autoencoder_forward.8} parent=0 // pred_fallthru
    _
  %v17 = vld [vmem:[%s0] sm:$0xff]
  %v18 = vld [vmem:[%s0 + $0x8] sm:$0xff]
  %v19 = vld [vmem:[%s0 + $0x10] sm:$0xff]
  %v20 = vld [vmem:[%s0 + $0x18] sm:$0xff]
  %v21 = vld [vmem:[%s0 + $0x20] sm:$0xff]
  %v22 = vld [vmem:[%s0 + $0x28] sm:$0xff]
  %v23 = vld [vmem:[%s0 + $0x30] sm:$0xff]
  %v24 = vld [vmem:[%s0 + $0x38] sm:$0xff]
  %v25 = vld [vmem:[%s0 + $0x40] sm:$0xff]
  %v26 = vld [vmem:[%s0 + $0x48] sm:$0xff]
  %v27 = vld [vmem:[%s0 + $0x50] sm:$0xff]
  %v28 = vld [vmem:[%s0 + $0x58] sm:$0xff]
  %v29 = vld [vmem:[%s0 + $0x60] sm:$0xff]
  %v30 = vld [vmem:[%s0 + $0x68] sm:$0xff]
  %v31 = vld [vmem:[%s0 + $0x70] sm:$0xff]
  %v32 = vld [vmem:[%s0 + $0x78] sm:$0xff]
  %v33 = vld [vmem:[%s1] sm:$0xff]
  %v34 = vld [vmem:[%s1 + $0x8] sm:$0xff]
  %v35 = vld [vmem:[%s1 + $0x10] sm:$0xff]
  %v36 = vld [vmem:[%s1 + $0x18] sm:$0xff]
  %v37 = vld [vmem:[%s1 + $0x20] sm:$0xff]
  %v38 = vld [vmem:[%s1 + $0x28] sm:$0xff]
  %v39 = vld [vmem:[%s1 + $0x30] sm:$0xff]
  %v40 = vld [vmem:[%s1 + $0x38] sm:$0xff]
  %v41 = vld [vmem:[%s1 + $0x40] sm:$0xff]
  %v42 = vld [vmem:[%s1 + $0x48] sm:$0xff]
  %v43 = vld [vmem:[%s1 + $0x50] sm:$0xff]
  %v44 = vld [vmem:[%s1 + $0x58] sm:$0xff]
  %v45 = vld [vmem:[%s1 + $0x60] sm:$0xff]
  %v46 = vld [vmem:[%s1 + $0x68] sm:$0xff]
  %v47 = vld [vmem:[%s1 + $0x70] sm:$0xff]
  %v48 = vld [vmem:[%s1 + $0x78] sm:$0xff]
  %v49 = vld [vmem:[%s1 + $0x80] sm:$0xff]
  %v50 = vld [vmem:[%s1 + $0x88] sm:$0xff]
  %v51 = vld [vmem:[%s1 + $0x90] sm:$0xff]
  %v52 = vld [vmem:[%s1 + $0x98] sm:$0xff]
  %v53 = vld [vmem:[%s1 + $0xa0] sm:$0xff]
  %v54 = vld [vmem:[%s1 + $0xa8] sm:$0xff]
  %v55 = vld [vmem:[%s1 + $0xb0] sm:$0xff]
  %v56 = vld [vmem:[%s1 + $0xb8] sm:$0xff]
  %v57 = vld [vmem:[%s1 + $0xc0] sm:$0xff]
  %v58 = vld [vmem:[%s1 + $0xc8] sm:$0xff]
  %v59 = vld [vmem:[%s1 + $0xd0] sm:$0xff]
  %v60 = vld [vmem:[%s1 + $0xd8] sm:$0xff]
  %v61 = vld [vmem:[%s1 + $0xe0] sm:$0xff]
  %v62 = vld [vmem:[%s1 + $0xe8] sm:$0xff]
  %v63 = vld [vmem:[%s1 + $0xf0] sm:$0xff]
  %v64 = vld [vmem:[%s1 + $0xf8] sm:$0xff]
  %v65 = vld [vmem:[%s1 + $0x100] sm:$0xff]
  %v66 = vld [vmem:[%s1 + $0x108] sm:$0xff]
  %v67 = vld [vmem:[%s1 + $0x110] sm:$0xff]
  %v68 = vld [vmem:[%s1 + $0x118] sm:$0xff]
  %v69 = vld [vmem:[%s1 + $0x120] sm:$0xff]
  %v70 = vld [vmem:[%s1 + $0x128] sm:$0xff]
  %v71 = vld [vmem:[%s1 + $0x130] sm:$0xff]
  %v72 = vld [vmem:[%s1 + $0x138] sm:$0xff]
  %v73 = vld [vmem:[%s1 + $0x140] sm:$0xff]
  %v74 = vld [vmem:[%s1 + $0x148] sm:$0xff]
  %v75 = vld [vmem:[%s1 + $0x150] sm:$0xff]
  %v76 = vld [vmem:[%s1 + $0x158] sm:$0xff]
  %v77 = vld [vmem:[%s1 + $0x160] sm:$0xff]
  %v78 = vld [vmem:[%s1 + $0x168] sm:$0xff]
  %v79 = vld [vmem:[%s1 + $0x170] sm:$0xff]
  %v80 = vld [vmem:[%s1 + $0x178] sm:$0xff]
  %v81 = vld [vmem:[%s1 + $0x180] sm:$0xff]
  %v82 = vld [vmem:[%s1 + $0x188] sm:$0xff]
  %v83 = vld [vmem:[%s1 + $0x190] sm:$0xff]
  %v84 = vld [vmem:[%s1 + $0x198] sm:$0xff]
  %v85 = vld [vmem:[%s1 + $0x1a0] sm:$0xff]
  %v86 = vld [vmem:[%s1 + $0x1a8] sm:$0xff]
  %v87 = vld [vmem:[%s1 + $0x1b0] sm:$0xff]
  %v88 = vld [vmem:[%s1 + $0x1b8] sm:$0xff]
  %v89 = vld [vmem:[%s1 + $0x1c0] sm:$0xff]
  %v90 = vld [vmem:[%s1 + $0x1c8] sm:$0xff]
  %v91 = vld [vmem:[%s1 + $0x1d0] sm:$0xff]
  %v92 = vld [vmem:[%s1 + $0x1d8] sm:$0xff]
  %v93 = vld [vmem:[%s1 + $0x1e0] sm:$0xff]
  %v94 = vld [vmem:[%s1 + $0x1e8] sm:$0xff]
  %v95 = vld [vmem:[%s1 + $0x1f0] sm:$0xff]
  %v96 = vld [vmem:[%s1 + $0x1f8] sm:$0xff]
  %v97 = vld [vmem:[%s1 + $0x200] sm:$0xff]
  %v98 = vld [vmem:[%s1 + $0x208] sm:$0xff]
  %v99 = vld [vmem:[%s1 + $0x210] sm:$0xff]
  %v100 = vld [vmem:[%s1 + $0x218] sm:$0xff]
  %v101 = vld [vmem:[%s1 + $0x220] sm:$0xff]
  %v102 = vld [vmem:[%s1 + $0x228] sm:$0xff]
  %v103 = vld [vmem:[%s1 + $0x230] sm:$0xff]
  %v104 = vld [vmem:[%s1 + $0x238] sm:$0xff]
  %v105 = vld [vmem:[%s1 + $0x240] sm:$0xff]
  %v106 = vld [vmem:[%s1 + $0x248] sm:$0xff]
  %v107 = vld [vmem:[%s1 + $0x250] sm:$0xff]
  %v108 = vld [vmem:[%s1 + $0x258] sm:$0xff]
  %v109 = vld [vmem:[%s1 + $0x260] sm:$0xff]
  %v110 = vld [vmem:[%s1 + $0x268] sm:$0xff]
  %v111 = vld [vmem:[%s1 + $0x270] sm:$0xff]
  %v112 = vld [vmem:[%s1 + $0x278] sm:$0xff]
  %v113 = vld [vmem:[%s1 + $0x280] sm:$0xff]
  %v114 = vld [vmem:[%s1 + $0x288] sm:$0xff]
  %v115 = vld [vmem:[%s1 + $0x290] sm:$0xff]
  %v116 = vld [vmem:[%s1 + $0x298] sm:$0xff]
  %v117 = vld [vmem:[%s1 + $0x2a0] sm:$0xff]
  %v118 = vld [vmem:[%s1 + $0x2a8] sm:$0xff]
  %v119 = vld [vmem:[%s1 + $0x2b0] sm:$0xff]
  %v120 = vld [vmem:[%s1 + $0x2b8] sm:$0xff]
  %v121 = vld [vmem:[%s1 + $0x2c0] sm:$0xff]
  %v122 = vld [vmem:[%s1 + $0x2c8] sm:$0xff]
  %v123 = vld [vmem:[%s1 + $0x2d0] sm:$0xff]
  %v124 = vld [vmem:[%s1 + $0x2d8] sm:$0xff]
  %v125 = vld [vmem:[%s1 + $0x2e0] sm:$0xff]
  %v126 = vld [vmem:[%s1 + $0x2e8] sm:$0xff]
  %v127 = vld [vmem:[%s1 + $0x2f0] sm:$0xff]
  %v128 = vld [vmem:[%s1 + $0x2f8] sm:$0xff]
  %v129 = vld [vmem:[%s1 + $0x300] sm:$0xff]
  %v130 = vld [vmem:[%s1 + $0x308] sm:$0xff]
  %v131 = vld [vmem:[%s1 + $0x310] sm:$0xff]
  %v132 = vld [vmem:[%s1 + $0x318] sm:$0xff]
  %v133 = vld [vmem:[%s1 + $0x320] sm:$0xff]
  %v134 = vld [vmem:[%s1 + $0x328] sm:$0xff]
  %v135 = vld [vmem:[%s1 + $0x330] sm:$0xff]
  %v136 = vld [vmem:[%s1 + $0x338] sm:$0xff]
  %v137 = vld [vmem:[%s1 + $0x340] sm:$0xff]
  %v138 = vld [vmem:[%s1 + $0x348] sm:$0xff]
  %v139 = vld [vmem:[%s1 + $0x350] sm:$0xff]
  %v140 = vld [vmem:[%s1 + $0x358] sm:$0xff]
  %v141 = vld [vmem:[%s1 + $0x360] sm:$0xff]
  %v142 = vld [vmem:[%s1 + $0x368] sm:$0xff]
  %v143 = vld [vmem:[%s1 + $0x370] sm:$0xff]
  %v144 = vld [vmem:[%s1 + $0x378] sm:$0xff]
  %v145 = vld [vmem:[%s1 + $0x380] sm:$0xff]
  %v146 = vld [vmem:[%s1 + $0x388] sm:$0xff]
  %v147 = vld [vmem:[%s1 + $0x390] sm:$0xff]
  %v148 = vld [vmem:[%s1 + $0x398] sm:$0xff]
  %v149 = vld [vmem:[%s1 + $0x3a0] sm:$0xff]
  %v150 = vld [vmem:[%s1 + $0x3a8] sm:$0xff]
  %v151 = vld [vmem:[%s1 + $0x3b0] sm:$0xff]
  %v152 = vld [vmem:[%s1 + $0x3b8] sm:$0xff]
  %v153 = vld [vmem:[%s1 + $0x3c0] sm:$0xff]
  %v154 = vld [vmem:[%s1 + $0x3c8] sm:$0xff]
  %v155 = vld [vmem:[%s1 + $0x3d0] sm:$0xff]
  %v156 = vld [vmem:[%s1 + $0x3d8] sm:$0xff]
  %v157 = vld [vmem:[%s1 + $0x3e0] sm:$0xff]
  %v158 = vld [vmem:[%s1 + $0x3e8] sm:$0xff]
  %v159 = vld [vmem:[%s1 + $0x3f0] sm:$0xff]
  %v160 = vld [vmem:[%s1 + $0x3f8] sm:$0xff]
  %v161 = vld [vmem:[%s1 + $0x400] sm:$0xff]
  %v162 = vld [vmem:[%s1 + $0x408] sm:$0xff]
  %v163 = vld [vmem:[%s1 + $0x410] sm:$0xff]
  %v164 = vld [vmem:[%s1 + $0x418] sm:$0xff]
  %v165 = vld [vmem:[%s1 + $0x420] sm:$0xff]
  %v166 = vld [vmem:[%s1 + $0x428] sm:$0xff]
  %v167 = vld [vmem:[%s1 + $0x430] sm:$0xff]
  %v168 = vld [vmem:[%s1 + $0x438] sm:$0xff]
  %v169 = vld [vmem:[%s1 + $0x440] sm:$0xff]
  %v170 = vld [vmem:[%s1 + $0x448] sm:$0xff]
  %v171 = vld [vmem:[%s1 + $0x450] sm:$0xff]
  %v172 = vld [vmem:[%s1 + $0x458] sm:$0xff]
  %v173 = vld [vmem:[%s1 + $0x460] sm:$0xff]
  %v174 = vld [vmem:[%s1 + $0x468] sm:$0xff]
  %v175 = vld [vmem:[%s1 + $0x470] sm:$0xff]
  %v176 = vld [vmem:[%s1 + $0x478] sm:$0xff]
  %v177 = vld [vmem:[%s1 + $0x480] sm:$0xff]
  %v178 = vld [vmem:[%s1 + $0x488] sm:$0xff]
  %v179 = vld [vmem:[%s1 + $0x490] sm:$0xff]
  %v180 = vld [vmem:[%s1 + $0x498] sm:$0xff]
  %v181 = vld [vmem:[%s1 + $0x4a0] sm:$0xff]
  %v182 = vld [vmem:[%s1 + $0x4a8] sm:$0xff]
  %v183 = vld [vmem:[%s1 + $0x4b0] sm:$0xff]
  %v184 = vld [vmem:[%s1 + $0x4b8] sm:$0xff]
  %v185 = vld [vmem:[%s1 + $0x4c0] sm:$0xff]
  %v186 = vld [vmem:[%s1 + $0x4c8] sm:$0xff]
  %v187 = vld [vmem:[%s1 + $0x4d0] sm:$0xff]
  %v188 = vld [vmem:[%s1 + $0x4d8] sm:$0xff]
  %v189 = vld [vmem:[%s1 + $0x4e0] sm:$0xff]
  %v190 = vld [vmem:[%s1 + $0x4e8] sm:$0xff]
  %v191 = vld [vmem:[%s1 + $0x4f0] sm:$0xff]
  %v192 = vld [vmem:[%s1 + $0x4f8] sm:$0xff]
  %v193 = vld [vmem:[%s1 + $0x500] sm:$0xff]
  %v194 = vld [vmem:[%s1 + $0x508] sm:$0xff]
  %v195 = vld [vmem:[%s1 + $0x510] sm:$0xff]
  %v196 = vld [vmem:[%s1 + $0x518] sm:$0xff]
  %v197 = vld [vmem:[%s1 + $0x520] sm:$0xff]
  %v198 = vld [vmem:[%s1 + $0x528] sm:$0xff]
  %v199 = vld [vmem:[%s1 + $0x530] sm:$0xff]
  %v200 = vld [vmem:[%s1 + $0x538] sm:$0xff]
  %v201 = vld [vmem:[%s1 + $0x540] sm:$0xff]
  %v202 = vld [vmem:[%s1 + $0x548] sm:$0xff]
  %v203 = vld [vmem:[%s1 + $0x550] sm:$0xff]
  %v204 = vld [vmem:[%s1 + $0x558] sm:$0xff]
  %v205 = vld [vmem:[%s1 + $0x560] sm:$0xff]
  %v206 = vld [vmem:[%s1 + $0x568] sm:$0xff]
  %v207 = vld [vmem:[%s1 + $0x570] sm:$0xff]
  %v208 = vld [vmem:[%s1 + $0x578] sm:$0xff]
  %v209 = vld [vmem:[%s1 + $0x580] sm:$0xff]
  %v210 = vld [vmem:[%s1 + $0x588] sm:$0xff]
  %v211 = vld [vmem:[%s1 + $0x590] sm:$0xff]
  %v212 = vld [vmem:[%s1 + $0x598] sm:$0xff]
  %v213 = vld [vmem:[%s1 + $0x5a0] sm:$0xff]
  %v214 = vld [vmem:[%s1 + $0x5a8] sm:$0xff]
  %v215 = vld [vmem:[%s1 + $0x5b0] sm:$0xff]
  %v216 = vld [vmem:[%s1 + $0x5b8] sm:$0xff]
  %v217 = vld [vmem:[%s1 + $0x5c0] sm:$0xff]
  %v218 = vld [vmem:[%s1 + $0x5c8] sm:$0xff]
  %v219 = vld [vmem:[%s1 + $0x5d0] sm:$0xff]
  %v220 = vld [vmem:[%s1 + $0x5d8] sm:$0xff]
  %v221 = vld [vmem:[%s1 + $0x5e0] sm:$0xff]
  %v222 = vld [vmem:[%s1 + $0x5e8] sm:$0xff]
  %v223 = vld [vmem:[%s1 + $0x5f0] sm:$0xff]
  %v224 = vld [vmem:[%s1 + $0x5f8] sm:$0xff]
  %v225 = vld [vmem:[%s1 + $0x600] sm:$0xff]
  %v226 = vld [vmem:[%s1 + $0x608] sm:$0xff]
  %v227 = vld [vmem:[%s1 + $0x610] sm:$0xff]
  %v228 = vld [vmem:[%s1 + $0x618] sm:$0xff]
  %v229 = vld [vmem:[%s1 + $0x620] sm:$0xff]
  %v230 = vld [vmem:[%s1 + $0x628] sm:$0xff]
  %v231 = vld [vmem:[%s1 + $0x630] sm:$0xff]
  %v232 = vld [vmem:[%s1 + $0x638] sm:$0xff]
  %v233 = vld [vmem:[%s1 + $0x640] sm:$0xff]
  %v234 = vld [vmem:[%s1 + $0x648] sm:$0xff]
  %v235 = vld [vmem:[%s1 + $0x650] sm:$0xff]
  %v236 = vld [vmem:[%s1 + $0x658] sm:$0xff]
  %v237 = vld [vmem:[%s1 + $0x660] sm:$0xff]
  %v238 = vld [vmem:[%s1 + $0x668] sm:$0xff]
  %v239 = vld [vmem:[%s1 + $0x670] sm:$0xff]
  %v240 = vld [vmem:[%s1 + $0x678] sm:$0xff]
  %v241 = vld [vmem:[%s1 + $0x680] sm:$0xff]
  %v242 = vld [vmem:[%s1 + $0x688] sm:$0xff]
  %v243 = vld [vmem:[%s1 + $0x690] sm:$0xff]
  %v244 = vld [vmem:[%s1 + $0x698] sm:$0xff]
  %v245 = vld [vmem:[%s1 + $0x6a0] sm:$0xff]
  %v246 = vld [vmem:[%s1 + $0x6a8] sm:$0xff]
  %v247 = vld [vmem:[%s1 + $0x6b0] sm:$0xff]
  %v248 = vld [vmem:[%s1 + $0x6b8] sm:$0xff]
  %v249 = vld [vmem:[%s1 + $0x6c0] sm:$0xff]
  %v250 = vld [vmem:[%s1 + $0x6c8] sm:$0xff]
  %v251 = vld [vmem:[%s1 + $0x6d0] sm:$0xff]
  %v252 = vld [vmem:[%s1 + $0x6d8] sm:$0xff]
  %v253 = vld [vmem:[%s1 + $0x6e0] sm:$0xff]
  %v254 = vld [vmem:[%s1 + $0x6e8] sm:$0xff]
  %v255 = vld [vmem:[%s1 + $0x6f0] sm:$0xff]
  %v256 = vld [vmem:[%s1 + $0x6f8] sm:$0xff]
  %v257 = vld [vmem:[%s1 + $0x700] sm:$0xff]
  %v258 = vld [vmem:[%s1 + $0x708] sm:$0xff]
  %v259 = vld [vmem:[%s1 + $0x710] sm:$0xff]
  %v260 = vld [vmem:[%s1 + $0x718] sm:$0xff]
  %v261 = vld [vmem:[%s1 + $0x720] sm:$0xff]
  %v262 = vld [vmem:[%s1 + $0x728] sm:$0xff]
  %v263 = vld [vmem:[%s1 + $0x730] sm:$0xff]
  %v264 = vld [vmem:[%s1 + $0x738] sm:$0xff]
  %v265 = vld [vmem:[%s1 + $0x740] sm:$0xff]
  %v266 = vld [vmem:[%s1 + $0x748] sm:$0xff]
  %v267 = vld [vmem:[%s1 + $0x750] sm:$0xff]
  %v268 = vld [vmem:[%s1 + $0x758] sm:$0xff]
  %v269 = vld [vmem:[%s1 + $0x760] sm:$0xff]
  %v270 = vld [vmem:[%s1 + $0x768] sm:$0xff]
  %v271 = vld [vmem:[%s1 + $0x770] sm:$0xff]
  %v272 = vld [vmem:[%s1 + $0x778] sm:$0xff]
  %v273 = vld [vmem:[%s1 + $0x780] sm:$0xff]
  %v274 = vld [vmem:[%s1 + $0x788] sm:$0xff]
  %v275 = vld [vmem:[%s1 + $0x790] sm:$0xff]
  %v276 = vld [vmem:[%s1 + $0x798] sm:$0xff]
  %v277 = vld [vmem:[%s1 + $0x7a0] sm:$0xff]
  %v278 = vld [vmem:[%s1 + $0x7a8] sm:$0xff]
  %v279 = vld [vmem:[%s1 + $0x7b0] sm:$0xff]
  %v280 = vld [vmem:[%s1 + $0x7b8] sm:$0xff]
  %v281 = vld [vmem:[%s1 + $0x7c0] sm:$0xff]
  %v282 = vld [vmem:[%s1 + $0x7c8] sm:$0xff]
  %v283 = vld [vmem:[%s1 + $0x7d0] sm:$0xff]
  %v284 = vld [vmem:[%s1 + $0x7d8] sm:$0xff]
  %v285 = vld [vmem:[%s1 + $0x7e0] sm:$0xff]
  %v286 = vld [vmem:[%s1 + $0x7e8] sm:$0xff]
  %v287 = vld [vmem:[%s1 + $0x7f0] sm:$0xff]
  %v288 = vld [vmem:[%s1 + $0x7f8] sm:$0xff]
  %v289 = vld [vmem:[%s1 + $0x800] sm:$0xff]
  %v290 = vld [vmem:[%s1 + $0x808] sm:$0xff]
  %v291 = vld [vmem:[%s1 + $0x810] sm:$0xff]
  %v292 = vld [vmem:[%s1 + $0x818] sm:$0xff]
  %v293 = vld [vmem:[%s1 + $0x820] sm:$0xff]
  %v294 = vld [vmem:[%s1 + $0x828] sm:$0xff]
  %v295 = vld [vmem:[%s1 + $0x830] sm:$0xff]
  %v296 = vld [vmem:[%s1 + $0x838] sm:$0xff]
  %v297 = vld [vmem:[%s1 + $0x840] sm:$0xff]
  %v298 = vld [vmem:[%s1 + $0x848] sm:$0xff]
  %v299 = vld [vmem:[%s1 + $0x850] sm:$0xff]
  %v300 = vld [vmem:[%s1 + $0x858] sm:$0xff]
  %v301 = vld [vmem:[%s1 + $0x860] sm:$0xff]
  %v302 = vld [vmem:[%s1 + $0x868] sm:$0xff]
  %v303 = vld [vmem:[%s1 + $0x870] sm:$0xff]
  %v304 = vld [vmem:[%s1 + $0x878] sm:$0xff]
  %v305 = vld [vmem:[%s1 + $0x880] sm:$0xff]
  %v306 = vld [vmem:[%s1 + $0x888] sm:$0xff]
  %v307 = vld [vmem:[%s1 + $0x890] sm:$0xff]
  %v308 = vld [vmem:[%s1 + $0x898] sm:$0xff]
  %v309 = vld [vmem:[%s1 + $0x8a0] sm:$0xff]
  %v310 = vld [vmem:[%s1 + $0x8a8] sm:$0xff]
  %v311 = vld [vmem:[%s1 + $0x8b0] sm:$0xff]
  %v312 = vld [vmem:[%s1 + $0x8b8] sm:$0xff]
  %v313 = vld [vmem:[%s1 + $0x8c0] sm:$0xff]
  %v314 = vld [vmem:[%s1 + $0x8c8] sm:$0xff]
  %v315 = vld [vmem:[%s1 + $0x8d0] sm:$0xff]
  %v316 = vld [vmem:[%s1 + $0x8d8] sm:$0xff]
  %v317 = vld [vmem:[%s1 + $0x8e0] sm:$0xff]
  %v318 = vld [vmem:[%s1 + $0x8e8] sm:$0xff]
  %v319 = vld [vmem:[%s1 + $0x8f0] sm:$0xff]
  %v320 = vld [vmem:[%s1 + $0x8f8] sm:$0xff]
  %v321 = vld [vmem:[%s1 + $0x900] sm:$0xff]
  %v322 = vld [vmem:[%s1 + $0x908] sm:$0xff]
  %v323 = vld [vmem:[%s1 + $0x910] sm:$0xff]
  %v324 = vld [vmem:[%s1 + $0x918] sm:$0xff]
  %v325 = vld [vmem:[%s1 + $0x920] sm:$0xff]
  %v326 = vld [vmem:[%s1 + $0x928] sm:$0xff]
  %v327 = vld [vmem:[%s1 + $0x930] sm:$0xff]
  %v328 = vld [vmem:[%s1 + $0x938] sm:$0xff]
  %v329 = vld [vmem:[%s1 + $0x940] sm:$0xff]
  %v330 = vld [vmem:[%s1 + $0x948] sm:$0xff]
  %v331 = vld [vmem:[%s1 + $0x950] sm:$0xff]
  %v332 = vld [vmem:[%s1 + $0x958] sm:$0xff]
  %v333 = vld [vmem:[%s1 + $0x960] sm:$0xff]
  %v334 = vld [vmem:[%s1 + $0x968] sm:$0xff]
  %v335 = vld [vmem:[%s1 + $0x970] sm:$0xff]
  %v336 = vld [vmem:[%s1 + $0x978] sm:$0xff]
  %v337 = vld [vmem:[%s1 + $0x980] sm:$0xff]
  %v338 = vld [vmem:[%s1 + $0x988] sm:$0xff]
  %v339 = vld [vmem:[%s1 + $0x990] sm:$0xff]
  %v340 = vld [vmem:[%s1 + $0x998] sm:$0xff]
  %v341 = vld [vmem:[%s1 + $0x9a0] sm:$0xff]
  %v342 = vld [vmem:[%s1 + $0x9a8] sm:$0xff]
  %v343 = vld [vmem:[%s1 + $0x9b0] sm:$0xff]
  %v344 = vld [vmem:[%s1 + $0x9b8] sm:$0xff]
  %v345 = vld [vmem:[%s1 + $0x9c0] sm:$0xff]
  %v346 = vld [vmem:[%s1 + $0x9c8] sm:$0xff]
  %v347 = vld [vmem:[%s1 + $0x9d0] sm:$0xff]
  %v348 = vld [vmem:[%s1 + $0x9d8] sm:$0xff]
  %v349 = vld [vmem:[%s1 + $0x9e0] sm:$0xff]
  %v350 = vld [vmem:[%s1 + $0x9e8] sm:$0xff]
  %v351 = vld [vmem:[%s1 + $0x9f0] sm:$0xff]
  %v352 = vld [vmem:[%s1 + $0x9f8] sm:$0xff]
  %v353 = vld [vmem:[%s1 + $0xa00] sm:$0xff]
  %v354 = vld [vmem:[%s1 + $0xa08] sm:$0xff]
  %v355 = vld [vmem:[%s1 + $0xa10] sm:$0xff]
  %v356 = vld [vmem:[%s1 + $0xa18] sm:$0xff]
  %v357 = vld [vmem:[%s1 + $0xa20] sm:$0xff]
  %v358 = vld [vmem:[%s1 + $0xa28] sm:$0xff]
  %v359 = vld [vmem:[%s1 + $0xa30] sm:$0xff]
  %v360 = vld [vmem:[%s1 + $0xa38] sm:$0xff]
  %v361 = vld [vmem:[%s1 + $0xa40] sm:$0xff]
  %v362 = vld [vmem:[%s1 + $0xa48] sm:$0xff]
  %v363 = vld [vmem:[%s1 + $0xa50] sm:$0xff]
  %v364 = vld [vmem:[%s1 + $0xa58] sm:$0xff]
  %v365 = vld [vmem:[%s1 + $0xa60] sm:$0xff]
  %v366 = vld [vmem:[%s1 + $0xa68] sm:$0xff]
  %v367 = vld [vmem:[%s1 + $0xa70] sm:$0xff]
  %v368 = vld [vmem:[%s1 + $0xa78] sm:$0xff]
  %v369 = vld [vmem:[%s1 + $0xa80] sm:$0xff]
  %v370 = vld [vmem:[%s1 + $0xa88] sm:$0xff]
  %v371 = vld [vmem:[%s1 + $0xa90] sm:$0xff]
  %v372 = vld [vmem:[%s1 + $0xa98] sm:$0xff]
  %v373 = vld [vmem:[%s1 + $0xaa0] sm:$0xff]
  %v374 = vld [vmem:[%s1 + $0xaa8] sm:$0xff]
  %v375 = vld [vmem:[%s1 + $0xab0] sm:$0xff]
  %v376 = vld [vmem:[%s1 + $0xab8] sm:$0xff]
  %v377 = vld [vmem:[%s1 + $0xac0] sm:$0xff]
  %v378 = vld [vmem:[%s1 + $0xac8] sm:$0xff]
  %v379 = vld [vmem:[%s1 + $0xad0] sm:$0xff]
  %v380 = vld [vmem:[%s1 + $0xad8] sm:$0xff]
  %v381 = vld [vmem:[%s1 + $0xae0] sm:$0xff]
  %v382 = vld [vmem:[%s1 + $0xae8] sm:$0xff]
  %v383 = vld [vmem:[%s1 + $0xaf0] sm:$0xff]
  %v384 = vld [vmem:[%s1 + $0xaf8] sm:$0xff]
  %v385 = vld [vmem:[%s1 + $0xb00] sm:$0xff]
  %v386 = vld [vmem:[%s1 + $0xb08] sm:$0xff]
  %v387 = vld [vmem:[%s1 + $0xb10] sm:$0xff]
  %v388 = vld [vmem:[%s1 + $0xb18] sm:$0xff]
  %v389 = vld [vmem:[%s1 + $0xb20] sm:$0xff]
  %v390 = vld [vmem:[%s1 + $0xb28] sm:$0xff]
  %v391 = vld [vmem:[%s1 + $0xb30] sm:$0xff]
  %v392 = vld [vmem:[%s1 + $0xb38] sm:$0xff]
  %v393 = vld [vmem:[%s1 + $0xb40] sm:$0xff]
  %v394 = vld [vmem:[%s1 + $0xb48] sm:$0xff]
  %v395 = vld [vmem:[%s1 + $0xb50] sm:$0xff]
  %v396 = vld [vmem:[%s1 + $0xb58] sm:$0xff]
  %v397 = vld [vmem:[%s1 + $0xb60] sm:$0xff]
  %v398 = vld [vmem:[%s1 + $0xb68] sm:$0xff]
  %v399 = vld [vmem:[%s1 + $0xb70] sm:$0xff]
  %v400 = vld [vmem:[%s1 + $0xb78] sm:$0xff]
  %v401 = vld [vmem:[%s1 + $0xb80] sm:$0xff]
  %v402 = vld [vmem:[%s1 + $0xb88] sm:$0xff]
  %v403 = vld [vmem:[%s1 + $0xb90] sm:$0xff]
  %v404 = vld [vmem:[%s1 + $0xb98] sm:$0xff]
  %v405 = vld [vmem:[%s1 + $0xba0] sm:$0xff]
  %v406 = vld [vmem:[%s1 + $0xba8] sm:$0xff]
  %v407 = vld [vmem:[%s1 + $0xbb0] sm:$0xff]
  %v408 = vld [vmem:[%s1 + $0xbb8] sm:$0xff]
  %v409 = vld [vmem:[%s1 + $0xbc0] sm:$0xff]
  %v410 = vld [vmem:[%s1 + $0xbc8] sm:$0xff]
  %v411 = vld [vmem:[%s1 + $0xbd0] sm:$0xff]
  %v412 = vld [vmem:[%s1 + $0xbd8] sm:$0xff]
  %v413 = vld [vmem:[%s1 + $0xbe0] sm:$0xff]
  %v414 = vld [vmem:[%s1 + $0xbe8] sm:$0xff]
  %v415 = vld [vmem:[%s1 + $0xbf0] sm:$0xff]
  %v416 = vld [vmem:[%s1 + $0xbf8] sm:$0xff]
  %v417 = vld [vmem:[%s1 + $0xc00] sm:$0xff]
  %v418 = vld [vmem:[%s1 + $0xc08] sm:$0xff]
  %v419 = vld [vmem:[%s1 + $0xc10] sm:$0xff]
  %v420 = vld [vmem:[%s1 + $0xc18] sm:$0xff]
  %v421 = vld [vmem:[%s1 + $0xc20] sm:$0xff]
  %v422 = vld [vmem:[%s1 + $0xc28] sm:$0xff]
  %v423 = vld [vmem:[%s1 + $0xc30] sm:$0xff]
  %v424 = vld [vmem:[%s1 + $0xc38] sm:$0xff]
  %v425 = vld [vmem:[%s1 + $0xc40] sm:$0xff]
  %v426 = vld [vmem:[%s1 + $0xc48] sm:$0xff]
  %v427 = vld [vmem:[%s1 + $0xc50] sm:$0xff]
  %v428 = vld [vmem:[%s1 + $0xc58] sm:$0xff]
  %v429 = vld [vmem:[%s1 + $0xc60] sm:$0xff]
  %v430 = vld [vmem:[%s1 + $0xc68] sm:$0xff]
  %v431 = vld [vmem:[%s1 + $0xc70] sm:$0xff]
  %v432 = vld [vmem:[%s1 + $0xc78] sm:$0xff]
  %v433 = vld [vmem:[%s1 + $0xc80] sm:$0xff]
  %v434 = vld [vmem:[%s1 + $0xc88] sm:$0xff]
  %v435 = vld [vmem:[%s1 + $0xc90] sm:$0xff]
  %v436 = vld [vmem:[%s1 + $0xc98] sm:$0xff]
  %v437 = vld [vmem:[%s1 + $0xca0] sm:$0xff]
  %v438 = vld [vmem:[%s1 + $0xca8] sm:$0xff]
  %v439 = vld [vmem:[%s1 + $0xcb0] sm:$0xff]
  %v440 = vld [vmem:[%s1 + $0xcb8] sm:$0xff]
  %v441 = vld [vmem:[%s1 + $0xcc0] sm:$0xff]
  %v442 = vld [vmem:[%s1 + $0xcc8] sm:$0xff]
  %v443 = vld [vmem:[%s1 + $0xcd0] sm:$0xff]
  %v444 = vld [vmem:[%s1 + $0xcd8] sm:$0xff]
  %v445 = vld [vmem:[%s1 + $0xce0] sm:$0xff]
  %v446 = vld [vmem:[%s1 + $0xce8] sm:$0xff]
  %v447 = vld [vmem:[%s1 + $0xcf0] sm:$0xff]
  %v448 = vld [vmem:[%s1 + $0xcf8] sm:$0xff]
  %v449 = vld [vmem:[%s1 + $0xd00] sm:$0xff]
  %v450 = vld [vmem:[%s1 + $0xd08] sm:$0xff]
  %v451 = vld [vmem:[%s1 + $0xd10] sm:$0xff]
  %v452 = vld [vmem:[%s1 + $0xd18] sm:$0xff]
  %v453 = vld [vmem:[%s1 + $0xd20] sm:$0xff]
  %v454 = vld [vmem:[%s1 + $0xd28] sm:$0xff]
  %v455 = vld [vmem:[%s1 + $0xd30] sm:$0xff]
  %v456 = vld [vmem:[%s1 + $0xd38] sm:$0xff]
  %v457 = vld [vmem:[%s1 + $0xd40] sm:$0xff]
  %v458 = vld [vmem:[%s1 + $0xd48] sm:$0xff]
  %v459 = vld [vmem:[%s1 + $0xd50] sm:$0xff]
  %v460 = vld [vmem:[%s1 + $0xd58] sm:$0xff]
  %v461 = vld [vmem:[%s1 + $0xd60] sm:$0xff]
  %v462 = vld [vmem:[%s1 + $0xd68] sm:$0xff]
  %v463 = vld [vmem:[%s1 + $0xd70] sm:$0xff]
  %v464 = vld [vmem:[%s1 + $0xd78] sm:$0xff]
  %v465 = vld [vmem:[%s1 + $0xd80] sm:$0xff]
  %v466 = vld [vmem:[%s1 + $0xd88] sm:$0xff]
  %v467 = vld [vmem:[%s1 + $0xd90] sm:$0xff]
  %v468 = vld [vmem:[%s1 + $0xd98] sm:$0xff]
  %v469 = vld [vmem:[%s1 + $0xda0] sm:$0xff]
  %v470 = vld [vmem:[%s1 + $0xda8] sm:$0xff]
  %v471 = vld [vmem:[%s1 + $0xdb0] sm:$0xff]
  %v472 = vld [vmem:[%s1 + $0xdb8] sm:$0xff]
  %v473 = vld [vmem:[%s1 + $0xdc0] sm:$0xff]
  %v474 = vld [vmem:[%s1 + $0xdc8] sm:$0xff]
  %v475 = vld [vmem:[%s1 + $0xdd0] sm:$0xff]
  %v476 = vld [vmem:[%s1 + $0xdd8] sm:$0xff]
  %v477 = vld [vmem:[%s1 + $0xde0] sm:$0xff]
  %v478 = vld [vmem:[%s1 + $0xde8] sm:$0xff]
  %v479 = vld [vmem:[%s1 + $0xdf0] sm:$0xff]
  %v480 = vld [vmem:[%s1 + $0xdf8] sm:$0xff]
  %v481 = vld [vmem:[%s1 + $0xe00] sm:$0xff]
  %v482 = vld [vmem:[%s1 + $0xe08] sm:$0xff]
  %v483 = vld [vmem:[%s1 + $0xe10] sm:$0xff]
  %v484 = vld [vmem:[%s1 + $0xe18] sm:$0xff]
  %v485 = vld [vmem:[%s1 + $0xe20] sm:$0xff]
  %v486 = vld [vmem:[%s1 + $0xe28] sm:$0xff]
  %v487 = vld [vmem:[%s1 + $0xe30] sm:$0xff]
  %v488 = vld [vmem:[%s1 + $0xe38] sm:$0xff]
  %v489 = vld [vmem:[%s1 + $0xe40] sm:$0xff]
  %v490 = vld [vmem:[%s1 + $0xe48] sm:$0xff]
  %v491 = vld [vmem:[%s1 + $0xe50] sm:$0xff]
  %v492 = vld [vmem:[%s1 + $0xe58] sm:$0xff]
  %v493 = vld [vmem:[%s1 + $0xe60] sm:$0xff]
  %v494 = vld [vmem:[%s1 + $0xe68] sm:$0xff]
  %v495 = vld [vmem:[%s1 + $0xe70] sm:$0xff]
  %v496 = vld [vmem:[%s1 + $0xe78] sm:$0xff]
  %v497 = vld [vmem:[%s1 + $0xe80] sm:$0xff]
  %v498 = vld [vmem:[%s1 + $0xe88] sm:$0xff]
  %v499 = vld [vmem:[%s1 + $0xe90] sm:$0xff]
  %v500 = vld [vmem:[%s1 + $0xe98] sm:$0xff]
  %v501 = vld [vmem:[%s1 + $0xea0] sm:$0xff]
  %v502 = vld [vmem:[%s1 + $0xea8] sm:$0xff]
  %v503 = vld [vmem:[%s1 + $0xeb0] sm:$0xff]
  %v504 = vld [vmem:[%s1 + $0xeb8] sm:$0xff]
  %v505 = vld [vmem:[%s1 + $0xec0] sm:$0xff]
  %v506 = vld [vmem:[%s1 + $0xec8] sm:$0xff]
  %v507 = vld [vmem:[%s1 + $0xed0] sm:$0xff]
  %v508 = vld [vmem:[%s1 + $0xed8] sm:$0xff]
  %v509 = vld [vmem:[%s1 + $0xee0] sm:$0xff]
  %v510 = vld [vmem:[%s1 + $0xee8] sm:$0xff]
  %v511 = vld [vmem:[%s1 + $0xef0] sm:$0xff]
  %v512 = vld [vmem:[%s1 + $0xef8] sm:$0xff]
  %v513 = vld [vmem:[%s1 + $0xf00] sm:$0xff]
  %v514 = vld [vmem:[%s1 + $0xf08] sm:$0xff]
  %v515 = vld [vmem:[%s1 + $0xf10] sm:$0xff]
  %v516 = vld [vmem:[%s1 + $0xf18] sm:$0xff]
  %v517 = vld [vmem:[%s1 + $0xf20] sm:$0xff]
  %v518 = vld [vmem:[%s1 + $0xf28] sm:$0xff]
  %v519 = vld [vmem:[%s1 + $0xf30] sm:$0xff]
  %v520 = vld [vmem:[%s1 + $0xf38] sm:$0xff]
  %v521 = vld [vmem:[%s1 + $0xf40] sm:$0xff]
  %v522 = vld [vmem:[%s1 + $0xf48] sm:$0xff]
  %v523 = vld [vmem:[%s1 + $0xf50] sm:$0xff]
  %v524 = vld [vmem:[%s1 + $0xf58] sm:$0xff]
  %v525 = vld [vmem:[%s1 + $0xf60] sm:$0xff]
  %v526 = vld [vmem:[%s1 + $0xf68] sm:$0xff]
  %v527 = vld [vmem:[%s1 + $0xf70] sm:$0xff]
  %v528 = vld [vmem:[%s1 + $0xf78] sm:$0xff]
  %v529 = vld [vmem:[%s1 + $0xf80] sm:$0xff]
  %v530 = vld [vmem:[%s1 + $0xf88] sm:$0xff]
  %v531 = vld [vmem:[%s1 + $0xf90] sm:$0xff]
  %v532 = vld [vmem:[%s1 + $0xf98] sm:$0xff]
  %v533 = vld [vmem:[%s1 + $0xfa0] sm:$0xff]
  %v534 = vld [vmem:[%s1 + $0xfa8] sm:$0xff]
  %v535 = vld [vmem:[%s1 + $0xfb0] sm:$0xff]
  %v536 = vld [vmem:[%s1 + $0xfb8] sm:$0xff]
  %v537 = vld [vmem:[%s1 + $0xfc0] sm:$0xff]
  %v538 = vld [vmem:[%s1 + $0xfc8] sm:$0xff]
  %v539 = vld [vmem:[%s1 + $0xfd0] sm:$0xff]
  %v540 = vld [vmem:[%s1 + $0xfd8] sm:$0xff]
  %v541 = vld [vmem:[%s1 + $0xfe0] sm:$0xff]
  %v542 = vld [vmem:[%s1 + $0xfe8] sm:$0xff]
  %v543 = vld [vmem:[%s1 + $0xff0] sm:$0xff]
  %v544 = vld [vmem:[%s1 + $0xff8] sm:$0xff]
  %545 = vmatprep.subr.mxu0 %v34
  %546 = vmatpush1.msra.mxu0 %v33
  %547 = vmatprep.subr.mxu0 %v36
  %548 = vmatpush1.msra.mxu0 %v35
  %549 = vmatprep.subr.mxu0 %v38
  %550 = vmatpush1.msra.mxu0 %v37
  %551 = vmatprep.subr.mxu0 %v40
  %552 = vmatpush1.msra.mxu0 %v39
  %553 = vmatprep.subr.mxu0 %v42
  %554 = vmatpush1.msra.mxu0 %v41
  %555 = vmatprep.subr.mxu0 %v44
  %556 = vmatpush1.msra.mxu0 %v43
  %557 = vmatprep.subr.mxu0 %v46
  %558 = vmatpush1.msra.mxu0 %v45
  %559 = vmatprep.subr.mxu0 %v48
  %560 = vmatpush1.msra.mxu0 %v47
  %561 = vmatprep.subr.mxu0 %v50
  %562 = vmatpush1.msra.mxu0 %v49
  %563 = vmatprep.subr.mxu0 %v52
  %564 = vmatpush1.msra.mxu0 %v51
  %565 = vmatprep.subr.mxu0 %v54
  %566 = vmatpush1.msra.mxu0 %v53
  %567 = vmatprep.subr.mxu0 %v56
  %568 = vmatpush1.msra.mxu0 %v55
  %569 = vmatprep.subr.mxu0 %v58
  %570 = vmatpush1.msra.mxu0 %v57
  %571 = vmatprep.subr.mxu0 %v60
  %572 = vmatpush1.msra.mxu0 %v59
  %573 = vmatprep.subr.mxu0 %v62
  %574 = vmatpush1.msra.mxu0 %v61
  %575 = vmatprep.subr.mxu0 %v64
  %576 = vmatpush1.msra.mxu0 %v63
  %577 = vmatprep.subr.mxu0 %v66
  %578 = vmatpush1.msra.mxu0 %v65
  %579 = vmatprep.subr.mxu0 %v68
  %580 = vmatpush1.msra.mxu0 %v67
  %581 = vmatprep.subr.mxu0 %v70
  %582 = vmatpush1.msra.mxu0 %v69
  %583 = vmatprep.subr.mxu0 %v72
  %584 = vmatpush1.msra.mxu0 %v71
  %585 = vmatprep.subr.mxu0 %v74
  %586 = vmatpush1.msra.mxu0 %v73
  %587 = vmatprep.subr.mxu0 %v76
  %588 = vmatpush1.msra.mxu0 %v75
  %589 = vmatprep.subr.mxu0 %v78
  %590 = vmatpush1.msra.mxu0 %v77
  %591 = vmatprep.subr.mxu0 %v80
  %592 = vmatpush1.msra.mxu0 %v79
  %593 = vmatprep.subr.mxu0 %v82
  %594 = vmatpush1.msra.mxu0 %v81
  %595 = vmatprep.subr.mxu0 %v84
  %596 = vmatpush1.msra.mxu0 %v83
  %597 = vmatprep.subr.mxu0 %v86
  %598 = vmatpush1.msra.mxu0 %v85
  %599 = vmatprep.subr.mxu0 %v88
  %600 = vmatpush1.msra.mxu0 %v87
  %601 = vmatprep.subr.mxu0 %v90
  %602 = vmatpush1.msra.mxu0 %v89
  %603 = vmatprep.subr.mxu0 %v92
  %604 = vmatpush1.msra.mxu0 %v91
  %605 = vmatprep.subr.mxu0 %v94
  %606 = vmatpush1.msra.mxu0 %v93
  %607 = vmatprep.subr.mxu0 %v96
  %608 = vmatpush1.msra.mxu0 %v95
  %609 = vmatprep.mubr.f32.mxu0 %v18
  %610 = vmatmul.mubr.f32.gmra.mrb[0].mxu0 %v17
  %v611 = vpop.f32.mrb[0].mxu0
  %v612 = vadd.f32 0.0, %v611
  %v613 = vpop.f32.mrb[0].mxu0
  %v614 = vadd.f32 0.0, %v613
  %615 = vdwg.mxu0
  %616 = vmatprep.subr.mxu0 %v98
  %617 = vmatpush1.msra.mxu0 %v97
  %618 = vmatprep.subr.mxu0 %v100
  %619 = vmatpush1.msra.mxu0 %v99
  %620 = vmatprep.subr.mxu0 %v102
  %621 = vmatpush1.msra.mxu0 %v101
  %622 = vmatprep.subr.mxu0 %v104
  %623 = vmatpush1.msra.mxu0 %v103
  %624 = vmatprep.subr.mxu0 %v106
  %625 = vmatpush1.msra.mxu0 %v105
  %626 = vmatprep.subr.mxu0 %v108
  %627 = vmatpush1.msra.mxu0 %v107
  %628 = vmatprep.subr.mxu0 %v110
  %629 = vmatpush1.msra.mxu0 %v109
  %630 = vmatprep.subr.mxu0 %v112
  %631 = vmatpush1.msra.mxu0 %v111
  %632 = vmatprep.subr.mxu0 %v114
  %633 = vmatpush1.msra.mxu0 %v113
  %634 = vmatprep.subr.mxu0 %v116
  %635 = vmatpush1.msra.mxu0 %v115
  %636 = vmatprep.subr.mxu0 %v118
  %637 = vmatpush1.msra.mxu0 %v117
  %638 = vmatprep.subr.mxu0 %v120
  %639 = vmatpush1.msra.mxu0 %v119
  %640 = vmatprep.subr.mxu0 %v122
  %641 = vmatpush1.msra.mxu0 %v121
  %642 = vmatprep.subr.mxu0 %v124
  %643 = vmatpush1.msra.mxu0 %v123
  %644 = vmatprep.subr.mxu0 %v126
  %645 = vmatpush1.msra.mxu0 %v125
  %646 = vmatprep.subr.mxu0 %v128
  %647 = vmatpush1.msra.mxu0 %v127
  %648 = vmatprep.subr.mxu0 %v130
  %649 = vmatpush1.msra.mxu0 %v129
  %650 = vmatprep.subr.mxu0 %v132
  %651 = vmatpush1.msra.mxu0 %v131
  %652 = vmatprep.subr.mxu0 %v134
  %653 = vmatpush1.msra.mxu0 %v133
  %654 = vmatprep.subr.mxu0 %v136
  %655 = vmatpush1.msra.mxu0 %v135
  %656 = vmatprep.subr.mxu0 %v138
  %657 = vmatpush1.msra.mxu0 %v137
  %658 = vmatprep.subr.mxu0 %v140
  %659 = vmatpush1.msra.mxu0 %v139
  %660 = vmatprep.subr.mxu0 %v142
  %661 = vmatpush1.msra.mxu0 %v141
  %662 = vmatprep.subr.mxu0 %v144
  %663 = vmatpush1.msra.mxu0 %v143
  %664 = vmatprep.subr.mxu0 %v146
  %665 = vmatpush1.msra.mxu0 %v145
  %666 = vmatprep.subr.mxu0 %v148
  %667 = vmatpush1.msra.mxu0 %v147
  %668 = vmatprep.subr.mxu0 %v150
  %669 = vmatpush1.msra.mxu0 %v149
  %670 = vmatprep.subr.mxu0 %v152
  %671 = vmatpush1.msra.mxu0 %v151
  %672 = vmatprep.subr.mxu0 %v154
  %673 = vmatpush1.msra.mxu0 %v153
  %674 = vmatprep.subr.mxu0 %v156
  %675 = vmatpush1.msra.mxu0 %v155
  %676 = vmatprep.subr.mxu0 %v158
  %677 = vmatpush1.msra.mxu0 %v157
  %678 = vmatprep.subr.mxu0 %v160
  %679 = vmatpush1.msra.mxu0 %v159
  %680 = vmatprep.mubr.f32.mxu0 %v20
  %681 = vmatmul.mubr.f32.gmra.mrb[0].mxu0 %v19
  %v682 = vpop.f32.mrb[0].mxu0
  %v683 = vadd.f32 %v612, %v682
  %v684 = vpop.f32.mrb[0].mxu0
  %v685 = vadd.f32 %v614, %v684
  %686 = vdwg.mxu0
  %687 = vmatprep.subr.mxu0 %v162
  %688 = vmatpush1.msra.mxu0 %v161
  %689 = vmatprep.subr.mxu0 %v164
  %690 = vmatpush1.msra.mxu0 %v163
  %691 = vmatprep.subr.mxu0 %v166
  %692 = vmatpush1.msra.mxu0 %v165
  %693 = vmatprep.subr.mxu0 %v168
  %694 = vmatpush1.msra.mxu0 %v167
  %695 = vmatprep.subr.mxu0 %v170
  %696 = vmatpush1.msra.mxu0 %v169
  %697 = vmatprep.subr.mxu0 %v172
  %698 = vmatpush1.msra.mxu0 %v171
  %699 = vmatprep.subr.mxu0 %v174
  %700 = vmatpush1.msra.mxu0 %v173
  %701 = vmatprep.subr.mxu0 %v176
  %702 = vmatpush1.msra.mxu0 %v175
  %703 = vmatprep.subr.mxu0 %v178
  %704 = vmatpush1.msra.mxu0 %v177
  %705 = vmatprep.subr.mxu0 %v180
  %706 = vmatpush1.msra.mxu0 %v179
  %707 = vmatprep.subr.mxu0 %v182
  %708 = vmatpush1.msra.mxu0 %v181
  %709 = vmatprep.subr.mxu0 %v184
  %710 = vmatpush1.msra.mxu0 %v183
  %711 = vmatprep.subr.mxu0 %v186
  %712 = vmatpush1.msra.mxu0 %v185
  %713 = vmatprep.subr.mxu0 %v188
  %714 = vmatpush1.msra.mxu0 %v187
  %715 = vmatprep.subr.mxu0 %v190
  %716 = vmatpush1.msra.mxu0 %v189
  %717 = vmatprep.subr.mxu0 %v192
  %718 = vmatpush1.msra.mxu0 %v191
  %719 = vmatprep.subr.mxu0 %v194
  %720 = vmatpush1.msra.mxu0 %v193
  %721 = vmatprep.subr.mxu0 %v196
  %722 = vmatpush1.msra.mxu0 %v195
  %723 = vmatprep.subr.mxu0 %v198
  %724 = vmatpush1.msra.mxu0 %v197
  %725 = vmatprep.subr.mxu0 %v200
  %726 = vmatpush1.msra.mxu0 %v199
  %727 = vmatprep.subr.mxu0 %v202
  %728 = vmatpush1.msra.mxu0 %v201
  %729 = vmatprep.subr.mxu0 %v204
  %730 = vmatpush1.msra.mxu0 %v203
  %731 = vmatprep.subr.mxu0 %v206
  %732 = vmatpush1.msra.mxu0 %v205
  %733 = vmatprep.subr.mxu0 %v208
  %734 = vmatpush1.msra.mxu0 %v207
  %735 = vmatprep.subr.mxu0 %v210
  %736 = vmatpush1.msra.mxu0 %v209
  %737 = vmatprep.subr.mxu0 %v212
  %738 = vmatpush1.msra.mxu0 %v211
  %739 = vmatprep.subr.mxu0 %v214
  %740 = vmatpush1.msra.mxu0 %v213
  %741 = vmatprep.subr.mxu0 %v216
  %742 = vmatpush1.msra.mxu0 %v215
  %743 = vmatprep.subr.mxu0 %v218
  %744 = vmatpush1.msra.mxu0 %v217
  %745 = vmatprep.subr.mxu0 %v220
  %746 = vmatpush1.msra.mxu0 %v219
  %747 = vmatprep.subr.mxu0 %v222
  %748 = vmatpush1.msra.mxu0 %v221
  %749 = vmatprep.subr.mxu0 %v224
  %750 = vmatpush1.msra.mxu0 %v223
  %751 = vmatprep.mubr.f32.mxu0 %v22
  %752 = vmatmul.mubr.f32.gmra.mrb[0].mxu0 %v21
  %v753 = vpop.f32.mrb[0].mxu0
  %v754 = vadd.f32 %v683, %v753
  %v755 = vpop.f32.mrb[0].mxu0
  %v756 = vadd.f32 %v685, %v755
  %757 = vdwg.mxu0
  %758 = vmatprep.subr.mxu0 %v226
  %759 = vmatpush1.msra.mxu0 %v225
  %760 = vmatprep.subr.mxu0 %v228
  %761 = vmatpush1.msra.mxu0 %v227
  %762 = vmatprep.subr.mxu0 %v230
  %763 = vmatpush1.msra.mxu0 %v229
  %764 = vmatprep.subr.mxu0 %v232
  %765 = vmatpush1.msra.mxu0 %v231
  %766 = vmatprep.subr.mxu0 %v234
  %767 = vmatpush1.msra.mxu0 %v233
  %768 = vmatprep.subr.mxu0 %v236
  %769 = vmatpush1.msra.mxu0 %v235
  %770 = vmatprep.subr.mxu0 %v238
  %771 = vmatpush1.msra.mxu0 %v237
  %772 = vmatprep.subr.mxu0 %v240
  %773 = vmatpush1.msra.mxu0 %v239
  %774 = vmatprep.subr.mxu0 %v242
  %775 = vmatpush1.msra.mxu0 %v241
  %776 = vmatprep.subr.mxu0 %v244
  %777 = vmatpush1.msra.mxu0 %v243
  %778 = vmatprep.subr.mxu0 %v246
  %779 = vmatpush1.msra.mxu0 %v245
  %780 = vmatprep.subr.mxu0 %v248
  %781 = vmatpush1.msra.mxu0 %v247
  %782 = vmatprep.subr.mxu0 %v250
  %783 = vmatpush1.msra.mxu0 %v249
  %784 = vmatprep.subr.mxu0 %v252
  %785 = vmatpush1.msra.mxu0 %v251
  %786 = vmatprep.subr.mxu0 %v254
  %787 = vmatpush1.msra.mxu0 %v253
  %788 = vmatprep.subr.mxu0 %v256
  %789 = vmatpush1.msra.mxu0 %v255
  %790 = vmatprep.subr.mxu0 %v258
  %791 = vmatpush1.msra.mxu0 %v257
  %792 = vmatprep.subr.mxu0 %v260
  %793 = vmatpush1.msra.mxu0 %v259
  %794 = vmatprep.subr.mxu0 %v262
  %795 = vmatpush1.msra.mxu0 %v261
  %796 = vmatprep.subr.mxu0 %v264
  %797 = vmatpush1.msra.mxu0 %v263
  %798 = vmatprep.subr.mxu0 %v266
  %799 = vmatpush1.msra.mxu0 %v265
  %800 = vmatprep.subr.mxu0 %v268
  %801 = vmatpush1.msra.mxu0 %v267
  %802 = vmatprep.subr.mxu0 %v270
  %803 = vmatpush1.msra.mxu0 %v269
  %804 = vmatprep.subr.mxu0 %v272
  %805 = vmatpush1.msra.mxu0 %v271
  %806 = vmatprep.subr.mxu0 %v274
  %807 = vmatpush1.msra.mxu0 %v273
  %808 = vmatprep.subr.mxu0 %v276
  %809 = vmatpush1.msra.mxu0 %v275
  %810 = vmatprep.subr.mxu0 %v278
  %811 = vmatpush1.msra.mxu0 %v277
  %812 = vmatprep.subr.mxu0 %v280
  %813 = vmatpush1.msra.mxu0 %v279
  %814 = vmatprep.subr.mxu0 %v282
  %815 = vmatpush1.msra.mxu0 %v281
  %816 = vmatprep.subr.mxu0 %v284
  %817 = vmatpush1.msra.mxu0 %v283
  %818 = vmatprep.subr.mxu0 %v286
  %819 = vmatpush1.msra.mxu0 %v285
  %820 = vmatprep.subr.mxu0 %v288
  %821 = vmatpush1.msra.mxu0 %v287
  %822 = vmatprep.mubr.f32.mxu0 %v24
  %823 = vmatmul.mubr.f32.gmra.mrb[0].mxu0 %v23
  %v824 = vpop.f32.mrb[0].mxu0
  %v825 = vadd.f32 %v754, %v824
  %v826 = vpop.f32.mrb[0].mxu0
  %v827 = vadd.f32 %v756, %v826
  %828 = vdwg.mxu0
  %829 = vmatprep.subr.mxu0 %v290
  %830 = vmatpush1.msra.mxu0 %v289
  %831 = vmatprep.subr.mxu0 %v292
  %832 = vmatpush1.msra.mxu0 %v291
  %833 = vmatprep.subr.mxu0 %v294
  %834 = vmatpush1.msra.mxu0 %v293
  %835 = vmatprep.subr.mxu0 %v296
  %836 = vmatpush1.msra.mxu0 %v295
  %837 = vmatprep.subr.mxu0 %v298
  %838 = vmatpush1.msra.mxu0 %v297
  %839 = vmatprep.subr.mxu0 %v300
  %840 = vmatpush1.msra.mxu0 %v299
  %841 = vmatprep.subr.mxu0 %v302
  %842 = vmatpush1.msra.mxu0 %v301
  %843 = vmatprep.subr.mxu0 %v304
  %844 = vmatpush1.msra.mxu0 %v303
  %845 = vmatprep.subr.mxu0 %v306
  %846 = vmatpush1.msra.mxu0 %v305
  %847 = vmatprep.subr.mxu0 %v308
  %848 = vmatpush1.msra.mxu0 %v307
  %849 = vmatprep.subr.mxu0 %v310
  %850 = vmatpush1.msra.mxu0 %v309
  %851 = vmatprep.subr.mxu0 %v312
  %852 = vmatpush1.msra.mxu0 %v311
  %853 = vmatprep.subr.mxu0 %v314
  %854 = vmatpush1.msra.mxu0 %v313
  %855 = vmatprep.subr.mxu0 %v316
  %856 = vmatpush1.msra.mxu0 %v315
  %857 = vmatprep.subr.mxu0 %v318
  %858 = vmatpush1.msra.mxu0 %v317
  %859 = vmatprep.subr.mxu0 %v320
  %860 = vmatpush1.msra.mxu0 %v319
  %861 = vmatprep.subr.mxu0 %v322
  %862 = vmatpush1.msra.mxu0 %v321
  %863 = vmatprep.subr.mxu0 %v324
  %864 = vmatpush1.msra.mxu0 %v323
  %865 = vmatprep.subr.mxu0 %v326
  %866 = vmatpush1.msra.mxu0 %v325
  %867 = vmatprep.subr.mxu0 %v328
  %868 = vmatpush1.msra.mxu0 %v327
  %869 = vmatprep.subr.mxu0 %v330
  %870 = vmatpush1.msra.mxu0 %v329
  %871 = vmatprep.subr.mxu0 %v332
  %872 = vmatpush1.msra.mxu0 %v331
  %873 = vmatprep.subr.mxu0 %v334
  %874 = vmatpush1.msra.mxu0 %v333
  %875 = vmatprep.subr.mxu0 %v336
  %876 = vmatpush1.msra.mxu0 %v335
  %877 = vmatprep.subr.mxu0 %v338
  %878 = vmatpush1.msra.mxu0 %v337
  %879 = vmatprep.subr.mxu0 %v340
  %880 = vmatpush1.msra.mxu0 %v339
  %881 = vmatprep.subr.mxu0 %v342
  %882 = vmatpush1.msra.mxu0 %v341
  %883 = vmatprep.subr.mxu0 %v344
  %884 = vmatpush1.msra.mxu0 %v343
  %885 = vmatprep.subr.mxu0 %v346
  %886 = vmatpush1.msra.mxu0 %v345
  %887 = vmatprep.subr.mxu0 %v348
  %888 = vmatpush1.msra.mxu0 %v347
  %889 = vmatprep.subr.mxu0 %v350
  %890 = vmatpush1.msra.mxu0 %v349
  %891 = vmatprep.subr.mxu0 %v352
  %892 = vmatpush1.msra.mxu0 %v351
  %893 = vmatprep.mubr.f32.mxu0 %v26
  %894 = vmatmul.mubr.f32.gmra.mrb[0].mxu0 %v25
  %v895 = vpop.f32.mrb[0].mxu0
  %v896 = vadd.f32 %v825, %v895
  %v897 = vpop.f32.mrb[0].mxu0
  %v898 = vadd.f32 %v827, %v897
  %899 = vdwg.mxu0
  %900 = vmatprep.subr.mxu0 %v354
  %901 = vmatpush1.msra.mxu0 %v353
  %902 = vmatprep.subr.mxu0 %v356
  %903 = vmatpush1.msra.mxu0 %v355
  %904 = vmatprep.subr.mxu0 %v358
  %905 = vmatpush1.msra.mxu0 %v357
  %906 = vmatprep.subr.mxu0 %v360
  %907 = vmatpush1.msra.mxu0 %v359
  %908 = vmatprep.subr.mxu0 %v362
  %909 = vmatpush1.msra.mxu0 %v361
  %910 = vmatprep.subr.mxu0 %v364
  %911 = vmatpush1.msra.mxu0 %v363
  %912 = vmatprep.subr.mxu0 %v366
  %913 = vmatpush1.msra.mxu0 %v365
  %914 = vmatprep.subr.mxu0 %v368
  %915 = vmatpush1.msra.mxu0 %v367
  %916 = vmatprep.subr.mxu0 %v370
  %917 = vmatpush1.msra.mxu0 %v369
  %918 = vmatprep.subr.mxu0 %v372
  %919 = vmatpush1.msra.mxu0 %v371
  %920 = vmatprep.subr.mxu0 %v374
  %921 = vmatpush1.msra.mxu0 %v373
  %922 = vmatprep.subr.mxu0 %v376
  %923 = vmatpush1.msra.mxu0 %v375
  %924 = vmatprep.subr.mxu0 %v378
  %925 = vmatpush1.msra.mxu0 %v377
  %926 = vmatprep.subr.mxu0 %v380
  %927 = vmatpush1.msra.mxu0 %v379
  %928 = vmatprep.subr.mxu0 %v382
  %929 = vmatpush1.msra.mxu0 %v381
  %930 = vmatprep.subr.mxu0 %v384
  %931 = vmatpush1.msra.mxu0 %v383
  %932 = vmatprep.subr.mxu0 %v386
  %933 = vmatpush1.msra.mxu0 %v385
  %934 = vmatprep.subr.mxu0 %v388
  %935 = vmatpush1.msra.mxu0 %v387
  %936 = vmatprep.subr.mxu0 %v390
  %937 = vmatpush1.msra.mxu0 %v389
  %938 = vmatprep.subr.mxu0 %v392
  %939 = vmatpush1.msra.mxu0 %v391
  %940 = vmatprep.subr.mxu0 %v394
  %941 = vmatpush1.msra.mxu0 %v393
  %942 = vmatprep.subr.mxu0 %v396
  %943 = vmatpush1.msra.mxu0 %v395
  %944 = vmatprep.subr.mxu0 %v398
  %945 = vmatpush1.msra.mxu0 %v397
  %946 = vmatprep.subr.mxu0 %v400
  %947 = vmatpush1.msra.mxu0 %v399
  %948 = vmatprep.subr.mxu0 %v402
  %949 = vmatpush1.msra.mxu0 %v401
  %950 = vmatprep.subr.mxu0 %v404
  %951 = vmatpush1.msra.mxu0 %v403
  %952 = vmatprep.subr.mxu0 %v406
  %953 = vmatpush1.msra.mxu0 %v405
  %954 = vmatprep.subr.mxu0 %v408
  %955 = vmatpush1.msra.mxu0 %v407
  %956 = vmatprep.subr.mxu0 %v410
  %957 = vmatpush1.msra.mxu0 %v409
  %958 = vmatprep.subr.mxu0 %v412
  %959 = vmatpush1.msra.mxu0 %v411
  %960 = vmatprep.subr.mxu0 %v414
  %961 = vmatpush1.msra.mxu0 %v413
  %962 = vmatprep.subr.mxu0 %v416
  %963 = vmatpush1.msra.mxu0 %v415
  %964 = vmatprep.mubr.f32.mxu0 %v28
  %965 = vmatmul.mubr.f32.gmra.mrb[0].mxu0 %v27
  %v966 = vpop.f32.mrb[0].mxu0
  %v967 = vadd.f32 %v896, %v966
  %v968 = vpop.f32.mrb[0].mxu0
  %v969 = vadd.f32 %v898, %v968
  %970 = vdwg.mxu0
  %971 = vmatprep.subr.mxu0 %v418
  %972 = vmatpush1.msra.mxu0 %v417
  %973 = vmatprep.subr.mxu0 %v420
  %974 = vmatpush1.msra.mxu0 %v419
  %975 = vmatprep.subr.mxu0 %v422
  %976 = vmatpush1.msra.mxu0 %v421
  %977 = vmatprep.subr.mxu0 %v424
  %978 = vmatpush1.msra.mxu0 %v423
  %979 = vmatprep.subr.mxu0 %v426
  %980 = vmatpush1.msra.mxu0 %v425
  %981 = vmatprep.subr.mxu0 %v428
  %982 = vmatpush1.msra.mxu0 %v427
  %983 = vmatprep.subr.mxu0 %v430
  %984 = vmatpush1.msra.mxu0 %v429
  %985 = vmatprep.subr.mxu0 %v432
  %986 = vmatpush1.msra.mxu0 %v431
  %987 = vmatprep.subr.mxu0 %v434
  %988 = vmatpush1.msra.mxu0 %v433
  %989 = vmatprep.subr.mxu0 %v436
  %990 = vmatpush1.msra.mxu0 %v435
  %991 = vmatprep.subr.mxu0 %v438
  %992 = vmatpush1.msra.mxu0 %v437
  %993 = vmatprep.subr.mxu0 %v440
  %994 = vmatpush1.msra.mxu0 %v439
  %995 = vmatprep.subr.mxu0 %v442
  %996 = vmatpush1.msra.mxu0 %v441
  %997 = vmatprep.subr.mxu0 %v444
  %998 = vmatpush1.msra.mxu0 %v443
  %999 = vmatprep.subr.mxu0 %v446
  %1000 = vmatpush1.msra.mxu0 %v445
  %1001 = vmatprep.subr.mxu0 %v448
  %1002 = vmatpush1.msra.mxu0 %v447
  %1003 = vmatprep.subr.mxu0 %v450
  %1004 = vmatpush1.msra.mxu0 %v449
  %1005 = vmatprep.subr.mxu0 %v452
  %1006 = vmatpush1.msra.mxu0 %v451
  %1007 = vmatprep.subr.mxu0 %v454
  %1008 = vmatpush1.msra.mxu0 %v453
  %1009 = vmatprep.subr.mxu0 %v456
  %1010 = vmatpush1.msra.mxu0 %v455
  %1011 = vmatprep.subr.mxu0 %v458
  %1012 = vmatpush1.msra.mxu0 %v457
  %1013 = vmatprep.subr.mxu0 %v460
  %1014 = vmatpush1.msra.mxu0 %v459
  %1015 = vmatprep.subr.mxu0 %v462
  %1016 = vmatpush1.msra.mxu0 %v461
  %1017 = vmatprep.subr.mxu0 %v464
  %1018 = vmatpush1.msra.mxu0 %v463
  %1019 = vmatprep.subr.mxu0 %v466
  %1020 = vmatpush1.msra.mxu0 %v465
  %1021 = vmatprep.subr.mxu0 %v468
  %1022 = vmatpush1.msra.mxu0 %v467
  %1023 = vmatprep.subr.mxu0 %v470
  %1024 = vmatpush1.msra.mxu0 %v469
  %1025 = vmatprep.subr.mxu0 %v472
  %1026 = vmatpush1.msra.mxu0 %v471
  %1027 = vmatprep.subr.mxu0 %v474
  %1028 = vmatpush1.msra.mxu0 %v473
  %1029 = vmatprep.subr.mxu0 %v476
  %1030 = vmatpush1.msra.mxu0 %v475
  %1031 = vmatprep.subr.mxu0 %v478
  %1032 = vmatpush1.msra.mxu0 %v477
  %1033 = vmatprep.subr.mxu0 %v480
  %1034 = vmatpush1.msra.mxu0 %v479
  %1035 = vmatprep.mubr.f32.mxu0 %v30
  %1036 = vmatmul.mubr.f32.gmra.mrb[0].mxu0 %v29
  %v1037 = vpop.f32.mrb[0].mxu0
  %v1038 = vadd.f32 %v967, %v1037
  %v1039 = vpop.f32.mrb[0].mxu0
  %v1040 = vadd.f32 %v969, %v1039
  %1041 = vdwg.mxu0
  %1042 = vmatprep.subr.mxu0 %v482
  %1043 = vmatpush1.msra.mxu0 %v481
  %1044 = vmatprep.subr.mxu0 %v484
  %1045 = vmatpush1.msra.mxu0 %v483
  %1046 = vmatprep.subr.mxu0 %v486
  %1047 = vmatpush1.msra.mxu0 %v485
  %1048 = vmatprep.subr.mxu0 %v488
  %1049 = vmatpush1.msra.mxu0 %v487
  %1050 = vmatprep.subr.mxu0 %v490
  %1051 = vmatpush1.msra.mxu0 %v489
  %1052 = vmatprep.subr.mxu0 %v492
  %1053 = vmatpush1.msra.mxu0 %v491
  %1054 = vmatprep.subr.mxu0 %v494
  %1055 = vmatpush1.msra.mxu0 %v493
  %1056 = vmatprep.subr.mxu0 %v496
  %1057 = vmatpush1.msra.mxu0 %v495
  %1058 = vmatprep.subr.mxu0 %v498
  %1059 = vmatpush1.msra.mxu0 %v497
  %1060 = vmatprep.subr.mxu0 %v500
  %1061 = vmatpush1.msra.mxu0 %v499
  %1062 = vmatprep.subr.mxu0 %v502
  %1063 = vmatpush1.msra.mxu0 %v501
  %1064 = vmatprep.subr.mxu0 %v504
  %1065 = vmatpush1.msra.mxu0 %v503
  %1066 = vmatprep.subr.mxu0 %v506
  %1067 = vmatpush1.msra.mxu0 %v505
  %1068 = vmatprep.subr.mxu0 %v508
  %1069 = vmatpush1.msra.mxu0 %v507
  %1070 = vmatprep.subr.mxu0 %v510
  %1071 = vmatpush1.msra.mxu0 %v509
  %1072 = vmatprep.subr.mxu0 %v512
  %1073 = vmatpush1.msra.mxu0 %v511
  %1074 = vmatprep.subr.mxu0 %v514
  %1075 = vmatpush1.msra.mxu0 %v513
  %1076 = vmatprep.subr.mxu0 %v516
  %1077 = vmatpush1.msra.mxu0 %v515
  %1078 = vmatprep.subr.mxu0 %v518
  %1079 = vmatpush1.msra.mxu0 %v517
  %1080 = vmatprep.subr.mxu0 %v520
  %1081 = vmatpush1.msra.mxu0 %v519
  %1082 = vmatprep.subr.mxu0 %v522
  %1083 = vmatpush1.msra.mxu0 %v521
  %1084 = vmatprep.subr.mxu0 %v524
  %1085 = vmatpush1.msra.mxu0 %v523
  %1086 = vmatprep.subr.mxu0 %v526
  %1087 = vmatpush1.msra.mxu0 %v525
  %1088 = vmatprep.subr.mxu0 %v528
  %1089 = vmatpush1.msra.mxu0 %v527
  %1090 = vmatprep.subr.mxu0 %v530
  %1091 = vmatpush1.msra.mxu0 %v529
  %1092 = vmatprep.subr.mxu0 %v532
  %1093 = vmatpush1.msra.mxu0 %v531
  %1094 = vmatprep.subr.mxu0 %v534
  %1095 = vmatpush1.msra.mxu0 %v533
  %1096 = vmatprep.subr.mxu0 %v536
  %1097 = vmatpush1.msra.mxu0 %v535
  %1098 = vmatprep.subr.mxu0 %v538
  %1099 = vmatpush1.msra.mxu0 %v537
  %1100 = vmatprep.subr.mxu0 %v540
  %1101 = vmatpush1.msra.mxu0 %v539
  %1102 = vmatprep.subr.mxu0 %v542
  %1103 = vmatpush1.msra.mxu0 %v541
  %1104 = vmatprep.subr.mxu0 %v544
  %1105 = vmatpush1.msra.mxu0 %v543
  %1106 = vmatprep.mubr.f32.mxu0 %v32
  %1107 = vmatmul.mubr.f32.gmra.mrb[0].mxu0 %v31
  %v1108 = vpop.f32.mrb[0].mxu0
  %v1109 = vadd.f32 %v1038, %v1108
  %v1110 = vpop.f32.mrb[0].mxu0
  %v1111 = vadd.f32 %v1040, %v1110
  %1112 = vdwg.mxu0
  %v1113 = vrot.slane %v1109, 4
  %v1114 = vadd.f32 %v1109, %v1113
  %v1115 = vrot.slane %v1114, 2
  %v1116 = vadd.f32 %v1114, %v1115
  %v1117 = vrot.slane %v1116, 1
  %v1118 = vadd.f32 %v1116, %v1117
  %v1119 = vrot.slane %v1111, 4
  %v1120 = vadd.f32 %v1111, %v1119
  %v1121 = vrot.slane %v1120, 2
  %v1122 = vadd.f32 %v1120, %v1121
  %v1123 = vrot.slane %v1122, 1
  %v1124 = vadd.f32 %v1122, %v1123
  %v1125 = vmul.f32 %v1109, %v1109
  %v1126 = vmul.f32 %v1111, %v1111
  %v1127 = vrot.slane %v1125, 4
  %v1128 = vadd.f32 %v1125, %v1127
  %v1129 = vrot.slane %v1128, 2
  %v1130 = vadd.f32 %v1128, %v1129
  %v1131 = vrot.slane %v1130, 1
  %v1132 = vadd.f32 %v1130, %v1131
  %v1133 = vrot.slane %v1126, 4
  %v1134 = vadd.f32 %v1126, %v1133
  %v1135 = vrot.slane %v1134, 2
  %v1136 = vadd.f32 %v1134, %v1135
  %v1137 = vrot.slane %v1136, 1
  %v1138 = vadd.f32 %v1136, %v1137
  %v1139 = vmul.f32 %v1118, 0.125
  %v1140 = vmul.f32 %v1124, 0.125
  %v1141 = vmul.f32 %v1132, 0.125
  %v1142 = vmul.f32 %v1138, 0.125
  %v1143 = vmul.f32 %v1139, %v1139
  %v1144 = vmul.f32 %v1140, %v1140
  %v1145 = vsub.f32 %v1141, %v1143
  %v1146 = vsub.f32 %v1142, %v1144
  %v1147 = vmax.f32 %v1145, 0.0
  %v1148 = vmax.f32 %v1146, 0.0
  %v1149 = vadd.f32 %v1147, 1e-05
  %v1150 = vadd.f32 %v1148, 1e-05
  %v1151 = vrsqrt.pop %v1149
  %v1152 = vrsqrt.pop %v1150
  %v1153 = vld [vmem:[%s2] sm:$0x3]
  %v1155 = vlaneseq
  %v1156 = vshrl.u32 %v1155, 7
  %v1157 = vsub.s32 0, %v1156
  %v1158 = vrot.slane %v1153, %v1157
  %v1159 = vlaneseq
  %v1160 = vshrl.u32 %v1159, 7
  %v1161 = vsub.s32 1, %v1160
  %v1162 = vrot.slane %v1153, %v1161
  %v1165 = vmul.f32 %v1151, %v1158
  %v1166 = vmul.f32 %v1152, %v1162
  %v1167 = vld [vmem:[%s3] sm:$0x3]
  %v1168 = vmul.f32 %v1139, %v1165
  %v1169 = vmul.f32 %v1140, %v1166
  %v1172 = vcombine.low %v1168, %v1169
  %v1174 = vunpack.c.l.s4 1966171168
  %v1175 = vunpack.c.0.s8 %v1174
  %v1176 = vlaneseq
  %v1177 = vshrl.u32 %v1176, 7
  %v1178 = vsub.s32 %v1175, %v1177
  %v1179 = vrot.slane %v1172, %v1178
  %v1181 = vunpack.c.l.s4 1966171168
  %v1182 = vunpack.c.0.s8 %v1181
  %v1183 = vlaneseq
  %v1184 = vshrl.u32 %v1183, 7
  %v1185 = vsub.s32 %v1182, %v1184
  %v1186 = vrot.slane %v1179, %v1185
  %v1188 = vsub.f32 %v1167, %v1186
  %v1189 = vlaneseq
  %v1190 = vshrl.u32 %v1189, 7
  %v1191 = vsub.s32 0, %v1190
  %v1192 = vrot.slane %v1165, %v1191
  %v1193 = vlaneseq
  %v1194 = vshrl.u32 %v1193, 7
  %v1195 = vsub.s32 0, %v1194
  %v1196 = vrot.slane %v1166, %v1195
  %v1197 = vmul.f32 %v1109, %v1192
  %v1198 = vmul.f32 %v1111, %v1196
  %v1200 = vlaneseq
  %v1201 = vshrl.u32 %v1200, 7
  %v1202 = vsub.s32 0, %v1201
  %v1203 = vrot.slane %v1188, %v1202
  %v1204 = vlaneseq
  %v1205 = vshrl.u32 %v1204, 7
  %v1206 = vsub.s32 1, %v1205
  %v1207 = vrot.slane %v1188, %v1206
  %v1210 = vadd.f32 %v1197, %v1203
  %v1211 = vadd.f32 %v1198, %v1207
  %vm1212 = vcmp.ge.f32.partialorder %v1210, 0.0
  %vm1213 = vcmp.ge.f32.partialorder %v1211, 0.0
  %v1214 = vmul.f32 %v1210, 0.2
  %v1215 = vmul.f32 %v1211, 0.2
  %v1216 = vsel %vm1212, %v1210, %v1214
  %v1217 = vsel %vm1213, %v1211, %v1215
  %1218 = vst [vmem:[%s4] sm:$0xff] %v1216
  %1219 = vst [vmem:[%s4 + $0x8] sm:$0xff] %v1217
  // Predicated region
  $region18: #{autoencoder_forward.8} parent=0 // pred_check
    _
  $region19: #{autoencoder_forward.8} parent=0 // pred_check_branch
    %1221 = sbr.rel (0) target = $region21
  $region20: #{autoencoder_forward.8} parent=0 // pred_region
    _
  $region21: #{autoencoder_forward.8} parent=0 // pred_fallthru
    _
  // Predicated region
  $region22: #{autoencoder_forward.8} parent=0 // pred_check
    _
  $region23: #{autoencoder_forward.8} parent=0 // pred_check_branch
    %1223 = sbr.rel (0) target = $region25
  $region24: #{autoencoder_forward.8} parent=0 // pred_region
    _
  $region25: #{autoencoder_forward.8} parent=0 // pred_fallthru
    _

// kernel: autoencoder_forward.9
$region0: #{autoencoder_forward.9}
  #allocation0 [shape = 'u32[]', space=smem, size = 0x4, offset = 0x4, fixed_abs, tag = 'smem constant byte address 0x4 - core index']
  #allocation1 [shape = 'u32[144,128]{1,0:T(1,128)}', space=vmem, size = 0x12000, scoped, tag = 'internal scratch']
  %s0 = inlined_call_operand.vmem [shape: f32[4,8,1024], index: 0, kind: input, shape index: {}]
  %s1 = inlined_call_operand.vmem [shape: f32[4,1024,128], index: 1, kind: input, shape index: {}]
  %s2 = inlined_call_operand.vmem [shape: f32[1,128], index: 2, kind: input, shape index: {}]
  %s3 = inlined_call_operand.vmem [shape: f32[1,128], index: 3, kind: input, shape index: {}]
  %s4 = inlined_call_operand.vmem [shape: f32[4,8,128], index: 4, kind: output, shape index: {}]
  %s5 = sld [smem:[#allocation0]]
  $region26: #{autoencoder_forward.9} parent=0
    _
  %s7 = ssub.s32 1, %s5
  %s8 = scalar_select 0, %s7, %s5
  // Predicated region
  $region2: #{autoencoder_forward.9} parent=0 // pred_check
    _
  $region3: #{autoencoder_forward.9} parent=0 // pred_check_branch
    %10 = sbr.rel (0) target = $region5
  $region4: #{autoencoder_forward.9} parent=0 // pred_region
    _
  $region5: #{autoencoder_forward.9} parent=0 // pred_fallthru
    _
  // Predicated region
  $region6: #{autoencoder_forward.9} parent=0 // pred_check
    _
  $region7: #{autoencoder_forward.9} parent=0 // pred_check_branch
    %12 = sbr.rel (0) target = $region9
  $region8: #{autoencoder_forward.9} parent=0 // pred_region
    _
  $region9: #{autoencoder_forward.9} parent=0 // pred_fallthru
    _
  // Predicated region
  $region10: #{autoencoder_forward.9} parent=0 // pred_check
    _
  $region11: #{autoencoder_forward.9} parent=0 // pred_check_branch
    %14 = sbr.rel (0) target = $region13
  $region12: #{autoencoder_forward.9} parent=0 // pred_region
    _
  $region13: #{autoencoder_forward.9} parent=0 // pred_fallthru
    _
  // Predicated region
  $region14: #{autoencoder_forward.9} parent=0 // pred_check
    _
  $region15: #{autoencoder_forward.9} parent=0 // pred_check_branch
    %16 = sbr.rel (0) target = $region17
  $region16: #{autoencoder_forward.9} parent=0 // pred_region
    _
  $region17: #{autoencoder_forward.9} parent=0 // pred_fallthru
    _
  %v17 = vld [vmem:[%s0] sm:$0xff]
  %v18 = vld [vmem:[%s0 + $0x8] sm:$0xff]
  %v19 = vld [vmem:[%s0 + $0x10] sm:$0xff]
  %v20 = vld [vmem:[%s0 + $0x18] sm:$0xff]
  %v21 = vld [vmem:[%s0 + $0x20] sm:$0xff]
  %v22 = vld [vmem:[%s0 + $0x28] sm:$0xff]
  %v23 = vld [vmem:[%s0 + $0x30] sm:$0xff]
  %v24 = vld [vmem:[%s0 + $0x38] sm:$0xff]
  %v25 = vld [vmem:[%s1] sm:$0xff]
  %v26 = vld [vmem:[%s1 + $0x8] sm:$0xff]
  %v27 = vld [vmem:[%s1 + $0x10] sm:$0xff]
  %v28 = vld [vmem:[%s1 + $0x18] sm:$0xff]
  %v29 = vld [vmem:[%s1 + $0x20] sm:$0xff]
  %v30 = vld [vmem:[%s1 + $0x28] sm:$0xff]
  %v31 = vld [vmem:[%s1 + $0x30] sm:$0xff]
  %v32 = vld [vmem:[%s1 + $0x38] sm:$0xff]
  %v33 = vld [vmem:[%s1 + $0x40] sm:$0xff]
  %v34 = vld [vmem:[%s1 + $0x48] sm:$0xff]
  %v35 = vld [vmem:[%s1 + $0x50] sm:$0xff]
  %v36 = vld [vmem:[%s1 + $0x58] sm:$0xff]
  %v37 = vld [vmem:[%s1 + $0x60] sm:$0xff]
  %v38 = vld [vmem:[%s1 + $0x68] sm:$0xff]
  %v39 = vld [vmem:[%s1 + $0x70] sm:$0xff]
  %v40 = vld [vmem:[%s1 + $0x78] sm:$0xff]
  %v41 = vld [vmem:[%s1 + $0x80] sm:$0xff]
  %v42 = vld [vmem:[%s1 + $0x88] sm:$0xff]
  %v43 = vld [vmem:[%s1 + $0x90] sm:$0xff]
  %v44 = vld [vmem:[%s1 + $0x98] sm:$0xff]
  %v45 = vld [vmem:[%s1 + $0xa0] sm:$0xff]
  %v46 = vld [vmem:[%s1 + $0xa8] sm:$0xff]
  %v47 = vld [vmem:[%s1 + $0xb0] sm:$0xff]
  %v48 = vld [vmem:[%s1 + $0xb8] sm:$0xff]
  %v49 = vld [vmem:[%s1 + $0xc0] sm:$0xff]
  %v50 = vld [vmem:[%s1 + $0xc8] sm:$0xff]
  %v51 = vld [vmem:[%s1 + $0xd0] sm:$0xff]
  %v52 = vld [vmem:[%s1 + $0xd8] sm:$0xff]
  %v53 = vld [vmem:[%s1 + $0xe0] sm:$0xff]
  %v54 = vld [vmem:[%s1 + $0xe8] sm:$0xff]
  %v55 = vld [vmem:[%s1 + $0xf0] sm:$0xff]
  %v56 = vld [vmem:[%s1 + $0xf8] sm:$0xff]
  %v57 = vld [vmem:[%s1 + $0x100] sm:$0xff]
  %v58 = vld [vmem:[%s1 + $0x108] sm:$0xff]
  %v59 = vld [vmem:[%s1 + $0x110] sm:$0xff]
  %v60 = vld [vmem:[%s1 + $0x118] sm:$0xff]
  %v61 = vld [vmem:[%s1 + $0x120] sm:$0xff]
  %v62 = vld [vmem:[%s1 + $0x128] sm:$0xff]
  %v63 = vld [vmem:[%s1 + $0x130] sm:$0xff]
  %v64 = vld [vmem:[%s1 + $0x138] sm:$0xff]
  %v65 = vld [vmem:[%s1 + $0x140] sm:$0xff]
  %v66 = vld [vmem:[%s1 + $0x148] sm:$0xff]
  %v67 = vld [vmem:[%s1 + $0x150] sm:$0xff]
  %v68 = vld [vmem:[%s1 + $0x158] sm:$0xff]
  %v69 = vld [vmem:[%s1 + $0x160] sm:$0xff]
  %v70 = vld [vmem:[%s1 + $0x168] sm:$0xff]
  %v71 = vld [vmem:[%s1 + $0x170] sm:$0xff]
  %v72 = vld [vmem:[%s1 + $0x178] sm:$0xff]
  %v73 = vld [vmem:[%s1 + $0x180] sm:$0xff]
  %v74 = vld [vmem:[%s1 + $0x188] sm:$0xff]
  %v75 = vld [vmem:[%s1 + $0x190] sm:$0xff]
  %v76 = vld [vmem:[%s1 + $0x198] sm:$0xff]
  %v77 = vld [vmem:[%s1 + $0x1a0] sm:$0xff]
  %v78 = vld [vmem:[%s1 + $0x1a8] sm:$0xff]
  %v79 = vld [vmem:[%s1 + $0x1b0] sm:$0xff]
  %v80 = vld [vmem:[%s1 + $0x1b8] sm:$0xff]
  %v81 = vld [vmem:[%s1 + $0x1c0] sm:$0xff]
  %v82 = vld [vmem:[%s1 + $0x1c8] sm:$0xff]
  %v83 = vld [vmem:[%s1 + $0x1d0] sm:$0xff]
  %v84 = vld [vmem:[%s1 + $0x1d8] sm:$0xff]
  %v85 = vld [vmem:[%s1 + $0x1e0] sm:$0xff]
  %v86 = vld [vmem:[%s1 + $0x1e8] sm:$0xff]
  %v87 = vld [vmem:[%s1 + $0x1f0] sm:$0xff]
  %v88 = vld [vmem:[%s1 + $0x1f8] sm:$0xff]
  %v89 = vld [vmem:[%s1 + $0x200] sm:$0xff]
  %v90 = vld [vmem:[%s1 + $0x208] sm:$0xff]
  %v91 = vld [vmem:[%s1 + $0x210] sm:$0xff]
  %v92 = vld [vmem:[%s1 + $0x218] sm:$0xff]
  %v93 = vld [vmem:[%s1 + $0x220] sm:$0xff]
  %v94 = vld [vmem:[%s1 + $0x228] sm:$0xff]
  %v95 = vld [vmem:[%s1 + $0x230] sm:$0xff]
  %v96 = vld [vmem:[%s1 + $0x238] sm:$0xff]
  %v97 = vld [vmem:[%s1 + $0x240] sm:$0xff]
  %v98 = vld [vmem:[%s1 + $0x248] sm:$0xff]
  %v99 = vld [vmem:[%s1 + $0x250] sm:$0xff]
  %v100 = vld [vmem:[%s1 + $0x258] sm:$0xff]
  %v101 = vld [vmem:[%s1 + $0x260] sm:$0xff]
  %v102 = vld [vmem:[%s1 + $0x268] sm:$0xff]
  %v103 = vld [vmem:[%s1 + $0x270] sm:$0xff]
  %v104 = vld [vmem:[%s1 + $0x278] sm:$0xff]
  %v105 = vld [vmem:[%s1 + $0x280] sm:$0xff]
  %v106 = vld [vmem:[%s1 + $0x288] sm:$0xff]
  %v107 = vld [vmem:[%s1 + $0x290] sm:$0xff]
  %v108 = vld [vmem:[%s1 + $0x298] sm:$0xff]
  %v109 = vld [vmem:[%s1 + $0x2a0] sm:$0xff]
  %v110 = vld [vmem:[%s1 + $0x2a8] sm:$0xff]
  %v111 = vld [vmem:[%s1 + $0x2b0] sm:$0xff]
  %v112 = vld [vmem:[%s1 + $0x2b8] sm:$0xff]
  %v113 = vld [vmem:[%s1 + $0x2c0] sm:$0xff]
  %v114 = vld [vmem:[%s1 + $0x2c8] sm:$0xff]
  %v115 = vld [vmem:[%s1 + $0x2d0] sm:$0xff]
  %v116 = vld [vmem:[%s1 + $0x2d8] sm:$0xff]
  %v117 = vld [vmem:[%s1 + $0x2e0] sm:$0xff]
  %v118 = vld [vmem:[%s1 + $0x2e8] sm:$0xff]
  %v119 = vld [vmem:[%s1 + $0x2f0] sm:$0xff]
  %v120 = vld [vmem:[%s1 + $0x2f8] sm:$0xff]
  %v121 = vld [vmem:[%s1 + $0x300] sm:$0xff]
  %v122 = vld [vmem:[%s1 + $0x308] sm:$0xff]
  %v123 = vld [vmem:[%s1 + $0x310] sm:$0xff]
  %v124 = vld [vmem:[%s1 + $0x318] sm:$0xff]
  %v125 = vld [vmem:[%s1 + $0x320] sm:$0xff]
  %v126 = vld [vmem:[%s1 + $0x328] sm:$0xff]
  %v127 = vld [vmem:[%s1 + $0x330] sm:$0xff]
  %v128 = vld [vmem:[%s1 + $0x338] sm:$0xff]
  %v129 = vld [vmem:[%s1 + $0x340] sm:$0xff]
  %v130 = vld [vmem:[%s1 + $0x348] sm:$0xff]
  %v131 = vld [vmem:[%s1 + $0x350] sm:$0xff]
  %v132 = vld [vmem:[%s1 + $0x358] sm:$0xff]
  %v133 = vld [vmem:[%s1 + $0x360] sm:$0xff]
  %v134 = vld [vmem:[%s1 + $0x368] sm:$0xff]
  %v135 = vld [vmem:[%s1 + $0x370] sm:$0xff]
  %v136 = vld [vmem:[%s1 + $0x378] sm:$0xff]
  %v137 = vld [vmem:[%s1 + $0x380] sm:$0xff]
  %v138 = vld [vmem:[%s1 + $0x388] sm:$0xff]
  %v139 = vld [vmem:[%s1 + $0x390] sm:$0xff]
  %v140 = vld [vmem:[%s1 + $0x398] sm:$0xff]
  %v141 = vld [vmem:[%s1 + $0x3a0] sm:$0xff]
  %v142 = vld [vmem:[%s1 + $0x3a8] sm:$0xff]
  %v143 = vld [vmem:[%s1 + $0x3b0] sm:$0xff]
  %v144 = vld [vmem:[%s1 + $0x3b8] sm:$0xff]
  %v145 = vld [vmem:[%s1 + $0x3c0] sm:$0xff]
  %v146 = vld [vmem:[%s1 + $0x3c8] sm:$0xff]
  %v147 = vld [vmem:[%s1 + $0x3d0] sm:$0xff]
  %v148 = vld [vmem:[%s1 + $0x3d8] sm:$0xff]
  %v149 = vld [vmem:[%s1 + $0x3e0] sm:$0xff]
  %v150 = vld [vmem:[%s1 + $0x3e8] sm:$0xff]
  %v151 = vld [vmem:[%s1 + $0x3f0] sm:$0xff]
  %v152 = vld [vmem:[%s1 + $0x3f8] sm:$0xff]
  %153 = vmatprep.subr.mxu0 0.0
  %154 = vmatpush1.msra.mxu0 %v25
  %155 = vmatprep.subr.mxu0 0.0
  %156 = vmatpush1.msra.mxu0 %v26
  %157 = vmatprep.subr.mxu0 0.0
  %158 = vmatpush1.msra.mxu0 %v27
  %159 = vmatprep.subr.mxu0 0.0
  %160 = vmatpush1.msra.mxu0 %v28
  %161 = vmatprep.subr.mxu0 0.0
  %162 = vmatpush1.msra.mxu0 %v29
  %163 = vmatprep.subr.mxu0 0.0
  %164 = vmatpush1.msra.mxu0 %v30
  %165 = vmatprep.subr.mxu0 0.0
  %166 = vmatpush1.msra.mxu0 %v31
  %167 = vmatprep.subr.mxu0 0.0
  %168 = vmatpush1.msra.mxu0 %v32
  %169 = vmatprep.subr.mxu0 0.0
  %170 = vmatpush1.msra.mxu0 %v33
  %171 = vmatprep.subr.mxu0 0.0
  %172 = vmatpush1.msra.mxu0 %v34
  %173 = vmatprep.subr.mxu0 0.0
  %174 = vmatpush1.msra.mxu0 %v35
  %175 = vmatprep.subr.mxu0 0.0
  %176 = vmatpush1.msra.mxu0 %v36
  %177 = vmatprep.subr.mxu0 0.0
  %178 = vmatpush1.msra.mxu0 %v37
  %179 = vmatprep.subr.mxu0 0.0
  %180 = vmatpush1.msra.mxu0 %v38
  %181 = vmatprep.subr.mxu0 0.0
  %182 = vmatpush1.msra.mxu0 %v39
  %183 = vmatprep.subr.mxu0 0.0
  %184 = vmatpush1.msra.mxu0 %v40
  %185 = vmatprep.subr.mxu0 0.0
  %186 = vmatpush1.msra.mxu0 %v41
  %187 = vmatprep.subr.mxu0 0.0
  %188 = vmatpush1.msra.mxu0 %v42
  %189 = vmatprep.subr.mxu0 0.0
  %190 = vmatpush1.msra.mxu0 %v43
  %191 = vmatprep.subr.mxu0 0.0
  %192 = vmatpush1.msra.mxu0 %v44
  %193 = vmatprep.subr.mxu0 0.0
  %194 = vmatpush1.msra.mxu0 %v45
  %195 = vmatprep.subr.mxu0 0.0
  %196 = vmatpush1.msra.mxu0 %v46
  %197 = vmatprep.subr.mxu0 0.0
  %198 = vmatpush1.msra.mxu0 %v47
  %199 = vmatprep.subr.mxu0 0.0
  %200 = vmatpush1.msra.mxu0 %v48
  %201 = vmatprep.subr.mxu0 0.0
  %202 = vmatpush1.msra.mxu0 %v49
  %203 = vmatprep.subr.mxu0 0.0
  %204 = vmatpush1.msra.mxu0 %v50
  %205 = vmatprep.subr.mxu0 0.0
  %206 = vmatpush1.msra.mxu0 %v51
  %207 = vmatprep.subr.mxu0 0.0
  %208 = vmatpush1.msra.mxu0 %v52
  %209 = vmatprep.subr.mxu0 0.0
  %210 = vmatpush1.msra.mxu0 %v53
  %211 = vmatprep.subr.mxu0 0.0
  %212 = vmatpush1.msra.mxu0 %v54
  %213 = vmatprep.subr.mxu0 0.0
  %214 = vmatpush1.msra.mxu0 %v55
  %215 = vmatprep.subr.mxu0 0.0
  %216 = vmatpush1.msra.mxu0 %v56
  %217 = vmatprep.mubr.f32.mxu0 %v18
  %218 = vmatmul.mubr.f32.gmra.mrb[0].mxu0 %v17
  %v219 = vpop.f32.mrb[0].mxu0
  %v220 = vadd.f32 0.0, %v219
  %v221 = vpop.f32.mrb[0].mxu0
  %222 = vdwg.mxu0
  %223 = vmatprep.subr.mxu0 0.0
  %224 = vmatpush1.msra.mxu0 %v57
  %225 = vmatprep.subr.mxu0 0.0
  %226 = vmatpush1.msra.mxu0 %v58
  %227 = vmatprep.subr.mxu0 0.0
  %228 = vmatpush1.msra.mxu0 %v59
  %229 = vmatprep.subr.mxu0 0.0
  %230 = vmatpush1.msra.mxu0 %v60
  %231 = vmatprep.subr.mxu0 0.0
  %232 = vmatpush1.msra.mxu0 %v61
  %233 = vmatprep.subr.mxu0 0.0
  %234 = vmatpush1.msra.mxu0 %v62
  %235 = vmatprep.subr.mxu0 0.0
  %236 = vmatpush1.msra.mxu0 %v63
  %237 = vmatprep.subr.mxu0 0.0
  %238 = vmatpush1.msra.mxu0 %v64
  %239 = vmatprep.subr.mxu0 0.0
  %240 = vmatpush1.msra.mxu0 %v65
  %241 = vmatprep.subr.mxu0 0.0
  %242 = vmatpush1.msra.mxu0 %v66
  %243 = vmatprep.subr.mxu0 0.0
  %244 = vmatpush1.msra.mxu0 %v67
  %245 = vmatprep.subr.mxu0 0.0
  %246 = vmatpush1.msra.mxu0 %v68
  %247 = vmatprep.subr.mxu0 0.0
  %248 = vmatpush1.msra.mxu0 %v69
  %249 = vmatprep.subr.mxu0 0.0
  %250 = vmatpush1.msra.mxu0 %v70
  %251 = vmatprep.subr.mxu0 0.0
  %252 = vmatpush1.msra.mxu0 %v71
  %253 = vmatprep.subr.mxu0 0.0
  %254 = vmatpush1.msra.mxu0 %v72
  %255 = vmatprep.subr.mxu0 0.0
  %256 = vmatpush1.msra.mxu0 %v73
  %257 = vmatprep.subr.mxu0 0.0
  %258 = vmatpush1.msra.mxu0 %v74
  %259 = vmatprep.subr.mxu0 0.0
  %260 = vmatpush1.msra.mxu0 %v75
  %261 = vmatprep.subr.mxu0 0.0
  %262 = vmatpush1.msra.mxu0 %v76
  %263 = vmatprep.subr.mxu0 0.0
  %264 = vmatpush1.msra.mxu0 %v77
  %265 = vmatprep.subr.mxu0 0.0
  %266 = vmatpush1.msra.mxu0 %v78
  %267 = vmatprep.subr.mxu0 0.0
  %268 = vmatpush1.msra.mxu0 %v79
  %269 = vmatprep.subr.mxu0 0.0
  %270 = vmatpush1.msra.mxu0 %v80
  %271 = vmatprep.subr.mxu0 0.0
  %272 = vmatpush1.msra.mxu0 %v81
  %273 = vmatprep.subr.mxu0 0.0
  %274 = vmatpush1.msra.mxu0 %v82
  %275 = vmatprep.subr.mxu0 0.0
  %276 = vmatpush1.msra.mxu0 %v83
  %277 = vmatprep.subr.mxu0 0.0
  %278 = vmatpush1.msra.mxu0 %v84
  %279 = vmatprep.subr.mxu0 0.0
  %280 = vmatpush1.msra.mxu0 %v85
  %281 = vmatprep.subr.mxu0 0.0
  %282 = vmatpush1.msra.mxu0 %v86
  %283 = vmatprep.subr.mxu0 0.0
  %284 = vmatpush1.msra.mxu0 %v87
  %285 = vmatprep.subr.mxu0 0.0
  %286 = vmatpush1.msra.mxu0 %v88
  %287 = vmatprep.mubr.f32.mxu0 %v20
  %288 = vmatmul.mubr.f32.gmra.mrb[0].mxu0 %v19
  %v289 = vpop.f32.mrb[0].mxu0
  %v290 = vadd.f32 %v220, %v289
  %v291 = vpop.f32.mrb[0].mxu0
  %292 = vdwg.mxu0
  %293 = vmatprep.subr.mxu0 0.0
  %294 = vmatpush1.msra.mxu0 %v89
  %295 = vmatprep.subr.mxu0 0.0
  %296 = vmatpush1.msra.mxu0 %v90
  %297 = vmatprep.subr.mxu0 0.0
  %298 = vmatpush1.msra.mxu0 %v91
  %299 = vmatprep.subr.mxu0 0.0
  %300 = vmatpush1.msra.mxu0 %v92
  %301 = vmatprep.subr.mxu0 0.0
  %302 = vmatpush1.msra.mxu0 %v93
  %303 = vmatprep.subr.mxu0 0.0
  %304 = vmatpush1.msra.mxu0 %v94
  %305 = vmatprep.subr.mxu0 0.0
  %306 = vmatpush1.msra.mxu0 %v95
  %307 = vmatprep.subr.mxu0 0.0
  %308 = vmatpush1.msra.mxu0 %v96
  %309 = vmatprep.subr.mxu0 0.0
  %310 = vmatpush1.msra.mxu0 %v97
  %311 = vmatprep.subr.mxu0 0.0
  %312 = vmatpush1.msra.mxu0 %v98
  %313 = vmatprep.subr.mxu0 0.0
  %314 = vmatpush1.msra.mxu0 %v99
  %315 = vmatprep.subr.mxu0 0.0
  %316 = vmatpush1.msra.mxu0 %v100
  %317 = vmatprep.subr.mxu0 0.0
  %318 = vmatpush1.msra.mxu0 %v101
  %319 = vmatprep.subr.mxu0 0.0
  %320 = vmatpush1.msra.mxu0 %v102
  %321 = vmatprep.subr.mxu0 0.0
  %322 = vmatpush1.msra.mxu0 %v103
  %323 = vmatprep.subr.mxu0 0.0
  %324 = vmatpush1.msra.mxu0 %v104
  %325 = vmatprep.subr.mxu0 0.0
  %326 = vmatpush1.msra.mxu0 %v105
  %327 = vmatprep.subr.mxu0 0.0
  %328 = vmatpush1.msra.mxu0 %v106
  %329 = vmatprep.subr.mxu0 0.0
  %330 = vmatpush1.msra.mxu0 %v107
  %331 = vmatprep.subr.mxu0 0.0
  %332 = vmatpush1.msra.mxu0 %v108
  %333 = vmatprep.subr.mxu0 0.0
  %334 = vmatpush1.msra.mxu0 %v109
  %335 = vmatprep.subr.mxu0 0.0
  %336 = vmatpush1.msra.mxu0 %v110
  %337 = vmatprep.subr.mxu0 0.0
  %338 = vmatpush1.msra.mxu0 %v111
  %339 = vmatprep.subr.mxu0 0.0
  %340 = vmatpush1.msra.mxu0 %v112
  %341 = vmatprep.subr.mxu0 0.0
  %342 = vmatpush1.msra.mxu0 %v113
  %343 = vmatprep.subr.mxu0 0.0
  %344 = vmatpush1.msra.mxu0 %v114
  %345 = vmatprep.subr.mxu0 0.0
  %346 = vmatpush1.msra.mxu0 %v115
  %347 = vmatprep.subr.mxu0 0.0
  %348 = vmatpush1.msra.mxu0 %v116
  %349 = vmatprep.subr.mxu0 0.0
  %350 = vmatpush1.msra.mxu0 %v117
  %351 = vmatprep.subr.mxu0 0.0
  %352 = vmatpush1.msra.mxu0 %v118
  %353 = vmatprep.subr.mxu0 0.0
  %354 = vmatpush1.msra.mxu0 %v119
  %355 = vmatprep.subr.mxu0 0.0
  %356 = vmatpush1.msra.mxu0 %v120
  %357 = vmatprep.mubr.f32.mxu0 %v22
  %358 = vmatmul.mubr.f32.gmra.mrb[0].mxu0 %v21
  %v359 = vpop.f32.mrb[0].mxu0
  %v360 = vadd.f32 %v290, %v359
  %v361 = vpop.f32.mrb[0].mxu0
  %362 = vdwg.mxu0
  %363 = vmatprep.subr.mxu0 0.0
  %364 = vmatpush1.msra.mxu0 %v121
  %365 = vmatprep.subr.mxu0 0.0
  %366 = vmatpush1.msra.mxu0 %v122
  %367 = vmatprep.subr.mxu0 0.0
  %368 = vmatpush1.msra.mxu0 %v123
  %369 = vmatprep.subr.mxu0 0.0
  %370 = vmatpush1.msra.mxu0 %v124
  %371 = vmatprep.subr.mxu0 0.0
  %372 = vmatpush1.msra.mxu0 %v125
  %373 = vmatprep.subr.mxu0 0.0
  %374 = vmatpush1.msra.mxu0 %v126
  %375 = vmatprep.subr.mxu0 0.0
  %376 = vmatpush1.msra.mxu0 %v127
  %377 = vmatprep.subr.mxu0 0.0
  %378 = vmatpush1.msra.mxu0 %v128
  %379 = vmatprep.subr.mxu0 0.0
  %380 = vmatpush1.msra.mxu0 %v129
  %381 = vmatprep.subr.mxu0 0.0
  %382 = vmatpush1.msra.mxu0 %v130
  %383 = vmatprep.subr.mxu0 0.0
  %384 = vmatpush1.msra.mxu0 %v131
  %385 = vmatprep.subr.mxu0 0.0
  %386 = vmatpush1.msra.mxu0 %v132
  %387 = vmatprep.subr.mxu0 0.0
  %388 = vmatpush1.msra.mxu0 %v133
  %389 = vmatprep.subr.mxu0 0.0
  %390 = vmatpush1.msra.mxu0 %v134
  %391 = vmatprep.subr.mxu0 0.0
  %392 = vmatpush1.msra.mxu0 %v135
  %393 = vmatprep.subr.mxu0 0.0
  %394 = vmatpush1.msra.mxu0 %v136
  %395 = vmatprep.subr.mxu0 0.0
  %396 = vmatpush1.msra.mxu0 %v137
  %397 = vmatprep.subr.mxu0 0.0
  %398 = vmatpush1.msra.mxu0 %v138
  %399 = vmatprep.subr.mxu0 0.0
  %400 = vmatpush1.msra.mxu0 %v139
  %401 = vmatprep.subr.mxu0 0.0
  %402 = vmatpush1.msra.mxu0 %v140
  %403 = vmatprep.subr.mxu0 0.0
  %404 = vmatpush1.msra.mxu0 %v141
  %405 = vmatprep.subr.mxu0 0.0
  %406 = vmatpush1.msra.mxu0 %v142
  %407 = vmatprep.subr.mxu0 0.0
  %408 = vmatpush1.msra.mxu0 %v143
  %409 = vmatprep.subr.mxu0 0.0
  %410 = vmatpush1.msra.mxu0 %v144
  %411 = vmatprep.subr.mxu0 0.0
  %412 = vmatpush1.msra.mxu0 %v145
  %413 = vmatprep.subr.mxu0 0.0
  %414 = vmatpush1.msra.mxu0 %v146
  %415 = vmatprep.subr.mxu0 0.0
  %416 = vmatpush1.msra.mxu0 %v147
  %417 = vmatprep.subr.mxu0 0.0
  %418 = vmatpush1.msra.mxu0 %v148
  %419 = vmatprep.subr.mxu0 0.0
  %420 = vmatpush1.msra.mxu0 %v149
  %421 = vmatprep.subr.mxu0 0.0
  %422 = vmatpush1.msra.mxu0 %v150
  %423 = vmatprep.subr.mxu0 0.0
  %424 = vmatpush1.msra.mxu0 %v151
  %425 = vmatprep.subr.mxu0 0.0
  %426 = vmatpush1.msra.mxu0 %v152
  %427 = vmatprep.mubr.f32.mxu0 %v24
  %428 = vmatmul.mubr.f32.gmra.mrb[0].mxu0 %v23
  %v429 = vpop.f32.mrb[0].mxu0
  %v430 = vadd.f32 %v360, %v429
  %v431 = vpop.f32.mrb[0].mxu0
  %432 = vdwg.mxu0
  %v433 = vrot.slane %v430, 4
  %v434 = vadd.f32 %v430, %v433
  %v435 = vrot.slane %v434, 2
  %v436 = vadd.f32 %v434, %v435
  %v437 = vrot.slane %v436, 1
  %v438 = vadd.f32 %v436, %v437
  %v439 = vmul.f32 %v430, %v430
  %v440 = vrot.slane %v439, 4
  %v441 = vadd.f32 %v439, %v440
  %v442 = vrot.slane %v441, 2
  %v443 = vadd.f32 %v441, %v442
  %v444 = vrot.slane %v443, 1
  %v445 = vadd.f32 %v443, %v444
  %s446 = scalar_lea.vmem %s0, 64
  %v447 = vld [vmem:[%s446] sm:$0xff]
  %v448 = vld [vmem:[%s446 + $0x8] sm:$0xff]
  %v449 = vld [vmem:[%s446 + $0x10] sm:$0xff]
  %v450 = vld [vmem:[%s446 + $0x18] sm:$0xff]
  %v451 = vld [vmem:[%s446 + $0x20] sm:$0xff]
  %v452 = vld [vmem:[%s446 + $0x28] sm:$0xff]
  %v453 = vld [vmem:[%s446 + $0x30] sm:$0xff]
  %v454 = vld [vmem:[%s446 + $0x38] sm:$0xff]
  %s455 = scalar_lea.vmem %s1, 1024
  %v456 = vld [vmem:[%s455] sm:$0xff]
  %v457 = vld [vmem:[%s455 + $0x8] sm:$0xff]
  %v458 = vld [vmem:[%s455 + $0x10] sm:$0xff]
  %v459 = vld [vmem:[%s455 + $0x18] sm:$0xff]
  %v460 = vld [vmem:[%s455 + $0x20] sm:$0xff]
  %v461 = vld [vmem:[%s455 + $0x28] sm:$0xff]
  %v462 = vld [vmem:[%s455 + $0x30] sm:$0xff]
  %v463 = vld [vmem:[%s455 + $0x38] sm:$0xff]
  %v464 = vld [vmem:[%s455 + $0x40] sm:$0xff]
  %v465 = vld [vmem:[%s455 + $0x48] sm:$0xff]
  %v466 = vld [vmem:[%s455 + $0x50] sm:$0xff]
  %v467 = vld [vmem:[%s455 + $0x58] sm:$0xff]
  %v468 = vld [vmem:[%s455 + $0x60] sm:$0xff]
  %v469 = vld [vmem:[%s455 + $0x68] sm:$0xff]
  %v470 = vld [vmem:[%s455 + $0x70] sm:$0xff]
  %v471 = vld [vmem:[%s455 + $0x78] sm:$0xff]
  %v472 = vld [vmem:[%s455 + $0x80] sm:$0xff]
  %v473 = vld [vmem:[%s455 + $0x88] sm:$0xff]
  %v474 = vld [vmem:[%s455 + $0x90] sm:$0xff]
  %v475 = vld [vmem:[%s455 + $0x98] sm:$0xff]
  %v476 = vld [vmem:[%s455 + $0xa0] sm:$0xff]
  %v477 = vld [vmem:[%s455 + $0xa8] sm:$0xff]
  %v478 = vld [vmem:[%s455 + $0xb0] sm:$0xff]
  %v479 = vld [vmem:[%s455 + $0xb8] sm:$0xff]
  %v480 = vld [vmem:[%s455 + $0xc0] sm:$0xff]
  %v481 = vld [vmem:[%s455 + $0xc8] sm:$0xff]
  %v482 = vld [vmem:[%s455 + $0xd0] sm:$0xff]
  %v483 = vld [vmem:[%s455 + $0xd8] sm:$0xff]
  %v484 = vld [vmem:[%s455 + $0xe0] sm:$0xff]
  %v485 = vld [vmem:[%s455 + $0xe8] sm:$0xff]
  %v486 = vld [vmem:[%s455 + $0xf0] sm:$0xff]
  %v487 = vld [vmem:[%s455 + $0xf8] sm:$0xff]
  %v488 = vld [vmem:[%s455 + $0x100] sm:$0xff]
  %v489 = vld [vmem:[%s455 + $0x108] sm:$0xff]
  %v490 = vld [vmem:[%s455 + $0x110] sm:$0xff]
  %v491 = vld [vmem:[%s455 + $0x118] sm:$0xff]
  %v492 = vld [vmem:[%s455 + $0x120] sm:$0xff]
  %v493 = vld [vmem:[%s455 + $0x128] sm:$0xff]
  %v494 = vld [vmem:[%s455 + $0x130] sm:$0xff]
  %v495 = vld [vmem:[%s455 + $0x138] sm:$0xff]
  %v496 = vld [vmem:[%s455 + $0x140] sm:$0xff]
  %v497 = vld [vmem:[%s455 + $0x148] sm:$0xff]
  %v498 = vld [vmem:[%s455 + $0x150] sm:$0xff]
  %v499 = vld [vmem:[%s455 + $0x158] sm:$0xff]
  %v500 = vld [vmem:[%s455 + $0x160] sm:$0xff]
  %v501 = vld [vmem:[%s455 + $0x168] sm:$0xff]
  %v502 = vld [vmem:[%s455 + $0x170] sm:$0xff]
  %v503 = vld [vmem:[%s455 + $0x178] sm:$0xff]
  %v504 = vld [vmem:[%s455 + $0x180] sm:$0xff]
  %v505 = vld [vmem:[%s455 + $0x188] sm:$0xff]
  %v506 = vld [vmem:[%s455 + $0x190] sm:$0xff]
  %v507 = vld [vmem:[%s455 + $0x198] sm:$0xff]
  %v508 = vld [vmem:[%s455 + $0x1a0] sm:$0xff]
  %v509 = vld [vmem:[%s455 + $0x1a8] sm:$0xff]
  %v510 = vld [vmem:[%s455 + $0x1b0] sm:$0xff]
  %v511 = vld [vmem:[%s455 + $0x1b8] sm:$0xff]
  %v512 = vld [vmem:[%s455 + $0x1c0] sm:$0xff]
  %v513 = vld [vmem:[%s455 + $0x1c8] sm:$0xff]
  %v514 = vld [vmem:[%s455 + $0x1d0] sm:$0xff]
  %v515 = vld [vmem:[%s455 + $0x1d8] sm:$0xff]
  %v516 = vld [vmem:[%s455 + $0x1e0] sm:$0xff]
  %v517 = vld [vmem:[%s455 + $0x1e8] sm:$0xff]
  %v518 = vld [vmem:[%s455 + $0x1f0] sm:$0xff]
  %v519 = vld [vmem:[%s455 + $0x1f8] sm:$0xff]
  %v520 = vld [vmem:[%s455 + $0x200] sm:$0xff]
  %v521 = vld [vmem:[%s455 + $0x208] sm:$0xff]
  %v522 = vld [vmem:[%s455 + $0x210] sm:$0xff]
  %v523 = vld [vmem:[%s455 + $0x218] sm:$0xff]
  %v524 = vld [vmem:[%s455 + $0x220] sm:$0xff]
  %v525 = vld [vmem:[%s455 + $0x228] sm:$0xff]
  %v526 = vld [vmem:[%s455 + $0x230] sm:$0xff]
  %v527 = vld [vmem:[%s455 + $0x238] sm:$0xff]
  %v528 = vld [vmem:[%s455 + $0x240] sm:$0xff]
  %v529 = vld [vmem:[%s455 + $0x248] sm:$0xff]
  %v530 = vld [vmem:[%s455 + $0x250] sm:$0xff]
  %v531 = vld [vmem:[%s455 + $0x258] sm:$0xff]
  %v532 = vld [vmem:[%s455 + $0x260] sm:$0xff]
  %v533 = vld [vmem:[%s455 + $0x268] sm:$0xff]
  %v534 = vld [vmem:[%s455 + $0x270] sm:$0xff]
  %v535 = vld [vmem:[%s455 + $0x278] sm:$0xff]
  %v536 = vld [vmem:[%s455 + $0x280] sm:$0xff]
  %v537 = vld [vmem:[%s455 + $0x288] sm:$0xff]
  %v538 = vld [vmem:[%s455 + $0x290] sm:$0xff]
  %v539 = vld [vmem:[%s455 + $0x298] sm:$0xff]
  %v540 = vld [vmem:[%s455 + $0x2a0] sm:$0xff]
  %v541 = vld [vmem:[%s455 + $0x2a8] sm:$0xff]
  %v542 = vld [vmem:[%s455 + $0x2b0] sm:$0xff]
  %v543 = vld [vmem:[%s455 + $0x2b8] sm:$0xff]
  %v544 = vld [vmem:[%s455 + $0x2c0] sm:$0xff]
  %v545 = vld [vmem:[%s455 + $0x2c8] sm:$0xff]
  %v546 = vld [vmem:[%s455 + $0x2d0] sm:$0xff]
  %v547 = vld [vmem:[%s455 + $0x2d8] sm:$0xff]
  %v548 = vld [vmem:[%s455 + $0x2e0] sm:$0xff]
  %v549 = vld [vmem:[%s455 + $0x2e8] sm:$0xff]
  %v550 = vld [vmem:[%s455 + $0x2f0] sm:$0xff]
  %v551 = vld [vmem:[%s455 + $0x2f8] sm:$0xff]
  %v552 = vld [vmem:[%s455 + $0x300] sm:$0xff]
  %v553 = vld [vmem:[%s455 + $0x308] sm:$0xff]
  %v554 = vld [vmem:[%s455 + $0x310] sm:$0xff]
  %v555 = vld [vmem:[%s455 + $0x318] sm:$0xff]
  %v556 = vld [vmem:[%s455 + $0x320] sm:$0xff]
  %v557 = vld [vmem:[%s455 + $0x328] sm:$0xff]
  %v558 = vld [vmem:[%s455 + $0x330] sm:$0xff]
  %v559 = vld [vmem:[%s455 + $0x338] sm:$0xff]
  %v560 = vld [vmem:[%s455 + $0x340] sm:$0xff]
  %v561 = vld [vmem:[%s455 + $0x348] sm:$0xff]
  %v562 = vld [vmem:[%s455 + $0x350] sm:$0xff]
  %v563 = vld [vmem:[%s455 + $0x358] sm:$0xff]
  %v564 = vld [vmem:[%s455 + $0x360] sm:$0xff]
  %v565 = vld [vmem:[%s455 + $0x368] sm:$0xff]
  %v566 = vld [vmem:[%s455 + $0x370] sm:$0xff]
  %v567 = vld [vmem:[%s455 + $0x378] sm:$0xff]
  %v568 = vld [vmem:[%s455 + $0x380] sm:$0xff]
  %v569 = vld [vmem:[%s455 + $0x388] sm:$0xff]
  %v570 = vld [vmem:[%s455 + $0x390] sm:$0xff]
  %v571 = vld [vmem:[%s455 + $0x398] sm:$0xff]
  %v572 = vld [vmem:[%s455 + $0x3a0] sm:$0xff]
  %v573 = vld [vmem:[%s455 + $0x3a8] sm:$0xff]
  %v574 = vld [vmem:[%s455 + $0x3b0] sm:$0xff]
  %v575 = vld [vmem:[%s455 + $0x3b8] sm:$0xff]
  %v576 = vld [vmem:[%s455 + $0x3c0] sm:$0xff]
  %v577 = vld [vmem:[%s455 + $0x3c8] sm:$0xff]
  %v578 = vld [vmem:[%s455 + $0x3d0] sm:$0xff]
  %v579 = vld [vmem:[%s455 + $0x3d8] sm:$0xff]
  %v580 = vld [vmem:[%s455 + $0x3e0] sm:$0xff]
  %v581 = vld [vmem:[%s455 + $0x3e8] sm:$0xff]
  %v582 = vld [vmem:[%s455 + $0x3f0] sm:$0xff]
  %v583 = vld [vmem:[%s455 + $0x3f8] sm:$0xff]
  %584 = vmatprep.subr.mxu0 0.0
  %585 = vmatpush1.msra.mxu0 %v456
  %586 = vmatprep.subr.mxu0 0.0
  %587 = vmatpush1.msra.mxu0 %v457
  %588 = vmatprep.subr.mxu0 0.0
  %589 = vmatpush1.msra.mxu0 %v458
  %590 = vmatprep.subr.mxu0 0.0
  %591 = vmatpush1.msra.mxu0 %v459
  %592 = vmatprep.subr.mxu0 0.0
  %593 = vmatpush1.msra.mxu0 %v460
  %594 = vmatprep.subr.mxu0 0.0
  %595 = vmatpush1.msra.mxu0 %v461
  %596 = vmatprep.subr.mxu0 0.0
  %597 = vmatpush1.msra.mxu0 %v462
  %598 = vmatprep.subr.mxu0 0.0
  %599 = vmatpush1.msra.mxu0 %v463
  %600 = vmatprep.subr.mxu0 0.0
  %601 = vmatpush1.msra.mxu0 %v464
  %602 = vmatprep.subr.mxu0 0.0
  %603 = vmatpush1.msra.mxu0 %v465
  %604 = vmatprep.subr.mxu0 0.0
  %605 = vmatpush1.msra.mxu0 %v466
  %606 = vmatprep.subr.mxu0 0.0
  %607 = vmatpush1.msra.mxu0 %v467
  %608 = vmatprep.subr.mxu0 0.0
  %609 = vmatpush1.msra.mxu0 %v468
  %610 = vmatprep.subr.mxu0 0.0
  %611 = vmatpush1.msra.mxu0 %v469
  %612 = vmatprep.subr.mxu0 0.0
  %613 = vmatpush1.msra.mxu0 %v470
  %614 = vmatprep.subr.mxu0 0.0
  %615 = vmatpush1.msra.mxu0 %v471
  %616 = vmatprep.subr.mxu0 0.0
  %617 = vmatpush1.msra.mxu0 %v472
  %618 = vmatprep.subr.mxu0 0.0
  %619 = vmatpush1.msra.mxu0 %v473
  %620 = vmatprep.subr.mxu0 0.0
  %621 = vmatpush1.msra.mxu0 %v474
  %622 = vmatprep.subr.mxu0 0.0
  %623 = vmatpush1.msra.mxu0 %v475
  %624 = vmatprep.subr.mxu0 0.0
  %625 = vmatpush1.msra.mxu0 %v476
  %626 = vmatprep.subr.mxu0 0.0
  %627 = vmatpush1.msra.mxu0 %v477
  %628 = vmatprep.subr.mxu0 0.0
  %629 = vmatpush1.msra.mxu0 %v478
  %630 = vmatprep.subr.mxu0 0.0
  %631 = vmatpush1.msra.mxu0 %v479
  %632 = vmatprep.subr.mxu0 0.0
  %633 = vmatpush1.msra.mxu0 %v480
  %634 = vmatprep.subr.mxu0 0.0
  %635 = vmatpush1.msra.mxu0 %v481
  %636 = vmatprep.subr.mxu0 0.0
  %637 = vmatpush1.msra.mxu0 %v482
  %638 = vmatprep.subr.mxu0 0.0
  %639 = vmatpush1.msra.mxu0 %v483
  %640 = vmatprep.subr.mxu0 0.0
  %641 = vmatpush1.msra.mxu0 %v484
  %642 = vmatprep.subr.mxu0 0.0
  %643 = vmatpush1.msra.mxu0 %v485
  %644 = vmatprep.subr.mxu0 0.0
  %645 = vmatpush1.msra.mxu0 %v486
  %646 = vmatprep.subr.mxu0 0.0
  %647 = vmatpush1.msra.mxu0 %v487
  %648 = vmatprep.mubr.f32.mxu0 %v448
  %649 = vmatmul.mubr.f32.gmra.mrb[0].mxu0 %v447
  %v650 = vpop.f32.mrb[0].mxu0
  %v651 = vadd.f32 0.0, %v650
  %v652 = vpop.f32.mrb[0].mxu0
  %653 = vdwg.mxu0
  %654 = vmatprep.subr.mxu0 0.0
  %655 = vmatpush1.msra.mxu0 %v488
  %656 = vmatprep.subr.mxu0 0.0
  %657 = vmatpush1.msra.mxu0 %v489
  %658 = vmatprep.subr.mxu0 0.0
  %659 = vmatpush1.msra.mxu0 %v490
  %660 = vmatprep.subr.mxu0 0.0
  %661 = vmatpush1.msra.mxu0 %v491
  %662 = vmatprep.subr.mxu0 0.0
  %663 = vmatpush1.msra.mxu0 %v492
  %664 = vmatprep.subr.mxu0 0.0
  %665 = vmatpush1.msra.mxu0 %v493
  %666 = vmatprep.subr.mxu0 0.0
  %667 = vmatpush1.msra.mxu0 %v494
  %668 = vmatprep.subr.mxu0 0.0
  %669 = vmatpush1.msra.mxu0 %v495
  %670 = vmatprep.subr.mxu0 0.0
  %671 = vmatpush1.msra.mxu0 %v496
  %672 = vmatprep.subr.mxu0 0.0
  %673 = vmatpush1.msra.mxu0 %v497
  %674 = vmatprep.subr.mxu0 0.0
  %675 = vmatpush1.msra.mxu0 %v498
  %676 = vmatprep.subr.mxu0 0.0
  %677 = vmatpush1.msra.mxu0 %v499
  %678 = vmatprep.subr.mxu0 0.0
  %679 = vmatpush1.msra.mxu0 %v500
  %680 = vmatprep.subr.mxu0 0.0
  %681 = vmatpush1.msra.mxu0 %v501
  %682 = vmatprep.subr.mxu0 0.0
  %683 = vmatpush1.msra.mxu0 %v502
  %684 = vmatprep.subr.mxu0 0.0
  %685 = vmatpush1.msra.mxu0 %v503
  %686 = vmatprep.subr.mxu0 0.0
  %687 = vmatpush1.msra.mxu0 %v504
  %688 = vmatprep.subr.mxu0 0.0
  %689 = vmatpush1.msra.mxu0 %v505
  %690 = vmatprep.subr.mxu0 0.0
  %691 = vmatpush1.msra.mxu0 %v506
  %692 = vmatprep.subr.mxu0 0.0
  %693 = vmatpush1.msra.mxu0 %v507
  %694 = vmatprep.subr.mxu0 0.0
  %695 = vmatpush1.msra.mxu0 %v508
  %696 = vmatprep.subr.mxu0 0.0
  %697 = vmatpush1.msra.mxu0 %v509
  %698 = vmatprep.subr.mxu0 0.0
  %699 = vmatpush1.msra.mxu0 %v510
  %700 = vmatprep.subr.mxu0 0.0
  %701 = vmatpush1.msra.mxu0 %v511
  %702 = vmatprep.subr.mxu0 0.0
  %703 = vmatpush1.msra.mxu0 %v512
  %704 = vmatprep.subr.mxu0 0.0
  %705 = vmatpush1.msra.mxu0 %v513
  %706 = vmatprep.subr.mxu0 0.0
  %707 = vmatpush1.msra.mxu0 %v514
  %708 = vmatprep.subr.mxu0 0.0
  %709 = vmatpush1.msra.mxu0 %v515
  %710 = vmatprep.subr.mxu0 0.0
  %711 = vmatpush1.msra.mxu0 %v516
  %712 = vmatprep.subr.mxu0 0.0
  %713 = vmatpush1.msra.mxu0 %v517
  %714 = vmatprep.subr.mxu0 0.0
  %715 = vmatpush1.msra.mxu0 %v518
  %716 = vmatprep.subr.mxu0 0.0
  %717 = vmatpush1.msra.mxu0 %v519
  %718 = vmatprep.mubr.f32.mxu0 %v450
  %719 = vmatmul.mubr.f32.gmra.mrb[0].mxu0 %v449
  %v720 = vpop.f32.mrb[0].mxu0
  %v721 = vadd.f32 %v651, %v720
  %v722 = vpop.f32.mrb[0].mxu0
  %723 = vdwg.mxu0
  %724 = vmatprep.subr.mxu0 0.0
  %725 = vmatpush1.msra.mxu0 %v520
  %726 = vmatprep.subr.mxu0 0.0
  %727 = vmatpush1.msra.mxu0 %v521
  %728 = vmatprep.subr.mxu0 0.0
  %729 = vmatpush1.msra.mxu0 %v522
  %730 = vmatprep.subr.mxu0 0.0
  %731 = vmatpush1.msra.mxu0 %v523
  %732 = vmatprep.subr.mxu0 0.0
  %733 = vmatpush1.msra.mxu0 %v524
  %734 = vmatprep.subr.mxu0 0.0
  %735 = vmatpush1.msra.mxu0 %v525
  %736 = vmatprep.subr.mxu0 0.0
  %737 = vmatpush1.msra.mxu0 %v526
  %738 = vmatprep.subr.mxu0 0.0
  %739 = vmatpush1.msra.mxu0 %v527
  %740 = vmatprep.subr.mxu0 0.0
  %741 = vmatpush1.msra.mxu0 %v528
  %742 = vmatprep.subr.mxu0 0.0
  %743 = vmatpush1.msra.mxu0 %v529
  %744 = vmatprep.subr.mxu0 0.0
  %745 = vmatpush1.msra.mxu0 %v530
  %746 = vmatprep.subr.mxu0 0.0
  %747 = vmatpush1.msra.mxu0 %v531
  %748 = vmatprep.subr.mxu0 0.0
  %749 = vmatpush1.msra.mxu0 %v532
  %750 = vmatprep.subr.mxu0 0.0
  %751 = vmatpush1.msra.mxu0 %v533
  %752 = vmatprep.subr.mxu0 0.0
  %753 = vmatpush1.msra.mxu0 %v534
  %754 = vmatprep.subr.mxu0 0.0
  %755 = vmatpush1.msra.mxu0 %v535
  %756 = vmatprep.subr.mxu0 0.0
  %757 = vmatpush1.msra.mxu0 %v536
  %758 = vmatprep.subr.mxu0 0.0
  %759 = vmatpush1.msra.mxu0 %v537
  %760 = vmatprep.subr.mxu0 0.0
  %761 = vmatpush1.msra.mxu0 %v538
  %762 = vmatprep.subr.mxu0 0.0
  %763 = vmatpush1.msra.mxu0 %v539
  %764 = vmatprep.subr.mxu0 0.0
  %765 = vmatpush1.msra.mxu0 %v540
  %766 = vmatprep.subr.mxu0 0.0
  %767 = vmatpush1.msra.mxu0 %v541
  %768 = vmatprep.subr.mxu0 0.0
  %769 = vmatpush1.msra.mxu0 %v542
  %770 = vmatprep.subr.mxu0 0.0
  %771 = vmatpush1.msra.mxu0 %v543
  %772 = vmatprep.subr.mxu0 0.0
  %773 = vmatpush1.msra.mxu0 %v544
  %774 = vmatprep.subr.mxu0 0.0
  %775 = vmatpush1.msra.mxu0 %v545
  %776 = vmatprep.subr.mxu0 0.0
  %777 = vmatpush1.msra.mxu0 %v546
  %778 = vmatprep.subr.mxu0 0.0
  %779 = vmatpush1.msra.mxu0 %v547
  %780 = vmatprep.subr.mxu0 0.0
  %781 = vmatpush1.msra.mxu0 %v548
  %782 = vmatprep.subr.mxu0 0.0
  %783 = vmatpush1.msra.mxu0 %v549
  %784 = vmatprep.subr.mxu0 0.0
  %785 = vmatpush1.msra.mxu0 %v550
  %786 = vmatprep.subr.mxu0 0.0
  %787 = vmatpush1.msra.mxu0 %v551
  %788 = vmatprep.mubr.f32.mxu0 %v452
  %789 = vmatmul.mubr.f32.gmra.mrb[0].mxu0 %v451
  %v790 = vpop.f32.mrb[0].mxu0
  %v791 = vadd.f32 %v721, %v790
  %v792 = vpop.f32.mrb[0].mxu0
  %793 = vdwg.mxu0
  %794 = vmatprep.subr.mxu0 0.0
  %795 = vmatpush1.msra.mxu0 %v552
  %796 = vmatprep.subr.mxu0 0.0
  %797 = vmatpush1.msra.mxu0 %v553
  %798 = vmatprep.subr.mxu0 0.0
  %799 = vmatpush1.msra.mxu0 %v554
  %800 = vmatprep.subr.mxu0 0.0
  %801 = vmatpush1.msra.mxu0 %v555
  %802 = vmatprep.subr.mxu0 0.0
  %803 = vmatpush1.msra.mxu0 %v556
  %804 = vmatprep.subr.mxu0 0.0
  %805 = vmatpush1.msra.mxu0 %v557
  %806 = vmatprep.subr.mxu0 0.0
  %807 = vmatpush1.msra.mxu0 %v558
  %808 = vmatprep.subr.mxu0 0.0
  %809 = vmatpush1.msra.mxu0 %v559
  %810 = vmatprep.subr.mxu0 0.0
  %811 = vmatpush1.msra.mxu0 %v560
  %812 = vmatprep.subr.mxu0 0.0
  %813 = vmatpush1.msra.mxu0 %v561
  %814 = vmatprep.subr.mxu0 0.0
  %815 = vmatpush1.msra.mxu0 %v562
  %816 = vmatprep.subr.mxu0 0.0
  %817 = vmatpush1.msra.mxu0 %v563
  %818 = vmatprep.subr.mxu0 0.0
  %819 = vmatpush1.msra.mxu0 %v564
  %820 = vmatprep.subr.mxu0 0.0
  %821 = vmatpush1.msra.mxu0 %v565
  %822 = vmatprep.subr.mxu0 0.0
  %823 = vmatpush1.msra.mxu0 %v566
  %824 = vmatprep.subr.mxu0 0.0
  %825 = vmatpush1.msra.mxu0 %v567
  %826 = vmatprep.subr.mxu0 0.0
  %827 = vmatpush1.msra.mxu0 %v568
  %828 = vmatprep.subr.mxu0 0.0
  %829 = vmatpush1.msra.mxu0 %v569
  %830 = vmatprep.subr.mxu0 0.0
  %831 = vmatpush1.msra.mxu0 %v570
  %832 = vmatprep.subr.mxu0 0.0
  %833 = vmatpush1.msra.mxu0 %v571
  %834 = vmatprep.subr.mxu0 0.0
  %835 = vmatpush1.msra.mxu0 %v572
  %836 = vmatprep.subr.mxu0 0.0
  %837 = vmatpush1.msra.mxu0 %v573
  %838 = vmatprep.subr.mxu0 0.0
  %839 = vmatpush1.msra.mxu0 %v574
  %840 = vmatprep.subr.mxu0 0.0
  %841 = vmatpush1.msra.mxu0 %v575
  %842 = vmatprep.subr.mxu0 0.0
  %843 = vmatpush1.msra.mxu0 %v576
  %844 = vmatprep.subr.mxu0 0.0
  %845 = vmatpush1.msra.mxu0 %v577
  %846 = vmatprep.subr.mxu0 0.0
  %847 = vmatpush1.msra.mxu0 %v578
  %848 = vmatprep.subr.mxu0 0.0
  %849 = vmatpush1.msra.mxu0 %v579
  %850 = vmatprep.subr.mxu0 0.0
  %851 = vmatpush1.msra.mxu0 %v580
  %852 = vmatprep.subr.mxu0 0.0
  %853 = vmatpush1.msra.mxu0 %v581
  %854 = vmatprep.subr.mxu0 0.0
  %855 = vmatpush1.msra.mxu0 %v582
  %856 = vmatprep.subr.mxu0 0.0
  %857 = vmatpush1.msra.mxu0 %v583
  %858 = vmatprep.mubr.f32.mxu0 %v454
  %859 = vmatmul.mubr.f32.gmra.mrb[0].mxu0 %v453
  %v860 = vpop.f32.mrb[0].mxu0
  %v861 = vadd.f32 %v791, %v860
  %v862 = vpop.f32.mrb[0].mxu0
  %863 = vdwg.mxu0
  %v864 = vrot.slane %v861, 4
  %v865 = vadd.f32 %v861, %v864
  %v866 = vrot.slane %v865, 2
  %v867 = vadd.f32 %v865, %v866
  %v868 = vrot.slane %v867, 1
  %v869 = vadd.f32 %v867, %v868
  %v870 = vmul.f32 %v861, %v861
  %v871 = vrot.slane %v870, 4
  %v872 = vadd.f32 %v870, %v871
  %v873 = vrot.slane %v872, 2
  %v874 = vadd.f32 %v872, %v873
  %v875 = vrot.slane %v874, 1
  %v876 = vadd.f32 %v874, %v875
  %v877 = vadd.f32 %v438, %v869
  %v878 = vadd.f32 %v445, %v876
  %s879 = scalar_lea.vmem %s0, 128
  %v880 = vld [vmem:[%s879] sm:$0xff]
  %v881 = vld [vmem:[%s879 + $0x8] sm:$0xff]
  %v882 = vld [vmem:[%s879 + $0x10] sm:$0xff]
  %v883 = vld [vmem:[%s879 + $0x18] sm:$0xff]
  %v884 = vld [vmem:[%s879 + $0x20] sm:$0xff]
  %v885 = vld [vmem:[%s879 + $0x28] sm:$0xff]
  %v886 = vld [vmem:[%s879 + $0x30] sm:$0xff]
  %v887 = vld [vmem:[%s879 + $0x38] sm:$0xff]
  %s888 = scalar_lea.vmem %s1, 2048
  %v889 = vld [vmem:[%s888] sm:$0xff]
  %v890 = vld [vmem:[%s888 + $0x8] sm:$0xff]
  %v891 = vld [vmem:[%s888 + $0x10] sm:$0xff]
  %v892 = vld [vmem:[%s888 + $0x18] sm:$0xff]
  %v893 = vld [vmem:[%s888 + $0x20] sm:$0xff]
  %v894 = vld [vmem:[%s888 + $0x28] sm:$0xff]
  %v895 = vld [vmem:[%s888 + $0x30] sm:$0xff]
  %v896 = vld [vmem:[%s888 + $0x38] sm:$0xff]
  %v897 = vld [vmem:[%s888 + $0x40] sm:$0xff]
  %v898 = vld [vmem:[%s888 + $0x48] sm:$0xff]
  %v899 = vld [vmem:[%s888 + $0x50] sm:$0xff]
  %v900 = vld [vmem:[%s888 + $0x58] sm:$0xff]
  %v901 = vld [vmem:[%s888 + $0x60] sm:$0xff]
  %v902 = vld [vmem:[%s888 + $0x68] sm:$0xff]
  %v903 = vld [vmem:[%s888 + $0x70] sm:$0xff]
  %v904 = vld [vmem:[%s888 + $0x78] sm:$0xff]
  %v905 = vld [vmem:[%s888 + $0x80] sm:$0xff]
  %v906 = vld [vmem:[%s888 + $0x88] sm:$0xff]
  %v907 = vld [vmem:[%s888 + $0x90] sm:$0xff]
  %v908 = vld [vmem:[%s888 + $0x98] sm:$0xff]
  %v909 = vld [vmem:[%s888 + $0xa0] sm:$0xff]
  %v910 = vld [vmem:[%s888 + $0xa8] sm:$0xff]
  %v911 = vld [vmem:[%s888 + $0xb0] sm:$0xff]
  %v912 = vld [vmem:[%s888 + $0xb8] sm:$0xff]
  %v913 = vld [vmem:[%s888 + $0xc0] sm:$0xff]
  %v914 = vld [vmem:[%s888 + $0xc8] sm:$0xff]
  %v915 = vld [vmem:[%s888 + $0xd0] sm:$0xff]
  %v916 = vld [vmem:[%s888 + $0xd8] sm:$0xff]
  %v917 = vld [vmem:[%s888 + $0xe0] sm:$0xff]
  %v918 = vld [vmem:[%s888 + $0xe8] sm:$0xff]
  %v919 = vld [vmem:[%s888 + $0xf0] sm:$0xff]
  %v920 = vld [vmem:[%s888 + $0xf8] sm:$0xff]
  %v921 = vld [vmem:[%s888 + $0x100] sm:$0xff]
  %v922 = vld [vmem:[%s888 + $0x108] sm:$0xff]
  %v923 = vld [vmem:[%s888 + $0x110] sm:$0xff]
  %v924 = vld [vmem:[%s888 + $0x118] sm:$0xff]
  %v925 = vld [vmem:[%s888 + $0x120] sm:$0xff]
  %v926 = vld [vmem:[%s888 + $0x128] sm:$0xff]
  %v927 = vld [vmem:[%s888 + $0x130] sm:$0xff]
  %v928 = vld [vmem:[%s888 + $0x138] sm:$0xff]
  %v929 = vld [vmem:[%s888 + $0x140] sm:$0xff]
  %v930 = vld [vmem:[%s888 + $0x148] sm:$0xff]
  %v931 = vld [vmem:[%s888 + $0x150] sm:$0xff]
  %v932 = vld [vmem:[%s888 + $0x158] sm:$0xff]
  %v933 = vld [vmem:[%s888 + $0x160] sm:$0xff]
  %v934 = vld [vmem:[%s888 + $0x168] sm:$0xff]
  %v935 = vld [vmem:[%s888 + $0x170] sm:$0xff]
  %v936 = vld [vmem:[%s888 + $0x178] sm:$0xff]
  %v937 = vld [vmem:[%s888 + $0x180] sm:$0xff]
  %v938 = vld [vmem:[%s888 + $0x188] sm:$0xff]
  %v939 = vld [vmem:[%s888 + $0x190] sm:$0xff]
  %v940 = vld [vmem:[%s888 + $0x198] sm:$0xff]
  %v941 = vld [vmem:[%s888 + $0x1a0] sm:$0xff]
  %v942 = vld [vmem:[%s888 + $0x1a8] sm:$0xff]
  %v943 = vld [vmem:[%s888 + $0x1b0] sm:$0xff]
  %v944 = vld [vmem:[%s888 + $0x1b8] sm:$0xff]
  %v945 = vld [vmem:[%s888 + $0x1c0] sm:$0xff]
  %v946 = vld [vmem:[%s888 + $0x1c8] sm:$0xff]
  %v947 = vld [vmem:[%s888 + $0x1d0] sm:$0xff]
  %v948 = vld [vmem:[%s888 + $0x1d8] sm:$0xff]
  %v949 = vld [vmem:[%s888 + $0x1e0] sm:$0xff]
  %v950 = vld [vmem:[%s888 + $0x1e8] sm:$0xff]
  %v951 = vld [vmem:[%s888 + $0x1f0] sm:$0xff]
  %v952 = vld [vmem:[%s888 + $0x1f8] sm:$0xff]
  %v953 = vld [vmem:[%s888 + $0x200] sm:$0xff]
  %v954 = vld [vmem:[%s888 + $0x208] sm:$0xff]
  %v955 = vld [vmem:[%s888 + $0x210] sm:$0xff]
  %v956 = vld [vmem:[%s888 + $0x218] sm:$0xff]
  %v957 = vld [vmem:[%s888 + $0x220] sm:$0xff]
  %v958 = vld [vmem:[%s888 + $0x228] sm:$0xff]
  %v959 = vld [vmem:[%s888 + $0x230] sm:$0xff]
  %v960 = vld [vmem:[%s888 + $0x238] sm:$0xff]
  %v961 = vld [vmem:[%s888 + $0x240] sm:$0xff]
  %v962 = vld [vmem:[%s888 + $0x248] sm:$0xff]
  %v963 = vld [vmem:[%s888 + $0x250] sm:$0xff]
  %v964 = vld [vmem:[%s888 + $0x258] sm:$0xff]
  %v965 = vld [vmem:[%s888 + $0x260] sm:$0xff]
  %v966 = vld [vmem:[%s888 + $0x268] sm:$0xff]
  %v967 = vld [vmem:[%s888 + $0x270] sm:$0xff]
  %v968 = vld [vmem:[%s888 + $0x278] sm:$0xff]
  %v969 = vld [vmem:[%s888 + $0x280] sm:$0xff]
  %v970 = vld [vmem:[%s888 + $0x288] sm:$0xff]
  %v971 = vld [vmem:[%s888 + $0x290] sm:$0xff]
  %v972 = vld [vmem:[%s888 + $0x298] sm:$0xff]
  %v973 = vld [vmem:[%s888 + $0x2a0] sm:$0xff]
  %v974 = vld [vmem:[%s888 + $0x2a8] sm:$0xff]
  %v975 = vld [vmem:[%s888 + $0x2b0] sm:$0xff]
  %v976 = vld [vmem:[%s888 + $0x2b8] sm:$0xff]
  %v977 = vld [vmem:[%s888 + $0x2c0] sm:$0xff]
  %v978 = vld [vmem:[%s888 + $0x2c8] sm:$0xff]
  %v979 = vld [vmem:[%s888 + $0x2d0] sm:$0xff]
  %v980 = vld [vmem:[%s888 + $0x2d8] sm:$0xff]
  %v981 = vld [vmem:[%s888 + $0x2e0] sm:$0xff]
  %v982 = vld [vmem:[%s888 + $0x2e8] sm:$0xff]
  %v983 = vld [vmem:[%s888 + $0x2f0] sm:$0xff]
  %v984 = vld [vmem:[%s888 + $0x2f8] sm:$0xff]
  %v985 = vld [vmem:[%s888 + $0x300] sm:$0xff]
  %v986 = vld [vmem:[%s888 + $0x308] sm:$0xff]
  %v987 = vld [vmem:[%s888 + $0x310] sm:$0xff]
  %v988 = vld [vmem:[%s888 + $0x318] sm:$0xff]
  %v989 = vld [vmem:[%s888 + $0x320] sm:$0xff]
  %v990 = vld [vmem:[%s888 + $0x328] sm:$0xff]
  %v991 = vld [vmem:[%s888 + $0x330] sm:$0xff]
  %v992 = vld [vmem:[%s888 + $0x338] sm:$0xff]
  %v993 = vld [vmem:[%s888 + $0x340] sm:$0xff]
  %v994 = vld [vmem:[%s888 + $0x348] sm:$0xff]
  %v995 = vld [vmem:[%s888 + $0x350] sm:$0xff]
  %v996 = vld [vmem:[%s888 + $0x358] sm:$0xff]
  %v997 = vld [vmem:[%s888 + $0x360] sm:$0xff]
  %v998 = vld [vmem:[%s888 + $0x368] sm:$0xff]
  %v999 = vld [vmem:[%s888 + $0x370] sm:$0xff]
  %v1000 = vld [vmem:[%s888 + $0x378] sm:$0xff]
  %v1001 = vld [vmem:[%s888 + $0x380] sm:$0xff]
  %v1002 = vld [vmem:[%s888 + $0x388] sm:$0xff]
  %v1003 = vld [vmem:[%s888 + $0x390] sm:$0xff]
  %v1004 = vld [vmem:[%s888 + $0x398] sm:$0xff]
  %v1005 = vld [vmem:[%s888 + $0x3a0] sm:$0xff]
  %v1006 = vld [vmem:[%s888 + $0x3a8] sm:$0xff]
  %v1007 = vld [vmem:[%s888 + $0x3b0] sm:$0xff]
  %v1008 = vld [vmem:[%s888 + $0x3b8] sm:$0xff]
  %v1009 = vld [vmem:[%s888 + $0x3c0] sm:$0xff]
  %v1010 = vld [vmem:[%s888 + $0x3c8] sm:$0xff]
  %v1011 = vld [vmem:[%s888 + $0x3d0] sm:$0xff]
  %v1012 = vld [vmem:[%s888 + $0x3d8] sm:$0xff]
  %v1013 = vld [vmem:[%s888 + $0x3e0] sm:$0xff]
  %v1014 = vld [vmem:[%s888 + $0x3e8] sm:$0xff]
  %v1015 = vld [vmem:[%s888 + $0x3f0] sm:$0xff]
  %v1016 = vld [vmem:[%s888 + $0x3f8] sm:$0xff]
  %1017 = vmatprep.subr.mxu0 0.0
  %1018 = vmatpush1.msra.mxu0 %v889
  %1019 = vmatprep.subr.mxu0 0.0
  %1020 = vmatpush1.msra.mxu0 %v890
  %1021 = vmatprep.subr.mxu0 0.0
  %1022 = vmatpush1.msra.mxu0 %v891
  %1023 = vmatprep.subr.mxu0 0.0
  %1024 = vmatpush1.msra.mxu0 %v892
  %1025 = vmatprep.subr.mxu0 0.0
  %1026 = vmatpush1.msra.mxu0 %v893
  %1027 = vmatprep.subr.mxu0 0.0
  %1028 = vmatpush1.msra.mxu0 %v894
  %1029 = vmatprep.subr.mxu0 0.0
  %1030 = vmatpush1.msra.mxu0 %v895
  %1031 = vmatprep.subr.mxu0 0.0
  %1032 = vmatpush1.msra.mxu0 %v896
  %1033 = vmatprep.subr.mxu0 0.0
  %1034 = vmatpush1.msra.mxu0 %v897
  %1035 = vmatprep.subr.mxu0 0.0
  %1036 = vmatpush1.msra.mxu0 %v898
  %1037 = vmatprep.subr.mxu0 0.0
  %1038 = vmatpush1.msra.mxu0 %v899
  %1039 = vmatprep.subr.mxu0 0.0
  %1040 = vmatpush1.msra.mxu0 %v900
  %1041 = vmatprep.subr.mxu0 0.0
  %1042 = vmatpush1.msra.mxu0 %v901
  %1043 = vmatprep.subr.mxu0 0.0
  %1044 = vmatpush1.msra.mxu0 %v902
  %1045 = vmatprep.subr.mxu0 0.0
  %1046 = vmatpush1.msra.mxu0 %v903
  %1047 = vmatprep.subr.mxu0 0.0
  %1048 = vmatpush1.msra.mxu0 %v904
  %1049 = vmatprep.subr.mxu0 0.0
  %1050 = vmatpush1.msra.mxu0 %v905
  %1051 = vmatprep.subr.mxu0 0.0
  %1052 = vmatpush1.msra.mxu0 %v906
  %1053 = vmatprep.subr.mxu0 0.0
  %1054 = vmatpush1.msra.mxu0 %v907
  %1055 = vmatprep.subr.mxu0 0.0
  %1056 = vmatpush1.msra.mxu0 %v908
  %1057 = vmatprep.subr.mxu0 0.0
  %1058 = vmatpush1.msra.mxu0 %v909
  %1059 = vmatprep.subr.mxu0 0.0
  %1060 = vmatpush1.msra.mxu0 %v910
  %1061 = vmatprep.subr.mxu0 0.0
  %1062 = vmatpush1.msra.mxu0 %v911
  %1063 = vmatprep.subr.mxu0 0.0
  %1064 = vmatpush1.msra.mxu0 %v912
  %1065 = vmatprep.subr.mxu0 0.0
  %1066 = vmatpush1.msra.mxu0 %v913
  %1067 = vmatprep.subr.mxu0 0.0
  %1068 = vmatpush1.msra.mxu0 %v914
  %1069 = vmatprep.subr.mxu0 0.0
  %1070 = vmatpush1.msra.mxu0 %v915
  %1071 = vmatprep.subr.mxu0 0.0
  %1072 = vmatpush1.msra.mxu0 %v916
  %1073 = vmatprep.subr.mxu0 0.0
  %1074 = vmatpush1.msra.mxu0 %v917
  %1075 = vmatprep.subr.mxu0 0.0
  %1076 = vmatpush1.msra.mxu0 %v918
  %1077 = vmatprep.subr.mxu0 0.0
  %1078 = vmatpush1.msra.mxu0 %v919
  %1079 = vmatprep.subr.mxu0 0.0
  %1080 = vmatpush1.msra.mxu0 %v920
  %1081 = vmatprep.mubr.f32.mxu0 %v881
  %1082 = vmatmul.mubr.f32.gmra.mrb[0].mxu0 %v880
  %v1083 = vpop.f32.mrb[0].mxu0
  %v1084 = vadd.f32 0.0, %v1083
  %v1085 = vpop.f32.mrb[0].mxu0
  %1086 = vdwg.mxu0
  %1087 = vmatprep.subr.mxu0 0.0
  %1088 = vmatpush1.msra.mxu0 %v921
  %1089 = vmatprep.subr.mxu0 0.0
  %1090 = vmatpush1.msra.mxu0 %v922
  %1091 = vmatprep.subr.mxu0 0.0
  %1092 = vmatpush1.msra.mxu0 %v923
  %1093 = vmatprep.subr.mxu0 0.0
  %1094 = vmatpush1.msra.mxu0 %v924
  %1095 = vmatprep.subr.mxu0 0.0
  %1096 = vmatpush1.msra.mxu0 %v925
  %1097 = vmatprep.subr.mxu0 0.0
  %1098 = vmatpush1.msra.mxu0 %v926
  %1099 = vmatprep.subr.mxu0 0.0
  %1100 = vmatpush1.msra.mxu0 %v927
  %1101 = vmatprep.subr.mxu0 0.0
  %1102 = vmatpush1.msra.mxu0 %v928
  %1103 = vmatprep.subr.mxu0 0.0
  %1104 = vmatpush1.msra.mxu0 %v929
  %1105 = vmatprep.subr.mxu0 0.0
  %1106 = vmatpush1.msra.mxu0 %v930
  %1107 = vmatprep.subr.mxu0 0.0
  %1108 = vmatpush1.msra.mxu0 %v931
  %1109 = vmatprep.subr.mxu0 0.0
  %1110 = vmatpush1.msra.mxu0 %v932
  %1111 = vmatprep.subr.mxu0 0.0
  %1112 = vmatpush1.msra.mxu0 %v933
  %1113 = vmatprep.subr.mxu0 0.0
  %1114 = vmatpush1.msra.mxu0 %v934
  %1115 = vmatprep.subr.mxu0 0.0
  %1116 = vmatpush1.msra.mxu0 %v935
  %1117 = vmatprep.subr.mxu0 0.0
  %1118 = vmatpush1.msra.mxu0 %v936
  %1119 = vmatprep.subr.mxu0 0.0
  %1120 = vmatpush1.msra.mxu0 %v937
  %1121 = vmatprep.subr.mxu0 0.0
  %1122 = vmatpush1.msra.mxu0 %v938
  %1123 = vmatprep.subr.mxu0 0.0
  %1124 = vmatpush1.msra.mxu0 %v939
  %1125 = vmatprep.subr.mxu0 0.0
  %1126 = vmatpush1.msra.mxu0 %v940
  %1127 = vmatprep.subr.mxu0 0.0
  %1128 = vmatpush1.msra.mxu0 %v941
  %1129 = vmatprep.subr.mxu0 0.0
  %1130 = vmatpush1.msra.mxu0 %v942
  %1131 = vmatprep.subr.mxu0 0.0
  %1132 = vmatpush1.msra.mxu0 %v943
  %1133 = vmatprep.subr.mxu0 0.0
  %1134 = vmatpush1.msra.mxu0 %v944
  %1135 = vmatprep.subr.mxu0 0.0
  %1136 = vmatpush1.msra.mxu0 %v945
  %1137 = vmatprep.subr.mxu0 0.0
  %1138 = vmatpush1.msra.mxu0 %v946
  %1139 = vmatprep.subr.mxu0 0.0
  %1140 = vmatpush1.msra.mxu0 %v947
  %1141 = vmatprep.subr.mxu0 0.0
  %1142 = vmatpush1.msra.mxu0 %v948
  %1143 = vmatprep.subr.mxu0 0.0
  %1144 = vmatpush1.msra.mxu0 %v949
  %1145 = vmatprep.subr.mxu0 0.0
  %1146 = vmatpush1.msra.mxu0 %v950
  %1147 = vmatprep.subr.mxu0 0.0
  %1148 = vmatpush1.msra.mxu0 %v951
  %1149 = vmatprep.subr.mxu0 0.0
  %1150 = vmatpush1.msra.mxu0 %v952
  %1151 = vmatprep.mubr.f32.mxu0 %v883
  %1152 = vmatmul.mubr.f32.gmra.mrb[0].mxu0 %v882
  %v1153 = vpop.f32.mrb[0].mxu0
  %v1154 = vadd.f32 %v1084, %v1153
  %v1155 = vpop.f32.mrb[0].mxu0
  %1156 = vdwg.mxu0
  %1157 = vmatprep.subr.mxu0 0.0
  %1158 = vmatpush1.msra.mxu0 %v953
  %1159 = vmatprep.subr.mxu0 0.0
  %1160 = vmatpush1.msra.mxu0 %v954
  %1161 = vmatprep.subr.mxu0 0.0
  %1162 = vmatpush1.msra.mxu0 %v955
  %1163 = vmatprep.subr.mxu0 0.0
  %1164 = vmatpush1.msra.mxu0 %v956
  %1165 = vmatprep.subr.mxu0 0.0
  %1166 = vmatpush1.msra.mxu0 %v957
  %1167 = vmatprep.subr.mxu0 0.0
  %1168 = vmatpush1.msra.mxu0 %v958
  %1169 = vmatprep.subr.mxu0 0.0
  %1170 = vmatpush1.msra.mxu0 %v959
  %1171 = vmatprep.subr.mxu0 0.0
  %1172 = vmatpush1.msra.mxu0 %v960
  %1173 = vmatprep.subr.mxu0 0.0
  %1174 = vmatpush1.msra.mxu0 %v961
  %1175 = vmatprep.subr.mxu0 0.0
  %1176 = vmatpush1.msra.mxu0 %v962
  %1177 = vmatprep.subr.mxu0 0.0
  %1178 = vmatpush1.msra.mxu0 %v963
  %1179 = vmatprep.subr.mxu0 0.0
  %1180 = vmatpush1.msra.mxu0 %v964
  %1181 = vmatprep.subr.mxu0 0.0
  %1182 = vmatpush1.msra.mxu0 %v965
  %1183 = vmatprep.subr.mxu0 0.0
  %1184 = vmatpush1.msra.mxu0 %v966
  %1185 = vmatprep.subr.mxu0 0.0
  %1186 = vmatpush1.msra.mxu0 %v967
  %1187 = vmatprep.subr.mxu0 0.0
  %1188 = vmatpush1.msra.mxu0 %v968
  %1189 = vmatprep.subr.mxu0 0.0
  %1190 = vmatpush1.msra.mxu0 %v969
  %1191 = vmatprep.subr.mxu0 0.0
  %1192 = vmatpush1.msra.mxu0 %v970
  %1193 = vmatprep.subr.mxu0 0.0
  %1194 = vmatpush1.msra.mxu0 %v971
  %1195 = vmatprep.subr.mxu0 0.0
  %1196 = vmatpush1.msra.mxu0 %v972
  %1197 = vmatprep.subr.mxu0 0.0
  %1198 = vmatpush1.msra.mxu0 %v973
  %1199 = vmatprep.subr.mxu0 0.0
  %1200 = vmatpush1.msra.mxu0 %v974
  %1201 = vmatprep.subr.mxu0 0.0
  %1202 = vmatpush1.msra.mxu0 %v975
  %1203 = vmatprep.subr.mxu0 0.0
  %1204 = vmatpush1.msra.mxu0 %v976
  %1205 = vmatprep.subr.mxu0 0.0
  %1206 = vmatpush1.msra.mxu0 %v977
  %1207 = vmatprep.subr.mxu0 0.0
  %1208 = vmatpush1.msra.mxu0 %v978
  %1209 = vmatprep.subr.mxu0 0.0
  %1210 = vmatpush1.msra.mxu0 %v979
  %1211 = vmatprep.subr.mxu0 0.0
  %1212 = vmatpush1.msra.mxu0 %v980
  %1213 = vmatprep.subr.mxu0 0.0
  %1214 = vmatpush1.msra.mxu0 %v981
  %1215 = vmatprep.subr.mxu0 0.0
  %1216 = vmatpush1.msra.mxu0 %v982
  %1217 = vmatprep.subr.mxu0 0.0
  %1218 = vmatpush1.msra.mxu0 %v983
  %1219 = vmatprep.subr.mxu0 0.0
  %1220 = vmatpush1.msra.mxu0 %v984
  %1221 = vmatprep.mubr.f32.mxu0 %v885
  %1222 = vmatmul.mubr.f32.gmra.mrb[0].mxu0 %v884
  %v1223 = vpop.f32.mrb[0].mxu0
  %v1224 = vadd.f32 %v1154, %v1223
  %v1225 = vpop.f32.mrb[0].mxu0
  %1226 = vdwg.mxu0
  %1227 = vmatprep.subr.mxu0 0.0
  %1228 = vmatpush1.msra.mxu0 %v985
  %1229 = vmatprep.subr.mxu0 0.0
  %1230 = vmatpush1.msra.mxu0 %v986
  %1231 = vmatprep.subr.mxu0 0.0
  %1232 = vmatpush1.msra.mxu0 %v987
  %1233 = vmatprep.subr.mxu0 0.0
  %1234 = vmatpush1.msra.mxu0 %v988
  %1235 = vmatprep.subr.mxu0 0.0
  %1236 = vmatpush1.msra.mxu0 %v989
  %1237 = vmatprep.subr.mxu0 0.0
  %1238 = vmatpush1.msra.mxu0 %v990
  %1239 = vmatprep.subr.mxu0 0.0
  %1240 = vmatpush1.msra.mxu0 %v991
  %1241 = vmatprep.subr.mxu0 0.0
  %1242 = vmatpush1.msra.mxu0 %v992
  %1243 = vmatprep.subr.mxu0 0.0
  %1244 = vmatpush1.msra.mxu0 %v993
  %1245 = vmatprep.subr.mxu0 0.0
  %1246 = vmatpush1.msra.mxu0 %v994
  %1247 = vmatprep.subr.mxu0 0.0
  %1248 = vmatpush1.msra.mxu0 %v995
  %1249 = vmatprep.subr.mxu0 0.0
  %1250 = vmatpush1.msra.mxu0 %v996
  %1251 = vmatprep.subr.mxu0 0.0
  %1252 = vmatpush1.msra.mxu0 %v997
  %1253 = vmatprep.subr.mxu0 0.0
  %1254 = vmatpush1.msra.mxu0 %v998
  %1255 = vmatprep.subr.mxu0 0.0
  %1256 = vmatpush1.msra.mxu0 %v999
  %1257 = vmatprep.subr.mxu0 0.0
  %1258 = vmatpush1.msra.mxu0 %v1000
  %1259 = vmatprep.subr.mxu0 0.0
  %1260 = vmatpush1.msra.mxu0 %v1001
  %1261 = vmatprep.subr.mxu0 0.0
  %1262 = vmatpush1.msra.mxu0 %v1002
  %1263 = vmatprep.subr.mxu0 0.0
  %1264 = vmatpush1.msra.mxu0 %v1003
  %1265 = vmatprep.subr.mxu0 0.0
  %1266 = vmatpush1.msra.mxu0 %v1004
  %1267 = vmatprep.subr.mxu0 0.0
  %1268 = vmatpush1.msra.mxu0 %v1005
  %1269 = vmatprep.subr.mxu0 0.0
  %1270 = vmatpush1.msra.mxu0 %v1006
  %1271 = vmatprep.subr.mxu0 0.0
  %1272 = vmatpush1.msra.mxu0 %v1007
  %1273 = vmatprep.subr.mxu0 0.0
  %1274 = vmatpush1.msra.mxu0 %v1008
  %1275 = vmatprep.subr.mxu0 0.0
  %1276 = vmatpush1.msra.mxu0 %v1009
  %1277 = vmatprep.subr.mxu0 0.0
  %1278 = vmatpush1.msra.mxu0 %v1010
  %1279 = vmatprep.subr.mxu0 0.0
  %1280 = vmatpush1.msra.mxu0 %v1011
  %1281 = vmatprep.subr.mxu0 0.0
  %1282 = vmatpush1.msra.mxu0 %v1012
  %1283 = vmatprep.subr.mxu0 0.0
  %1284 = vmatpush1.msra.mxu0 %v1013
  %1285 = vmatprep.subr.mxu0 0.0
  %1286 = vmatpush1.msra.mxu0 %v1014
  %1287 = vmatprep.subr.mxu0 0.0
  %1288 = vmatpush1.msra.mxu0 %v1015
  %1289 = vmatprep.subr.mxu0 0.0
  %1290 = vmatpush1.msra.mxu0 %v1016
  %1291 = vmatprep.mubr.f32.mxu0 %v887
  %1292 = vmatmul.mubr.f32.gmra.mrb[0].mxu0 %v886
  %v1293 = vpop.f32.mrb[0].mxu0
  %v1294 = vadd.f32 %v1224, %v1293
  %v1295 = vpop.f32.mrb[0].mxu0
  %1296 = vdwg.mxu0
  %v1297 = vrot.slane %v1294, 4
  %v1298 = vadd.f32 %v1294, %v1297
  %v1299 = vrot.slane %v1298, 2
  %v1300 = vadd.f32 %v1298, %v1299
  %v1301 = vrot.slane %v1300, 1
  %v1302 = vadd.f32 %v1300, %v1301
  %v1303 = vmul.f32 %v1294, %v1294
  %v1304 = vrot.slane %v1303, 4
  %v1305 = vadd.f32 %v1303, %v1304
  %v1306 = vrot.slane %v1305, 2
  %v1307 = vadd.f32 %v1305, %v1306
  %v1308 = vrot.slane %v1307, 1
  %v1309 = vadd.f32 %v1307, %v1308
  %v1310 = vadd.f32 %v877, %v1302
  %v1311 = vadd.f32 %v878, %v1309
  %s1312 = scalar_lea.vmem %s0, 192
  %v1313 = vld [vmem:[%s1312] sm:$0xff]
  %v1314 = vld [vmem:[%s1312 + $0x8] sm:$0xff]
  %v1315 = vld [vmem:[%s1312 + $0x10] sm:$0xff]
  %v1316 = vld [vmem:[%s1312 + $0x18] sm:$0xff]
  %v1317 = vld [vmem:[%s1312 + $0x20] sm:$0xff]
  %v1318 = vld [vmem:[%s1312 + $0x28] sm:$0xff]
  %v1319 = vld [vmem:[%s1312 + $0x30] sm:$0xff]
  %v1320 = vld [vmem:[%s1312 + $0x38] sm:$0xff]
  %s1321 = scalar_lea.vmem %s1, 3072
  %v1322 = vld [vmem:[%s1321] sm:$0xff]
  %v1323 = vld [vmem:[%s1321 + $0x8] sm:$0xff]
  %v1324 = vld [vmem:[%s1321 + $0x10] sm:$0xff]
  %v1325 = vld [vmem:[%s1321 + $0x18] sm:$0xff]
  %v1326 = vld [vmem:[%s1321 + $0x20] sm:$0xff]
  %v1327 = vld [vmem:[%s1321 + $0x28] sm:$0xff]
  %v1328 = vld [vmem:[%s1321 + $0x30] sm:$0xff]
  %v1329 = vld [vmem:[%s1321 + $0x38] sm:$0xff]
  %v1330 = vld [vmem:[%s1321 + $0x40] sm:$0xff]
  %v1331 = vld [vmem:[%s1321 + $0x48] sm:$0xff]
  %v1332 = vld [vmem:[%s1321 + $0x50] sm:$0xff]
  %v1333 = vld [vmem:[%s1321 + $0x58] sm:$0xff]
  %v1334 = vld [vmem:[%s1321 + $0x60] sm:$0xff]
  %v1335 = vld [vmem:[%s1321 + $0x68] sm:$0xff]
  %v1336 = vld [vmem:[%s1321 + $0x70] sm:$0xff]
  %v1337 = vld [vmem:[%s1321 + $0x78] sm:$0xff]
  %v1338 = vld [vmem:[%s1321 + $0x80] sm:$0xff]
  %v1339 = vld [vmem:[%s1321 + $0x88] sm:$0xff]
  %v1340 = vld [vmem:[%s1321 + $0x90] sm:$0xff]
  %v1341 = vld [vmem:[%s1321 + $0x98] sm:$0xff]
  %v1342 = vld [vmem:[%s1321 + $0xa0] sm:$0xff]
  %v1343 = vld [vmem:[%s1321 + $0xa8] sm:$0xff]
  %v1344 = vld [vmem:[%s1321 + $0xb0] sm:$0xff]
  %v1345 = vld [vmem:[%s1321 + $0xb8] sm:$0xff]
  %v1346 = vld [vmem:[%s1321 + $0xc0] sm:$0xff]
  %v1347 = vld [vmem:[%s1321 + $0xc8] sm:$0xff]
  %v1348 = vld [vmem:[%s1321 + $0xd0] sm:$0xff]
  %v1349 = vld [vmem:[%s1321 + $0xd8] sm:$0xff]
  %v1350 = vld [vmem:[%s1321 + $0xe0] sm:$0xff]
  %v1351 = vld [vmem:[%s1321 + $0xe8] sm:$0xff]
  %v1352 = vld [vmem:[%s1321 + $0xf0] sm:$0xff]
  %v1353 = vld [vmem:[%s1321 + $0xf8] sm:$0xff]
  %v1354 = vld [vmem:[%s1321 + $0x100] sm:$0xff]
  %v1355 = vld [vmem:[%s1321 + $0x108] sm:$0xff]
  %v1356 = vld [vmem:[%s1321 + $0x110] sm:$0xff]
  %v1357 = vld [vmem:[%s1321 + $0x118] sm:$0xff]
  %v1358 = vld [vmem:[%s1321 + $0x120] sm:$0xff]
  %v1359 = vld [vmem:[%s1321 + $0x128] sm:$0xff]
  %v1360 = vld [vmem:[%s1321 + $0x130] sm:$0xff]
  %v1361 = vld [vmem:[%s1321 + $0x138] sm:$0xff]
  %v1362 = vld [vmem:[%s1321 + $0x140] sm:$0xff]
  %v1363 = vld [vmem:[%s1321 + $0x148] sm:$0xff]
  %v1364 = vld [vmem:[%s1321 + $0x150] sm:$0xff]
  %v1365 = vld [vmem:[%s1321 + $0x158] sm:$0xff]
  %v1366 = vld [vmem:[%s1321 + $0x160] sm:$0xff]
  %v1367 = vld [vmem:[%s1321 + $0x168] sm:$0xff]
  %v1368 = vld [vmem:[%s1321 + $0x170] sm:$0xff]
  %v1369 = vld [vmem:[%s1321 + $0x178] sm:$0xff]
  %v1370 = vld [vmem:[%s1321 + $0x180] sm:$0xff]
  %v1371 = vld [vmem:[%s1321 + $0x188] sm:$0xff]
  %v1372 = vld [vmem:[%s1321 + $0x190] sm:$0xff]
  %v1373 = vld [vmem:[%s1321 + $0x198] sm:$0xff]
  %v1374 = vld [vmem:[%s1321 + $0x1a0] sm:$0xff]
  %v1375 = vld [vmem:[%s1321 + $0x1a8] sm:$0xff]
  %v1376 = vld [vmem:[%s1321 + $0x1b0] sm:$0xff]
  %v1377 = vld [vmem:[%s1321 + $0x1b8] sm:$0xff]
  %v1378 = vld [vmem:[%s1321 + $0x1c0] sm:$0xff]
  %v1379 = vld [vmem:[%s1321 + $0x1c8] sm:$0xff]
  %v1380 = vld [vmem:[%s1321 + $0x1d0] sm:$0xff]
  %v1381 = vld [vmem:[%s1321 + $0x1d8] sm:$0xff]
  %v1382 = vld [vmem:[%s1321 + $0x1e0] sm:$0xff]
  %v1383 = vld [vmem:[%s1321 + $0x1e8] sm:$0xff]
  %v1384 = vld [vmem:[%s1321 + $0x1f0] sm:$0xff]
  %v1385 = vld [vmem:[%s1321 + $0x1f8] sm:$0xff]
  %v1386 = vld [vmem:[%s1321 + $0x200] sm:$0xff]
  %v1387 = vld [vmem:[%s1321 + $0x208] sm:$0xff]
  %v1388 = vld [vmem:[%s1321 + $0x210] sm:$0xff]
  %v1389 = vld [vmem:[%s1321 + $0x218] sm:$0xff]
  %v1390 = vld [vmem:[%s1321 + $0x220] sm:$0xff]
  %v1391 = vld [vmem:[%s1321 + $0x228] sm:$0xff]
  %v1392 = vld [vmem:[%s1321 + $0x230] sm:$0xff]
  %v1393 = vld [vmem:[%s1321 + $0x238] sm:$0xff]
  %v1394 = vld [vmem:[%s1321 + $0x240] sm:$0xff]
  %v1395 = vld [vmem:[%s1321 + $0x248] sm:$0xff]
  %v1396 = vld [vmem:[%s1321 + $0x250] sm:$0xff]
  %v1397 = vld [vmem:[%s1321 + $0x258] sm:$0xff]
  %v1398 = vld [vmem:[%s1321 + $0x260] sm:$0xff]
  %v1399 = vld [vmem:[%s1321 + $0x268] sm:$0xff]
  %v1400 = vld [vmem:[%s1321 + $0x270] sm:$0xff]
  %v1401 = vld [vmem:[%s1321 + $0x278] sm:$0xff]
  %v1402 = vld [vmem:[%s1321 + $0x280] sm:$0xff]
  %v1403 = vld [vmem:[%s1321 + $0x288] sm:$0xff]
  %v1404 = vld [vmem:[%s1321 + $0x290] sm:$0xff]
  %v1405 = vld [vmem:[%s1321 + $0x298] sm:$0xff]
  %v1406 = vld [vmem:[%s1321 + $0x2a0] sm:$0xff]
  %v1407 = vld [vmem:[%s1321 + $0x2a8] sm:$0xff]
  %v1408 = vld [vmem:[%s1321 + $0x2b0] sm:$0xff]
  %v1409 = vld [vmem:[%s1321 + $0x2b8] sm:$0xff]
  %v1410 = vld [vmem:[%s1321 + $0x2c0] sm:$0xff]
  %v1411 = vld [vmem:[%s1321 + $0x2c8] sm:$0xff]
  %v1412 = vld [vmem:[%s1321 + $0x2d0] sm:$0xff]
  %v1413 = vld [vmem:[%s1321 + $0x2d8] sm:$0xff]
  %v1414 = vld [vmem:[%s1321 + $0x2e0] sm:$0xff]
  %v1415 = vld [vmem:[%s1321 + $0x2e8] sm:$0xff]
  %v1416 = vld [vmem:[%s1321 + $0x2f0] sm:$0xff]
  %v1417 = vld [vmem:[%s1321 + $0x2f8] sm:$0xff]
  %v1418 = vld [vmem:[%s1321 + $0x300] sm:$0xff]
  %v1419 = vld [vmem:[%s1321 + $0x308] sm:$0xff]
  %v1420 = vld [vmem:[%s1321 + $0x310] sm:$0xff]
  %v1421 = vld [vmem:[%s1321 + $0x318] sm:$0xff]
  %v1422 = vld [vmem:[%s1321 + $0x320] sm:$0xff]
  %v1423 = vld [vmem:[%s1321 + $0x328] sm:$0xff]
  %v1424 = vld [vmem:[%s1321 + $0x330] sm:$0xff]
  %v1425 = vld [vmem:[%s1321 + $0x338] sm:$0xff]
  %v1426 = vld [vmem:[%s1321 + $0x340] sm:$0xff]
  %v1427 = vld [vmem:[%s1321 + $0x348] sm:$0xff]
  %v1428 = vld [vmem:[%s1321 + $0x350] sm:$0xff]
  %v1429 = vld [vmem:[%s1321 + $0x358] sm:$0xff]
  %v1430 = vld [vmem:[%s1321 + $0x360] sm:$0xff]
  %v1431 = vld [vmem:[%s1321 + $0x368] sm:$0xff]
  %v1432 = vld [vmem:[%s1321 + $0x370] sm:$0xff]
  %v1433 = vld [vmem:[%s1321 + $0x378] sm:$0xff]
  %v1434 = vld [vmem:[%s1321 + $0x380] sm:$0xff]
  %v1435 = vld [vmem:[%s1321 + $0x388] sm:$0xff]
  %v1436 = vld [vmem:[%s1321 + $0x390] sm:$0xff]
  %v1437 = vld [vmem:[%s1321 + $0x398] sm:$0xff]
  %v1438 = vld [vmem:[%s1321 + $0x3a0] sm:$0xff]
  %v1439 = vld [vmem:[%s1321 + $0x3a8] sm:$0xff]
  %v1440 = vld [vmem:[%s1321 + $0x3b0] sm:$0xff]
  %v1441 = vld [vmem:[%s1321 + $0x3b8] sm:$0xff]
  %v1442 = vld [vmem:[%s1321 + $0x3c0] sm:$0xff]
  %v1443 = vld [vmem:[%s1321 + $0x3c8] sm:$0xff]
  %v1444 = vld [vmem:[%s1321 + $0x3d0] sm:$0xff]
  %v1445 = vld [vmem:[%s1321 + $0x3d8] sm:$0xff]
  %v1446 = vld [vmem:[%s1321 + $0x3e0] sm:$0xff]
  %v1447 = vld [vmem:[%s1321 + $0x3e8] sm:$0xff]
  %v1448 = vld [vmem:[%s1321 + $0x3f0] sm:$0xff]
  %v1449 = vld [vmem:[%s1321 + $0x3f8] sm:$0xff]
  %1450 = vmatprep.subr.mxu0 0.0
  %1451 = vmatpush1.msra.mxu0 %v1322
  %1452 = vmatprep.subr.mxu0 0.0
  %1453 = vmatpush1.msra.mxu0 %v1323
  %1454 = vmatprep.subr.mxu0 0.0
  %1455 = vmatpush1.msra.mxu0 %v1324
  %1456 = vmatprep.subr.mxu0 0.0
  %1457 = vmatpush1.msra.mxu0 %v1325
  %1458 = vmatprep.subr.mxu0 0.0
  %1459 = vmatpush1.msra.mxu0 %v1326
  %1460 = vmatprep.subr.mxu0 0.0
  %1461 = vmatpush1.msra.mxu0 %v1327
  %1462 = vmatprep.subr.mxu0 0.0
  %1463 = vmatpush1.msra.mxu0 %v1328
  %1464 = vmatprep.subr.mxu0 0.0
  %1465 = vmatpush1.msra.mxu0 %v1329
  %1466 = vmatprep.subr.mxu0 0.0
  %1467 = vmatpush1.msra.mxu0 %v1330
  %1468 = vmatprep.subr.mxu0 0.0
  %1469 = vmatpush1.msra.mxu0 %v1331
  %1470 = vmatprep.subr.mxu0 0.0
  %1471 = vmatpush1.msra.mxu0 %v1332
  %1472 = vmatprep.subr.mxu0 0.0
  %1473 = vmatpush1.msra.mxu0 %v1333
  %1474 = vmatprep.subr.mxu0 0.0
  %1475 = vmatpush1.msra.mxu0 %v1334
  %1476 = vmatprep.subr.mxu0 0.0
  %1477 = vmatpush1.msra.mxu0 %v1335
  %1478 = vmatprep.subr.mxu0 0.0
  %1479 = vmatpush1.msra.mxu0 %v1336
  %1480 = vmatprep.subr.mxu0 0.0
  %1481 = vmatpush1.msra.mxu0 %v1337
  %1482 = vmatprep.subr.mxu0 0.0
  %1483 = vmatpush1.msra.mxu0 %v1338
  %1484 = vmatprep.subr.mxu0 0.0
  %1485 = vmatpush1.msra.mxu0 %v1339
  %1486 = vmatprep.subr.mxu0 0.0
  %1487 = vmatpush1.msra.mxu0 %v1340
  %1488 = vmatprep.subr.mxu0 0.0
  %1489 = vmatpush1.msra.mxu0 %v1341
  %1490 = vmatprep.subr.mxu0 0.0
  %1491 = vmatpush1.msra.mxu0 %v1342
  %1492 = vmatprep.subr.mxu0 0.0
  %1493 = vmatpush1.msra.mxu0 %v1343
  %1494 = vmatprep.subr.mxu0 0.0
  %1495 = vmatpush1.msra.mxu0 %v1344
  %1496 = vmatprep.subr.mxu0 0.0
  %1497 = vmatpush1.msra.mxu0 %v1345
  %1498 = vmatprep.subr.mxu0 0.0
  %1499 = vmatpush1.msra.mxu0 %v1346
  %1500 = vmatprep.subr.mxu0 0.0
  %1501 = vmatpush1.msra.mxu0 %v1347
  %1502 = vmatprep.subr.mxu0 0.0
  %1503 = vmatpush1.msra.mxu0 %v1348
  %1504 = vmatprep.subr.mxu0 0.0
  %1505 = vmatpush1.msra.mxu0 %v1349
  %1506 = vmatprep.subr.mxu0 0.0
  %1507 = vmatpush1.msra.mxu0 %v1350
  %1508 = vmatprep.subr.mxu0 0.0
  %1509 = vmatpush1.msra.mxu0 %v1351
  %1510 = vmatprep.subr.mxu0 0.0
  %1511 = vmatpush1.msra.mxu0 %v1352
  %1512 = vmatprep.subr.mxu0 0.0
  %1513 = vmatpush1.msra.mxu0 %v1353
  %1514 = vmatprep.mubr.f32.mxu0 %v1314
  %1515 = vmatmul.mubr.f32.gmra.mrb[0].mxu0 %v1313
  %v1516 = vpop.f32.mrb[0].mxu0
  %v1517 = vadd.f32 0.0, %v1516
  %v1518 = vpop.f32.mrb[0].mxu0
  %1519 = vdwg.mxu0
  %1520 = vmatprep.subr.mxu0 0.0
  %1521 = vmatpush1.msra.mxu0 %v1354
  %1522 = vmatprep.subr.mxu0 0.0
  %1523 = vmatpush1.msra.mxu0 %v1355
  %1524 = vmatprep.subr.mxu0 0.0
  %1525 = vmatpush1.msra.mxu0 %v1356
  %1526 = vmatprep.subr.mxu0 0.0
  %1527 = vmatpush1.msra.mxu0 %v1357
  %1528 = vmatprep.subr.mxu0 0.0
  %1529 = vmatpush1.msra.mxu0 %v1358
  %1530 = vmatprep.subr.mxu0 0.0
  %1531 = vmatpush1.msra.mxu0 %v1359
  %1532 = vmatprep.subr.mxu0 0.0
  %1533 = vmatpush1.msra.mxu0 %v1360
  %1534 = vmatprep.subr.mxu0 0.0
  %1535 = vmatpush1.msra.mxu0 %v1361
  %1536 = vmatprep.subr.mxu0 0.0
  %1537 = vmatpush1.msra.mxu0 %v1362
  %1538 = vmatprep.subr.mxu0 0.0
  %1539 = vmatpush1.msra.mxu0 %v1363
  %1540 = vmatprep.subr.mxu0 0.0
  %1541 = vmatpush1.msra.mxu0 %v1364
  %1542 = vmatprep.subr.mxu0 0.0
  %1543 = vmatpush1.msra.mxu0 %v1365
  %1544 = vmatprep.subr.mxu0 0.0
  %1545 = vmatpush1.msra.mxu0 %v1366
  %1546 = vmatprep.subr.mxu0 0.0
  %1547 = vmatpush1.msra.mxu0 %v1367
  %1548 = vmatprep.subr.mxu0 0.0
  %1549 = vmatpush1.msra.mxu0 %v1368
  %1550 = vmatprep.subr.mxu0 0.0
  %1551 = vmatpush1.msra.mxu0 %v1369
  %1552 = vmatprep.subr.mxu0 0.0
  %1553 = vmatpush1.msra.mxu0 %v1370
  %1554 = vmatprep.subr.mxu0 0.0
  %1555 = vmatpush1.msra.mxu0 %v1371
  %1556 = vmatprep.subr.mxu0 0.0
  %1557 = vmatpush1.msra.mxu0 %v1372
  %1558 = vmatprep.subr.mxu0 0.0
  %1559 = vmatpush1.msra.mxu0 %v1373
  %1560 = vmatprep.subr.mxu0 0.0
  %1561 = vmatpush1.msra.mxu0 %v1374
  %1562 = vmatprep.subr.mxu0 0.0
  %1563 = vmatpush1.msra.mxu0 %v1375
  %1564 = vmatprep.subr.mxu0 0.0
  %1565 = vmatpush1.msra.mxu0 %v1376
  %1566 = vmatprep.subr.mxu0 0.0
  %1567 = vmatpush1.msra.mxu0 %v1377
  %1568 = vmatprep.subr.mxu0 0.0
  %1569 = vmatpush1.msra.mxu0 %v1378
  %1570 = vmatprep.subr.mxu0 0.0
  %1571 = vmatpush1.msra.mxu0 %v1379
  %1572 = vmatprep.subr.mxu0 0.0
  %1573 = vmatpush1.msra.mxu0 %v1380
  %1574 = vmatprep.subr.mxu0 0.0
  %1575 = vmatpush1.msra.mxu0 %v1381
  %1576 = vmatprep.subr.mxu0 0.0
  %1577 = vmatpush1.msra.mxu0 %v1382
  %1578 = vmatprep.subr.mxu0 0.0
  %1579 = vmatpush1.msra.mxu0 %v1383
  %1580 = vmatprep.subr.mxu0 0.0
  %1581 = vmatpush1.msra.mxu0 %v1384
  %1582 = vmatprep.subr.mxu0 0.0
  %1583 = vmatpush1.msra.mxu0 %v1385
  %1584 = vmatprep.mubr.f32.mxu0 %v1316
  %1585 = vmatmul.mubr.f32.gmra.mrb[0].mxu0 %v1315
  %v1586 = vpop.f32.mrb[0].mxu0
  %v1587 = vadd.f32 %v1517, %v1586
  %v1588 = vpop.f32.mrb[0].mxu0
  %1589 = vdwg.mxu0
  %1590 = vmatprep.subr.mxu0 0.0
  %1591 = vmatpush1.msra.mxu0 %v1386
  %1592 = vmatprep.subr.mxu0 0.0
  %1593 = vmatpush1.msra.mxu0 %v1387
  %1594 = vmatprep.subr.mxu0 0.0
  %1595 = vmatpush1.msra.mxu0 %v1388
  %1596 = vmatprep.subr.mxu0 0.0
  %1597 = vmatpush1.msra.mxu0 %v1389
  %1598 = vmatprep.subr.mxu0 0.0
  %1599 = vmatpush1.msra.mxu0 %v1390
  %1600 = vmatprep.subr.mxu0 0.0
  %1601 = vmatpush1.msra.mxu0 %v1391
  %1602 = vmatprep.subr.mxu0 0.0
  %1603 = vmatpush1.msra.mxu0 %v1392
  %1604 = vmatprep.subr.mxu0 0.0
  %1605 = vmatpush1.msra.mxu0 %v1393
  %1606 = vmatprep.subr.mxu0 0.0
  %1607 = vmatpush1.msra.mxu0 %v1394
  %1608 = vmatprep.subr.mxu0 0.0
  %1609 = vmatpush1.msra.mxu0 %v1395
  %1610 = vmatprep.subr.mxu0 0.0
  %1611 = vmatpush1.msra.mxu0 %v1396
  %1612 = vmatprep.subr.mxu0 0.0
  %1613 = vmatpush1.msra.mxu0 %v1397
  %1614 = vmatprep.subr.mxu0 0.0
  %1615 = vmatpush1.msra.mxu0 %v1398
  %1616 = vmatprep.subr.mxu0 0.0
  %1617 = vmatpush1.msra.mxu0 %v1399
  %1618 = vmatprep.subr.mxu0 0.0
  %1619 = vmatpush1.msra.mxu0 %v1400
  %1620 = vmatprep.subr.mxu0 0.0
  %1621 = vmatpush1.msra.mxu0 %v1401
  %1622 = vmatprep.subr.mxu0 0.0
  %1623 = vmatpush1.msra.mxu0 %v1402
  %1624 = vmatprep.subr.mxu0 0.0
  %1625 = vmatpush1.msra.mxu0 %v1403
  %1626 = vmatprep.subr.mxu0 0.0
  %1627 = vmatpush1.msra.mxu0 %v1404
  %1628 = vmatprep.subr.mxu0 0.0
  %1629 = vmatpush1.msra.mxu0 %v1405
  %1630 = vmatprep.subr.mxu0 0.0
  %1631 = vmatpush1.msra.mxu0 %v1406
  %1632 = vmatprep.subr.mxu0 0.0
  %1633 = vmatpush1.msra.mxu0 %v1407
  %1634 = vmatprep.subr.mxu0 0.0
  %1635 = vmatpush1.msra.mxu0 %v1408
  %1636 = vmatprep.subr.mxu0 0.0
  %1637 = vmatpush1.msra.mxu0 %v1409
  %1638 = vmatprep.subr.mxu0 0.0
  %1639 = vmatpush1.msra.mxu0 %v1410
  %1640 = vmatprep.subr.mxu0 0.0
  %1641 = vmatpush1.msra.mxu0 %v1411
  %1642 = vmatprep.subr.mxu0 0.0
  %1643 = vmatpush1.msra.mxu0 %v1412
  %1644 = vmatprep.subr.mxu0 0.0
  %1645 = vmatpush1.msra.mxu0 %v1413
  %1646 = vmatprep.subr.mxu0 0.0
  %1647 = vmatpush1.msra.mxu0 %v1414
  %1648 = vmatprep.subr.mxu0 0.0
  %1649 = vmatpush1.msra.mxu0 %v1415
  %1650 = vmatprep.subr.mxu0 0.0
  %1651 = vmatpush1.msra.mxu0 %v1416
  %1652 = vmatprep.subr.mxu0 0.0
  %1653 = vmatpush1.msra.mxu0 %v1417
  %1654 = vmatprep.mubr.f32.mxu0 %v1318
  %1655 = vmatmul.mubr.f32.gmra.mrb[0].mxu0 %v1317
  %v1656 = vpop.f32.mrb[0].mxu0
  %v1657 = vadd.f32 %v1587, %v1656
  %v1658 = vpop.f32.mrb[0].mxu0
  %1659 = vdwg.mxu0
  %1660 = vmatprep.subr.mxu0 0.0
  %1661 = vmatpush1.msra.mxu0 %v1418
  %1662 = vmatprep.subr.mxu0 0.0
  %1663 = vmatpush1.msra.mxu0 %v1419
  %1664 = vmatprep.subr.mxu0 0.0
  %1665 = vmatpush1.msra.mxu0 %v1420
  %1666 = vmatprep.subr.mxu0 0.0
  %1667 = vmatpush1.msra.mxu0 %v1421
  %1668 = vmatprep.subr.mxu0 0.0
  %1669 = vmatpush1.msra.mxu0 %v1422
  %1670 = vmatprep.subr.mxu0 0.0
  %1671 = vmatpush1.msra.mxu0 %v1423
  %1672 = vmatprep.subr.mxu0 0.0
  %1673 = vmatpush1.msra.mxu0 %v1424
  %1674 = vmatprep.subr.mxu0 0.0
  %1675 = vmatpush1.msra.mxu0 %v1425
  %1676 = vmatprep.subr.mxu0 0.0
  %1677 = vmatpush1.msra.mxu0 %v1426
  %1678 = vmatprep.subr.mxu0 0.0
  %1679 = vmatpush1.msra.mxu0 %v1427
  %1680 = vmatprep.subr.mxu0 0.0
  %1681 = vmatpush1.msra.mxu0 %v1428
  %1682 = vmatprep.subr.mxu0 0.0
  %1683 = vmatpush1.msra.mxu0 %v1429
  %1684 = vmatprep.subr.mxu0 0.0
  %1685 = vmatpush1.msra.mxu0 %v1430
  %1686 = vmatprep.subr.mxu0 0.0
  %1687 = vmatpush1.msra.mxu0 %v1431
  %1688 = vmatprep.subr.mxu0 0.0
  %1689 = vmatpush1.msra.mxu0 %v1432
  %1690 = vmatprep.subr.mxu0 0.0
  %1691 = vmatpush1.msra.mxu0 %v1433
  %1692 = vmatprep.subr.mxu0 0.0
  %1693 = vmatpush1.msra.mxu0 %v1434
  %1694 = vmatprep.subr.mxu0 0.0
  %1695 = vmatpush1.msra.mxu0 %v1435
  %1696 = vmatprep.subr.mxu0 0.0
  %1697 = vmatpush1.msra.mxu0 %v1436
  %1698 = vmatprep.subr.mxu0 0.0
  %1699 = vmatpush1.msra.mxu0 %v1437
  %1700 = vmatprep.subr.mxu0 0.0
  %1701 = vmatpush1.msra.mxu0 %v1438
  %1702 = vmatprep.subr.mxu0 0.0
  %1703 = vmatpush1.msra.mxu0 %v1439
  %1704 = vmatprep.subr.mxu0 0.0
  %1705 = vmatpush1.msra.mxu0 %v1440
  %1706 = vmatprep.subr.mxu0 0.0
  %1707 = vmatpush1.msra.mxu0 %v1441
  %1708 = vmatprep.subr.mxu0 0.0
  %1709 = vmatpush1.msra.mxu0 %v1442
  %1710 = vmatprep.subr.mxu0 0.0
  %1711 = vmatpush1.msra.mxu0 %v1443
  %1712 = vmatprep.subr.mxu0 0.0
  %1713 = vmatpush1.msra.mxu0 %v1444
  %1714 = vmatprep.subr.mxu0 0.0
  %1715 = vmatpush1.msra.mxu0 %v1445
  %1716 = vmatprep.subr.mxu0 0.0
  %1717 = vmatpush1.msra.mxu0 %v1446
  %1718 = vmatprep.subr.mxu0 0.0
  %1719 = vmatpush1.msra.mxu0 %v1447
  %1720 = vmatprep.subr.mxu0 0.0
  %1721 = vmatpush1.msra.mxu0 %v1448
  %1722 = vmatprep.subr.mxu0 0.0
  %1723 = vmatpush1.msra.mxu0 %v1449
  %1724 = vmatprep.mubr.f32.mxu0 %v1320
  %1725 = vmatmul.mubr.f32.gmra.mrb[0].mxu0 %v1319
  %v1726 = vpop.f32.mrb[0].mxu0
  %v1727 = vadd.f32 %v1657, %v1726
  %v1728 = vpop.f32.mrb[0].mxu0
  %1729 = vdwg.mxu0
  %v1730 = vrot.slane %v1727, 4
  %v1731 = vadd.f32 %v1727, %v1730
  %v1732 = vrot.slane %v1731, 2
  %v1733 = vadd.f32 %v1731, %v1732
  %v1734 = vrot.slane %v1733, 1
  %v1735 = vadd.f32 %v1733, %v1734
  %v1736 = vmul.f32 %v1727, %v1727
  %v1737 = vrot.slane %v1736, 4
  %v1738 = vadd.f32 %v1736, %v1737
  %v1739 = vrot.slane %v1738, 2
  %v1740 = vadd.f32 %v1738, %v1739
  %v1741 = vrot.slane %v1740, 1
  %v1742 = vadd.f32 %v1740, %v1741
  %v1743 = vadd.f32 %v1310, %v1735
  %v1744 = vadd.f32 %v1311, %v1742
  %v1745 = vmul.f32 %v1743, 0.03125
  %v1746 = vmul.f32 %v1744, 0.03125
  %v1747 = vmul.f32 %v1745, %v1745
  %v1748 = vsub.f32 %v1746, %v1747
  %v1749 = vmax.f32 %v1748, 0.0
  %v1750 = vadd.f32 %v1749, 1e-05
  %v1751 = vrsqrt.pop %v1750
  %v1752 = vld [vmem:[%s2] sm:$0x1]
  %v1753 = vmul.f32 %v1751, %v1752
  %v1754 = vld [vmem:[%s3] sm:$0x1]
  %v1755 = vmul.f32 %v1745, %v1753
  %v1756 = vsub.f32 %v1754, %v1755
  %v1757 = vlaneseq
  %v1758 = vshrl.u32 %v1757, 7
  %v1759 = vsub.s32 0, %v1758
  %v1760 = vrot.slane %v1753, %v1759
  %v1761 = vmul.f32 %v430, %v1760
  %v1763 = vlaneseq
  %v1764 = vshrl.u32 %v1763, 7
  %v1765 = vsub.s32 0, %v1764
  %v1766 = vrot.slane %v1756, %v1765
  %v1768 = vadd.f32 %v1761, %v1766
  %vm1769 = vcmp.ge.f32.partialorder %v1768, 0.0
  %v1770 = vmul.f32 %v1768, 0.2
  %v1771 = vsel %vm1769, %v1768, %v1770
  %1772 = vst [vmem:[%s4] sm:$0xff] %v1771
  %v1773 = vmul.f32 %v861, %v1760
  %v1774 = vadd.f32 %v1773, %v1766
  %vm1775 = vcmp.ge.f32.partialorder %v1774, 0.0
  %v1776 = vmul.f32 %v1774, 0.2
  %v1777 = vsel %vm1775, %v1774, %v1776
  %s1778 = scalar_lea.vmem %s4, 8
  %1779 = vst [vmem:[%s1778] sm:$0xff] %v1777
  %v1780 = vmul.f32 %v1294, %v1760
  %v1781 = vadd.f32 %v1780, %v1766
  %vm1782 = vcmp.ge.f32.partialorder %v1781, 0.0
  %v1783 = vmul.f32 %v1781, 0.2
  %v1784 = vsel %vm1782, %v1781, %v1783
  %s1785 = scalar_lea.vmem %s4, 16
  %1786 = vst [vmem:[%s1785] sm:$0xff] %v1784
  %v1787 = vmul.f32 %v1727, %v1760
  %v1788 = vadd.f32 %v1787, %v1766
  %vm1789 = vcmp.ge.f32.partialorder %v1788, 0.0
  %v1790 = vmul.f32 %v1788, 0.2
  %v1791 = vsel %vm1789, %v1788, %v1790
  %s1792 = scalar_lea.vmem %s4, 24
  %1793 = vst [vmem:[%s1792] sm:$0xff] %v1791
  // Predicated region
  $region18: #{autoencoder_forward.9} parent=0 // pred_check
    _
  $region19: #{autoencoder_forward.9} parent=0 // pred_check_branch
    %1795 = sbr.rel (0) target = $region21
  $region20: #{autoencoder_forward.9} parent=0 // pred_region
    _
  $region21: #{autoencoder_forward.9} parent=0 // pred_fallthru
    _
  // Predicated region
  $region22: #{autoencoder_forward.9} parent=0 // pred_check
    _
  $region23: #{autoencoder_forward.9} parent=0 // pred_check_branch
    %1797 = sbr.rel (0) target = $region25
  $region24: #{autoencoder_forward.9} parent=0 // pred_region
    _
  $region25: #{autoencoder_forward.9} parent=0 // pred_fallthru
    _

// kernel: autoencoder_forward.10
$region0: #{autoencoder_forward.10}
  #allocation0 [shape = 'u32[]', space=smem, size = 0x4, offset = 0x4, fixed_abs, tag = 'smem constant byte address 0x4 - core index']
  #allocation1 [shape = 'u32[144,128]{1,0:T(1,128)}', space=vmem, size = 0x12000, scoped, tag = 'internal scratch']
  %s0 = inlined_call_operand.vmem [shape: f32[4,32,512], index: 0, kind: input, shape index: {}]
  %s1 = inlined_call_operand.vmem [shape: f32[4,512,64], index: 1, kind: input, shape index: {}]
  %s2 = inlined_call_operand.vmem [shape: f32[1,64], index: 2, kind: input, shape index: {}]
  %s3 = inlined_call_operand.vmem [shape: f32[1,64], index: 3, kind: input, shape index: {}]
  %s4 = inlined_call_operand.vmem [shape: f32[4,32,64], index: 4, kind: output, shape index: {}]
  %s5 = sld [smem:[#allocation0]]
  $region26: #{autoencoder_forward.10} parent=0
    _
  %s7 = ssub.s32 1, %s5
  %s8 = scalar_select 0, %s7, %s5
  // Predicated region
  $region2: #{autoencoder_forward.10} parent=0 // pred_check
    _
  $region3: #{autoencoder_forward.10} parent=0 // pred_check_branch
    %10 = sbr.rel (0) target = $region5
  $region4: #{autoencoder_forward.10} parent=0 // pred_region
    _
  $region5: #{autoencoder_forward.10} parent=0 // pred_fallthru
    _
  // Predicated region
  $region6: #{autoencoder_forward.10} parent=0 // pred_check
    _
  $region7: #{autoencoder_forward.10} parent=0 // pred_check_branch
    %12 = sbr.rel (0) target = $region9
  $region8: #{autoencoder_forward.10} parent=0 // pred_region
    _
  $region9: #{autoencoder_forward.10} parent=0 // pred_fallthru
    _
  // Predicated region
  $region10: #{autoencoder_forward.10} parent=0 // pred_check
    _
  $region11: #{autoencoder_forward.10} parent=0 // pred_check_branch
    %14 = sbr.rel (0) target = $region13
  $region12: #{autoencoder_forward.10} parent=0 // pred_region
    _
  $region13: #{autoencoder_forward.10} parent=0 // pred_fallthru
    _
  // Predicated region
  $region14: #{autoencoder_forward.10} parent=0 // pred_check
    _
  $region15: #{autoencoder_forward.10} parent=0 // pred_check_branch
    %16 = sbr.rel (0) target = $region17
  $region16: #{autoencoder_forward.10} parent=0 // pred_region
    _
  $region17: #{autoencoder_forward.10} parent=0 // pred_fallthru
    _
  %v17 = vld [vmem:[%s0] sm:$0xff]
  %v18 = vld [vmem:[%s0 + $0x8] sm:$0xff]
  %v19 = vld [vmem:[%s0 + $0x10] sm:$0xff]
  %v20 = vld [vmem:[%s0 + $0x18] sm:$0xff]
  %v21 = vld [vmem:[%s0 + $0x20] sm:$0xff]
  %v22 = vld [vmem:[%s0 + $0x28] sm:$0xff]
  %v23 = vld [vmem:[%s0 + $0x30] sm:$0xff]
  %v24 = vld [vmem:[%s0 + $0x38] sm:$0xff]
  %v25 = vld [vmem:[%s0 + $0x40] sm:$0xff]
  %v26 = vld [vmem:[%s0 + $0x48] sm:$0xff]
  %v27 = vld [vmem:[%s0 + $0x50] sm:$0xff]
  %v28 = vld [vmem:[%s0 + $0x58] sm:$0xff]
  %v29 = vld [vmem:[%s0 + $0x60] sm:$0xff]
  %v30 = vld [vmem:[%s0 + $0x68] sm:$0xff]
  %v31 = vld [vmem:[%s0 + $0x70] sm:$0xff]
  %v32 = vld [vmem:[%s0 + $0x78] sm:$0xff]
  %v33 = vld [vmem:[%s1] sm:$0xff]
  %v34 = vld [vmem:[%s1 + $0x8] sm:$0xff]
  %v35 = vld [vmem:[%s1 + $0x10] sm:$0xff]
  %v36 = vld [vmem:[%s1 + $0x18] sm:$0xff]
  %v37 = vld [vmem:[%s1 + $0x20] sm:$0xff]
  %v38 = vld [vmem:[%s1 + $0x28] sm:$0xff]
  %v39 = vld [vmem:[%s1 + $0x30] sm:$0xff]
  %v40 = vld [vmem:[%s1 + $0x38] sm:$0xff]
  %v41 = vld [vmem:[%s1 + $0x40] sm:$0xff]
  %v42 = vld [vmem:[%s1 + $0x48] sm:$0xff]
  %v43 = vld [vmem:[%s1 + $0x50] sm:$0xff]
  %v44 = vld [vmem:[%s1 + $0x58] sm:$0xff]
  %v45 = vld [vmem:[%s1 + $0x60] sm:$0xff]
  %v46 = vld [vmem:[%s1 + $0x68] sm:$0xff]
  %v47 = vld [vmem:[%s1 + $0x70] sm:$0xff]
  %v48 = vld [vmem:[%s1 + $0x78] sm:$0xff]
  %v49 = vld [vmem:[%s1 + $0x80] sm:$0xff]
  %v50 = vld [vmem:[%s1 + $0x88] sm:$0xff]
  %v51 = vld [vmem:[%s1 + $0x90] sm:$0xff]
  %v52 = vld [vmem:[%s1 + $0x98] sm:$0xff]
  %v53 = vld [vmem:[%s1 + $0xa0] sm:$0xff]
  %v54 = vld [vmem:[%s1 + $0xa8] sm:$0xff]
  %v55 = vld [vmem:[%s1 + $0xb0] sm:$0xff]
  %v56 = vld [vmem:[%s1 + $0xb8] sm:$0xff]
  %v57 = vld [vmem:[%s1 + $0xc0] sm:$0xff]
  %v58 = vld [vmem:[%s1 + $0xc8] sm:$0xff]
  %v59 = vld [vmem:[%s1 + $0xd0] sm:$0xff]
  %v60 = vld [vmem:[%s1 + $0xd8] sm:$0xff]
  %v61 = vld [vmem:[%s1 + $0xe0] sm:$0xff]
  %v62 = vld [vmem:[%s1 + $0xe8] sm:$0xff]
  %v63 = vld [vmem:[%s1 + $0xf0] sm:$0xff]
  %v64 = vld [vmem:[%s1 + $0xf8] sm:$0xff]
  %v65 = vld [vmem:[%s1 + $0x100] sm:$0xff]
  %v66 = vld [vmem:[%s1 + $0x108] sm:$0xff]
  %v67 = vld [vmem:[%s1 + $0x110] sm:$0xff]
  %v68 = vld [vmem:[%s1 + $0x118] sm:$0xff]
  %v69 = vld [vmem:[%s1 + $0x120] sm:$0xff]
  %v70 = vld [vmem:[%s1 + $0x128] sm:$0xff]
  %v71 = vld [vmem:[%s1 + $0x130] sm:$0xff]
  %v72 = vld [vmem:[%s1 + $0x138] sm:$0xff]
  %v73 = vld [vmem:[%s1 + $0x140] sm:$0xff]
  %v74 = vld [vmem:[%s1 + $0x148] sm:$0xff]
  %v75 = vld [vmem:[%s1 + $0x150] sm:$0xff]
  %v76 = vld [vmem:[%s1 + $0x158] sm:$0xff]
  %v77 = vld [vmem:[%s1 + $0x160] sm:$0xff]
  %v78 = vld [vmem:[%s1 + $0x168] sm:$0xff]
  %v79 = vld [vmem:[%s1 + $0x170] sm:$0xff]
  %v80 = vld [vmem:[%s1 + $0x178] sm:$0xff]
  %v81 = vld [vmem:[%s1 + $0x180] sm:$0xff]
  %v82 = vld [vmem:[%s1 + $0x188] sm:$0xff]
  %v83 = vld [vmem:[%s1 + $0x190] sm:$0xff]
  %v84 = vld [vmem:[%s1 + $0x198] sm:$0xff]
  %v85 = vld [vmem:[%s1 + $0x1a0] sm:$0xff]
  %v86 = vld [vmem:[%s1 + $0x1a8] sm:$0xff]
  %v87 = vld [vmem:[%s1 + $0x1b0] sm:$0xff]
  %v88 = vld [vmem:[%s1 + $0x1b8] sm:$0xff]
  %v89 = vld [vmem:[%s1 + $0x1c0] sm:$0xff]
  %v90 = vld [vmem:[%s1 + $0x1c8] sm:$0xff]
  %v91 = vld [vmem:[%s1 + $0x1d0] sm:$0xff]
  %v92 = vld [vmem:[%s1 + $0x1d8] sm:$0xff]
  %v93 = vld [vmem:[%s1 + $0x1e0] sm:$0xff]
  %v94 = vld [vmem:[%s1 + $0x1e8] sm:$0xff]
  %v95 = vld [vmem:[%s1 + $0x1f0] sm:$0xff]
  %v96 = vld [vmem:[%s1 + $0x1f8] sm:$0xff]
  %97 = vmatprep.subr.mxu0 0.0
  %98 = vmatpush1.msra.mxu0 %v33
  %99 = vmatprep.subr.mxu0 0.0
  %100 = vmatpush1.msra.mxu0 %v34
  %101 = vmatprep.subr.mxu0 0.0
  %102 = vmatpush1.msra.mxu0 %v35
  %103 = vmatprep.subr.mxu0 0.0
  %104 = vmatpush1.msra.mxu0 %v36
  %105 = vmatprep.subr.mxu0 0.0
  %106 = vmatpush1.msra.mxu0 %v37
  %107 = vmatprep.subr.mxu0 0.0
  %108 = vmatpush1.msra.mxu0 %v38
  %109 = vmatprep.subr.mxu0 0.0
  %110 = vmatpush1.msra.mxu0 %v39
  %111 = vmatprep.subr.mxu0 0.0
  %112 = vmatpush1.msra.mxu0 %v40
  %113 = vmatprep.subr.mxu0 0.0
  %114 = vmatpush1.msra.mxu0 %v41
  %115 = vmatprep.subr.mxu0 0.0
  %116 = vmatpush1.msra.mxu0 %v42
  %117 = vmatprep.subr.mxu0 0.0
  %118 = vmatpush1.msra.mxu0 %v43
  %119 = vmatprep.subr.mxu0 0.0
  %120 = vmatpush1.msra.mxu0 %v44
  %121 = vmatprep.subr.mxu0 0.0
  %122 = vmatpush1.msra.mxu0 %v45
  %123 = vmatprep.subr.mxu0 0.0
  %124 = vmatpush1.msra.mxu0 %v46
  %125 = vmatprep.subr.mxu0 0.0
  %126 = vmatpush1.msra.mxu0 %v47
  %127 = vmatprep.subr.mxu0 0.0
  %128 = vmatpush1.msra.mxu0 %v48
  %129 = vmatprep.subr.mxu0 0.0
  %130 = vmatpush1.msra.mxu0 %v49
  %131 = vmatprep.subr.mxu0 0.0
  %132 = vmatpush1.msra.mxu0 %v50
  %133 = vmatprep.subr.mxu0 0.0
  %134 = vmatpush1.msra.mxu0 %v51
  %135 = vmatprep.subr.mxu0 0.0
  %136 = vmatpush1.msra.mxu0 %v52
  %137 = vmatprep.subr.mxu0 0.0
  %138 = vmatpush1.msra.mxu0 %v53
  %139 = vmatprep.subr.mxu0 0.0
  %140 = vmatpush1.msra.mxu0 %v54
  %141 = vmatprep.subr.mxu0 0.0
  %142 = vmatpush1.msra.mxu0 %v55
  %143 = vmatprep.subr.mxu0 0.0
  %144 = vmatpush1.msra.mxu0 %v56
  %145 = vmatprep.subr.mxu0 0.0
  %146 = vmatpush1.msra.mxu0 %v57
  %147 = vmatprep.subr.mxu0 0.0
  %148 = vmatpush1.msra.mxu0 %v58
  %149 = vmatprep.subr.mxu0 0.0
  %150 = vmatpush1.msra.mxu0 %v59
  %151 = vmatprep.subr.mxu0 0.0
  %152 = vmatpush1.msra.mxu0 %v60
  %153 = vmatprep.subr.mxu0 0.0
  %154 = vmatpush1.msra.mxu0 %v61
  %155 = vmatprep.subr.mxu0 0.0
  %156 = vmatpush1.msra.mxu0 %v62
  %157 = vmatprep.subr.mxu0 0.0
  %158 = vmatpush1.msra.mxu0 %v63
  %159 = vmatprep.subr.mxu0 0.0
  %160 = vmatpush1.msra.mxu0 %v64
  %161 = vmatprep.mubr.f32.mxu0 %v18
  %162 = vmatmul.mubr.f32.gmra.mrb[0].mxu0 %v17
  %v163 = vpop.f32.mrb[0].mxu0
  %v164 = vadd.f32 0.0, %v163
  %v165 = vpop.f32.mrb[0].mxu0
  %166 = vmatprep.mubr.f32.mxu0 %v22
  %167 = vmatmul.mubr.f32.gmra.mrb[0].mxu0 %v21
  %v168 = vpop.f32.mrb[0].mxu0
  %v169 = vadd.f32 0.0, %v168
  %v170 = vpop.f32.mrb[0].mxu0
  %171 = vmatprep.mubr.f32.mxu0 %v26
  %172 = vmatmul.mubr.f32.gmra.mrb[0].mxu0 %v25
  %v173 = vpop.f32.mrb[0].mxu0
  %v174 = vadd.f32 0.0, %v173
  %v175 = vpop.f32.mrb[0].mxu0
  %176 = vmatprep.mubr.f32.mxu0 %v30
  %177 = vmatmul.mubr.f32.gmra.mrb[0].mxu0 %v29
  %v178 = vpop.f32.mrb[0].mxu0
  %v179 = vadd.f32 0.0, %v178
  %v180 = vpop.f32.mrb[0].mxu0
  %181 = vdwg.mxu0
  %182 = vmatprep.subr.mxu0 0.0
  %183 = vmatpush1.msra.mxu0 %v65
  %184 = vmatprep.subr.mxu0 0.0
  %185 = vmatpush1.msra.mxu0 %v66
  %186 = vmatprep.subr.mxu0 0.0
  %187 = vmatpush1.msra.mxu0 %v67
  %188 = vmatprep.subr.mxu0 0.0
  %189 = vmatpush1.msra.mxu0 %v68
  %190 = vmatprep.subr.mxu0 0.0
  %191 = vmatpush1.msra.mxu0 %v69
  %192 = vmatprep.subr.mxu0 0.0
  %193 = vmatpush1.msra.mxu0 %v70
  %194 = vmatprep.subr.mxu0 0.0
  %195 = vmatpush1.msra.mxu0 %v71
  %196 = vmatprep.subr.mxu0 0.0
  %197 = vmatpush1.msra.mxu0 %v72
  %198 = vmatprep.subr.mxu0 0.0
  %199 = vmatpush1.msra.mxu0 %v73
  %200 = vmatprep.subr.mxu0 0.0
  %201 = vmatpush1.msra.mxu0 %v74
  %202 = vmatprep.subr.mxu0 0.0
  %203 = vmatpush1.msra.mxu0 %v75
  %204 = vmatprep.subr.mxu0 0.0
  %205 = vmatpush1.msra.mxu0 %v76
  %206 = vmatprep.subr.mxu0 0.0
  %207 = vmatpush1.msra.mxu0 %v77
  %208 = vmatprep.subr.mxu0 0.0
  %209 = vmatpush1.msra.mxu0 %v78
  %210 = vmatprep.subr.mxu0 0.0
  %211 = vmatpush1.msra.mxu0 %v79
  %212 = vmatprep.subr.mxu0 0.0
  %213 = vmatpush1.msra.mxu0 %v80
  %214 = vmatprep.subr.mxu0 0.0
  %215 = vmatpush1.msra.mxu0 %v81
  %216 = vmatprep.subr.mxu0 0.0
  %217 = vmatpush1.msra.mxu0 %v82
  %218 = vmatprep.subr.mxu0 0.0
  %219 = vmatpush1.msra.mxu0 %v83
  %220 = vmatprep.subr.mxu0 0.0
  %221 = vmatpush1.msra.mxu0 %v84
  %222 = vmatprep.subr.mxu0 0.0
  %223 = vmatpush1.msra.mxu0 %v85
  %224 = vmatprep.subr.mxu0 0.0
  %225 = vmatpush1.msra.mxu0 %v86
  %226 = vmatprep.subr.mxu0 0.0
  %227 = vmatpush1.msra.mxu0 %v87
  %228 = vmatprep.subr.mxu0 0.0
  %229 = vmatpush1.msra.mxu0 %v88
  %230 = vmatprep.subr.mxu0 0.0
  %231 = vmatpush1.msra.mxu0 %v89
  %232 = vmatprep.subr.mxu0 0.0
  %233 = vmatpush1.msra.mxu0 %v90
  %234 = vmatprep.subr.mxu0 0.0
  %235 = vmatpush1.msra.mxu0 %v91
  %236 = vmatprep.subr.mxu0 0.0
  %237 = vmatpush1.msra.mxu0 %v92
  %238 = vmatprep.subr.mxu0 0.0
  %239 = vmatpush1.msra.mxu0 %v93
  %240 = vmatprep.subr.mxu0 0.0
  %241 = vmatpush1.msra.mxu0 %v94
  %242 = vmatprep.subr.mxu0 0.0
  %243 = vmatpush1.msra.mxu0 %v95
  %244 = vmatprep.subr.mxu0 0.0
  %245 = vmatpush1.msra.mxu0 %v96
  %246 = vmatprep.mubr.f32.mxu0 %v20
  %247 = vmatmul.mubr.f32.gmra.mrb[0].mxu0 %v19
  %v248 = vpop.f32.mrb[0].mxu0
  %v249 = vadd.f32 %v164, %v248
  %v250 = vpop.f32.mrb[0].mxu0
  %251 = vmatprep.mubr.f32.mxu0 %v24
  %252 = vmatmul.mubr.f32.gmra.mrb[0].mxu0 %v23
  %v253 = vpop.f32.mrb[0].mxu0
  %v254 = vadd.f32 %v169, %v253
  %v255 = vpop.f32.mrb[0].mxu0
  %256 = vmatprep.mubr.f32.mxu0 %v28
  %257 = vmatmul.mubr.f32.gmra.mrb[0].mxu0 %v27
  %v258 = vpop.f32.mrb[0].mxu0
  %v259 = vadd.f32 %v174, %v258
  %v260 = vpop.f32.mrb[0].mxu0
  %261 = vmatprep.mubr.f32.mxu0 %v32
  %262 = vmatmul.mubr.f32.gmra.mrb[0].mxu0 %v31
  %v263 = vpop.f32.mrb[0].mxu0
  %v264 = vadd.f32 %v179, %v263
  %v265 = vpop.f32.mrb[0].mxu0
  %266 = vdwg.mxu0
  %vm267 = vcmask 523264
  %v268 = vsel %vm267, %v249, 0.0
  %v269 = vsel %vm267, %v254, 0.0
  %v270 = vadd.f32 %v268, %v269
  %v271 = vsel %vm267, %v259, 0.0
  %v272 = vadd.f32 %v270, %v271
  %v273 = vsel %vm267, %v264, 0.0
  %v274 = vadd.f32 %v272, %v273
  %v275 = vrot.slane %v274, 4
  %v276 = vadd.f32 %v274, %v275
  %v277 = vrot.slane %v276, 2
  %v278 = vadd.f32 %v276, %v277
  %v279 = vrot.slane %v278, 1
  %v280 = vadd.f32 %v278, %v279
  %v281 = vmul.f32 %v249, %v249
  %v282 = vmul.f32 %v254, %v254
  %v283 = vmul.f32 %v259, %v259
  %v284 = vmul.f32 %v264, %v264
  %v285 = vsel %vm267, %v281, 0.0
  %v286 = vsel %vm267, %v282, 0.0
  %v287 = vadd.f32 %v285, %v286
  %v288 = vsel %vm267, %v283, 0.0
  %v289 = vadd.f32 %v287, %v288
  %v290 = vsel %vm267, %v284, 0.0
  %v291 = vadd.f32 %v289, %v290
  %v292 = vrot.slane %v291, 4
  %v293 = vadd.f32 %v291, %v292
  %v294 = vrot.slane %v293, 2
  %v295 = vadd.f32 %v293, %v294
  %v296 = vrot.slane %v295, 1
  %v297 = vadd.f32 %v295, %v296
  %s298 = scalar_lea.vmem %s0, 128
  %v299 = vld [vmem:[%s298] sm:$0xff]
  %v300 = vld [vmem:[%s298 + $0x8] sm:$0xff]
  %v301 = vld [vmem:[%s298 + $0x10] sm:$0xff]
  %v302 = vld [vmem:[%s298 + $0x18] sm:$0xff]
  %v303 = vld [vmem:[%s298 + $0x20] sm:$0xff]
  %v304 = vld [vmem:[%s298 + $0x28] sm:$0xff]
  %v305 = vld [vmem:[%s298 + $0x30] sm:$0xff]
  %v306 = vld [vmem:[%s298 + $0x38] sm:$0xff]
  %v307 = vld [vmem:[%s298 + $0x40] sm:$0xff]
  %v308 = vld [vmem:[%s298 + $0x48] sm:$0xff]
  %v309 = vld [vmem:[%s298 + $0x50] sm:$0xff]
  %v310 = vld [vmem:[%s298 + $0x58] sm:$0xff]
  %v311 = vld [vmem:[%s298 + $0x60] sm:$0xff]
  %v312 = vld [vmem:[%s298 + $0x68] sm:$0xff]
  %v313 = vld [vmem:[%s298 + $0x70] sm:$0xff]
  %v314 = vld [vmem:[%s298 + $0x78] sm:$0xff]
  %s315 = scalar_lea.vmem %s1, 512
  %v316 = vld [vmem:[%s315] sm:$0xff]
  %v317 = vld [vmem:[%s315 + $0x8] sm:$0xff]
  %v318 = vld [vmem:[%s315 + $0x10] sm:$0xff]
  %v319 = vld [vmem:[%s315 + $0x18] sm:$0xff]
  %v320 = vld [vmem:[%s315 + $0x20] sm:$0xff]
  %v321 = vld [vmem:[%s315 + $0x28] sm:$0xff]
  %v322 = vld [vmem:[%s315 + $0x30] sm:$0xff]
  %v323 = vld [vmem:[%s315 + $0x38] sm:$0xff]
  %v324 = vld [vmem:[%s315 + $0x40] sm:$0xff]
  %v325 = vld [vmem:[%s315 + $0x48] sm:$0xff]
  %v326 = vld [vmem:[%s315 + $0x50] sm:$0xff]
  %v327 = vld [vmem:[%s315 + $0x58] sm:$0xff]
  %v328 = vld [vmem:[%s315 + $0x60] sm:$0xff]
  %v329 = vld [vmem:[%s315 + $0x68] sm:$0xff]
  %v330 = vld [vmem:[%s315 + $0x70] sm:$0xff]
  %v331 = vld [vmem:[%s315 + $0x78] sm:$0xff]
  %v332 = vld [vmem:[%s315 + $0x80] sm:$0xff]
  %v333 = vld [vmem:[%s315 + $0x88] sm:$0xff]
  %v334 = vld [vmem:[%s315 + $0x90] sm:$0xff]
  %v335 = vld [vmem:[%s315 + $0x98] sm:$0xff]
  %v336 = vld [vmem:[%s315 + $0xa0] sm:$0xff]
  %v337 = vld [vmem:[%s315 + $0xa8] sm:$0xff]
  %v338 = vld [vmem:[%s315 + $0xb0] sm:$0xff]
  %v339 = vld [vmem:[%s315 + $0xb8] sm:$0xff]
  %v340 = vld [vmem:[%s315 + $0xc0] sm:$0xff]
  %v341 = vld [vmem:[%s315 + $0xc8] sm:$0xff]
  %v342 = vld [vmem:[%s315 + $0xd0] sm:$0xff]
  %v343 = vld [vmem:[%s315 + $0xd8] sm:$0xff]
  %v344 = vld [vmem:[%s315 + $0xe0] sm:$0xff]
  %v345 = vld [vmem:[%s315 + $0xe8] sm:$0xff]
  %v346 = vld [vmem:[%s315 + $0xf0] sm:$0xff]
  %v347 = vld [vmem:[%s315 + $0xf8] sm:$0xff]
  %v348 = vld [vmem:[%s315 + $0x100] sm:$0xff]
  %v349 = vld [vmem:[%s315 + $0x108] sm:$0xff]
  %v350 = vld [vmem:[%s315 + $0x110] sm:$0xff]
  %v351 = vld [vmem:[%s315 + $0x118] sm:$0xff]
  %v352 = vld [vmem:[%s315 + $0x120] sm:$0xff]
  %v353 = vld [vmem:[%s315 + $0x128] sm:$0xff]
  %v354 = vld [vmem:[%s315 + $0x130] sm:$0xff]
  %v355 = vld [vmem:[%s315 + $0x138] sm:$0xff]
  %v356 = vld [vmem:[%s315 + $0x140] sm:$0xff]
  %v357 = vld [vmem:[%s315 + $0x148] sm:$0xff]
  %v358 = vld [vmem:[%s315 + $0x150] sm:$0xff]
  %v359 = vld [vmem:[%s315 + $0x158] sm:$0xff]
  %v360 = vld [vmem:[%s315 + $0x160] sm:$0xff]
  %v361 = vld [vmem:[%s315 + $0x168] sm:$0xff]
  %v362 = vld [vmem:[%s315 + $0x170] sm:$0xff]
  %v363 = vld [vmem:[%s315 + $0x178] sm:$0xff]
  %v364 = vld [vmem:[%s315 + $0x180] sm:$0xff]
  %v365 = vld [vmem:[%s315 + $0x188] sm:$0xff]
  %v366 = vld [vmem:[%s315 + $0x190] sm:$0xff]
  %v367 = vld [vmem:[%s315 + $0x198] sm:$0xff]
  %v368 = vld [vmem:[%s315 + $0x1a0] sm:$0xff]
  %v369 = vld [vmem:[%s315 + $0x1a8] sm:$0xff]
  %v370 = vld [vmem:[%s315 + $0x1b0] sm:$0xff]
  %v371 = vld [vmem:[%s315 + $0x1b8] sm:$0xff]
  %v372 = vld [vmem:[%s315 + $0x1c0] sm:$0xff]
  %v373 = vld [vmem:[%s315 + $0x1c8] sm:$0xff]
  %v374 = vld [vmem:[%s315 + $0x1d0] sm:$0xff]
  %v375 = vld [vmem:[%s315 + $0x1d8] sm:$0xff]
  %v376 = vld [vmem:[%s315 + $0x1e0] sm:$0xff]
  %v377 = vld [vmem:[%s315 + $0x1e8] sm:$0xff]
  %v378 = vld [vmem:[%s315 + $0x1f0] sm:$0xff]
  %v379 = vld [vmem:[%s315 + $0x1f8] sm:$0xff]
  %380 = vmatprep.subr.mxu0 0.0
  %381 = vmatpush1.msra.mxu0 %v316
  %382 = vmatprep.subr.mxu0 0.0
  %383 = vmatpush1.msra.mxu0 %v317
  %384 = vmatprep.subr.mxu0 0.0
  %385 = vmatpush1.msra.mxu0 %v318
  %386 = vmatprep.subr.mxu0 0.0
  %387 = vmatpush1.msra.mxu0 %v319
  %388 = vmatprep.subr.mxu0 0.0
  %389 = vmatpush1.msra.mxu0 %v320
  %390 = vmatprep.subr.mxu0 0.0
  %391 = vmatpush1.msra.mxu0 %v321
  %392 = vmatprep.subr.mxu0 0.0
  %393 = vmatpush1.msra.mxu0 %v322
  %394 = vmatprep.subr.mxu0 0.0
  %395 = vmatpush1.msra.mxu0 %v323
  %396 = vmatprep.subr.mxu0 0.0
  %397 = vmatpush1.msra.mxu0 %v324
  %398 = vmatprep.subr.mxu0 0.0
  %399 = vmatpush1.msra.mxu0 %v325
  %400 = vmatprep.subr.mxu0 0.0
  %401 = vmatpush1.msra.mxu0 %v326
  %402 = vmatprep.subr.mxu0 0.0
  %403 = vmatpush1.msra.mxu0 %v327
  %404 = vmatprep.subr.mxu0 0.0
  %405 = vmatpush1.msra.mxu0 %v328
  %406 = vmatprep.subr.mxu0 0.0
  %407 = vmatpush1.msra.mxu0 %v329
  %408 = vmatprep.subr.mxu0 0.0
  %409 = vmatpush1.msra.mxu0 %v330
  %410 = vmatprep.subr.mxu0 0.0
  %411 = vmatpush1.msra.mxu0 %v331
  %412 = vmatprep.subr.mxu0 0.0
  %413 = vmatpush1.msra.mxu0 %v332
  %414 = vmatprep.subr.mxu0 0.0
  %415 = vmatpush1.msra.mxu0 %v333
  %416 = vmatprep.subr.mxu0 0.0
  %417 = vmatpush1.msra.mxu0 %v334
  %418 = vmatprep.subr.mxu0 0.0
  %419 = vmatpush1.msra.mxu0 %v335
  %420 = vmatprep.subr.mxu0 0.0
  %421 = vmatpush1.msra.mxu0 %v336
  %422 = vmatprep.subr.mxu0 0.0
  %423 = vmatpush1.msra.mxu0 %v337
  %424 = vmatprep.subr.mxu0 0.0
  %425 = vmatpush1.msra.mxu0 %v338
  %426 = vmatprep.subr.mxu0 0.0
  %427 = vmatpush1.msra.mxu0 %v339
  %428 = vmatprep.subr.mxu0 0.0
  %429 = vmatpush1.msra.mxu0 %v340
  %430 = vmatprep.subr.mxu0 0.0
  %431 = vmatpush1.msra.mxu0 %v341
  %432 = vmatprep.subr.mxu0 0.0
  %433 = vmatpush1.msra.mxu0 %v342
  %434 = vmatprep.subr.mxu0 0.0
  %435 = vmatpush1.msra.mxu0 %v343
  %436 = vmatprep.subr.mxu0 0.0
  %437 = vmatpush1.msra.mxu0 %v344
  %438 = vmatprep.subr.mxu0 0.0
  %439 = vmatpush1.msra.mxu0 %v345
  %440 = vmatprep.subr.mxu0 0.0
  %441 = vmatpush1.msra.mxu0 %v346
  %442 = vmatprep.subr.mxu0 0.0
  %443 = vmatpush1.msra.mxu0 %v347
  %444 = vmatprep.mubr.f32.mxu0 %v300
  %445 = vmatmul.mubr.f32.gmra.mrb[0].mxu0 %v299
  %v446 = vpop.f32.mrb[0].mxu0
  %v447 = vadd.f32 0.0, %v446
  %v448 = vpop.f32.mrb[0].mxu0
  %449 = vmatprep.mubr.f32.mxu0 %v304
  %450 = vmatmul.mubr.f32.gmra.mrb[0].mxu0 %v303
  %v451 = vpop.f32.mrb[0].mxu0
  %v452 = vadd.f32 0.0, %v451
  %v453 = vpop.f32.mrb[0].mxu0
  %454 = vmatprep.mubr.f32.mxu0 %v308
  %455 = vmatmul.mubr.f32.gmra.mrb[0].mxu0 %v307
  %v456 = vpop.f32.mrb[0].mxu0
  %v457 = vadd.f32 0.0, %v456
  %v458 = vpop.f32.mrb[0].mxu0
  %459 = vmatprep.mubr.f32.mxu0 %v312
  %460 = vmatmul.mubr.f32.gmra.mrb[0].mxu0 %v311
  %v461 = vpop.f32.mrb[0].mxu0
  %v462 = vadd.f32 0.0, %v461
  %v463 = vpop.f32.mrb[0].mxu0
  %464 = vdwg.mxu0
  %465 = vmatprep.subr.mxu0 0.0
  %466 = vmatpush1.msra.mxu0 %v348
  %467 = vmatprep.subr.mxu0 0.0
  %468 = vmatpush1.msra.mxu0 %v349
  %469 = vmatprep.subr.mxu0 0.0
  %470 = vmatpush1.msra.mxu0 %v350
  %471 = vmatprep.subr.mxu0 0.0
  %472 = vmatpush1.msra.mxu0 %v351
  %473 = vmatprep.subr.mxu0 0.0
  %474 = vmatpush1.msra.mxu0 %v352
  %475 = vmatprep.subr.mxu0 0.0
  %476 = vmatpush1.msra.mxu0 %v353
  %477 = vmatprep.subr.mxu0 0.0
  %478 = vmatpush1.msra.mxu0 %v354
  %479 = vmatprep.subr.mxu0 0.0
  %480 = vmatpush1.msra.mxu0 %v355
  %481 = vmatprep.subr.mxu0 0.0
  %482 = vmatpush1.msra.mxu0 %v356
  %483 = vmatprep.subr.mxu0 0.0
  %484 = vmatpush1.msra.mxu0 %v357
  %485 = vmatprep.subr.mxu0 0.0
  %486 = vmatpush1.msra.mxu0 %v358
  %487 = vmatprep.subr.mxu0 0.0
  %488 = vmatpush1.msra.mxu0 %v359
  %489 = vmatprep.subr.mxu0 0.0
  %490 = vmatpush1.msra.mxu0 %v360
  %491 = vmatprep.subr.mxu0 0.0
  %492 = vmatpush1.msra.mxu0 %v361
  %493 = vmatprep.subr.mxu0 0.0
  %494 = vmatpush1.msra.mxu0 %v362
  %495 = vmatprep.subr.mxu0 0.0
  %496 = vmatpush1.msra.mxu0 %v363
  %497 = vmatprep.subr.mxu0 0.0
  %498 = vmatpush1.msra.mxu0 %v364
  %499 = vmatprep.subr.mxu0 0.0
  %500 = vmatpush1.msra.mxu0 %v365
  %501 = vmatprep.subr.mxu0 0.0
  %502 = vmatpush1.msra.mxu0 %v366
  %503 = vmatprep.subr.mxu0 0.0
  %504 = vmatpush1.msra.mxu0 %v367
  %505 = vmatprep.subr.mxu0 0.0
  %506 = vmatpush1.msra.mxu0 %v368
  %507 = vmatprep.subr.mxu0 0.0
  %508 = vmatpush1.msra.mxu0 %v369
  %509 = vmatprep.subr.mxu0 0.0
  %510 = vmatpush1.msra.mxu0 %v370
  %511 = vmatprep.subr.mxu0 0.0
  %512 = vmatpush1.msra.mxu0 %v371
  %513 = vmatprep.subr.mxu0 0.0
  %514 = vmatpush1.msra.mxu0 %v372
  %515 = vmatprep.subr.mxu0 0.0
  %516 = vmatpush1.msra.mxu0 %v373
  %517 = vmatprep.subr.mxu0 0.0
  %518 = vmatpush1.msra.mxu0 %v374
  %519 = vmatprep.subr.mxu0 0.0
  %520 = vmatpush1.msra.mxu0 %v375
  %521 = vmatprep.subr.mxu0 0.0
  %522 = vmatpush1.msra.mxu0 %v376
  %523 = vmatprep.subr.mxu0 0.0
  %524 = vmatpush1.msra.mxu0 %v377
  %525 = vmatprep.subr.mxu0 0.0
  %526 = vmatpush1.msra.mxu0 %v378
  %527 = vmatprep.subr.mxu0 0.0
  %528 = vmatpush1.msra.mxu0 %v379
  %529 = vmatprep.mubr.f32.mxu0 %v302
  %530 = vmatmul.mubr.f32.gmra.mrb[0].mxu0 %v301
  %v531 = vpop.f32.mrb[0].mxu0
  %v532 = vadd.f32 %v447, %v531
  %v533 = vpop.f32.mrb[0].mxu0
  %534 = vmatprep.mubr.f32.mxu0 %v306
  %535 = vmatmul.mubr.f32.gmra.mrb[0].mxu0 %v305
  %v536 = vpop.f32.mrb[0].mxu0
  %v537 = vadd.f32 %v452, %v536
  %v538 = vpop.f32.mrb[0].mxu0
  %539 = vmatprep.mubr.f32.mxu0 %v310
  %540 = vmatmul.mubr.f32.gmra.mrb[0].mxu0 %v309
  %v541 = vpop.f32.mrb[0].mxu0
  %v542 = vadd.f32 %v457, %v541
  %v543 = vpop.f32.mrb[0].mxu0
  %544 = vmatprep.mubr.f32.mxu0 %v314
  %545 = vmatmul.mubr.f32.gmra.mrb[0].mxu0 %v313
  %v546 = vpop.f32.mrb[0].mxu0
  %v547 = vadd.f32 %v462, %v546
  %v548 = vpop.f32.mrb[0].mxu0
  %549 = vdwg.mxu0
  %v550 = vsel %vm267, %v532, 0.0
  %v551 = vsel %vm267, %v537, 0.0
  %v552 = vadd.f32 %v550, %v551
  %v553 = vsel %vm267, %v542, 0.0
  %v554 = vadd.f32 %v552, %v553
  %v555 = vsel %vm267, %v547, 0.0
  %v556 = vadd.f32 %v554, %v555
  %v557 = vrot.slane %v556, 4
  %v558 = vadd.f32 %v556, %v557
  %v559 = vrot.slane %v558, 2
  %v560 = vadd.f32 %v558, %v559
  %v561 = vrot.slane %v560, 1
  %v562 = vadd.f32 %v560, %v561
  %v563 = vmul.f32 %v532, %v532
  %v564 = vmul.f32 %v537, %v537
  %v565 = vmul.f32 %v542, %v542
  %v566 = vmul.f32 %v547, %v547
  %v567 = vsel %vm267, %v563, 0.0
  %v568 = vsel %vm267, %v564, 0.0
  %v569 = vadd.f32 %v567, %v568
  %v570 = vsel %vm267, %v565, 0.0
  %v571 = vadd.f32 %v569, %v570
  %v572 = vsel %vm267, %v566, 0.0
  %v573 = vadd.f32 %v571, %v572
  %v574 = vrot.slane %v573, 4
  %v575 = vadd.f32 %v573, %v574
  %v576 = vrot.slane %v575, 2
  %v577 = vadd.f32 %v575, %v576
  %v578 = vrot.slane %v577, 1
  %v579 = vadd.f32 %v577, %v578
  %v580 = vadd.f32 %v280, %v562
  %v581 = vadd.f32 %v297, %v579
  %s582 = scalar_lea.vmem %s0, 256
  %v583 = vld [vmem:[%s582] sm:$0xff]
  %v584 = vld [vmem:[%s582 + $0x8] sm:$0xff]
  %v585 = vld [vmem:[%s582 + $0x10] sm:$0xff]
  %v586 = vld [vmem:[%s582 + $0x18] sm:$0xff]
  %v587 = vld [vmem:[%s582 + $0x20] sm:$0xff]
  %v588 = vld [vmem:[%s582 + $0x28] sm:$0xff]
  %v589 = vld [vmem:[%s582 + $0x30] sm:$0xff]
  %v590 = vld [vmem:[%s582 + $0x38] sm:$0xff]
  %v591 = vld [vmem:[%s582 + $0x40] sm:$0xff]
  %v592 = vld [vmem:[%s582 + $0x48] sm:$0xff]
  %v593 = vld [vmem:[%s582 + $0x50] sm:$0xff]
  %v594 = vld [vmem:[%s582 + $0x58] sm:$0xff]
  %v595 = vld [vmem:[%s582 + $0x60] sm:$0xff]
  %v596 = vld [vmem:[%s582 + $0x68] sm:$0xff]
  %v597 = vld [vmem:[%s582 + $0x70] sm:$0xff]
  %v598 = vld [vmem:[%s582 + $0x78] sm:$0xff]
  %s599 = scalar_lea.vmem %s1, 1024
  %v600 = vld [vmem:[%s599] sm:$0xff]
  %v601 = vld [vmem:[%s599 + $0x8] sm:$0xff]
  %v602 = vld [vmem:[%s599 + $0x10] sm:$0xff]
  %v603 = vld [vmem:[%s599 + $0x18] sm:$0xff]
  %v604 = vld [vmem:[%s599 + $0x20] sm:$0xff]
  %v605 = vld [vmem:[%s599 + $0x28] sm:$0xff]
  %v606 = vld [vmem:[%s599 + $0x30] sm:$0xff]
  %v607 = vld [vmem:[%s599 + $0x38] sm:$0xff]
  %v608 = vld [vmem:[%s599 + $0x40] sm:$0xff]
  %v609 = vld [vmem:[%s599 + $0x48] sm:$0xff]
  %v610 = vld [vmem:[%s599 + $0x50] sm:$0xff]
  %v611 = vld [vmem:[%s599 + $0x58] sm:$0xff]
  %v612 = vld [vmem:[%s599 + $0x60] sm:$0xff]
  %v613 = vld [vmem:[%s599 + $0x68] sm:$0xff]
  %v614 = vld [vmem:[%s599 + $0x70] sm:$0xff]
  %v615 = vld [vmem:[%s599 + $0x78] sm:$0xff]
  %v616 = vld [vmem:[%s599 + $0x80] sm:$0xff]
  %v617 = vld [vmem:[%s599 + $0x88] sm:$0xff]
  %v618 = vld [vmem:[%s599 + $0x90] sm:$0xff]
  %v619 = vld [vmem:[%s599 + $0x98] sm:$0xff]
  %v620 = vld [vmem:[%s599 + $0xa0] sm:$0xff]
  %v621 = vld [vmem:[%s599 + $0xa8] sm:$0xff]
  %v622 = vld [vmem:[%s599 + $0xb0] sm:$0xff]
  %v623 = vld [vmem:[%s599 + $0xb8] sm:$0xff]
  %v624 = vld [vmem:[%s599 + $0xc0] sm:$0xff]
  %v625 = vld [vmem:[%s599 + $0xc8] sm:$0xff]
  %v626 = vld [vmem:[%s599 + $0xd0] sm:$0xff]
  %v627 = vld [vmem:[%s599 + $0xd8] sm:$0xff]
  %v628 = vld [vmem:[%s599 + $0xe0] sm:$0xff]
  %v629 = vld [vmem:[%s599 + $0xe8] sm:$0xff]
  %v630 = vld [vmem:[%s599 + $0xf0] sm:$0xff]
  %v631 = vld [vmem:[%s599 + $0xf8] sm:$0xff]
  %v632 = vld [vmem:[%s599 + $0x100] sm:$0xff]
  %v633 = vld [vmem:[%s599 + $0x108] sm:$0xff]
  %v634 = vld [vmem:[%s599 + $0x110] sm:$0xff]
  %v635 = vld [vmem:[%s599 + $0x118] sm:$0xff]
  %v636 = vld [vmem:[%s599 + $0x120] sm:$0xff]
  %v637 = vld [vmem:[%s599 + $0x128] sm:$0xff]
  %v638 = vld [vmem:[%s599 + $0x130] sm:$0xff]
  %v639 = vld [vmem:[%s599 + $0x138] sm:$0xff]
  %v640 = vld [vmem:[%s599 + $0x140] sm:$0xff]
  %v641 = vld [vmem:[%s599 + $0x148] sm:$0xff]
  %v642 = vld [vmem:[%s599 + $0x150] sm:$0xff]
  %v643 = vld [vmem:[%s599 + $0x158] sm:$0xff]
  %v644 = vld [vmem:[%s599 + $0x160] sm:$0xff]
  %v645 = vld [vmem:[%s599 + $0x168] sm:$0xff]
  %v646 = vld [vmem:[%s599 + $0x170] sm:$0xff]
  %v647 = vld [vmem:[%s599 + $0x178] sm:$0xff]
  %v648 = vld [vmem:[%s599 + $0x180] sm:$0xff]
  %v649 = vld [vmem:[%s599 + $0x188] sm:$0xff]
  %v650 = vld [vmem:[%s599 + $0x190] sm:$0xff]
  %v651 = vld [vmem:[%s599 + $0x198] sm:$0xff]
  %v652 = vld [vmem:[%s599 + $0x1a0] sm:$0xff]
  %v653 = vld [vmem:[%s599 + $0x1a8] sm:$0xff]
  %v654 = vld [vmem:[%s599 + $0x1b0] sm:$0xff]
  %v655 = vld [vmem:[%s599 + $0x1b8] sm:$0xff]
  %v656 = vld [vmem:[%s599 + $0x1c0] sm:$0xff]
  %v657 = vld [vmem:[%s599 + $0x1c8] sm:$0xff]
  %v658 = vld [vmem:[%s599 + $0x1d0] sm:$0xff]
  %v659 = vld [vmem:[%s599 + $0x1d8] sm:$0xff]
  %v660 = vld [vmem:[%s599 + $0x1e0] sm:$0xff]
  %v661 = vld [vmem:[%s599 + $0x1e8] sm:$0xff]
  %v662 = vld [vmem:[%s599 + $0x1f0] sm:$0xff]
  %v663 = vld [vmem:[%s599 + $0x1f8] sm:$0xff]
  %664 = vmatprep.subr.mxu0 0.0
  %665 = vmatpush1.msra.mxu0 %v600
  %666 = vmatprep.subr.mxu0 0.0
  %667 = vmatpush1.msra.mxu0 %v601
  %668 = vmatprep.subr.mxu0 0.0
  %669 = vmatpush1.msra.mxu0 %v602
  %670 = vmatprep.subr.mxu0 0.0
  %671 = vmatpush1.msra.mxu0 %v603
  %672 = vmatprep.subr.mxu0 0.0
  %673 = vmatpush1.msra.mxu0 %v604
  %674 = vmatprep.subr.mxu0 0.0
  %675 = vmatpush1.msra.mxu0 %v605
  %676 = vmatprep.subr.mxu0 0.0
  %677 = vmatpush1.msra.mxu0 %v606
  %678 = vmatprep.subr.mxu0 0.0
  %679 = vmatpush1.msra.mxu0 %v607
  %680 = vmatprep.subr.mxu0 0.0
  %681 = vmatpush1.msra.mxu0 %v608
  %682 = vmatprep.subr.mxu0 0.0
  %683 = vmatpush1.msra.mxu0 %v609
  %684 = vmatprep.subr.mxu0 0.0
  %685 = vmatpush1.msra.mxu0 %v610
  %686 = vmatprep.subr.mxu0 0.0
  %687 = vmatpush1.msra.mxu0 %v611
  %688 = vmatprep.subr.mxu0 0.0
  %689 = vmatpush1.msra.mxu0 %v612
  %690 = vmatprep.subr.mxu0 0.0
  %691 = vmatpush1.msra.mxu0 %v613
  %692 = vmatprep.subr.mxu0 0.0
  %693 = vmatpush1.msra.mxu0 %v614
  %694 = vmatprep.subr.mxu0 0.0
  %695 = vmatpush1.msra.mxu0 %v615
  %696 = vmatprep.subr.mxu0 0.0
  %697 = vmatpush1.msra.mxu0 %v616
  %698 = vmatprep.subr.mxu0 0.0
  %699 = vmatpush1.msra.mxu0 %v617
  %700 = vmatprep.subr.mxu0 0.0
  %701 = vmatpush1.msra.mxu0 %v618
  %702 = vmatprep.subr.mxu0 0.0
  %703 = vmatpush1.msra.mxu0 %v619
  %704 = vmatprep.subr.mxu0 0.0
  %705 = vmatpush1.msra.mxu0 %v620
  %706 = vmatprep.subr.mxu0 0.0
  %707 = vmatpush1.msra.mxu0 %v621
  %708 = vmatprep.subr.mxu0 0.0
  %709 = vmatpush1.msra.mxu0 %v622
  %710 = vmatprep.subr.mxu0 0.0
  %711 = vmatpush1.msra.mxu0 %v623
  %712 = vmatprep.subr.mxu0 0.0
  %713 = vmatpush1.msra.mxu0 %v624
  %714 = vmatprep.subr.mxu0 0.0
  %715 = vmatpush1.msra.mxu0 %v625
  %716 = vmatprep.subr.mxu0 0.0
  %717 = vmatpush1.msra.mxu0 %v626
  %718 = vmatprep.subr.mxu0 0.0
  %719 = vmatpush1.msra.mxu0 %v627
  %720 = vmatprep.subr.mxu0 0.0
  %721 = vmatpush1.msra.mxu0 %v628
  %722 = vmatprep.subr.mxu0 0.0
  %723 = vmatpush1.msra.mxu0 %v629
  %724 = vmatprep.subr.mxu0 0.0
  %725 = vmatpush1.msra.mxu0 %v630
  %726 = vmatprep.subr.mxu0 0.0
  %727 = vmatpush1.msra.mxu0 %v631
  %728 = vmatprep.mubr.f32.mxu0 %v584
  %729 = vmatmul.mubr.f32.gmra.mrb[0].mxu0 %v583
  %v730 = vpop.f32.mrb[0].mxu0
  %v731 = vadd.f32 0.0, %v730
  %v732 = vpop.f32.mrb[0].mxu0
  %733 = vmatprep.mubr.f32.mxu0 %v588
  %734 = vmatmul.mubr.f32.gmra.mrb[0].mxu0 %v587
  %v735 = vpop.f32.mrb[0].mxu0
  %v736 = vadd.f32 0.0, %v735
  %v737 = vpop.f32.mrb[0].mxu0
  %738 = vmatprep.mubr.f32.mxu0 %v592
  %739 = vmatmul.mubr.f32.gmra.mrb[0].mxu0 %v591
  %v740 = vpop.f32.mrb[0].mxu0
  %v741 = vadd.f32 0.0, %v740
  %v742 = vpop.f32.mrb[0].mxu0
  %743 = vmatprep.mubr.f32.mxu0 %v596
  %744 = vmatmul.mubr.f32.gmra.mrb[0].mxu0 %v595
  %v745 = vpop.f32.mrb[0].mxu0
  %v746 = vadd.f32 0.0, %v745
  %v747 = vpop.f32.mrb[0].mxu0
  %748 = vdwg.mxu0
  %749 = vmatprep.subr.mxu0 0.0
  %750 = vmatpush1.msra.mxu0 %v632
  %751 = vmatprep.subr.mxu0 0.0
  %752 = vmatpush1.msra.mxu0 %v633
  %753 = vmatprep.subr.mxu0 0.0
  %754 = vmatpush1.msra.mxu0 %v634
  %755 = vmatprep.subr.mxu0 0.0
  %756 = vmatpush1.msra.mxu0 %v635
  %757 = vmatprep.subr.mxu0 0.0
  %758 = vmatpush1.msra.mxu0 %v636
  %759 = vmatprep.subr.mxu0 0.0
  %760 = vmatpush1.msra.mxu0 %v637
  %761 = vmatprep.subr.mxu0 0.0
  %762 = vmatpush1.msra.mxu0 %v638
  %763 = vmatprep.subr.mxu0 0.0
  %764 = vmatpush1.msra.mxu0 %v639
  %765 = vmatprep.subr.mxu0 0.0
  %766 = vmatpush1.msra.mxu0 %v640
  %767 = vmatprep.subr.mxu0 0.0
  %768 = vmatpush1.msra.mxu0 %v641
  %769 = vmatprep.subr.mxu0 0.0
  %770 = vmatpush1.msra.mxu0 %v642
  %771 = vmatprep.subr.mxu0 0.0
  %772 = vmatpush1.msra.mxu0 %v643
  %773 = vmatprep.subr.mxu0 0.0
  %774 = vmatpush1.msra.mxu0 %v644
  %775 = vmatprep.subr.mxu0 0.0
  %776 = vmatpush1.msra.mxu0 %v645
  %777 = vmatprep.subr.mxu0 0.0
  %778 = vmatpush1.msra.mxu0 %v646
  %779 = vmatprep.subr.mxu0 0.0
  %780 = vmatpush1.msra.mxu0 %v647
  %781 = vmatprep.subr.mxu0 0.0
  %782 = vmatpush1.msra.mxu0 %v648
  %783 = vmatprep.subr.mxu0 0.0
  %784 = vmatpush1.msra.mxu0 %v649
  %785 = vmatprep.subr.mxu0 0.0
  %786 = vmatpush1.msra.mxu0 %v650
  %787 = vmatprep.subr.mxu0 0.0
  %788 = vmatpush1.msra.mxu0 %v651
  %789 = vmatprep.subr.mxu0 0.0
  %790 = vmatpush1.msra.mxu0 %v652
  %791 = vmatprep.subr.mxu0 0.0
  %792 = vmatpush1.msra.mxu0 %v653
  %793 = vmatprep.subr.mxu0 0.0
  %794 = vmatpush1.msra.mxu0 %v654
  %795 = vmatprep.subr.mxu0 0.0
  %796 = vmatpush1.msra.mxu0 %v655
  %797 = vmatprep.subr.mxu0 0.0
  %798 = vmatpush1.msra.mxu0 %v656
  %799 = vmatprep.subr.mxu0 0.0
  %800 = vmatpush1.msra.mxu0 %v657
  %801 = vmatprep.subr.mxu0 0.0
  %802 = vmatpush1.msra.mxu0 %v658
  %803 = vmatprep.subr.mxu0 0.0
  %804 = vmatpush1.msra.mxu0 %v659
  %805 = vmatprep.subr.mxu0 0.0
  %806 = vmatpush1.msra.mxu0 %v660
  %807 = vmatprep.subr.mxu0 0.0
  %808 = vmatpush1.msra.mxu0 %v661
  %809 = vmatprep.subr.mxu0 0.0
  %810 = vmatpush1.msra.mxu0 %v662
  %811 = vmatprep.subr.mxu0 0.0
  %812 = vmatpush1.msra.mxu0 %v663
  %813 = vmatprep.mubr.f32.mxu0 %v586
  %814 = vmatmul.mubr.f32.gmra.mrb[0].mxu0 %v585
  %v815 = vpop.f32.mrb[0].mxu0
  %v816 = vadd.f32 %v731, %v815
  %v817 = vpop.f32.mrb[0].mxu0
  %818 = vmatprep.mubr.f32.mxu0 %v590
  %819 = vmatmul.mubr.f32.gmra.mrb[0].mxu0 %v589
  %v820 = vpop.f32.mrb[0].mxu0
  %v821 = vadd.f32 %v736, %v820
  %v822 = vpop.f32.mrb[0].mxu0
  %823 = vmatprep.mubr.f32.mxu0 %v594
  %824 = vmatmul.mubr.f32.gmra.mrb[0].mxu0 %v593
  %v825 = vpop.f32.mrb[0].mxu0
  %v826 = vadd.f32 %v741, %v825
  %v827 = vpop.f32.mrb[0].mxu0
  %828 = vmatprep.mubr.f32.mxu0 %v598
  %829 = vmatmul.mubr.f32.gmra.mrb[0].mxu0 %v597
  %v830 = vpop.f32.mrb[0].mxu0
  %v831 = vadd.f32 %v746, %v830
  %v832 = vpop.f32.mrb[0].mxu0
  %833 = vdwg.mxu0
  %v834 = vsel %vm267, %v816, 0.0
  %v835 = vsel %vm267, %v821, 0.0
  %v836 = vadd.f32 %v834, %v835
  %v837 = vsel %vm267, %v826, 0.0
  %v838 = vadd.f32 %v836, %v837
  %v839 = vsel %vm267, %v831, 0.0
  %v840 = vadd.f32 %v838, %v839
  %v841 = vrot.slane %v840, 4
  %v842 = vadd.f32 %v840, %v841
  %v843 = vrot.slane %v842, 2
  %v844 = vadd.f32 %v842, %v843
  %v845 = vrot.slane %v844, 1
  %v846 = vadd.f32 %v844, %v845
  %v847 = vmul.f32 %v816, %v816
  %v848 = vmul.f32 %v821, %v821
  %v849 = vmul.f32 %v826, %v826
  %v850 = vmul.f32 %v831, %v831
  %v851 = vsel %vm267, %v847, 0.0
  %v852 = vsel %vm267, %v848, 0.0
  %v853 = vadd.f32 %v851, %v852
  %v854 = vsel %vm267, %v849, 0.0
  %v855 = vadd.f32 %v853, %v854
  %v856 = vsel %vm267, %v850, 0.0
  %v857 = vadd.f32 %v855, %v856
  %v858 = vrot.slane %v857, 4
  %v859 = vadd.f32 %v857, %v858
  %v860 = vrot.slane %v859, 2
  %v861 = vadd.f32 %v859, %v860
  %v862 = vrot.slane %v861, 1
  %v863 = vadd.f32 %v861, %v862
  %v864 = vadd.f32 %v580, %v846
  %v865 = vadd.f32 %v581, %v863
  %s866 = scalar_lea.vmem %s0, 384
  %v867 = vld [vmem:[%s866] sm:$0xff]
  %v868 = vld [vmem:[%s866 + $0x8] sm:$0xff]
  %v869 = vld [vmem:[%s866 + $0x10] sm:$0xff]
  %v870 = vld [vmem:[%s866 + $0x18] sm:$0xff]
  %v871 = vld [vmem:[%s866 + $0x20] sm:$0xff]
  %v872 = vld [vmem:[%s866 + $0x28] sm:$0xff]
  %v873 = vld [vmem:[%s866 + $0x30] sm:$0xff]
  %v874 = vld [vmem:[%s866 + $0x38] sm:$0xff]
  %v875 = vld [vmem:[%s866 + $0x40] sm:$0xff]
  %v876 = vld [vmem:[%s866 + $0x48] sm:$0xff]
  %v877 = vld [vmem:[%s866 + $0x50] sm:$0xff]
  %v878 = vld [vmem:[%s866 + $0x58] sm:$0xff]
  %v879 = vld [vmem:[%s866 + $0x60] sm:$0xff]
  %v880 = vld [vmem:[%s866 + $0x68] sm:$0xff]
  %v881 = vld [vmem:[%s866 + $0x70] sm:$0xff]
  %v882 = vld [vmem:[%s866 + $0x78] sm:$0xff]
  %s883 = scalar_lea.vmem %s1, 1536
  %v884 = vld [vmem:[%s883] sm:$0xff]
  %v885 = vld [vmem:[%s883 + $0x8] sm:$0xff]
  %v886 = vld [vmem:[%s883 + $0x10] sm:$0xff]
  %v887 = vld [vmem:[%s883 + $0x18] sm:$0xff]
  %v888 = vld [vmem:[%s883 + $0x20] sm:$0xff]
  %v889 = vld [vmem:[%s883 + $0x28] sm:$0xff]
  %v890 = vld [vmem:[%s883 + $0x30] sm:$0xff]
  %v891 = vld [vmem:[%s883 + $0x38] sm:$0xff]
  %v892 = vld [vmem:[%s883 + $0x40] sm:$0xff]
  %v893 = vld [vmem:[%s883 + $0x48] sm:$0xff]
  %v894 = vld [vmem:[%s883 + $0x50] sm:$0xff]
  %v895 = vld [vmem:[%s883 + $0x58] sm:$0xff]
  %v896 = vld [vmem:[%s883 + $0x60] sm:$0xff]
  %v897 = vld [vmem:[%s883 + $0x68] sm:$0xff]
  %v898 = vld [vmem:[%s883 + $0x70] sm:$0xff]
  %v899 = vld [vmem:[%s883 + $0x78] sm:$0xff]
  %v900 = vld [vmem:[%s883 + $0x80] sm:$0xff]
  %v901 = vld [vmem:[%s883 + $0x88] sm:$0xff]
  %v902 = vld [vmem:[%s883 + $0x90] sm:$0xff]
  %v903 = vld [vmem:[%s883 + $0x98] sm:$0xff]
  %v904 = vld [vmem:[%s883 + $0xa0] sm:$0xff]
  %v905 = vld [vmem:[%s883 + $0xa8] sm:$0xff]
  %v906 = vld [vmem:[%s883 + $0xb0] sm:$0xff]
  %v907 = vld [vmem:[%s883 + $0xb8] sm:$0xff]
  %v908 = vld [vmem:[%s883 + $0xc0] sm:$0xff]
  %v909 = vld [vmem:[%s883 + $0xc8] sm:$0xff]
  %v910 = vld [vmem:[%s883 + $0xd0] sm:$0xff]
  %v911 = vld [vmem:[%s883 + $0xd8] sm:$0xff]
  %v912 = vld [vmem:[%s883 + $0xe0] sm:$0xff]
  %v913 = vld [vmem:[%s883 + $0xe8] sm:$0xff]
  %v914 = vld [vmem:[%s883 + $0xf0] sm:$0xff]
  %v915 = vld [vmem:[%s883 + $0xf8] sm:$0xff]
  %v916 = vld [vmem:[%s883 + $0x100] sm:$0xff]
  %v917 = vld [vmem:[%s883 + $0x108] sm:$0xff]
  %v918 = vld [vmem:[%s883 + $0x110] sm:$0xff]
  %v919 = vld [vmem:[%s883 + $0x118] sm:$0xff]
  %v920 = vld [vmem:[%s883 + $0x120] sm:$0xff]
  %v921 = vld [vmem:[%s883 + $0x128] sm:$0xff]
  %v922 = vld [vmem:[%s883 + $0x130] sm:$0xff]
  %v923 = vld [vmem:[%s883 + $0x138] sm:$0xff]
  %v924 = vld [vmem:[%s883 + $0x140] sm:$0xff]
  %v925 = vld [vmem:[%s883 + $0x148] sm:$0xff]
  %v926 = vld [vmem:[%s883 + $0x150] sm:$0xff]
  %v927 = vld [vmem:[%s883 + $0x158] sm:$0xff]
  %v928 = vld [vmem:[%s883 + $0x160] sm:$0xff]
  %v929 = vld [vmem:[%s883 + $0x168] sm:$0xff]
  %v930 = vld [vmem:[%s883 + $0x170] sm:$0xff]
  %v931 = vld [vmem:[%s883 + $0x178] sm:$0xff]
  %v932 = vld [vmem:[%s883 + $0x180] sm:$0xff]
  %v933 = vld [vmem:[%s883 + $0x188] sm:$0xff]
  %v934 = vld [vmem:[%s883 + $0x190] sm:$0xff]
  %v935 = vld [vmem:[%s883 + $0x198] sm:$0xff]
  %v936 = vld [vmem:[%s883 + $0x1a0] sm:$0xff]
  %v937 = vld [vmem:[%s883 + $0x1a8] sm:$0xff]
  %v938 = vld [vmem:[%s883 + $0x1b0] sm:$0xff]
  %v939 = vld [vmem:[%s883 + $0x1b8] sm:$0xff]
  %v940 = vld [vmem:[%s883 + $0x1c0] sm:$0xff]
  %v941 = vld [vmem:[%s883 + $0x1c8] sm:$0xff]
  %v942 = vld [vmem:[%s883 + $0x1d0] sm:$0xff]
  %v943 = vld [vmem:[%s883 + $0x1d8] sm:$0xff]
  %v944 = vld [vmem:[%s883 + $0x1e0] sm:$0xff]
  %v945 = vld [vmem:[%s883 + $0x1e8] sm:$0xff]
  %v946 = vld [vmem:[%s883 + $0x1f0] sm:$0xff]
  %v947 = vld [vmem:[%s883 + $0x1f8] sm:$0xff]
  %948 = vmatprep.subr.mxu0 0.0
  %949 = vmatpush1.msra.mxu0 %v884
  %950 = vmatprep.subr.mxu0 0.0
  %951 = vmatpush1.msra.mxu0 %v885
  %952 = vmatprep.subr.mxu0 0.0
  %953 = vmatpush1.msra.mxu0 %v886
  %954 = vmatprep.subr.mxu0 0.0
  %955 = vmatpush1.msra.mxu0 %v887
  %956 = vmatprep.subr.mxu0 0.0
  %957 = vmatpush1.msra.mxu0 %v888
  %958 = vmatprep.subr.mxu0 0.0
  %959 = vmatpush1.msra.mxu0 %v889
  %960 = vmatprep.subr.mxu0 0.0
  %961 = vmatpush1.msra.mxu0 %v890
  %962 = vmatprep.subr.mxu0 0.0
  %963 = vmatpush1.msra.mxu0 %v891
  %964 = vmatprep.subr.mxu0 0.0
  %965 = vmatpush1.msra.mxu0 %v892
  %966 = vmatprep.subr.mxu0 0.0
  %967 = vmatpush1.msra.mxu0 %v893
  %968 = vmatprep.subr.mxu0 0.0
  %969 = vmatpush1.msra.mxu0 %v894
  %970 = vmatprep.subr.mxu0 0.0
  %971 = vmatpush1.msra.mxu0 %v895
  %972 = vmatprep.subr.mxu0 0.0
  %973 = vmatpush1.msra.mxu0 %v896
  %974 = vmatprep.subr.mxu0 0.0
  %975 = vmatpush1.msra.mxu0 %v897
  %976 = vmatprep.subr.mxu0 0.0
  %977 = vmatpush1.msra.mxu0 %v898
  %978 = vmatprep.subr.mxu0 0.0
  %979 = vmatpush1.msra.mxu0 %v899
  %980 = vmatprep.subr.mxu0 0.0
  %981 = vmatpush1.msra.mxu0 %v900
  %982 = vmatprep.subr.mxu0 0.0
  %983 = vmatpush1.msra.mxu0 %v901
  %984 = vmatprep.subr.mxu0 0.0
  %985 = vmatpush1.msra.mxu0 %v902
  %986 = vmatprep.subr.mxu0 0.0
  %987 = vmatpush1.msra.mxu0 %v903
  %988 = vmatprep.subr.mxu0 0.0
  %989 = vmatpush1.msra.mxu0 %v904
  %990 = vmatprep.subr.mxu0 0.0
  %991 = vmatpush1.msra.mxu0 %v905
  %992 = vmatprep.subr.mxu0 0.0
  %993 = vmatpush1.msra.mxu0 %v906
  %994 = vmatprep.subr.mxu0 0.0
  %995 = vmatpush1.msra.mxu0 %v907
  %996 = vmatprep.subr.mxu0 0.0
  %997 = vmatpush1.msra.mxu0 %v908
  %998 = vmatprep.subr.mxu0 0.0
  %999 = vmatpush1.msra.mxu0 %v909
  %1000 = vmatprep.subr.mxu0 0.0
  %1001 = vmatpush1.msra.mxu0 %v910
  %1002 = vmatprep.subr.mxu0 0.0
  %1003 = vmatpush1.msra.mxu0 %v911
  %1004 = vmatprep.subr.mxu0 0.0
  %1005 = vmatpush1.msra.mxu0 %v912
  %1006 = vmatprep.subr.mxu0 0.0
  %1007 = vmatpush1.msra.mxu0 %v913
  %1008 = vmatprep.subr.mxu0 0.0
  %1009 = vmatpush1.msra.mxu0 %v914
  %1010 = vmatprep.subr.mxu0 0.0
  %1011 = vmatpush1.msra.mxu0 %v915
  %1012 = vmatprep.mubr.f32.mxu0 %v868
  %1013 = vmatmul.mubr.f32.gmra.mrb[0].mxu0 %v867
  %v1014 = vpop.f32.mrb[0].mxu0
  %v1015 = vadd.f32 0.0, %v1014
  %v1016 = vpop.f32.mrb[0].mxu0
  %1017 = vmatprep.mubr.f32.mxu0 %v872
  %1018 = vmatmul.mubr.f32.gmra.mrb[0].mxu0 %v871
  %v1019 = vpop.f32.mrb[0].mxu0
  %v1020 = vadd.f32 0.0, %v1019
  %v1021 = vpop.f32.mrb[0].mxu0
  %1022 = vmatprep.mubr.f32.mxu0 %v876
  %1023 = vmatmul.mubr.f32.gmra.mrb[0].mxu0 %v875
  %v1024 = vpop.f32.mrb[0].mxu0
  %v1025 = vadd.f32 0.0, %v1024
  %v1026 = vpop.f32.mrb[0].mxu0
  %1027 = vmatprep.mubr.f32.mxu0 %v880
  %1028 = vmatmul.mubr.f32.gmra.mrb[0].mxu0 %v879
  %v1029 = vpop.f32.mrb[0].mxu0
  %v1030 = vadd.f32 0.0, %v1029
  %v1031 = vpop.f32.mrb[0].mxu0
  %1032 = vdwg.mxu0
  %1033 = vmatprep.subr.mxu0 0.0
  %1034 = vmatpush1.msra.mxu0 %v916
  %1035 = vmatprep.subr.mxu0 0.0
  %1036 = vmatpush1.msra.mxu0 %v917
  %1037 = vmatprep.subr.mxu0 0.0
  %1038 = vmatpush1.msra.mxu0 %v918
  %1039 = vmatprep.subr.mxu0 0.0
  %1040 = vmatpush1.msra.mxu0 %v919
  %1041 = vmatprep.subr.mxu0 0.0
  %1042 = vmatpush1.msra.mxu0 %v920
  %1043 = vmatprep.subr.mxu0 0.0
  %1044 = vmatpush1.msra.mxu0 %v921
  %1045 = vmatprep.subr.mxu0 0.0
  %1046 = vmatpush1.msra.mxu0 %v922
  %1047 = vmatprep.subr.mxu0 0.0
  %1048 = vmatpush1.msra.mxu0 %v923
  %1049 = vmatprep.subr.mxu0 0.0
  %1050 = vmatpush1.msra.mxu0 %v924
  %1051 = vmatprep.subr.mxu0 0.0
  %1052 = vmatpush1.msra.mxu0 %v925
  %1053 = vmatprep.subr.mxu0 0.0
  %1054 = vmatpush1.msra.mxu0 %v926
  %1055 = vmatprep.subr.mxu0 0.0
  %1056 = vmatpush1.msra.mxu0 %v927
  %1057 = vmatprep.subr.mxu0 0.0
  %1058 = vmatpush1.msra.mxu0 %v928
  %1059 = vmatprep.subr.mxu0 0.0
  %1060 = vmatpush1.msra.mxu0 %v929
  %1061 = vmatprep.subr.mxu0 0.0
  %1062 = vmatpush1.msra.mxu0 %v930
  %1063 = vmatprep.subr.mxu0 0.0
  %1064 = vmatpush1.msra.mxu0 %v931
  %1065 = vmatprep.subr.mxu0 0.0
  %1066 = vmatpush1.msra.mxu0 %v932
  %1067 = vmatprep.subr.mxu0 0.0
  %1068 = vmatpush1.msra.mxu0 %v933
  %1069 = vmatprep.subr.mxu0 0.0
  %1070 = vmatpush1.msra.mxu0 %v934
  %1071 = vmatprep.subr.mxu0 0.0
  %1072 = vmatpush1.msra.mxu0 %v935
  %1073 = vmatprep.subr.mxu0 0.0
  %1074 = vmatpush1.msra.mxu0 %v936
  %1075 = vmatprep.subr.mxu0 0.0
  %1076 = vmatpush1.msra.mxu0 %v937
  %1077 = vmatprep.subr.mxu0 0.0
  %1078 = vmatpush1.msra.mxu0 %v938
  %1079 = vmatprep.subr.mxu0 0.0
  %1080 = vmatpush1.msra.mxu0 %v939
  %1081 = vmatprep.subr.mxu0 0.0
  %1082 = vmatpush1.msra.mxu0 %v940
  %1083 = vmatprep.subr.mxu0 0.0
  %1084 = vmatpush1.msra.mxu0 %v941
  %1085 = vmatprep.subr.mxu0 0.0
  %1086 = vmatpush1.msra.mxu0 %v942
  %1087 = vmatprep.subr.mxu0 0.0
  %1088 = vmatpush1.msra.mxu0 %v943
  %1089 = vmatprep.subr.mxu0 0.0
  %1090 = vmatpush1.msra.mxu0 %v944
  %1091 = vmatprep.subr.mxu0 0.0
  %1092 = vmatpush1.msra.mxu0 %v945
  %1093 = vmatprep.subr.mxu0 0.0
  %1094 = vmatpush1.msra.mxu0 %v946
  %1095 = vmatprep.subr.mxu0 0.0
  %1096 = vmatpush1.msra.mxu0 %v947
  %1097 = vmatprep.mubr.f32.mxu0 %v870
  %1098 = vmatmul.mubr.f32.gmra.mrb[0].mxu0 %v869
  %v1099 = vpop.f32.mrb[0].mxu0
  %v1100 = vadd.f32 %v1015, %v1099
  %v1101 = vpop.f32.mrb[0].mxu0
  %1102 = vmatprep.mubr.f32.mxu0 %v874
  %1103 = vmatmul.mubr.f32.gmra.mrb[0].mxu0 %v873
  %v1104 = vpop.f32.mrb[0].mxu0
  %v1105 = vadd.f32 %v1020, %v1104
  %v1106 = vpop.f32.mrb[0].mxu0
  %1107 = vmatprep.mubr.f32.mxu0 %v878
  %1108 = vmatmul.mubr.f32.gmra.mrb[0].mxu0 %v877
  %v1109 = vpop.f32.mrb[0].mxu0
  %v1110 = vadd.f32 %v1025, %v1109
  %v1111 = vpop.f32.mrb[0].mxu0
  %1112 = vmatprep.mubr.f32.mxu0 %v882
  %1113 = vmatmul.mubr.f32.gmra.mrb[0].mxu0 %v881
  %v1114 = vpop.f32.mrb[0].mxu0
  %v1115 = vadd.f32 %v1030, %v1114
  %v1116 = vpop.f32.mrb[0].mxu0
  %1117 = vdwg.mxu0
  %v1118 = vsel %vm267, %v1100, 0.0
  %v1119 = vsel %vm267, %v1105, 0.0
  %v1120 = vadd.f32 %v1118, %v1119
  %v1121 = vsel %vm267, %v1110, 0.0
  %v1122 = vadd.f32 %v1120, %v1121
  %v1123 = vsel %vm267, %v1115, 0.0
  %v1124 = vadd.f32 %v1122, %v1123
  %v1125 = vrot.slane %v1124, 4
  %v1126 = vadd.f32 %v1124, %v1125
  %v1127 = vrot.slane %v1126, 2
  %v1128 = vadd.f32 %v1126, %v1127
  %v1129 = vrot.slane %v1128, 1
  %v1130 = vadd.f32 %v1128, %v1129
  %v1131 = vmul.f32 %v1100, %v1100
  %v1132 = vmul.f32 %v1105, %v1105
  %v1133 = vmul.f32 %v1110, %v1110
  %v1134 = vmul.f32 %v1115, %v1115
  %v1135 = vsel %vm267, %v1131, 0.0
  %v1136 = vsel %vm267, %v1132, 0.0
  %v1137 = vadd.f32 %v1135, %v1136
  %v1138 = vsel %vm267, %v1133, 0.0
  %v1139 = vadd.f32 %v1137, %v1138
  %v1140 = vsel %vm267, %v1134, 0.0
  %v1141 = vadd.f32 %v1139, %v1140
  %v1142 = vrot.slane %v1141, 4
  %v1143 = vadd.f32 %v1141, %v1142
  %v1144 = vrot.slane %v1143, 2
  %v1145 = vadd.f32 %v1143, %v1144
  %v1146 = vrot.slane %v1145, 1
  %v1147 = vadd.f32 %v1145, %v1146
  %v1148 = vadd.f32 %v864, %v1130
  %v1149 = vadd.f32 %v865, %v1147
  %v1150 = vmul.f32 %v1148, 0.0078125
  %v1151 = vmul.f32 %v1149, 0.0078125
  %v1152 = vmul.f32 %v1150, %v1150
  %v1153 = vsub.f32 %v1151, %v1152
  %v1154 = vmax.f32 %v1153, 0.0
  %v1155 = vadd.f32 %v1154, 1e-05
  %v1156 = vrsqrt.pop %v1155
  %v1157 = vld [vmem:[%s2] sm:$0x1]
  %v1158 = vmul.f32 %v1156, %v1157
  %v1159 = vld [vmem:[%s3] sm:$0x1]
  %v1160 = vmul.f32 %v1150, %v1158
  %v1161 = vsub.f32 %v1159, %v1160
  %v1162 = vlaneseq
  %v1163 = vshrl.u32 %v1162, 7
  %v1164 = vsub.s32 0, %v1163
  %v1165 = vrot.slane %v1158, %v1164
  %v1166 = vmul.f32 %v249, %v1165
  %v1167 = vmul.f32 %v254, %v1165
  %v1168 = vmul.f32 %v259, %v1165
  %v1169 = vmul.f32 %v264, %v1165
  %v1171 = vlaneseq
  %v1172 = vshrl.u32 %v1171, 7
  %v1173 = vsub.s32 0, %v1172
  %v1174 = vrot.slane %v1161, %v1173
  %v1176 = vadd.f32 %v1166, %v1174
  %v1177 = vadd.f32 %v1167, %v1174
  %v1178 = vadd.f32 %v1168, %v1174
  %v1179 = vadd.f32 %v1169, %v1174
  %vm1180 = vcmp.ge.f32.partialorder %v1176, 0.0
  %vm1181 = vcmp.ge.f32.partialorder %v1177, 0.0
  %vm1182 = vcmp.ge.f32.partialorder %v1178, 0.0
  %vm1183 = vcmp.ge.f32.partialorder %v1179, 0.0
  %v1184 = vmul.f32 %v1176, 0.2
  %v1185 = vmul.f32 %v1177, 0.2
  %v1186 = vmul.f32 %v1178, 0.2
  %v1187 = vmul.f32 %v1179, 0.2
  %v1188 = vsel %vm1180, %v1176, %v1184
  %v1189 = vsel %vm1181, %v1177, %v1185
  %v1190 = vsel %vm1182, %v1178, %v1186
  %v1191 = vsel %vm1183, %v1179, %v1187
  %1192 = vst.msk [vmem:[%s4] sm:$0xff] %vm267, %v1188
  %1193 = vst.msk [vmem:[%s4 + $0x8] sm:$0xff] %vm267, %v1189
  %1194 = vst.msk [vmem:[%s4 + $0x10] sm:$0xff] %vm267, %v1190
  %1195 = vst.msk [vmem:[%s4 + $0x18] sm:$0xff] %vm267, %v1191
  %v1196 = vmul.f32 %v532, %v1165
  %v1197 = vmul.f32 %v537, %v1165
  %v1198 = vmul.f32 %v542, %v1165
  %v1199 = vmul.f32 %v547, %v1165
  %v1200 = vadd.f32 %v1196, %v1174
  %v1201 = vadd.f32 %v1197, %v1174
  %v1202 = vadd.f32 %v1198, %v1174
  %v1203 = vadd.f32 %v1199, %v1174
  %vm1204 = vcmp.ge.f32.partialorder %v1200, 0.0
  %vm1205 = vcmp.ge.f32.partialorder %v1201, 0.0
  %vm1206 = vcmp.ge.f32.partialorder %v1202, 0.0
  %vm1207 = vcmp.ge.f32.partialorder %v1203, 0.0
  %v1208 = vmul.f32 %v1200, 0.2
  %v1209 = vmul.f32 %v1201, 0.2
  %v1210 = vmul.f32 %v1202, 0.2
  %v1211 = vmul.f32 %v1203, 0.2
  %v1212 = vsel %vm1204, %v1200, %v1208
  %v1213 = vsel %vm1205, %v1201, %v1209
  %v1214 = vsel %vm1206, %v1202, %v1210
  %v1215 = vsel %vm1207, %v1203, %v1211
  %s1216 = scalar_lea.vmem %s4, 32
  %1217 = vst.msk [vmem:[%s1216] sm:$0xff] %vm267, %v1212
  %1218 = vst.msk [vmem:[%s1216 + $0x8] sm:$0xff] %vm267, %v1213
  %1219 = vst.msk [vmem:[%s1216 + $0x10] sm:$0xff] %vm267, %v1214
  %1220 = vst.msk [vmem:[%s1216 + $0x18] sm:$0xff] %vm267, %v1215
  %v1221 = vmul.f32 %v816, %v1165
  %v1222 = vmul.f32 %v821, %v1165
  %v1223 = vmul.f32 %v826, %v1165
  %v1224 = vmul.f32 %v831, %v1165
  %v1225 = vadd.f32 %v1221, %v1174
  %v1226 = vadd.f32 %v1222, %v1174
  %v1227 = vadd.f32 %v1223, %v1174
  %v1228 = vadd.f32 %v1224, %v1174
  %vm1229 = vcmp.ge.f32.partialorder %v1225, 0.0
  %vm1230 = vcmp.ge.f32.partialorder %v1226, 0.0
  %vm1231 = vcmp.ge.f32.partialorder %v1227, 0.0
  %vm1232 = vcmp.ge.f32.partialorder %v1228, 0.0
  %v1233 = vmul.f32 %v1225, 0.2
  %v1234 = vmul.f32 %v1226, 0.2
  %v1235 = vmul.f32 %v1227, 0.2
  %v1236 = vmul.f32 %v1228, 0.2
  %v1237 = vsel %vm1229, %v1225, %v1233
  %v1238 = vsel %vm1230, %v1226, %v1234
  %v1239 = vsel %vm1231, %v1227, %v1235
  %v1240 = vsel %vm1232, %v1228, %v1236
  %s1241 = scalar_lea.vmem %s4, 64
  %1242 = vst.msk [vmem:[%s1241] sm:$0xff] %vm267, %v1237
  %1243 = vst.msk [vmem:[%s1241 + $0x8] sm:$0xff] %vm267, %v1238
  %1244 = vst.msk [vmem:[%s1241 + $0x10] sm:$0xff] %vm267, %v1239
  %1245 = vst.msk [vmem:[%s1241 + $0x18] sm:$0xff] %vm267, %v1240
  %v1246 = vmul.f32 %v1100, %v1165
  %v1247 = vmul.f32 %v1105, %v1165
  %v1248 = vmul.f32 %v1110, %v1165
  %v1249 = vmul.f32 %v1115, %v1165
  %v1250 = vadd.f32 %v1246, %v1174
  %v1251 = vadd.f32 %v1247, %v1174
  %v1252 = vadd.f32 %v1248, %v1174
  %v1253 = vadd.f32 %v1249, %v1174
  %vm1254 = vcmp.ge.f32.partialorder %v1250, 0.0
  %vm1255 = vcmp.ge.f32.partialorder %v1251, 0.0
  %vm1256 = vcmp.ge.f32.partialorder %v1252, 0.0
  %vm1257 = vcmp.ge.f32.partialorder %v1253, 0.0
  %v1258 = vmul.f32 %v1250, 0.2
  %v1259 = vmul.f32 %v1251, 0.2
  %v1260 = vmul.f32 %v1252, 0.2
  %v1261 = vmul.f32 %v1253, 0.2
  %v1262 = vsel %vm1254, %v1250, %v1258
  %v1263 = vsel %vm1255, %v1251, %v1259
  %v1264 = vsel %vm1256, %v1252, %v1260
  %v1265 = vsel %vm1257, %v1253, %v1261
  %s1266 = scalar_lea.vmem %s4, 96
  %1267 = vst.msk [vmem:[%s1266] sm:$0xff] %vm267, %v1262
  %1268 = vst.msk [vmem:[%s1266 + $0x8] sm:$0xff] %vm267, %v1263
  %1269 = vst.msk [vmem:[%s1266 + $0x10] sm:$0xff] %vm267, %v1264
  %1270 = vst.msk [vmem:[%s1266 + $0x18] sm:$0xff] %vm267, %v1265
  // Predicated region
  $region18: #{autoencoder_forward.10} parent=0 // pred_check
    _
  $region19: #{autoencoder_forward.10} parent=0 // pred_check_branch
    %1272 = sbr.rel (0) target = $region21
  $region20: #{autoencoder_forward.10} parent=0 // pred_region
    _
  $region21: #{autoencoder_forward.10} parent=0 // pred_fallthru
    _
  // Predicated region
  $region22: #{autoencoder_forward.10} parent=0 // pred_check
    _
  $region23: #{autoencoder_forward.10} parent=0 // pred_check_branch
    %1274 = sbr.rel (0) target = $region25
  $region24: #{autoencoder_forward.10} parent=0 // pred_region
    _
  $region25: #{autoencoder_forward.10} parent=0 // pred_fallthru
    _

// kernel: autoencoder_forward.11
$region0: #{autoencoder_forward.11}
  #allocation0 [shape = 'u32[]', space=smem, size = 0x4, offset = 0x4, fixed_abs, tag = 'smem constant byte address 0x4 - core index']
  #allocation1 [shape = 'u32[144,128]{1,0:T(1,128)}', space=vmem, size = 0x12000, scoped, tag = 'internal scratch']
  %s0 = inlined_call_operand.vmem [shape: f32[4,256,128], index: 0, kind: input, shape index: {}]
  %s1 = inlined_call_operand.vmem [shape: f32[4,3,256], index: 1, kind: input, shape index: {}]
  %s2 = inlined_call_operand.vmem [shape: f32[3,1], index: 2, kind: input, shape index: {}]
  %s3 = inlined_call_operand.vmem [shape: f32[3,1], index: 3, kind: input, shape index: {}]
  %s4 = inlined_call_operand.vmem [shape: f32[4,3,128], index: 4, kind: output, shape index: {}]
  %s5 = sld [smem:[#allocation0]]
  $region26: #{autoencoder_forward.11} parent=0
    _
  %s7 = ssub.s32 1, %s5
  %s8 = scalar_select 0, %s7, %s5
  // Predicated region
  $region2: #{autoencoder_forward.11} parent=0 // pred_check
    _
  $region3: #{autoencoder_forward.11} parent=0 // pred_check_branch
    %10 = sbr.rel (0) target = $region5
  $region4: #{autoencoder_forward.11} parent=0 // pred_region
    _
  $region5: #{autoencoder_forward.11} parent=0 // pred_fallthru
    _
  // Predicated region
  $region6: #{autoencoder_forward.11} parent=0 // pred_check
    _
  $region7: #{autoencoder_forward.11} parent=0 // pred_check_branch
    %12 = sbr.rel (0) target = $region9
  $region8: #{autoencoder_forward.11} parent=0 // pred_region
    _
  $region9: #{autoencoder_forward.11} parent=0 // pred_fallthru
    _
  // Predicated region
  $region10: #{autoencoder_forward.11} parent=0 // pred_check
    _
  $region11: #{autoencoder_forward.11} parent=0 // pred_check_branch
    %14 = sbr.rel (0) target = $region13
  $region12: #{autoencoder_forward.11} parent=0 // pred_region
    _
  $region13: #{autoencoder_forward.11} parent=0 // pred_fallthru
    _
  // Predicated region
  $region14: #{autoencoder_forward.11} parent=0 // pred_check
    _
  $region15: #{autoencoder_forward.11} parent=0 // pred_check_branch
    %16 = sbr.rel (0) target = $region17
  $region16: #{autoencoder_forward.11} parent=0 // pred_region
    _
  $region17: #{autoencoder_forward.11} parent=0 // pred_fallthru
    _
  %v17 = vld [vmem:[%s1] sm:$0x77]
  %v18 = vld [vmem:[%s0] sm:$0xff]
  %v19 = vld [vmem:[%s0 + $0x8] sm:$0xff]
  %v20 = vld [vmem:[%s0 + $0x10] sm:$0xff]
  %v21 = vld [vmem:[%s0 + $0x18] sm:$0xff]
  %v22 = vld [vmem:[%s0 + $0x20] sm:$0xff]
  %v23 = vld [vmem:[%s0 + $0x28] sm:$0xff]
  %v24 = vld [vmem:[%s0 + $0x30] sm:$0xff]
  %v25 = vld [vmem:[%s0 + $0x38] sm:$0xff]
  %v26 = vld [vmem:[%s0 + $0x40] sm:$0xff]
  %v27 = vld [vmem:[%s0 + $0x48] sm:$0xff]
  %v28 = vld [vmem:[%s0 + $0x50] sm:$0xff]
  %v29 = vld [vmem:[%s0 + $0x58] sm:$0xff]
  %v30 = vld [vmem:[%s0 + $0x60] sm:$0xff]
  %v31 = vld [vmem:[%s0 + $0x68] sm:$0xff]
  %v32 = vld [vmem:[%s0 + $0x70] sm:$0xff]
  %v33 = vld [vmem:[%s0 + $0x78] sm:$0xff]
  %v34 = vld [vmem:[%s0 + $0x80] sm:$0xff]
  %v35 = vld [vmem:[%s0 + $0x88] sm:$0xff]
  %v36 = vld [vmem:[%s0 + $0x90] sm:$0xff]
  %v37 = vld [vmem:[%s0 + $0x98] sm:$0xff]
  %v38 = vld [vmem:[%s0 + $0xa0] sm:$0xff]
  %v39 = vld [vmem:[%s0 + $0xa8] sm:$0xff]
  %v40 = vld [vmem:[%s0 + $0xb0] sm:$0xff]
  %v41 = vld [vmem:[%s0 + $0xb8] sm:$0xff]
  %v42 = vld [vmem:[%s0 + $0xc0] sm:$0xff]
  %v43 = vld [vmem:[%s0 + $0xc8] sm:$0xff]
  %v44 = vld [vmem:[%s0 + $0xd0] sm:$0xff]
  %v45 = vld [vmem:[%s0 + $0xd8] sm:$0xff]
  %v46 = vld [vmem:[%s0 + $0xe0] sm:$0xff]
  %v47 = vld [vmem:[%s0 + $0xe8] sm:$0xff]
  %v48 = vld [vmem:[%s0 + $0xf0] sm:$0xff]
  %v49 = vld [vmem:[%s0 + $0xf8] sm:$0xff]
  %v51 = vcombine.high %v17, %v17
  %53 = vmatprep.subr.mxu0 0.0
  %54 = vmatpush1.msra.mxu0 %v18
  %55 = vmatprep.subr.mxu0 0.0
  %56 = vmatpush1.msra.mxu0 %v19
  %57 = vmatprep.subr.mxu0 0.0
  %58 = vmatpush1.msra.mxu0 %v20
  %59 = vmatprep.subr.mxu0 0.0
  %60 = vmatpush1.msra.mxu0 %v21
  %61 = vmatprep.subr.mxu0 0.0
  %62 = vmatpush1.msra.mxu0 %v22
  %63 = vmatprep.subr.mxu0 0.0
  %64 = vmatpush1.msra.mxu0 %v23
  %65 = vmatprep.subr.mxu0 0.0
  %66 = vmatpush1.msra.mxu0 %v24
  %67 = vmatprep.subr.mxu0 0.0
  %68 = vmatpush1.msra.mxu0 %v25
  %69 = vmatprep.subr.mxu0 0.0
  %70 = vmatpush1.msra.mxu0 %v26
  %71 = vmatprep.subr.mxu0 0.0
  %72 = vmatpush1.msra.mxu0 %v27
  %73 = vmatprep.subr.mxu0 0.0
  %74 = vmatpush1.msra.mxu0 %v28
  %75 = vmatprep.subr.mxu0 0.0
  %76 = vmatpush1.msra.mxu0 %v29
  %77 = vmatprep.subr.mxu0 0.0
  %78 = vmatpush1.msra.mxu0 %v30
  %79 = vmatprep.subr.mxu0 0.0
  %80 = vmatpush1.msra.mxu0 %v31
  %81 = vmatprep.subr.mxu0 0.0
  %82 = vmatpush1.msra.mxu0 %v32
  %83 = vmatprep.subr.mxu0 0.0
  %84 = vmatpush1.msra.mxu0 %v33
  %85 = vmatprep.subr.mxu0 0.0
  %86 = vmatpush1.msra.mxu0 %v34
  %87 = vmatprep.subr.mxu0 0.0
  %88 = vmatpush1.msra.mxu0 %v35
  %89 = vmatprep.subr.mxu0 0.0
  %90 = vmatpush1.msra.mxu0 %v36
  %91 = vmatprep.subr.mxu0 0.0
  %92 = vmatpush1.msra.mxu0 %v37
  %93 = vmatprep.subr.mxu0 0.0
  %94 = vmatpush1.msra.mxu0 %v38
  %95 = vmatprep.subr.mxu0 0.0
  %96 = vmatpush1.msra.mxu0 %v39
  %97 = vmatprep.subr.mxu0 0.0
  %98 = vmatpush1.msra.mxu0 %v40
  %99 = vmatprep.subr.mxu0 0.0
  %100 = vmatpush1.msra.mxu0 %v41
  %101 = vmatprep.subr.mxu0 0.0
  %102 = vmatpush1.msra.mxu0 %v42
  %103 = vmatprep.subr.mxu0 0.0
  %104 = vmatpush1.msra.mxu0 %v43
  %105 = vmatprep.subr.mxu0 0.0
  %106 = vmatpush1.msra.mxu0 %v44
  %107 = vmatprep.subr.mxu0 0.0
  %108 = vmatpush1.msra.mxu0 %v45
  %109 = vmatprep.subr.mxu0 0.0
  %110 = vmatpush1.msra.mxu0 %v46
  %111 = vmatprep.subr.mxu0 0.0
  %112 = vmatpush1.msra.mxu0 %v47
  %113 = vmatprep.subr.mxu0 0.0
  %114 = vmatpush1.msra.mxu0 %v48
  %115 = vmatprep.subr.mxu0 0.0
  %116 = vmatpush1.msra.mxu0 %v49
  %117 = vmatprep.mubr.f32.mxu0 %v51
  %118 = vmatmul.mubr.f32.gmra.mrb[0].mxu0 %v17
  %v119 = vpop.f32.mrb[0].mxu0
  %v120 = vadd.f32 0.0, %v119
  %v121 = vpop.f32.mrb[0].mxu0
  %122 = vdwg.mxu0
  %vm123 = vcmask 1042432
  %v124 = vsel %vm123, %v120, 0.0
  %125 = vadd.xlane.f32.xlu0 %v124
  %v126 = vpop.xlane.xlu0 %125
  %v127 = vmul.f32 %v120, %v120
  %v128 = vsel %vm123, %v127, 0.0
  %129 = vadd.xlane.f32.xlu0 %v128
  %v130 = vpop.xlane.xlu0 %129
  %s131 = scalar_lea.vmem %s1, 8
  %v132 = vld [vmem:[%s131] sm:$0x77]
  %s133 = scalar_lea.vmem %s0, 256
  %v134 = vld [vmem:[%s133] sm:$0xff]
  %v135 = vld [vmem:[%s133 + $0x8] sm:$0xff]
  %v136 = vld [vmem:[%s133 + $0x10] sm:$0xff]
  %v137 = vld [vmem:[%s133 + $0x18] sm:$0xff]
  %v138 = vld [vmem:[%s133 + $0x20] sm:$0xff]
  %v139 = vld [vmem:[%s133 + $0x28] sm:$0xff]
  %v140 = vld [vmem:[%s133 + $0x30] sm:$0xff]
  %v141 = vld [vmem:[%s133 + $0x38] sm:$0xff]
  %v142 = vld [vmem:[%s133 + $0x40] sm:$0xff]
  %v143 = vld [vmem:[%s133 + $0x48] sm:$0xff]
  %v144 = vld [vmem:[%s133 + $0x50] sm:$0xff]
  %v145 = vld [vmem:[%s133 + $0x58] sm:$0xff]
  %v146 = vld [vmem:[%s133 + $0x60] sm:$0xff]
  %v147 = vld [vmem:[%s133 + $0x68] sm:$0xff]
  %v148 = vld [vmem:[%s133 + $0x70] sm:$0xff]
  %v149 = vld [vmem:[%s133 + $0x78] sm:$0xff]
  %v150 = vld [vmem:[%s133 + $0x80] sm:$0xff]
  %v151 = vld [vmem:[%s133 + $0x88] sm:$0xff]
  %v152 = vld [vmem:[%s133 + $0x90] sm:$0xff]
  %v153 = vld [vmem:[%s133 + $0x98] sm:$0xff]
  %v154 = vld [vmem:[%s133 + $0xa0] sm:$0xff]
  %v155 = vld [vmem:[%s133 + $0xa8] sm:$0xff]
  %v156 = vld [vmem:[%s133 + $0xb0] sm:$0xff]
  %v157 = vld [vmem:[%s133 + $0xb8] sm:$0xff]
  %v158 = vld [vmem:[%s133 + $0xc0] sm:$0xff]
  %v159 = vld [vmem:[%s133 + $0xc8] sm:$0xff]
  %v160 = vld [vmem:[%s133 + $0xd0] sm:$0xff]
  %v161 = vld [vmem:[%s133 + $0xd8] sm:$0xff]
  %v162 = vld [vmem:[%s133 + $0xe0] sm:$0xff]
  %v163 = vld [vmem:[%s133 + $0xe8] sm:$0xff]
  %v164 = vld [vmem:[%s133 + $0xf0] sm:$0xff]
  %v165 = vld [vmem:[%s133 + $0xf8] sm:$0xff]
  %v167 = vcombine.high %v132, %v132
  %169 = vmatprep.subr.mxu0 0.0
  %170 = vmatpush1.msra.mxu0 %v134
  %171 = vmatprep.subr.mxu0 0.0
  %172 = vmatpush1.msra.mxu0 %v135
  %173 = vmatprep.subr.mxu0 0.0
  %174 = vmatpush1.msra.mxu0 %v136
  %175 = vmatprep.subr.mxu0 0.0
  %176 = vmatpush1.msra.mxu0 %v137
  %177 = vmatprep.subr.mxu0 0.0
  %178 = vmatpush1.msra.mxu0 %v138
  %179 = vmatprep.subr.mxu0 0.0
  %180 = vmatpush1.msra.mxu0 %v139
  %181 = vmatprep.subr.mxu0 0.0
  %182 = vmatpush1.msra.mxu0 %v140
  %183 = vmatprep.subr.mxu0 0.0
  %184 = vmatpush1.msra.mxu0 %v141
  %185 = vmatprep.subr.mxu0 0.0
  %186 = vmatpush1.msra.mxu0 %v142
  %187 = vmatprep.subr.mxu0 0.0
  %188 = vmatpush1.msra.mxu0 %v143
  %189 = vmatprep.subr.mxu0 0.0
  %190 = vmatpush1.msra.mxu0 %v144
  %191 = vmatprep.subr.mxu0 0.0
  %192 = vmatpush1.msra.mxu0 %v145
  %193 = vmatprep.subr.mxu0 0.0
  %194 = vmatpush1.msra.mxu0 %v146
  %195 = vmatprep.subr.mxu0 0.0
  %196 = vmatpush1.msra.mxu0 %v147
  %197 = vmatprep.subr.mxu0 0.0
  %198 = vmatpush1.msra.mxu0 %v148
  %199 = vmatprep.subr.mxu0 0.0
  %200 = vmatpush1.msra.mxu0 %v149
  %201 = vmatprep.subr.mxu0 0.0
  %202 = vmatpush1.msra.mxu0 %v150
  %203 = vmatprep.subr.mxu0 0.0
  %204 = vmatpush1.msra.mxu0 %v151
  %205 = vmatprep.subr.mxu0 0.0
  %206 = vmatpush1.msra.mxu0 %v152
  %207 = vmatprep.subr.mxu0 0.0
  %208 = vmatpush1.msra.mxu0 %v153
  %209 = vmatprep.subr.mxu0 0.0
  %210 = vmatpush1.msra.mxu0 %v154
  %211 = vmatprep.subr.mxu0 0.0
  %212 = vmatpush1.msra.mxu0 %v155
  %213 = vmatprep.subr.mxu0 0.0
  %214 = vmatpush1.msra.mxu0 %v156
  %215 = vmatprep.subr.mxu0 0.0
  %216 = vmatpush1.msra.mxu0 %v157
  %217 = vmatprep.subr.mxu0 0.0
  %218 = vmatpush1.msra.mxu0 %v158
  %219 = vmatprep.subr.mxu0 0.0
  %220 = vmatpush1.msra.mxu0 %v159
  %221 = vmatprep.subr.mxu0 0.0
  %222 = vmatpush1.msra.mxu0 %v160
  %223 = vmatprep.subr.mxu0 0.0
  %224 = vmatpush1.msra.mxu0 %v161
  %225 = vmatprep.subr.mxu0 0.0
  %226 = vmatpush1.msra.mxu0 %v162
  %227 = vmatprep.subr.mxu0 0.0
  %228 = vmatpush1.msra.mxu0 %v163
  %229 = vmatprep.subr.mxu0 0.0
  %230 = vmatpush1.msra.mxu0 %v164
  %231 = vmatprep.subr.mxu0 0.0
  %232 = vmatpush1.msra.mxu0 %v165
  %233 = vmatprep.mubr.f32.mxu0 %v167
  %234 = vmatmul.mubr.f32.gmra.mrb[0].mxu0 %v132
  %v235 = vpop.f32.mrb[0].mxu0
  %v236 = vadd.f32 0.0, %v235
  %v237 = vpop.f32.mrb[0].mxu0
  %238 = vdwg.mxu0
  %v239 = vsel %vm123, %v236, 0.0
  %240 = vadd.xlane.f32.xlu0 %v239
  %v241 = vpop.xlane.xlu0 %240
  %v242 = vmul.f32 %v236, %v236
  %v243 = vsel %vm123, %v242, 0.0
  %244 = vadd.xlane.f32.xlu0 %v243
  %v245 = vpop.xlane.xlu0 %244
  %v246 = vadd.f32 %v126, %v241
  %v247 = vadd.f32 %v130, %v245
  %s248 = scalar_lea.vmem %s1, 16
  %v249 = vld [vmem:[%s248] sm:$0x77]
  %s250 = scalar_lea.vmem %s0, 512
  %v251 = vld [vmem:[%s250] sm:$0xff]
  %v252 = vld [vmem:[%s250 + $0x8] sm:$0xff]
  %v253 = vld [vmem:[%s250 + $0x10] sm:$0xff]
  %v254 = vld [vmem:[%s250 + $0x18] sm:$0xff]
  %v255 = vld [vmem:[%s250 + $0x20] sm:$0xff]
  %v256 = vld [vmem:[%s250 + $0x28] sm:$0xff]
  %v257 = vld [vmem:[%s250 + $0x30] sm:$0xff]
  %v258 = vld [vmem:[%s250 + $0x38] sm:$0xff]
  %v259 = vld [vmem:[%s250 + $0x40] sm:$0xff]
  %v260 = vld [vmem:[%s250 + $0x48] sm:$0xff]
  %v261 = vld [vmem:[%s250 + $0x50] sm:$0xff]
  %v262 = vld [vmem:[%s250 + $0x58] sm:$0xff]
  %v263 = vld [vmem:[%s250 + $0x60] sm:$0xff]
  %v264 = vld [vmem:[%s250 + $0x68] sm:$0xff]
  %v265 = vld [vmem:[%s250 + $0x70] sm:$0xff]
  %v266 = vld [vmem:[%s250 + $0x78] sm:$0xff]
  %v267 = vld [vmem:[%s250 + $0x80] sm:$0xff]
  %v268 = vld [vmem:[%s250 + $0x88] sm:$0xff]
  %v269 = vld [vmem:[%s250 + $0x90] sm:$0xff]
  %v270 = vld [vmem:[%s250 + $0x98] sm:$0xff]
  %v271 = vld [vmem:[%s250 + $0xa0] sm:$0xff]
  %v272 = vld [vmem:[%s250 + $0xa8] sm:$0xff]
  %v273 = vld [vmem:[%s250 + $0xb0] sm:$0xff]
  %v274 = vld [vmem:[%s250 + $0xb8] sm:$0xff]
  %v275 = vld [vmem:[%s250 + $0xc0] sm:$0xff]
  %v276 = vld [vmem:[%s250 + $0xc8] sm:$0xff]
  %v277 = vld [vmem:[%s250 + $0xd0] sm:$0xff]
  %v278 = vld [vmem:[%s250 + $0xd8] sm:$0xff]
  %v279 = vld [vmem:[%s250 + $0xe0] sm:$0xff]
  %v280 = vld [vmem:[%s250 + $0xe8] sm:$0xff]
  %v281 = vld [vmem:[%s250 + $0xf0] sm:$0xff]
  %v282 = vld [vmem:[%s250 + $0xf8] sm:$0xff]
  %v284 = vcombine.high %v249, %v249
  %286 = vmatprep.subr.mxu0 0.0
  %287 = vmatpush1.msra.mxu0 %v251
  %288 = vmatprep.subr.mxu0 0.0
  %289 = vmatpush1.msra.mxu0 %v252
  %290 = vmatprep.subr.mxu0 0.0
  %291 = vmatpush1.msra.mxu0 %v253
  %292 = vmatprep.subr.mxu0 0.0
  %293 = vmatpush1.msra.mxu0 %v254
  %294 = vmatprep.subr.mxu0 0.0
  %295 = vmatpush1.msra.mxu0 %v255
  %296 = vmatprep.subr.mxu0 0.0
  %297 = vmatpush1.msra.mxu0 %v256
  %298 = vmatprep.subr.mxu0 0.0
  %299 = vmatpush1.msra.mxu0 %v257
  %300 = vmatprep.subr.mxu0 0.0
  %301 = vmatpush1.msra.mxu0 %v258
  %302 = vmatprep.subr.mxu0 0.0
  %303 = vmatpush1.msra.mxu0 %v259
  %304 = vmatprep.subr.mxu0 0.0
  %305 = vmatpush1.msra.mxu0 %v260
  %306 = vmatprep.subr.mxu0 0.0
  %307 = vmatpush1.msra.mxu0 %v261
  %308 = vmatprep.subr.mxu0 0.0
  %309 = vmatpush1.msra.mxu0 %v262
  %310 = vmatprep.subr.mxu0 0.0
  %311 = vmatpush1.msra.mxu0 %v263
  %312 = vmatprep.subr.mxu0 0.0
  %313 = vmatpush1.msra.mxu0 %v264
  %314 = vmatprep.subr.mxu0 0.0
  %315 = vmatpush1.msra.mxu0 %v265
  %316 = vmatprep.subr.mxu0 0.0
  %317 = vmatpush1.msra.mxu0 %v266
  %318 = vmatprep.subr.mxu0 0.0
  %319 = vmatpush1.msra.mxu0 %v267
  %320 = vmatprep.subr.mxu0 0.0
  %321 = vmatpush1.msra.mxu0 %v268
  %322 = vmatprep.subr.mxu0 0.0
  %323 = vmatpush1.msra.mxu0 %v269
  %324 = vmatprep.subr.mxu0 0.0
  %325 = vmatpush1.msra.mxu0 %v270
  %326 = vmatprep.subr.mxu0 0.0
  %327 = vmatpush1.msra.mxu0 %v271
  %328 = vmatprep.subr.mxu0 0.0
  %329 = vmatpush1.msra.mxu0 %v272
  %330 = vmatprep.subr.mxu0 0.0
  %331 = vmatpush1.msra.mxu0 %v273
  %332 = vmatprep.subr.mxu0 0.0
  %333 = vmatpush1.msra.mxu0 %v274
  %334 = vmatprep.subr.mxu0 0.0
  %335 = vmatpush1.msra.mxu0 %v275
  %336 = vmatprep.subr.mxu0 0.0
  %337 = vmatpush1.msra.mxu0 %v276
  %338 = vmatprep.subr.mxu0 0.0
  %339 = vmatpush1.msra.mxu0 %v277
  %340 = vmatprep.subr.mxu0 0.0
  %341 = vmatpush1.msra.mxu0 %v278
  %342 = vmatprep.subr.mxu0 0.0
  %343 = vmatpush1.msra.mxu0 %v279
  %344 = vmatprep.subr.mxu0 0.0
  %345 = vmatpush1.msra.mxu0 %v280
  %346 = vmatprep.subr.mxu0 0.0
  %347 = vmatpush1.msra.mxu0 %v281
  %348 = vmatprep.subr.mxu0 0.0
  %349 = vmatpush1.msra.mxu0 %v282
  %350 = vmatprep.mubr.f32.mxu0 %v284
  %351 = vmatmul.mubr.f32.gmra.mrb[0].mxu0 %v249
  %v352 = vpop.f32.mrb[0].mxu0
  %v353 = vadd.f32 0.0, %v352
  %v354 = vpop.f32.mrb[0].mxu0
  %355 = vdwg.mxu0
  %v356 = vsel %vm123, %v353, 0.0
  %357 = vadd.xlane.f32.xlu0 %v356
  %v358 = vpop.xlane.xlu0 %357
  %v359 = vmul.f32 %v353, %v353
  %v360 = vsel %vm123, %v359, 0.0
  %361 = vadd.xlane.f32.xlu0 %v360
  %v362 = vpop.xlane.xlu0 %361
  %v363 = vadd.f32 %v246, %v358
  %v364 = vadd.f32 %v247, %v362
  %s365 = scalar_lea.vmem %s1, 24
  %v366 = vld [vmem:[%s365] sm:$0x77]
  %s367 = scalar_lea.vmem %s0, 768
  %v368 = vld [vmem:[%s367] sm:$0xff]
  %v369 = vld [vmem:[%s367 + $0x8] sm:$0xff]
  %v370 = vld [vmem:[%s367 + $0x10] sm:$0xff]
  %v371 = vld [vmem:[%s367 + $0x18] sm:$0xff]
  %v372 = vld [vmem:[%s367 + $0x20] sm:$0xff]
  %v373 = vld [vmem:[%s367 + $0x28] sm:$0xff]
  %v374 = vld [vmem:[%s367 + $0x30] sm:$0xff]
  %v375 = vld [vmem:[%s367 + $0x38] sm:$0xff]
  %v376 = vld [vmem:[%s367 + $0x40] sm:$0xff]
  %v377 = vld [vmem:[%s367 + $0x48] sm:$0xff]
  %v378 = vld [vmem:[%s367 + $0x50] sm:$0xff]
  %v379 = vld [vmem:[%s367 + $0x58] sm:$0xff]
  %v380 = vld [vmem:[%s367 + $0x60] sm:$0xff]
  %v381 = vld [vmem:[%s367 + $0x68] sm:$0xff]
  %v382 = vld [vmem:[%s367 + $0x70] sm:$0xff]
  %v383 = vld [vmem:[%s367 + $0x78] sm:$0xff]
  %v384 = vld [vmem:[%s367 + $0x80] sm:$0xff]
  %v385 = vld [vmem:[%s367 + $0x88] sm:$0xff]
  %v386 = vld [vmem:[%s367 + $0x90] sm:$0xff]
  %v387 = vld [vmem:[%s367 + $0x98] sm:$0xff]
  %v388 = vld [vmem:[%s367 + $0xa0] sm:$0xff]
  %v389 = vld [vmem:[%s367 + $0xa8] sm:$0xff]
  %v390 = vld [vmem:[%s367 + $0xb0] sm:$0xff]
  %v391 = vld [vmem:[%s367 + $0xb8] sm:$0xff]
  %v392 = vld [vmem:[%s367 + $0xc0] sm:$0xff]
  %v393 = vld [vmem:[%s367 + $0xc8] sm:$0xff]
  %v394 = vld [vmem:[%s367 + $0xd0] sm:$0xff]
  %v395 = vld [vmem:[%s367 + $0xd8] sm:$0xff]
  %v396 = vld [vmem:[%s367 + $0xe0] sm:$0xff]
  %v397 = vld [vmem:[%s367 + $0xe8] sm:$0xff]
  %v398 = vld [vmem:[%s367 + $0xf0] sm:$0xff]
  %v399 = vld [vmem:[%s367 + $0xf8] sm:$0xff]
  %v401 = vcombine.high %v366, %v366
  %403 = vmatprep.subr.mxu0 0.0
  %404 = vmatpush1.msra.mxu0 %v368
  %405 = vmatprep.subr.mxu0 0.0
  %406 = vmatpush1.msra.mxu0 %v369
  %407 = vmatprep.subr.mxu0 0.0
  %408 = vmatpush1.msra.mxu0 %v370
  %409 = vmatprep.subr.mxu0 0.0
  %410 = vmatpush1.msra.mxu0 %v371
  %411 = vmatprep.subr.mxu0 0.0
  %412 = vmatpush1.msra.mxu0 %v372
  %413 = vmatprep.subr.mxu0 0.0
  %414 = vmatpush1.msra.mxu0 %v373
  %415 = vmatprep.subr.mxu0 0.0
  %416 = vmatpush1.msra.mxu0 %v374
  %417 = vmatprep.subr.mxu0 0.0
  %418 = vmatpush1.msra.mxu0 %v375
  %419 = vmatprep.subr.mxu0 0.0
  %420 = vmatpush1.msra.mxu0 %v376
  %421 = vmatprep.subr.mxu0 0.0
  %422 = vmatpush1.msra.mxu0 %v377
  %423 = vmatprep.subr.mxu0 0.0
  %424 = vmatpush1.msra.mxu0 %v378
  %425 = vmatprep.subr.mxu0 0.0
  %426 = vmatpush1.msra.mxu0 %v379
  %427 = vmatprep.subr.mxu0 0.0
  %428 = vmatpush1.msra.mxu0 %v380
  %429 = vmatprep.subr.mxu0 0.0
  %430 = vmatpush1.msra.mxu0 %v381
  %431 = vmatprep.subr.mxu0 0.0
  %432 = vmatpush1.msra.mxu0 %v382
  %433 = vmatprep.subr.mxu0 0.0
  %434 = vmatpush1.msra.mxu0 %v383
  %435 = vmatprep.subr.mxu0 0.0
  %436 = vmatpush1.msra.mxu0 %v384
  %437 = vmatprep.subr.mxu0 0.0
  %438 = vmatpush1.msra.mxu0 %v385
  %439 = vmatprep.subr.mxu0 0.0
  %440 = vmatpush1.msra.mxu0 %v386
  %441 = vmatprep.subr.mxu0 0.0
  %442 = vmatpush1.msra.mxu0 %v387
  %443 = vmatprep.subr.mxu0 0.0
  %444 = vmatpush1.msra.mxu0 %v388
  %445 = vmatprep.subr.mxu0 0.0
  %446 = vmatpush1.msra.mxu0 %v389
  %447 = vmatprep.subr.mxu0 0.0
  %448 = vmatpush1.msra.mxu0 %v390
  %449 = vmatprep.subr.mxu0 0.0
  %450 = vmatpush1.msra.mxu0 %v391
  %451 = vmatprep.subr.mxu0 0.0
  %452 = vmatpush1.msra.mxu0 %v392
  %453 = vmatprep.subr.mxu0 0.0
  %454 = vmatpush1.msra.mxu0 %v393
  %455 = vmatprep.subr.mxu0 0.0
  %456 = vmatpush1.msra.mxu0 %v394
  %457 = vmatprep.subr.mxu0 0.0
  %458 = vmatpush1.msra.mxu0 %v395
  %459 = vmatprep.subr.mxu0 0.0
  %460 = vmatpush1.msra.mxu0 %v396
  %461 = vmatprep.subr.mxu0 0.0
  %462 = vmatpush1.msra.mxu0 %v397
  %463 = vmatprep.subr.mxu0 0.0
  %464 = vmatpush1.msra.mxu0 %v398
  %465 = vmatprep.subr.mxu0 0.0
  %466 = vmatpush1.msra.mxu0 %v399
  %467 = vmatprep.mubr.f32.mxu0 %v401
  %468 = vmatmul.mubr.f32.gmra.mrb[0].mxu0 %v366
  %v469 = vpop.f32.mrb[0].mxu0
  %v470 = vadd.f32 0.0, %v469
  %v471 = vpop.f32.mrb[0].mxu0
  %472 = vdwg.mxu0
  %v473 = vsel %vm123, %v470, 0.0
  %474 = vadd.xlane.f32.xlu0 %v473
  %v475 = vpop.xlane.xlu0 %474
  %v476 = vmul.f32 %v470, %v470
  %v477 = vsel %vm123, %v476, 0.0
  %478 = vadd.xlane.f32.xlu0 %v477
  %v479 = vpop.xlane.xlu0 %478
  %v480 = vadd.f32 %v363, %v475
  %v481 = vadd.f32 %v364, %v479
  %v482 = vmul.f32 %v480, 0.001953125
  %v483 = vmul.f32 %v481, 0.001953125
  %v484 = vmul.f32 %v482, %v482
  %v485 = vsub.f32 %v483, %v484
  %v486 = vmax.f32 %v485, 0.0
  %v487 = vadd.f32 %v486, 1e-05
  %v488 = vrsqrt.pop %v487
  %v489 = vld [vmem:[%s2] sm:$0x7]
  %v490 = vmul.f32 %v488, %v489
  %v491 = vld [vmem:[%s3] sm:$0x7]
  %v492 = vmul.f32 %v482, %v490
  %v493 = vsub.f32 %v491, %v492
  %495 = vset.pattern.permute.xlu0 0
  %496 = vperm.xlu0 %495, %v490
  %v497 = vpop.permute.xlu0 %496
  %v499 = vmul.f32 %v120, %v497
  %501 = vset.pattern.permute.xlu0 0
  %502 = vperm.xlu0 %501, %v493
  %v503 = vpop.permute.xlu0 %502
  %v505 = vadd.f32 %v499, %v503
  %v506 = vtanh.pop %v505
  %507 = vst [vmem:[%s4] sm:$0x7] %v506
  %v508 = vmul.f32 %v236, %v497
  %v509 = vadd.f32 %v508, %v503
  %v510 = vtanh.pop %v509
  %s511 = scalar_lea.vmem %s4, 4
  %512 = vst [vmem:[%s511] sm:$0x7] %v510
  %v513 = vmul.f32 %v353, %v497
  %v514 = vadd.f32 %v513, %v503
  %v515 = vtanh.pop %v514
  %s516 = scalar_lea.vmem %s4, 8
  %517 = vst [vmem:[%s516] sm:$0x7] %v515
  %v518 = vmul.f32 %v470, %v497
  %v519 = vadd.f32 %v518, %v503
  %v520 = vtanh.pop %v519
  %s521 = scalar_lea.vmem %s4, 12
  %522 = vst [vmem:[%s521] sm:$0x7] %v520
  // Predicated region
  $region18: #{autoencoder_forward.11} parent=0 // pred_check
    _
  $region19: #{autoencoder_forward.11} parent=0 // pred_check_branch
    %524 = sbr.rel (0) target = $region21
  $region20: #{autoencoder_forward.11} parent=0 // pred_region
    _
  $region21: #{autoencoder_forward.11} parent=0 // pred_fallthru
    _
  // Predicated region
  $region22: #{autoencoder_forward.11} parent=0 // pred_check
    _
  $region23: #{autoencoder_forward.11} parent=0 // pred_check_branch
    %526 = sbr.rel (0) target = $region25
  $region24: #{autoencoder_forward.11} parent=0 // pred_region
    _
  $region25: #{autoencoder_forward.11} parent=0 // pred_fallthru
    _

</llo_original>
